<compile_context>
chip_gen: v7x
topology: tpu7x:2x2x1
jax: 0.10.0
libtpu: 0.0.40
codegen_flags: <defaults>
</compile_context>

<pallas_src>
import jax
import jax.numpy as jnp
from jax.experimental import pallas as pl
from jax.experimental.pallas import tpu as pltpu

STORE_DTYPE = jnp.bfloat16           # HBM storage dtype (activations & conv weights)
VMEM_LIMIT = 64 * 1024 * 1024        # <= physical VMEM on v5e/v6e (128 MiB) and v7x (64 MiB)
TM_1X1 = 512                         # pixel-tile for the 1x1 convs (raise to 1024+ on v5e/v6e)


# ---------------------------------------------------------------------------
# In-kernel helpers
# ---------------------------------------------------------------------------

def _silu(y):
    # exact SiLU (f32): y * sigmoid(y); no approx reciprocal (parity with torch)
    return y * (1.0 / (1.0 + jnp.exp(-y)))


def _round_up(x, m):
    return ((x + m - 1) // m) * m


def _pool5(x):
    """Separable 5x5, stride-1, pad-2 max pool of (H, W, C) with -inf border."""
    H, W, C = x.shape
    negw = jnp.full((H, 2, C), -jnp.inf, x.dtype)
    xw = jnp.concatenate([negw, x, negw], axis=1)        # (H, W+4, C)
    m = xw[:, 0:W, :]
    for dx in range(1, 5):
        m = jnp.maximum(m, xw[:, dx:dx + W, :])
    negh = jnp.full((2, W, C), -jnp.inf, x.dtype)
    mh = jnp.concatenate([negh, m, negh], axis=0)        # (H+4, W, C)
    out = mh[0:H, :, :]
    for dy in range(1, 5):
        out = jnp.maximum(out, mh[dy:dy + H, :, :])
    return out


# ---------------------------------------------------------------------------
# Pallas kernels
# ---------------------------------------------------------------------------

def _conv1x1_dual_kernel(x_ref, w_ref, s_ref, b_ref, o1_ref, o2_ref):
    """Fused cv1 + cv2: one matmul against the Cout-concatenated weight,
    two outputs.  x is read from HBM exactly once."""
    c1 = o1_ref.shape[-1]
    acc = jnp.dot(x_ref[...], w_ref[...], preferred_element_type=jnp.float32)
    y = _silu(acc * s_ref[...] + b_ref[...])
    o1_ref[...] = y[:, :c1].astype(o1_ref.dtype)
    o2_ref[...] = y[:, c1:].astype(o2_ref.dtype)


def _make_conv1x1_kernel(n_in):
    """1x1 conv + folded BN + SiLU over flattened pixels with n_in inputs whose
    channel-concat would feed the conv: cat([x0..xk], C) @ W == sum_i x_i @ W_i,
    so the concatenated activation is never materialized in HBM."""
    def kernel(*refs):
        x_refs = refs[:n_in]
        w_refs = refs[n_in:2 * n_in]
        s_ref, b_ref, o_ref = refs[2 * n_in:]
        acc = jnp.dot(x_refs[0][...], w_refs[0][...],
                      preferred_element_type=jnp.float32)
        for i in range(1, n_in):
            acc = acc + jnp.dot(x_refs[i][...], w_refs[i][...],
                                preferred_element_type=jnp.float32)
        o_ref[...] = _silu(acc * s_ref[...] + b_ref[...]).astype(o_ref.dtype)
    return kernel


def _conv3x3_bn_silu_kernel(x_ref, w_ref, s_ref, b_ref, o_ref):
    """3x3 conv (pad=1) + folded BN + SiLU for one image.

    The zero border is built in-kernel and the 9 taps are accumulated as 9
    shifted (H*W, Cin) @ (Cin, Cout) dots — no (H, W, 9*Cin) im2col tensor."""
    _, H, W, Cin = x_ref.shape
    Cout = o_ref.shape[-1]
    x = x_ref[0].astype(jnp.float32)                       # (H, W, Cin)
    zw = jnp.zeros((H, 1, Cin), jnp.float32)
    xp = jnp.concatenate([zw, x, zw], axis=1)              # (H, W+2, Cin)
    zh = jnp.zeros((1, W + 2, Cin), jnp.float32)
    xp = jnp.concatenate([zh, xp, zh], axis=0)             # (H+2, W+2, Cin)
    wdt = w_ref.dtype
    acc = None
    for dy in range(3):
        for dx in range(3):
            patch = xp[dy:dy + H, dx:dx + W, :].reshape(H * W, Cin)
            part = jnp.dot(patch.astype(wdt), w_ref[dy * 3 + dx],
                           preferred_element_type=jnp.float32)
            acc = part if acc is None else acc + part
    y = _silu(acc * s_ref[...] + b_ref[...])
    o_ref[...] = y.reshape(1, H, W, Cout).astype(o_ref.dtype)


def _cv4_pool_cv5_kernel(x_ref, w4_ref, s4_ref, b4_ref,
                         w5_ref, s5_ref, b5_ref, o_ref):
    """Fused cv4 (1x1) + triple cascaded 5x5 max pool + cv5 (1x1) per image.

    x1 / y1 / y2 / y3 stay in VMEM/vregs; cv5 consumes the implicit channel
    concat via weight-split accumulation.  Emits only t5 = cv5(...)."""
    _, H, W, C = x_ref.shape
    x3 = x_ref[0].reshape(H * W, C)
    # cv4: 1x1 + BN + SiLU (f32 epilogue)
    x1 = _silu(jnp.dot(x3, w4_ref[...], preferred_element_type=jnp.float32)
               * s4_ref[...] + b4_ref[...])                # (H*W, C) f32
    # cascaded 5x5 max pools, entirely on-chip
    y1 = _pool5(x1.reshape(H, W, C))
    y2 = _pool5(y1)
    y3 = _pool5(y2)
    # cv5 on cat([x1, y1, y2, y3], C) via weight-split accumulation
    wdt = w5_ref.dtype
    acc = jnp.dot(x1.astype(wdt), w5_ref[0], preferred_element_type=jnp.float32)
    acc = acc + jnp.dot(y1.reshape(H * W, C).astype(wdt), w5_ref[1],
                        preferred_element_type=jnp.float32)
    acc = acc + jnp.dot(y2.reshape(H * W, C).astype(wdt), w5_ref[2],
                        preferred_element_type=jnp.float32)
    acc = acc + jnp.dot(y3.reshape(H * W, C).astype(wdt), w5_ref[3],
                        preferred_element_type=jnp.float32)
    t5 = _silu(acc * s5_ref[...] + b5_ref[...])
    o_ref[...] = t5.reshape(1, H, W, C).astype(o_ref.dtype)


# ---------------------------------------------------------------------------
# pallas_call wrappers
# ---------------------------------------------------------------------------

def conv1x1_dual_bn_silu(x, w_cat, scale_cat, bias_cat, c1, c2, *, tm=TM_1X1):
    """x: (M, Cin); w_cat: (Cin, c1+c2). Returns (o1 (M,c1), o2 (M,c2))."""
    M, Cin = x.shape
    tm = min(tm, _round_up(M, 8))
    grid_m = pl.cdiv(M, tm)                      # ragged tail masked by Pallas
    return pl.pallas_call(
        _conv1x1_dual_kernel,
        out_shape=(jax.ShapeDtypeStruct((M, c1), STORE_DTYPE),
                   jax.ShapeDtypeStruct((M, c2), STORE_DTYPE)),
        grid=(grid_m,),
        in_specs=[pl.BlockSpec((tm, Cin), lambda i: (i, 0)),
                  pl.BlockSpec((Cin, c1 + c2), lambda i: (0, 0)),
                  pl.BlockSpec((1, c1 + c2), lambda i: (0, 0)),
                  pl.BlockSpec((1, c1 + c2), lambda i: (0, 0))],
        out_specs=(pl.BlockSpec((tm, c1), lambda i: (i, 0)),
                   pl.BlockSpec((tm, c2), lambda i: (i, 0))),
        compiler_params=pltpu.CompilerParams(
            dimension_semantics=("parallel",), vmem_limit_bytes=VMEM_LIMIT),
    )(x, w_cat, scale_cat, bias_cat)


def conv1x1_bn_silu(xs, ws, scale, bias, *, tm=TM_1X1, out_dtype=None):
    """xs: list of (M, Cin_i); ws: list of (Cin_i, Cout). Returns (M, Cout)."""
    n_in = len(xs)
    M = xs[0].shape[0]
    Cout = ws[0].shape[1]
    out_dtype = STORE_DTYPE if out_dtype is None else out_dtype
    tm = min(tm, _round_up(M, 8))
    grid_m = pl.cdiv(M, tm)                      # no wrapper jnp.pad for the tail
    in_specs = [pl.BlockSpec((tm, int(x.shape[1])), lambda i: (i, 0)) for x in xs]
    in_specs += [pl.BlockSpec(tuple(w.shape), lambda i: (0, 0)) for w in ws]
    in_specs += [pl.BlockSpec((1, Cout), lambda i: (0, 0)),
                 pl.BlockSpec((1, Cout), lambda i: (0, 0))]
    return pl.pallas_call(
        _make_conv1x1_kernel(n_in),
        out_shape=jax.ShapeDtypeStruct((M, Cout), out_dtype),
        grid=(grid_m,),
        in_specs=in_specs,
        out_specs=pl.BlockSpec((tm, Cout), lambda i: (i, 0)),
        compiler_params=pltpu.CompilerParams(
            dimension_semantics=("parallel",), vmem_limit_bytes=VMEM_LIMIT),
    )(*xs, *ws, scale, bias)


def conv3x3_bn_silu(x, w, scale, bias):
    N, H, W, Cin = x.shape
    Cout = w.shape[-1]
    # TODO(synk): at production resolutions, tile H (grid=(N, H//th)) with a
    # 1-row halo so per-image VMEM fits v7x's 64 MiB and the pipeline overlaps.
    return pl.pallas_call(
        _conv3x3_bn_silu_kernel,
        out_shape=jax.ShapeDtypeStruct((N, H, W, Cout), STORE_DTYPE),
        grid=(N,),
        in_specs=[pl.BlockSpec((1, H, W, Cin), lambda n: (n, 0, 0, 0)),
                  pl.BlockSpec((9, Cin, Cout), lambda n: (0, 0, 0)),
                  pl.BlockSpec((1, Cout), lambda n: (0, 0)),
                  pl.BlockSpec((1, Cout), lambda n: (0, 0))],
        out_specs=pl.BlockSpec((1, H, W, Cout), lambda n: (n, 0, 0, 0)),
        compiler_params=pltpu.CompilerParams(
            dimension_semantics=("parallel",), vmem_limit_bytes=VMEM_LIMIT),
    )(x, w, scale, bias)


def cv4_pool_cv5(x3, p4, p5):
    """Fused cv4 -> (5x5 max pool)x3 -> cv5; only t5 is written to HBM."""
    N, H, W, C = x3.shape
    w5 = p5["w"].reshape(4, C, C)        # row-block split of the (4c_, c_) weight
    # TODO(synk): H-tile with a 6-row halo (3 cascaded 5x5 pools) for production
    # feature maps to restore double-buffering / megacore sharding.
    return pl.pallas_call(
        _cv4_pool_cv5_kernel,
        out_shape=jax.ShapeDtypeStruct((N, H, W, C), STORE_DTYPE),
        grid=(N,),
        in_specs=[pl.BlockSpec((1, H, W, C), lambda n: (n, 0, 0, 0)),
                  pl.BlockSpec((C, C), lambda n: (0, 0)),
                  pl.BlockSpec((1, C), lambda n: (0, 0)),
                  pl.BlockSpec((1, C), lambda n: (0, 0)),
                  pl.BlockSpec((4, C, C), lambda n: (0, 0, 0)),
                  pl.BlockSpec((1, C), lambda n: (0, 0)),
                  pl.BlockSpec((1, C), lambda n: (0, 0))],
        out_specs=pl.BlockSpec((1, H, W, C), lambda n: (n, 0, 0, 0)),
        compiler_params=pltpu.CompilerParams(
            dimension_semantics=("parallel",), vmem_limit_bytes=VMEM_LIMIT),
    )(x3, p4["w"], p4["scale"], p4["bias"], w5, p5["scale"], p5["bias"])


# ---------------------------------------------------------------------------
# Parameter construction (deterministic, synthetic; BN folded into scale/bias)
# ---------------------------------------------------------------------------

def make_conv_params(key, cin, cout, k):
    kw, kg, kb, km, kv = jax.random.split(key, 5)
    w = 0.1 * jax.random.normal(kw, (cout, cin, k, k), jnp.float32)   # OIHW
    gamma = 1.0 + 0.1 * jax.random.normal(kg, (cout,), jnp.float32)
    beta = 0.1 * jax.random.normal(kb, (cout,), jnp.float32)
    mean = 0.1 * jax.random.normal(km, (cout,), jnp.float32)
    var = jnp.abs(jax.random.normal(kv, (cout,), jnp.float32)) + 0.5
    eps = 1e-5
    scale = gamma / jnp.sqrt(var + eps)
    bias = beta - mean * scale
    if k == 1:
        w_k = w[:, :, 0, 0].T                                 # (Cin, Cout)
    else:
        # OIHW -> (kh*kw, Cin, Cout); tap-major (dy, dx) to match the kernel.
        w_k = jnp.transpose(w, (2, 3, 1, 0)).reshape(k * k, cin, cout)
    return {"w": w_k.astype(STORE_DTYPE),
            "scale": scale.reshape(1, cout).astype(jnp.float32),
            "bias": bias.reshape(1, cout).astype(jnp.float32)}


def make_cspsppf_params(key, in_channels, out_channels, e=0.5):
    c_ = int(out_channels * e)
    keys = jax.random.split(key, 7)
    return {
        "cv1": make_conv_params(keys[0], in_channels, c_, 1),
        "cv2": make_conv_params(keys[1], in_channels, c_, 1),
        "cv3": make_conv_params(keys[2], c_, c_, 3),
        "cv4": make_conv_params(keys[3], c_, c_, 1),
        "cv5": make_conv_params(keys[4], 4 * c_, c_, 1),
        "cv6": make_conv_params(keys[5], c_, c_, 3),
        "cv7": make_conv_params(keys[6], 2 * c_, out_channels, 1),
    }


# ---------------------------------------------------------------------------
# CSPSPPF forward (wrapper glue around the Pallas kernels)
# ---------------------------------------------------------------------------

def cspsppf_forward(x_nchw, params):
    x = jnp.transpose(x_nchw, (0, 2, 3, 1)).astype(STORE_DTYPE)      # NCHW->NHWC
    N, H, W, Cin = x.shape
    M = N * H * W
    c_ = params["cv1"]["w"].shape[1]
    out_channels = params["cv7"]["w"].shape[1]

    # fused cv1 + cv2: one pass over x, one (Cin, 2c_)-wide MXU matmul
    w12 = jnp.concatenate([params["cv1"]["w"], params["cv2"]["w"]], axis=1)
    s12 = jnp.concatenate([params["cv1"]["scale"], params["cv2"]["scale"]], axis=1)
    b12 = jnp.concatenate([params["cv1"]["bias"], params["cv2"]["bias"]], axis=1)
    x1p, y0 = conv1x1_dual_bn_silu(x.reshape(M, Cin), w12, s12, b12, c_, c_)

    # cv3 (3x3) on the cv1 branch
    x3 = conv3x3_bn_silu(x1p.reshape(N, H, W, c_), params["cv3"]["w"],
                         params["cv3"]["scale"], params["cv3"]["bias"])

    # fused cv4 + triple 5x5 max pool + cv5: x1/y1/y2/y3 never hit HBM
    t5 = cv4_pool_cv5(x3, params["cv4"], params["cv5"])

    # cv6 (3x3)
    y3c = conv3x3_bn_silu(t5, params["cv6"]["w"],
                          params["cv6"]["scale"], params["cv6"]["bias"])

    # cv7 on cat([y0, y3], C) via weight-split accumulation (no concat)
    w7 = params["cv7"]["w"]
    out = conv1x1_bn_silu([y0, y3c.reshape(M, c_)], [w7[:c_], w7[c_:]],
                          params["cv7"]["scale"], params["cv7"]["bias"],
                          out_dtype=jnp.float32)
    return jnp.transpose(out.reshape(N, H, W, out_channels), (0, 3, 1, 2))


if __name__ == "__main__":
    key = jax.random.PRNGKey(0)
    kx, kp = jax.random.split(key)

    in_channels, out_channels = 4, 8
    N, H, W = 2, 16, 16

    x = jax.random.normal(kx, (N, in_channels, H, W), jnp.float32)   # NCHW input
    params = make_cspsppf_params(kp, in_channels, out_channels, e=0.5)

    fwd = jax.jit(cspsppf_forward)
    out = fwd(x, params)
    jax.block_until_ready(out)
    assert out.shape == (N, out_channels, H, W), out.shape
    assert bool(jnp.all(jnp.isfinite(out)))
    print("KERNEL_OK")
</pallas_src>

<mosaic_0001>
module attributes {stable_mosaic.version = 11 : i64} {
  func.func @_conv1x1_dual_kernel(%arg0: i32, %arg1: memref<512x4xbf16, #tpu.memory_space<vmem>>, %arg2: memref<4x8xbf16, #tpu.memory_space<vmem>>, %arg3: memref<1x8xf32, #tpu.memory_space<vmem>>, %arg4: memref<1x8xf32, #tpu.memory_space<vmem>>, %arg5: memref<512x4xbf16, #tpu.memory_space<vmem>>, %arg6: memref<512x4xbf16, #tpu.memory_space<vmem>>) attributes {dimension_semantics = [#tpu.dimension_semantics<parallel>], iteration_bounds = array<i64: 1>, scalar_prefetch = 0 : i64, scratch_operands = 0 : i64, tpu.core_type = #tpu.core_type<tc>, window_params = [{transform_indices = @transform_0, window_bounds = array<i64: 512, 4>}, {pipeline_mode = #tpu.pipeline_mode<synchronous>, transform_indices = @transform_1, window_bounds = array<i64: 4, 8>}, {pipeline_mode = #tpu.pipeline_mode<synchronous>, transform_indices = @transform_2, window_bounds = array<i64: 1, 8>}, {pipeline_mode = #tpu.pipeline_mode<synchronous>, transform_indices = @transform_3, window_bounds = array<i64: 1, 8>}, {transform_indices = @transform_4, window_bounds = array<i64: 512, 4>}, {transform_indices = @transform_5, window_bounds = array<i64: 512, 4>}]} {
    %c0 = arith.constant 0 : index
    %c0_0 = arith.constant 0 : index
    %0 = vector.load %arg1[%c0, %c0_0] : memref<512x4xbf16, #tpu.memory_space<vmem>>, vector<512x4xbf16>
    %c0_1 = arith.constant 0 : index
    %c0_2 = arith.constant 0 : index
    %1 = vector.load %arg2[%c0_1, %c0_2] : memref<4x8xbf16, #tpu.memory_space<vmem>>, vector<4x8xbf16>
    %cst = arith.constant dense<0.000000e+00> : vector<512x8xf32>
    %2 = tpu.matmul %0, %1, %cst {dimension_numbers = #tpu.dot_dimension_numbers<[1], [0], [0], [1], [0, 0, 1, 1], [], []>} : vector<512x4xbf16>, vector<4x8xbf16>, vector<512x8xf32> -> vector<512x8xf32>
    %c0_3 = arith.constant 0 : index
    %c0_4 = arith.constant 0 : index
    %3 = vector.load %arg3[%c0_3, %c0_4] : memref<1x8xf32, #tpu.memory_space<vmem>>, vector<1x8xf32>
    %4 = vector.broadcast %3 : vector<1x8xf32> to vector<512x8xf32>
    %5 = arith.mulf %2, %4 : vector<512x8xf32>
    %c0_5 = arith.constant 0 : index
    %c0_6 = arith.constant 0 : index
    %6 = vector.load %arg4[%c0_5, %c0_6] : memref<1x8xf32, #tpu.memory_space<vmem>>, vector<1x8xf32>
    %7 = vector.broadcast %6 : vector<1x8xf32> to vector<512x8xf32>
    %8 = arith.addf %5, %7 : vector<512x8xf32>
    %cst_7 = arith.constant 0.000000e+00 : f32
    %9 = vector.broadcast %cst_7 : f32 to vector<512x8xf32>
    %10 = arith.subf %9, %8 : vector<512x8xf32>
    %11 = math.exp %10 : vector<512x8xf32>
    %cst_8 = arith.constant 1.000000e+00 : f32
    %12 = vector.broadcast %cst_8 : f32 to vector<512x8xf32>
    %13 = arith.addf %12, %11 : vector<512x8xf32>
    %cst_9 = arith.constant 1.000000e+00 : f32
    %14 = vector.broadcast %cst_9 : f32 to vector<512x8xf32>
    %15 = arith.divf %14, %13 : vector<512x8xf32>
    %16 = arith.mulf %8, %15 : vector<512x8xf32>
    %17 = vector.extract_strided_slice %16 {offsets = [0, 0], sizes = [512, 4], strides = [1, 1]} : vector<512x8xf32> to vector<512x4xf32>
    %18 = arith.truncf %17 : vector<512x4xf32> to vector<512x4xbf16>
    %c0_10 = arith.constant 0 : index
    %c0_11 = arith.constant 0 : index
    %19 = vector.load %arg5[%c0_10, %c0_11] : memref<512x4xbf16, #tpu.memory_space<vmem>>, vector<512x4xbf16>
    tpu.vector_store %arg5[%c0_10, %c0_11], %18 {strides = array<i32>} : memref<512x4xbf16, #tpu.memory_space<vmem>>, vector<512x4xbf16>,
    %20 = vector.extract_strided_slice %16 {offsets = [0, 4], sizes = [512, 4], strides = [1, 1]} : vector<512x8xf32> to vector<512x4xf32>
    %21 = arith.truncf %20 : vector<512x4xf32> to vector<512x4xbf16>
    %c0_12 = arith.constant 0 : index
    %c0_13 = arith.constant 0 : index
    %22 = vector.load %arg6[%c0_12, %c0_13] : memref<512x4xbf16, #tpu.memory_space<vmem>>, vector<512x4xbf16>
    tpu.vector_store %arg6[%c0_12, %c0_13], %21 {strides = array<i32>} : memref<512x4xbf16, #tpu.memory_space<vmem>>, vector<512x4xbf16>,
    return
  }
  func.func @transform_0(%arg0: i32) -> (i32, i32) {
    %c0_i32 = arith.constant 0 : i32
    %c0_i32_0 = arith.constant 0 : i32
    return %arg0, %c0_i32 : i32, i32
  }
  func.func @transform_1(%arg0: i32) -> (i32, i32) {
    %c0_i32 = arith.constant 0 : i32
    %c0_i32_0 = arith.constant 0 : i32
    %c0_i32_1 = arith.constant 0 : i32
    return %c0_i32, %c0_i32_0 : i32, i32
  }
  func.func @transform_2(%arg0: i32) -> (i32, i32) {
    %c0_i32 = arith.constant 0 : i32
    %c0_i32_0 = arith.constant 0 : i32
    %c0_i32_1 = arith.constant 0 : i32
    return %c0_i32, %c0_i32_0 : i32, i32
  }
  func.func @transform_3(%arg0: i32) -> (i32, i32) {
    %c0_i32 = arith.constant 0 : i32
    %c0_i32_0 = arith.constant 0 : i32
    %c0_i32_1 = arith.constant 0 : i32
    return %c0_i32, %c0_i32_0 : i32, i32
  }
  func.func @transform_4(%arg0: i32) -> (i32, i32) {
    %c0_i32 = arith.constant 0 : i32
    %c0_i32_0 = arith.constant 0 : i32
    return %arg0, %c0_i32 : i32, i32
  }
  func.func @transform_5(%arg0: i32) -> (i32, i32) {
    %c0_i32 = arith.constant 0 : i32
    %c0_i32_0 = arith.constant 0 : i32
    return %arg0, %c0_i32 : i32, i32
  }
}

module attributes {stable_mosaic.version = 11 : i64} {
  func.func @_conv3x3_bn_silu_kernel(%arg0: i32, %arg1: memref<1x16x16x4xbf16, #tpu.memory_space<vmem>>, %arg2: memref<9x4x4xbf16, #tpu.memory_space<vmem>>, %arg3: memref<1x4xf32, #tpu.memory_space<vmem>>, %arg4: memref<1x4xf32, #tpu.memory_space<vmem>>, %arg5: memref<1x16x16x4xbf16, #tpu.memory_space<vmem>>) attributes {dimension_semantics = [#tpu.dimension_semantics<parallel>], iteration_bounds = array<i64: 2>, scalar_prefetch = 0 : i64, scratch_operands = 0 : i64, tpu.core_type = #tpu.core_type<tc>, window_params = [{transform_indices = @transform_0, window_bounds = array<i64: 1, 16, 16, 4>}, {pipeline_mode = #tpu.pipeline_mode<synchronous>, transform_indices = @transform_1, window_bounds = array<i64: 9, 4, 4>}, {pipeline_mode = #tpu.pipeline_mode<synchronous>, transform_indices = @transform_2, window_bounds = array<i64: 1, 4>}, {pipeline_mode = #tpu.pipeline_mode<synchronous>, transform_indices = @transform_3, window_bounds = array<i64: 1, 4>}, {transform_indices = @transform_4, window_bounds = array<i64: 1, 16, 16, 4>}]} {
    %c0 = arith.constant 0 : index
    %c0_0 = arith.constant 0 : index
    %c0_1 = arith.constant 0 : index
    %c0_2 = arith.constant 0 : index
    %0 = vector.load %arg1[%c0, %c0_0, %c0_1, %c0_2] : memref<1x16x16x4xbf16, #tpu.memory_space<vmem>>, vector<1x16x16x4xbf16>
    %1 = vector.shape_cast %0 : vector<1x16x16x4xbf16> to vector<16x16x4xbf16>
    %2 = arith.extf %1 : vector<16x16x4xbf16> to vector<16x16x4xf32>
    %cst = arith.constant 0.000000e+00 : f32
    %3 = vector.broadcast %cst : f32 to vector<16x1x4xf32>
    %4 = tpu.concatenate %3, %2, %3 in 1 : vector<16x1x4xf32>, vector<16x16x4xf32>, vector<16x1x4xf32> -> vector<16x18x4xf32>
    %cst_3 = arith.constant 0.000000e+00 : f32
    %5 = vector.broadcast %cst_3 : f32 to vector<1x18x4xf32>
    %6 = tpu.concatenate %5, %4, %5 in 0 : vector<1x18x4xf32>, vector<16x18x4xf32>, vector<1x18x4xf32> -> vector<18x18x4xf32>
    %7 = vector.extract_strided_slice %6 {offsets = [0, 0, 0], sizes = [16, 16, 4], strides = [1, 1, 1]} : vector<18x18x4xf32> to vector<16x16x4xf32>
    %8 = vector.shape_cast %7 : vector<16x16x4xf32> to vector<256x4xf32>
    %9 = arith.truncf %8 : vector<256x4xf32> to vector<256x4xbf16>
    %c0_4 = arith.constant 0 : index
    %c0_5 = arith.constant 0 : index
    %c0_6 = arith.constant 0 : index
    %10 = vector.load %arg2[%c0_4, %c0_5, %c0_6] : memref<9x4x4xbf16, #tpu.memory_space<vmem>>, vector<1x4x4xbf16>
    %11 = vector.shape_cast %10 : vector<1x4x4xbf16> to vector<4x4xbf16>
    %cst_7 = arith.constant dense<0.000000e+00> : vector<256x4xf32>
    %12 = tpu.matmul %9, %11, %cst_7 {dimension_numbers = #tpu.dot_dimension_numbers<[1], [0], [0], [1], [0, 0, 1, 1], [], []>} : vector<256x4xbf16>, vector<4x4xbf16>, vector<256x4xf32> -> vector<256x4xf32>
    %13 = vector.extract_strided_slice %6 {offsets = [0, 1, 0], sizes = [16, 16, 4], strides = [1, 1, 1]} : vector<18x18x4xf32> to vector<16x16x4xf32>
    %14 = vector.shape_cast %13 : vector<16x16x4xf32> to vector<256x4xf32>
    %15 = arith.truncf %14 : vector<256x4xf32> to vector<256x4xbf16>
    %c1 = arith.constant 1 : index
    %c0_8 = arith.constant 0 : index
    %c0_9 = arith.constant 0 : index
    %16 = vector.load %arg2[%c1, %c0_8, %c0_9] : memref<9x4x4xbf16, #tpu.memory_space<vmem>>, vector<1x4x4xbf16>
    %17 = vector.shape_cast %16 : vector<1x4x4xbf16> to vector<4x4xbf16>
    %cst_10 = arith.constant dense<0.000000e+00> : vector<256x4xf32>
    %18 = tpu.matmul %15, %17, %cst_10 {dimension_numbers = #tpu.dot_dimension_numbers<[1], [0], [0], [1], [0, 0, 1, 1], [], []>} : vector<256x4xbf16>, vector<4x4xbf16>, vector<256x4xf32> -> vector<256x4xf32>
    %19 = arith.addf %12, %18 : vector<256x4xf32>
    %20 = vector.extract_strided_slice %6 {offsets = [0, 2, 0], sizes = [16, 16, 4], strides = [1, 1, 1]} : vector<18x18x4xf32> to vector<16x16x4xf32>
    %21 = vector.shape_cast %20 : vector<16x16x4xf32> to vector<256x4xf32>
    %22 = arith.truncf %21 : vector<256x4xf32> to vector<256x4xbf16>
    %c2 = arith.constant 2 : index
    %c0_11 = arith.constant 0 : index
    %c0_12 = arith.constant 0 : index
    %23 = vector.load %arg2[%c2, %c0_11, %c0_12] : memref<9x4x4xbf16, #tpu.memory_space<vmem>>, vector<1x4x4xbf16>
    %24 = vector.shape_cast %23 : vector<1x4x4xbf16> to vector<4x4xbf16>
    %cst_13 = arith.constant dense<0.000000e+00> : vector<256x4xf32>
    %25 = tpu.matmul %22, %24, %cst_13 {dimension_numbers = #tpu.dot_dimension_numbers<[1], [0], [0], [1], [0, 0, 1, 1], [], []>} : vector<256x4xbf16>, vector<4x4xbf16>, vector<256x4xf32> -> vector<256x4xf32>
    %26 = arith.addf %19, %25 : vector<256x4xf32>
    %27 = vector.extract_strided_slice %6 {offsets = [1, 0, 0], sizes = [16, 16, 4], strides = [1, 1, 1]} : vector<18x18x4xf32> to vector<16x16x4xf32>
    %28 = vector.shape_cast %27 : vector<16x16x4xf32> to vector<256x4xf32>
    %29 = arith.truncf %28 : vector<256x4xf32> to vector<256x4xbf16>
    %c3 = arith.constant 3 : index
    %c0_14 = arith.constant 0 : index
    %c0_15 = arith.constant 0 : index
    %30 = vector.load %arg2[%c3, %c0_14, %c0_15] : memref<9x4x4xbf16, #tpu.memory_space<vmem>>, vector<1x4x4xbf16>
    %31 = vector.shape_cast %30 : vector<1x4x4xbf16> to vector<4x4xbf16>
    %cst_16 = arith.constant dense<0.000000e+00> : vector<256x4xf32>
    %32 = tpu.matmul %29, %31, %cst_16 {dimension_numbers = #tpu.dot_dimension_numbers<[1], [0], [0], [1], [0, 0, 1, 1], [], []>} : vector<256x4xbf16>, vector<4x4xbf16>, vector<256x4xf32> -> vector<256x4xf32>
    %33 = arith.addf %26, %32 : vector<256x4xf32>
    %34 = vector.extract_strided_slice %6 {offsets = [1, 1, 0], sizes = [16, 16, 4], strides = [1, 1, 1]} : vector<18x18x4xf32> to vector<16x16x4xf32>
    %35 = vector.shape_cast %34 : vector<16x16x4xf32> to vector<256x4xf32>
    %36 = arith.truncf %35 : vector<256x4xf32> to vector<256x4xbf16>
    %c4 = arith.constant 4 : index
    %c0_17 = arith.constant 0 : index
    %c0_18 = arith.constant 0 : index
    %37 = vector.load %arg2[%c4, %c0_17, %c0_18] : memref<9x4x4xbf16, #tpu.memory_space<vmem>>, vector<1x4x4xbf16>
    %38 = vector.shape_cast %37 : vector<1x4x4xbf16> to vector<4x4xbf16>
    %cst_19 = arith.constant dense<0.000000e+00> : vector<256x4xf32>
    %39 = tpu.matmul %36, %38, %cst_19 {dimension_numbers = #tpu.dot_dimension_numbers<[1], [0], [0], [1], [0, 0, 1, 1], [], []>} : vector<256x4xbf16>, vector<4x4xbf16>, vector<256x4xf32> -> vector<256x4xf32>
    %40 = arith.addf %33, %39 : vector<256x4xf32>
    %41 = vector.extract_strided_slice %6 {offsets = [1, 2, 0], sizes = [16, 16, 4], strides = [1, 1, 1]} : vector<18x18x4xf32> to vector<16x16x4xf32>
    %42 = vector.shape_cast %41 : vector<16x16x4xf32> to vector<256x4xf32>
    %43 = arith.truncf %42 : vector<256x4xf32> to vector<256x4xbf16>
    %c5 = arith.constant 5 : index
    %c0_20 = arith.constant 0 : index
    %c0_21 = arith.constant 0 : index
    %44 = vector.load %arg2[%c5, %c0_20, %c0_21] : memref<9x4x4xbf16, #tpu.memory_space<vmem>>, vector<1x4x4xbf16>
    %45 = vector.shape_cast %44 : vector<1x4x4xbf16> to vector<4x4xbf16>
    %cst_22 = arith.constant dense<0.000000e+00> : vector<256x4xf32>
    %46 = tpu.matmul %43, %45, %cst_22 {dimension_numbers = #tpu.dot_dimension_numbers<[1], [0], [0], [1], [0, 0, 1, 1], [], []>} : vector<256x4xbf16>, vector<4x4xbf16>, vector<256x4xf32> -> vector<256x4xf32>
    %47 = arith.addf %40, %46 : vector<256x4xf32>
    %48 = vector.extract_strided_slice %6 {offsets = [2, 0, 0], sizes = [16, 16, 4], strides = [1, 1, 1]} : vector<18x18x4xf32> to vector<16x16x4xf32>
    %49 = vector.shape_cast %48 : vector<16x16x4xf32> to vector<256x4xf32>
    %50 = arith.truncf %49 : vector<256x4xf32> to vector<256x4xbf16>
    %c6 = arith.constant 6 : index
    %c0_23 = arith.constant 0 : index
    %c0_24 = arith.constant 0 : index
    %51 = vector.load %arg2[%c6, %c0_23, %c0_24] : memref<9x4x4xbf16, #tpu.memory_space<vmem>>, vector<1x4x4xbf16>
    %52 = vector.shape_cast %51 : vector<1x4x4xbf16> to vector<4x4xbf16>
    %cst_25 = arith.constant dense<0.000000e+00> : vector<256x4xf32>
    %53 = tpu.matmul %50, %52, %cst_25 {dimension_numbers = #tpu.dot_dimension_numbers<[1], [0], [0], [1], [0, 0, 1, 1], [], []>} : vector<256x4xbf16>, vector<4x4xbf16>, vector<256x4xf32> -> vector<256x4xf32>
    %54 = arith.addf %47, %53 : vector<256x4xf32>
    %55 = vector.extract_strided_slice %6 {offsets = [2, 1, 0], sizes = [16, 16, 4], strides = [1, 1, 1]} : vector<18x18x4xf32> to vector<16x16x4xf32>
    %56 = vector.shape_cast %55 : vector<16x16x4xf32> to vector<256x4xf32>
    %57 = arith.truncf %56 : vector<256x4xf32> to vector<256x4xbf16>
    %c7 = arith.constant 7 : index
    %c0_26 = arith.constant 0 : index
    %c0_27 = arith.constant 0 : index
    %58 = vector.load %arg2[%c7, %c0_26, %c0_27] : memref<9x4x4xbf16, #tpu.memory_space<vmem>>, vector<1x4x4xbf16>
    %59 = vector.shape_cast %58 : vector<1x4x4xbf16> to vector<4x4xbf16>
    %cst_28 = arith.constant dense<0.000000e+00> : vector<256x4xf32>
    %60 = tpu.matmul %57, %59, %cst_28 {dimension_numbers = #tpu.dot_dimension_numbers<[1], [0], [0], [1], [0, 0, 1, 1], [], []>} : vector<256x4xbf16>, vector<4x4xbf16>, vector<256x4xf32> -> vector<256x4xf32>
    %61 = arith.addf %54, %60 : vector<256x4xf32>
    %62 = vector.extract_strided_slice %6 {offsets = [2, 2, 0], sizes = [16, 16, 4], strides = [1, 1, 1]} : vector<18x18x4xf32> to vector<16x16x4xf32>
    %63 = vector.shape_cast %62 : vector<16x16x4xf32> to vector<256x4xf32>
    %64 = arith.truncf %63 : vector<256x4xf32> to vector<256x4xbf16>
    %c8 = arith.constant 8 : index
    %c0_29 = arith.constant 0 : index
    %c0_30 = arith.constant 0 : index
    %65 = vector.load %arg2[%c8, %c0_29, %c0_30] : memref<9x4x4xbf16, #tpu.memory_space<vmem>>, vector<1x4x4xbf16>
    %66 = vector.shape_cast %65 : vector<1x4x4xbf16> to vector<4x4xbf16>
    %cst_31 = arith.constant dense<0.000000e+00> : vector<256x4xf32>
    %67 = tpu.matmul %64, %66, %cst_31 {dimension_numbers = #tpu.dot_dimension_numbers<[1], [0], [0], [1], [0, 0, 1, 1], [], []>} : vector<256x4xbf16>, vector<4x4xbf16>, vector<256x4xf32> -> vector<256x4xf32>
    %68 = arith.addf %61, %67 : vector<256x4xf32>
    %c0_32 = arith.constant 0 : index
    %c0_33 = arith.constant 0 : index
    %69 = vector.load %arg3[%c0_32, %c0_33] : memref<1x4xf32, #tpu.memory_space<vmem>>, vector<1x4xf32>
    %70 = vector.broadcast %69 : vector<1x4xf32> to vector<256x4xf32>
    %71 = arith.mulf %68, %70 : vector<256x4xf32>
    %c0_34 = arith.constant 0 : index
    %c0_35 = arith.constant 0 : index
    %72 = vector.load %arg4[%c0_34, %c0_35] : memref<1x4xf32, #tpu.memory_space<vmem>>, vector<1x4xf32>
    %73 = vector.broadcast %72 : vector<1x4xf32> to vector<256x4xf32>
    %74 = arith.addf %71, %73 : vector<256x4xf32>
    %cst_36 = arith.constant 0.000000e+00 : f32
    %75 = vector.broadcast %cst_36 : f32 to vector<256x4xf32>
    %76 = arith.subf %75, %74 : vector<256x4xf32>
    %77 = math.exp %76 : vector<256x4xf32>
    %cst_37 = arith.constant 1.000000e+00 : f32
    %78 = vector.broadcast %cst_37 : f32 to vector<256x4xf32>
    %79 = arith.addf %78, %77 : vector<256x4xf32>
    %cst_38 = arith.constant 1.000000e+00 : f32
    %80 = vector.broadcast %cst_38 : f32 to vector<256x4xf32>
    %81 = arith.divf %80, %79 : vector<256x4xf32>
    %82 = arith.mulf %74, %81 : vector<256x4xf32>
    %83 = vector.shape_cast %82 : vector<256x4xf32> to vector<1x16x16x4xf32>
    %84 = arith.truncf %83 : vector<1x16x16x4xf32> to vector<1x16x16x4xbf16>
    %c0_39 = arith.constant 0 : index
    %c0_40 = arith.constant 0 : index
    %c0_41 = arith.constant 0 : index
    %c0_42 = arith.constant 0 : index
    %85 = vector.load %arg5[%c0_39, %c0_40, %c0_41, %c0_42] : memref<1x16x16x4xbf16, #tpu.memory_space<vmem>>, vector<1x16x16x4xbf16>
    tpu.vector_store %arg5[%c0_39, %c0_40, %c0_41, %c0_42], %84 {strides = array<i32>} : memref<1x16x16x4xbf16, #tpu.memory_space<vmem>>, vector<1x16x16x4xbf16>,
    return
  }
  func.func @transform_0(%arg0: i32) -> (i32, i32, i32, i32) {
    %c0_i32 = arith.constant 0 : i32
    %c0_i32_0 = arith.constant 0 : i32
    %c0_i32_1 = arith.constant 0 : i32
    %c0_i32_2 = arith.constant 0 : i32
    return %arg0, %c0_i32, %c0_i32_0, %c0_i32_1 : i32, i32, i32, i32
  }
  func.func @transform_1(%arg0: i32) -> (i32, i32, i32) {
    %c0_i32 = arith.constant 0 : i32
    %c0_i32_0 = arith.constant 0 : i32
    %c0_i32_1 = arith.constant 0 : i32
    %c0_i32_2 = arith.constant 0 : i32
    return %c0_i32, %c0_i32_0, %c0_i32_1 : i32, i32, i32
  }
  func.func @transform_2(%arg0: i32) -> (i32, i32) {
    %c0_i32 = arith.constant 0 : i32
    %c0_i32_0 = arith.constant 0 : i32
    %c0_i32_1 = arith.constant 0 : i32
    return %c0_i32, %c0_i32_0 : i32, i32
  }
  func.func @transform_3(%arg0: i32) -> (i32, i32) {
    %c0_i32 = arith.constant 0 : i32
    %c0_i32_0 = arith.constant 0 : i32
    %c0_i32_1 = arith.constant 0 : i32
    return %c0_i32, %c0_i32_0 : i32, i32
  }
  func.func @transform_4(%arg0: i32) -> (i32, i32, i32, i32) {
    %c0_i32 = arith.constant 0 : i32
    %c0_i32_0 = arith.constant 0 : i32
    %c0_i32_1 = arith.constant 0 : i32
    %c0_i32_2 = arith.constant 0 : i32
    return %arg0, %c0_i32, %c0_i32_0, %c0_i32_1 : i32, i32, i32, i32
  }
}

module attributes {stable_mosaic.version = 11 : i64} {
  func.func @_cv4_pool_cv5_kernel(%arg0: i32, %arg1: memref<1x16x16x4xbf16, #tpu.memory_space<vmem>>, %arg2: memref<4x4xbf16, #tpu.memory_space<vmem>>, %arg3: memref<1x4xf32, #tpu.memory_space<vmem>>, %arg4: memref<1x4xf32, #tpu.memory_space<vmem>>, %arg5: memref<4x4x4xbf16, #tpu.memory_space<vmem>>, %arg6: memref<1x4xf32, #tpu.memory_space<vmem>>, %arg7: memref<1x4xf32, #tpu.memory_space<vmem>>, %arg8: memref<1x16x16x4xbf16, #tpu.memory_space<vmem>>) attributes {dimension_semantics = [#tpu.dimension_semantics<parallel>], iteration_bounds = array<i64: 2>, scalar_prefetch = 0 : i64, scratch_operands = 0 : i64, tpu.core_type = #tpu.core_type<tc>, window_params = [{transform_indices = @transform_0, window_bounds = array<i64: 1, 16, 16, 4>}, {pipeline_mode = #tpu.pipeline_mode<synchronous>, transform_indices = @transform_1, window_bounds = array<i64: 4, 4>}, {pipeline_mode = #tpu.pipeline_mode<synchronous>, transform_indices = @transform_2, window_bounds = array<i64: 1, 4>}, {pipeline_mode = #tpu.pipeline_mode<synchronous>, transform_indices = @transform_3, window_bounds = array<i64: 1, 4>}, {pipeline_mode = #tpu.pipeline_mode<synchronous>, transform_indices = @transform_4, window_bounds = array<i64: 4, 4, 4>}, {pipeline_mode = #tpu.pipeline_mode<synchronous>, transform_indices = @transform_5, window_bounds = array<i64: 1, 4>}, {pipeline_mode = #tpu.pipeline_mode<synchronous>, transform_indices = @transform_6, window_bounds = array<i64: 1, 4>}, {transform_indices = @transform_7, window_bounds = array<i64: 1, 16, 16, 4>}]} {
    %c0 = arith.constant 0 : index
    %c0_0 = arith.constant 0 : index
    %c0_1 = arith.constant 0 : index
    %c0_2 = arith.constant 0 : index
    %0 = vector.load %arg1[%c0, %c0_0, %c0_1, %c0_2] : memref<1x16x16x4xbf16, #tpu.memory_space<vmem>>, vector<1x16x16x4xbf16>
    %1 = vector.shape_cast %0 : vector<1x16x16x4xbf16> to vector<16x16x4xbf16>
    %2 = vector.shape_cast %1 : vector<16x16x4xbf16> to vector<256x4xbf16>
    %c0_3 = arith.constant 0 : index
    %c0_4 = arith.constant 0 : index
    %3 = vector.load %arg2[%c0_3, %c0_4] : memref<4x4xbf16, #tpu.memory_space<vmem>>, vector<4x4xbf16>
    %cst = arith.constant dense<0.000000e+00> : vector<256x4xf32>
    %4 = tpu.matmul %2, %3, %cst {dimension_numbers = #tpu.dot_dimension_numbers<[1], [0], [0], [1], [0, 0, 1, 1], [], []>} : vector<256x4xbf16>, vector<4x4xbf16>, vector<256x4xf32> -> vector<256x4xf32>
    %c0_5 = arith.constant 0 : index
    %c0_6 = arith.constant 0 : index
    %5 = vector.load %arg3[%c0_5, %c0_6] : memref<1x4xf32, #tpu.memory_space<vmem>>, vector<1x4xf32>
    %6 = vector.broadcast %5 : vector<1x4xf32> to vector<256x4xf32>
    %7 = arith.mulf %4, %6 : vector<256x4xf32>
    %c0_7 = arith.constant 0 : index
    %c0_8 = arith.constant 0 : index
    %8 = vector.load %arg4[%c0_7, %c0_8] : memref<1x4xf32, #tpu.memory_space<vmem>>, vector<1x4xf32>
    %9 = vector.broadcast %8 : vector<1x4xf32> to vector<256x4xf32>
    %10 = arith.addf %7, %9 : vector<256x4xf32>
    %cst_9 = arith.constant 0.000000e+00 : f32
    %11 = vector.broadcast %cst_9 : f32 to vector<256x4xf32>
    %12 = arith.subf %11, %10 : vector<256x4xf32>
    %13 = math.exp %12 : vector<256x4xf32>
    %cst_10 = arith.constant 1.000000e+00 : f32
    %14 = vector.broadcast %cst_10 : f32 to vector<256x4xf32>
    %15 = arith.addf %14, %13 : vector<256x4xf32>
    %cst_11 = arith.constant 1.000000e+00 : f32
    %16 = vector.broadcast %cst_11 : f32 to vector<256x4xf32>
    %17 = arith.divf %16, %15 : vector<256x4xf32>
    %18 = arith.mulf %10, %17 : vector<256x4xf32>
    %19 = vector.shape_cast %18 : vector<256x4xf32> to vector<16x16x4xf32>
    %cst_12 = arith.constant 0xFF800000 : f32
    %20 = vector.broadcast %cst_12 : f32 to vector<16x2x4xf32>
    %21 = tpu.concatenate %20, %19, %20 in 1 : vector<16x2x4xf32>, vector<16x16x4xf32>, vector<16x2x4xf32> -> vector<16x20x4xf32>
    %22 = vector.extract_strided_slice %21 {offsets = [0, 0, 0], sizes = [16, 16, 4], strides = [1, 1, 1]} : vector<16x20x4xf32> to vector<16x16x4xf32>
    %23 = vector.extract_strided_slice %21 {offsets = [0, 1, 0], sizes = [16, 16, 4], strides = [1, 1, 1]} : vector<16x20x4xf32> to vector<16x16x4xf32>
    %24 = arith.maximumf %22, %23 : vector<16x16x4xf32>
    %25 = vector.extract_strided_slice %21 {offsets = [0, 2, 0], sizes = [16, 16, 4], strides = [1, 1, 1]} : vector<16x20x4xf32> to vector<16x16x4xf32>
    %26 = arith.maximumf %24, %25 : vector<16x16x4xf32>
    %27 = vector.extract_strided_slice %21 {offsets = [0, 3, 0], sizes = [16, 16, 4], strides = [1, 1, 1]} : vector<16x20x4xf32> to vector<16x16x4xf32>
    %28 = arith.maximumf %26, %27 : vector<16x16x4xf32>
    %29 = vector.extract_strided_slice %21 {offsets = [0, 4, 0], sizes = [16, 16, 4], strides = [1, 1, 1]} : vector<16x20x4xf32> to vector<16x16x4xf32>
    %30 = arith.maximumf %28, %29 : vector<16x16x4xf32>
    %cst_13 = arith.constant 0xFF800000 : f32
    %31 = vector.broadcast %cst_13 : f32 to vector<2x16x4xf32>
    %32 = tpu.concatenate %31, %30, %31 in 0 : vector<2x16x4xf32>, vector<16x16x4xf32>, vector<2x16x4xf32> -> vector<20x16x4xf32>
    %33 = vector.extract_strided_slice %32 {offsets = [0, 0, 0], sizes = [16, 16, 4], strides = [1, 1, 1]} : vector<20x16x4xf32> to vector<16x16x4xf32>
    %34 = vector.extract_strided_slice %32 {offsets = [1, 0, 0], sizes = [16, 16, 4], strides = [1, 1, 1]} : vector<20x16x4xf32> to vector<16x16x4xf32>
    %35 = arith.maximumf %33, %34 : vector<16x16x4xf32>
    %36 = vector.extract_strided_slice %32 {offsets = [2, 0, 0], sizes = [16, 16, 4], strides = [1, 1, 1]} : vector<20x16x4xf32> to vector<16x16x4xf32>
    %37 = arith.maximumf %35, %36 : vector<16x16x4xf32>
    %38 = vector.extract_strided_slice %32 {offsets = [3, 0, 0], sizes = [16, 16, 4], strides = [1, 1, 1]} : vector<20x16x4xf32> to vector<16x16x4xf32>
    %39 = arith.maximumf %37, %38 : vector<16x16x4xf32>
    %40 = vector.extract_strided_slice %32 {offsets = [4, 0, 0], sizes = [16, 16, 4], strides = [1, 1, 1]} : vector<20x16x4xf32> to vector<16x16x4xf32>
    %41 = arith.maximumf %39, %40 : vector<16x16x4xf32>
    %cst_14 = arith.constant 0xFF800000 : f32
    %42 = vector.broadcast %cst_14 : f32 to vector<16x2x4xf32>
    %43 = tpu.concatenate %42, %41, %42 in 1 : vector<16x2x4xf32>, vector<16x16x4xf32>, vector<16x2x4xf32> -> vector<16x20x4xf32>
    %44 = vector.extract_strided_slice %43 {offsets = [0, 0, 0], sizes = [16, 16, 4], strides = [1, 1, 1]} : vector<16x20x4xf32> to vector<16x16x4xf32>
    %45 = vector.extract_strided_slice %43 {offsets = [0, 1, 0], sizes = [16, 16, 4], strides = [1, 1, 1]} : vector<16x20x4xf32> to vector<16x16x4xf32>
    %46 = arith.maximumf %44, %45 : vector<16x16x4xf32>
    %47 = vector.extract_strided_slice %43 {offsets = [0, 2, 0], sizes = [16, 16, 4], strides = [1, 1, 1]} : vector<16x20x4xf32> to vector<16x16x4xf32>
    %48 = arith.maximumf %46, %47 : vector<16x16x4xf32>
    %49 = vector.extract_strided_slice %43 {offsets = [0, 3, 0], sizes = [16, 16, 4], strides = [1, 1, 1]} : vector<16x20x4xf32> to vector<16x16x4xf32>
    %50 = arith.maximumf %48, %49 : vector<16x16x4xf32>
    %51 = vector.extract_strided_slice %43 {offsets = [0, 4, 0], sizes = [16, 16, 4], strides = [1, 1, 1]} : vector<16x20x4xf32> to vector<16x16x4xf32>
    %52 = arith.maximumf %50, %51 : vector<16x16x4xf32>
    %cst_15 = arith.constant 0xFF800000 : f32
    %53 = vector.broadcast %cst_15 : f32 to vector<2x16x4xf32>
    %54 = tpu.concatenate %53, %52, %53 in 0 : vector<2x16x4xf32>, vector<16x16x4xf32>, vector<2x16x4xf32> -> vector<20x16x4xf32>
    %55 = vector.extract_strided_slice %54 {offsets = [0, 0, 0], sizes = [16, 16, 4], strides = [1, 1, 1]} : vector<20x16x4xf32> to vector<16x16x4xf32>
    %56 = vector.extract_strided_slice %54 {offsets = [1, 0, 0], sizes = [16, 16, 4], strides = [1, 1, 1]} : vector<20x16x4xf32> to vector<16x16x4xf32>
    %57 = arith.maximumf %55, %56 : vector<16x16x4xf32>
    %58 = vector.extract_strided_slice %54 {offsets = [2, 0, 0], sizes = [16, 16, 4], strides = [1, 1, 1]} : vector<20x16x4xf32> to vector<16x16x4xf32>
    %59 = arith.maximumf %57, %58 : vector<16x16x4xf32>
    %60 = vector.extract_strided_slice %54 {offsets = [3, 0, 0], sizes = [16, 16, 4], strides = [1, 1, 1]} : vector<20x16x4xf32> to vector<16x16x4xf32>
    %61 = arith.maximumf %59, %60 : vector<16x16x4xf32>
    %62 = vector.extract_strided_slice %54 {offsets = [4, 0, 0], sizes = [16, 16, 4], strides = [1, 1, 1]} : vector<20x16x4xf32> to vector<16x16x4xf32>
    %63 = arith.maximumf %61, %62 : vector<16x16x4xf32>
    %cst_16 = arith.constant 0xFF800000 : f32
    %64 = vector.broadcast %cst_16 : f32 to vector<16x2x4xf32>
    %65 = tpu.concatenate %64, %63, %64 in 1 : vector<16x2x4xf32>, vector<16x16x4xf32>, vector<16x2x4xf32> -> vector<16x20x4xf32>
    %66 = vector.extract_strided_slice %65 {offsets = [0, 0, 0], sizes = [16, 16, 4], strides = [1, 1, 1]} : vector<16x20x4xf32> to vector<16x16x4xf32>
    %67 = vector.extract_strided_slice %65 {offsets = [0, 1, 0], sizes = [16, 16, 4], strides = [1, 1, 1]} : vector<16x20x4xf32> to vector<16x16x4xf32>
    %68 = arith.maximumf %66, %67 : vector<16x16x4xf32>
    %69 = vector.extract_strided_slice %65 {offsets = [0, 2, 0], sizes = [16, 16, 4], strides = [1, 1, 1]} : vector<16x20x4xf32> to vector<16x16x4xf32>
    %70 = arith.maximumf %68, %69 : vector<16x16x4xf32>
    %71 = vector.extract_strided_slice %65 {offsets = [0, 3, 0], sizes = [16, 16, 4], strides = [1, 1, 1]} : vector<16x20x4xf32> to vector<16x16x4xf32>
    %72 = arith.maximumf %70, %71 : vector<16x16x4xf32>
    %73 = vector.extract_strided_slice %65 {offsets = [0, 4, 0], sizes = [16, 16, 4], strides = [1, 1, 1]} : vector<16x20x4xf32> to vector<16x16x4xf32>
    %74 = arith.maximumf %72, %73 : vector<16x16x4xf32>
    %cst_17 = arith.constant 0xFF800000 : f32
    %75 = vector.broadcast %cst_17 : f32 to vector<2x16x4xf32>
    %76 = tpu.concatenate %75, %74, %75 in 0 : vector<2x16x4xf32>, vector<16x16x4xf32>, vector<2x16x4xf32> -> vector<20x16x4xf32>
    %77 = vector.extract_strided_slice %76 {offsets = [0, 0, 0], sizes = [16, 16, 4], strides = [1, 1, 1]} : vector<20x16x4xf32> to vector<16x16x4xf32>
    %78 = vector.extract_strided_slice %76 {offsets = [1, 0, 0], sizes = [16, 16, 4], strides = [1, 1, 1]} : vector<20x16x4xf32> to vector<16x16x4xf32>
    %79 = arith.maximumf %77, %78 : vector<16x16x4xf32>
    %80 = vector.extract_strided_slice %76 {offsets = [2, 0, 0], sizes = [16, 16, 4], strides = [1, 1, 1]} : vector<20x16x4xf32> to vector<16x16x4xf32>
    %81 = arith.maximumf %79, %80 : vector<16x16x4xf32>
    %82 = vector.extract_strided_slice %76 {offsets = [3, 0, 0], sizes = [16, 16, 4], strides = [1, 1, 1]} : vector<20x16x4xf32> to vector<16x16x4xf32>
    %83 = arith.maximumf %81, %82 : vector<16x16x4xf32>
    %84 = vector.extract_strided_slice %76 {offsets = [4, 0, 0], sizes = [16, 16, 4], strides = [1, 1, 1]} : vector<20x16x4xf32> to vector<16x16x4xf32>
    %85 = arith.maximumf %83, %84 : vector<16x16x4xf32>
    %86 = arith.truncf %18 : vector<256x4xf32> to vector<256x4xbf16>
    %c0_18 = arith.constant 0 : index
    %c0_19 = arith.constant 0 : index
    %c0_20 = arith.constant 0 : index
    %87 = vector.load %arg5[%c0_18, %c0_19, %c0_20] : memref<4x4x4xbf16, #tpu.memory_space<vmem>>, vector<1x4x4xbf16>
    %88 = vector.shape_cast %87 : vector<1x4x4xbf16> to vector<4x4xbf16>
    %cst_21 = arith.constant dense<0.000000e+00> : vector<256x4xf32>
    %89 = tpu.matmul %86, %88, %cst_21 {dimension_numbers = #tpu.dot_dimension_numbers<[1], [0], [0], [1], [0, 0, 1, 1], [], []>} : vector<256x4xbf16>, vector<4x4xbf16>, vector<256x4xf32> -> vector<256x4xf32>
    %90 = vector.shape_cast %41 : vector<16x16x4xf32> to vector<256x4xf32>
    %91 = arith.truncf %90 : vector<256x4xf32> to vector<256x4xbf16>
    %c1 = arith.constant 1 : index
    %c0_22 = arith.constant 0 : index
    %c0_23 = arith.constant 0 : index
    %92 = vector.load %arg5[%c1, %c0_22, %c0_23] : memref<4x4x4xbf16, #tpu.memory_space<vmem>>, vector<1x4x4xbf16>
    %93 = vector.shape_cast %92 : vector<1x4x4xbf16> to vector<4x4xbf16>
    %cst_24 = arith.constant dense<0.000000e+00> : vector<256x4xf32>
    %94 = tpu.matmul %91, %93, %cst_24 {dimension_numbers = #tpu.dot_dimension_numbers<[1], [0], [0], [1], [0, 0, 1, 1], [], []>} : vector<256x4xbf16>, vector<4x4xbf16>, vector<256x4xf32> -> vector<256x4xf32>
    %95 = arith.addf %89, %94 : vector<256x4xf32>
    %96 = vector.shape_cast %63 : vector<16x16x4xf32> to vector<256x4xf32>
    %97 = arith.truncf %96 : vector<256x4xf32> to vector<256x4xbf16>
    %c2 = arith.constant 2 : index
    %c0_25 = arith.constant 0 : index
    %c0_26 = arith.constant 0 : index
    %98 = vector.load %arg5[%c2, %c0_25, %c0_26] : memref<4x4x4xbf16, #tpu.memory_space<vmem>>, vector<1x4x4xbf16>
    %99 = vector.shape_cast %98 : vector<1x4x4xbf16> to vector<4x4xbf16>
    %cst_27 = arith.constant dense<0.000000e+00> : vector<256x4xf32>
    %100 = tpu.matmul %97, %99, %cst_27 {dimension_numbers = #tpu.dot_dimension_numbers<[1], [0], [0], [1], [0, 0, 1, 1], [], []>} : vector<256x4xbf16>, vector<4x4xbf16>, vector<256x4xf32> -> vector<256x4xf32>
    %101 = arith.addf %95, %100 : vector<256x4xf32>
    %102 = vector.shape_cast %85 : vector<16x16x4xf32> to vector<256x4xf32>
    %103 = arith.truncf %102 : vector<256x4xf32> to vector<256x4xbf16>
    %c3 = arith.constant 3 : index
    %c0_28 = arith.constant 0 : index
    %c0_29 = arith.constant 0 : index
    %104 = vector.load %arg5[%c3, %c0_28, %c0_29] : memref<4x4x4xbf16, #tpu.memory_space<vmem>>, vector<1x4x4xbf16>
    %105 = vector.shape_cast %104 : vector<1x4x4xbf16> to vector<4x4xbf16>
    %cst_30 = arith.constant dense<0.000000e+00> : vector<256x4xf32>
    %106 = tpu.matmul %103, %105, %cst_30 {dimension_numbers = #tpu.dot_dimension_numbers<[1], [0], [0], [1], [0, 0, 1, 1], [], []>} : vector<256x4xbf16>, vector<4x4xbf16>, vector<256x4xf32> -> vector<256x4xf32>
    %107 = arith.addf %101, %106 : vector<256x4xf32>
    %c0_31 = arith.constant 0 : index
    %c0_32 = arith.constant 0 : index
    %108 = vector.load %arg6[%c0_31, %c0_32] : memref<1x4xf32, #tpu.memory_space<vmem>>, vector<1x4xf32>
    %109 = vector.broadcast %108 : vector<1x4xf32> to vector<256x4xf32>
    %110 = arith.mulf %107, %109 : vector<256x4xf32>
    %c0_33 = arith.constant 0 : index
    %c0_34 = arith.constant 0 : index
    %111 = vector.load %arg7[%c0_33, %c0_34] : memref<1x4xf32, #tpu.memory_space<vmem>>, vector<1x4xf32>
    %112 = vector.broadcast %111 : vector<1x4xf32> to vector<256x4xf32>
    %113 = arith.addf %110, %112 : vector<256x4xf32>
    %cst_35 = arith.constant 0.000000e+00 : f32
    %114 = vector.broadcast %cst_35 : f32 to vector<256x4xf32>
    %115 = arith.subf %114, %113 : vector<256x4xf32>
    %116 = math.exp %115 : vector<256x4xf32>
    %cst_36 = arith.constant 1.000000e+00 : f32
    %117 = vector.broadcast %cst_36 : f32 to vector<256x4xf32>
    %118 = arith.addf %117, %116 : vector<256x4xf32>
    %cst_37 = arith.constant 1.000000e+00 : f32
    %119 = vector.broadcast %cst_37 : f32 to vector<256x4xf32>
    %120 = arith.divf %119, %118 : vector<256x4xf32>
    %121 = arith.mulf %113, %120 : vector<256x4xf32>
    %122 = vector.shape_cast %121 : vector<256x4xf32> to vector<1x16x16x4xf32>
    %123 = arith.truncf %122 : vector<1x16x16x4xf32> to vector<1x16x16x4xbf16>
    %c0_38 = arith.constant 0 : index
    %c0_39 = arith.constant 0 : index
    %c0_40 = arith.constant 0 : index
    %c0_41 = arith.constant 0 : index
    %124 = vector.load %arg8[%c0_38, %c0_39, %c0_40, %c0_41] : memref<1x16x16x4xbf16, #tpu.memory_space<vmem>>, vector<1x16x16x4xbf16>
    tpu.vector_store %arg8[%c0_38, %c0_39, %c0_40, %c0_41], %123 {strides = array<i32>} : memref<1x16x16x4xbf16, #tpu.memory_space<vmem>>, vector<1x16x16x4xbf16>,
    return
  }
  func.func @transform_0(%arg0: i32) -> (i32, i32, i32, i32) {
    %c0_i32 = arith.constant 0 : i32
    %c0_i32_0 = arith.constant 0 : i32
    %c0_i32_1 = arith.constant 0 : i32
    %c0_i32_2 = arith.constant 0 : i32
    return %arg0, %c0_i32, %c0_i32_0, %c0_i32_1 : i32, i32, i32, i32
  }
  func.func @transform_1(%arg0: i32) -> (i32, i32) {
    %c0_i32 = arith.constant 0 : i32
    %c0_i32_0 = arith.constant 0 : i32
    %c0_i32_1 = arith.constant 0 : i32
    return %c0_i32, %c0_i32_0 : i32, i32
  }
  func.func @transform_2(%arg0: i32) -> (i32, i32) {
    %c0_i32 = arith.constant 0 : i32
    %c0_i32_0 = arith.constant 0 : i32
    %c0_i32_1 = arith.constant 0 : i32
    return %c0_i32, %c0_i32_0 : i32, i32
  }
  func.func @transform_3(%arg0: i32) -> (i32, i32) {
    %c0_i32 = arith.constant 0 : i32
    %c0_i32_0 = arith.constant 0 : i32
    %c0_i32_1 = arith.constant 0 : i32
    return %c0_i32, %c0_i32_0 : i32, i32
  }
  func.func @transform_4(%arg0: i32) -> (i32, i32, i32) {
    %c0_i32 = arith.constant 0 : i32
    %c0_i32_0 = arith.constant 0 : i32
    %c0_i32_1 = arith.constant 0 : i32
    %c0_i32_2 = arith.constant 0 : i32
    return %c0_i32, %c0_i32_0, %c0_i32_1 : i32, i32, i32
  }
  func.func @transform_5(%arg0: i32) -> (i32, i32) {
    %c0_i32 = arith.constant 0 : i32
    %c0_i32_0 = arith.constant 0 : i32
    %c0_i32_1 = arith.constant 0 : i32
    return %c0_i32, %c0_i32_0 : i32, i32
  }
  func.func @transform_6(%arg0: i32) -> (i32, i32) {
    %c0_i32 = arith.constant 0 : i32
    %c0_i32_0 = arith.constant 0 : i32
    %c0_i32_1 = arith.constant 0 : i32
    return %c0_i32, %c0_i32_0 : i32, i32
  }
  func.func @transform_7(%arg0: i32) -> (i32, i32, i32, i32) {
    %c0_i32 = arith.constant 0 : i32
    %c0_i32_0 = arith.constant 0 : i32
    %c0_i32_1 = arith.constant 0 : i32
    %c0_i32_2 = arith.constant 0 : i32
    return %arg0, %c0_i32, %c0_i32_0, %c0_i32_1 : i32, i32, i32, i32
  }
}

module attributes {stable_mosaic.version = 11 : i64} {
  func.func @kernel(%arg0: i32, %arg1: memref<512x4xbf16, #tpu.memory_space<vmem>>, %arg2: memref<512x4xbf16, #tpu.memory_space<vmem>>, %arg3: memref<4x8xbf16, #tpu.memory_space<vmem>>, %arg4: memref<4x8xbf16, #tpu.memory_space<vmem>>, %arg5: memref<1x8xf32, #tpu.memory_space<vmem>>, %arg6: memref<1x8xf32, #tpu.memory_space<vmem>>, %arg7: memref<512x8xf32, #tpu.memory_space<vmem>>) attributes {dimension_semantics = [#tpu.dimension_semantics<parallel>], iteration_bounds = array<i64: 1>, scalar_prefetch = 0 : i64, scratch_operands = 0 : i64, tpu.core_type = #tpu.core_type<tc>, window_params = [{transform_indices = @transform_0, window_bounds = array<i64: 512, 4>}, {transform_indices = @transform_1, window_bounds = array<i64: 512, 4>}, {pipeline_mode = #tpu.pipeline_mode<synchronous>, transform_indices = @transform_2, window_bounds = array<i64: 4, 8>}, {pipeline_mode = #tpu.pipeline_mode<synchronous>, transform_indices = @transform_3, window_bounds = array<i64: 4, 8>}, {pipeline_mode = #tpu.pipeline_mode<synchronous>, transform_indices = @transform_4, window_bounds = array<i64: 1, 8>}, {pipeline_mode = #tpu.pipeline_mode<synchronous>, transform_indices = @transform_5, window_bounds = array<i64: 1, 8>}, {transform_indices = @transform_6, window_bounds = array<i64: 512, 8>}]} {
    %c0 = arith.constant 0 : index
    %c0_0 = arith.constant 0 : index
    %0 = vector.load %arg1[%c0, %c0_0] : memref<512x4xbf16, #tpu.memory_space<vmem>>, vector<512x4xbf16>
    %c0_1 = arith.constant 0 : index
    %c0_2 = arith.constant 0 : index
    %1 = vector.load %arg3[%c0_1, %c0_2] : memref<4x8xbf16, #tpu.memory_space<vmem>>, vector<4x8xbf16>
    %cst = arith.constant dense<0.000000e+00> : vector<512x8xf32>
    %2 = tpu.matmul %0, %1, %cst {dimension_numbers = #tpu.dot_dimension_numbers<[1], [0], [0], [1], [0, 0, 1, 1], [], []>} : vector<512x4xbf16>, vector<4x8xbf16>, vector<512x8xf32> -> vector<512x8xf32>
    %c0_3 = arith.constant 0 : index
    %c0_4 = arith.constant 0 : index
    %3 = vector.load %arg2[%c0_3, %c0_4] : memref<512x4xbf16, #tpu.memory_space<vmem>>, vector<512x4xbf16>
    %c0_5 = arith.constant 0 : index
    %c0_6 = arith.constant 0 : index
    %4 = vector.load %arg4[%c0_5, %c0_6] : memref<4x8xbf16, #tpu.memory_space<vmem>>, vector<4x8xbf16>
    %cst_7 = arith.constant dense<0.000000e+00> : vector<512x8xf32>
    %5 = tpu.matmul %3, %4, %cst_7 {dimension_numbers = #tpu.dot_dimension_numbers<[1], [0], [0], [1], [0, 0, 1, 1], [], []>} : vector<512x4xbf16>, vector<4x8xbf16>, vector<512x8xf32> -> vector<512x8xf32>
    %6 = arith.addf %2, %5 : vector<512x8xf32>
    %c0_8 = arith.constant 0 : index
    %c0_9 = arith.constant 0 : index
    %7 = vector.load %arg5[%c0_8, %c0_9] : memref<1x8xf32, #tpu.memory_space<vmem>>, vector<1x8xf32>
    %8 = vector.broadcast %7 : vector<1x8xf32> to vector<512x8xf32>
    %9 = arith.mulf %6, %8 : vector<512x8xf32>
    %c0_10 = arith.constant 0 : index
    %c0_11 = arith.constant 0 : index
    %10 = vector.load %arg6[%c0_10, %c0_11] : memref<1x8xf32, #tpu.memory_space<vmem>>, vector<1x8xf32>
    %11 = vector.broadcast %10 : vector<1x8xf32> to vector<512x8xf32>
    %12 = arith.addf %9, %11 : vector<512x8xf32>
    %cst_12 = arith.constant 0.000000e+00 : f32
    %13 = vector.broadcast %cst_12 : f32 to vector<512x8xf32>
    %14 = arith.subf %13, %12 : vector<512x8xf32>
    %15 = math.exp %14 : vector<512x8xf32>
    %cst_13 = arith.constant 1.000000e+00 : f32
    %16 = vector.broadcast %cst_13 : f32 to vector<512x8xf32>
    %17 = arith.addf %16, %15 : vector<512x8xf32>
    %cst_14 = arith.constant 1.000000e+00 : f32
    %18 = vector.broadcast %cst_14 : f32 to vector<512x8xf32>
    %19 = arith.divf %18, %17 : vector<512x8xf32>
    %20 = arith.mulf %12, %19 : vector<512x8xf32>
    %c0_15 = arith.constant 0 : index
    %c0_16 = arith.constant 0 : index
    %21 = vector.load %arg7[%c0_15, %c0_16] : memref<512x8xf32, #tpu.memory_space<vmem>>, vector<512x8xf32>
    tpu.vector_store %arg7[%c0_15, %c0_16], %20 {strides = array<i32>} : memref<512x8xf32, #tpu.memory_space<vmem>>, vector<512x8xf32>,
    return
  }
  func.func @transform_0(%arg0: i32) -> (i32, i32) {
    %c0_i32 = arith.constant 0 : i32
    %c0_i32_0 = arith.constant 0 : i32
    return %arg0, %c0_i32 : i32, i32
  }
  func.func @transform_1(%arg0: i32) -> (i32, i32) {
    %c0_i32 = arith.constant 0 : i32
    %c0_i32_0 = arith.constant 0 : i32
    return %arg0, %c0_i32 : i32, i32
  }
  func.func @transform_2(%arg0: i32) -> (i32, i32) {
    %c0_i32 = arith.constant 0 : i32
    %c0_i32_0 = arith.constant 0 : i32
    %c0_i32_1 = arith.constant 0 : i32
    return %c0_i32, %c0_i32_0 : i32, i32
  }
  func.func @transform_3(%arg0: i32) -> (i32, i32) {
    %c0_i32 = arith.constant 0 : i32
    %c0_i32_0 = arith.constant 0 : i32
    %c0_i32_1 = arith.constant 0 : i32
    return %c0_i32, %c0_i32_0 : i32, i32
  }
  func.func @transform_4(%arg0: i32) -> (i32, i32) {
    %c0_i32 = arith.constant 0 : i32
    %c0_i32_0 = arith.constant 0 : i32
    %c0_i32_1 = arith.constant 0 : i32
    return %c0_i32, %c0_i32_0 : i32, i32
  }
  func.func @transform_5(%arg0: i32) -> (i32, i32) {
    %c0_i32 = arith.constant 0 : i32
    %c0_i32_0 = arith.constant 0 : i32
    %c0_i32_1 = arith.constant 0 : i32
    return %c0_i32, %c0_i32_0 : i32, i32
  }
  func.func @transform_6(%arg0: i32) -> (i32, i32) {
    %c0_i32 = arith.constant 0 : i32
    %c0_i32_0 = arith.constant 0 : i32
    return %arg0, %c0_i32 : i32, i32
  }
}

</mosaic_0001>

<llo_original>
// kernel: cspsppf_forward.5
$region0: #{cspsppf_forward.5}
  #allocation0 [shape = 'u32[]', space=smem, size = 0x4, offset = 0x4, fixed_abs, tag = 'smem constant byte address 0x4 - core index']
  #allocation1 [shape = 'u32[144,128]{1,0:T(1,128)}', space=vmem, size = 0x12000, scoped, tag = 'internal scratch']
  %s0 = inlined_call_operand.hbm [shape: bf16[512,4], index: 0, kind: input, shape index: {}]
  %s1 = inlined_call_operand.hbm [shape: bf16[4,8], index: 1, kind: input, shape index: {}]
  %s2 = inlined_call_operand.hbm [shape: f32[1,8], index: 2, kind: input, shape index: {}]
  %s3 = inlined_call_operand.hbm [shape: f32[1,8], index: 3, kind: input, shape index: {}]
  %s4 = inlined_call_operand.hbm [shape: bf16[512,4], index: 4, kind: output, shape index: {0}]
  %s5 = inlined_call_operand.hbm [shape: bf16[512,4], index: 5, kind: output, shape index: {1}]
  %6 = xla_tuple %s4, %s5
  %s7 = sld [smem:[#allocation0]]
  $region50: #{cspsppf_forward.5} parent=0
    _
  %s9 = ssub.s32 1, %s7
  %s10 = scalar_select 0, %s9, %s7
  $region1: #{cspsppf_forward.5} parent=0
    #allocation2 [shape = 'u8[131072]{0}', space=vmem, size = 0x20000, scoped, tag = 'input window, operand 0, single buffered']
    #allocation3 [shape = 's32[1]{0}', space=sflag, size = 0x4, scoped, tag = 'scoped memory for cspsppf_forward.5']
    #allocation4 [shape = 's32[1]{0}', space=sflag, size = 0x4, scoped, tag = 'scoped memory for cspsppf_forward.5']
    #allocation5 [shape = 'u8[1024]{0}', space=vmem, size = 0x400, scoped, tag = 'input window, operand 1, single buffered']
    #allocation6 [shape = 's32[1]{0}', space=sflag, size = 0x4, scoped, tag = 'scoped memory for cspsppf_forward.5']
    #allocation7 [shape = 'u8[512]{0}', space=vmem, size = 0x400, scoped, tag = 'input window, operand 2, single buffered']
    #allocation8 [shape = 'u8[512]{0}', space=vmem, size = 0x400, scoped, tag = 'input window, operand 3, single buffered']
    #allocation9 [shape = 's32[1]{0}', space=sflag, size = 0x4, scoped, tag = 'scoped memory for cspsppf_forward.5']
    #allocation10 [shape = 'u8[131072]{0}', space=vmem, size = 0x20000, scoped, tag = 'output window, operand 0, single buffered']
    #allocation11 [shape = 'u8[131072]{0}', space=vmem, size = 0x20000, scoped, tag = 'output window, operand 1, single buffered']
    #allocation12 [shape = 's32[1]{0}', space=sflag, size = 0x4, scoped, tag = 'scoped memory for cspsppf_forward.5']
    %11 = vsyncpa [#allocation3], 0
    %12 = vsyncpa [#allocation6], 0
    %13 = vsyncpa [#allocation9], 0
    %14 = vsyncpa [#allocation4], 0
    %15 = vsyncpa [#allocation12], 0
    // Predicated region
    $region2: #{cspsppf_forward.5} parent=1 // pred_check
      _
    $region3: #{cspsppf_forward.5} parent=1 // pred_check_branch
      %17 = sbr.rel (0) target = $region5
    $region4: #{cspsppf_forward.5} parent=1 // pred_region
      %s19 = ssub.s32 4096, 4096
      %20 = vsyncadd [#allocation3], %s19
      %s21 = sshll.u32 [#allocation2], 4
      %s22 = int_to_ptr.vmem [resolvable:$true] %s21
      %27 = dma.hbm_to_vmem [thread:$0]  %s0, 4096, %s22, [#allocation3], 64, 64, 4
    $region5: #{cspsppf_forward.5} parent=1 // pred_fallthru
      _
    // Predicated region
    $region6: #{cspsppf_forward.5} parent=1 // pred_check
      _
    $region7: #{cspsppf_forward.5} parent=1 // pred_check_branch
      %29 = sbr.rel (0) target = $region9
    $region8: #{cspsppf_forward.5} parent=1 // pred_region
      %s31 = ssub.s32 32, 32
      %32 = vsyncadd [#allocation6], %s31
      %s34 = sshll.u32 [#allocation5], 4
      %s35 = int_to_ptr.vmem [resolvable:$true] %s34
      %37 = dma.hbm_to_vmem [thread:$0]  %s1, 32, %s35, [#allocation6]
    $region9: #{cspsppf_forward.5} parent=1 // pred_fallthru
      _
    // Predicated region
    $region10: #{cspsppf_forward.5} parent=1 // pred_check
      _
    $region11: #{cspsppf_forward.5} parent=1 // pred_check_branch
      %39 = sbr.rel (0) target = $region13
    $region12: #{cspsppf_forward.5} parent=1 // pred_region
      %s41 = ssub.s32 16, 16
      %42 = vsyncadd [#allocation6], %s41
      %s44 = sshll.u32 [#allocation7], 4
      %s45 = int_to_ptr.vmem [resolvable:$true] %s44
      %47 = dma.hbm_to_vmem [thread:$0]  %s2, 16, %s45, [#allocation6]
    $region13: #{cspsppf_forward.5} parent=1 // pred_fallthru
      _
    // Predicated region
    $region14: #{cspsppf_forward.5} parent=1 // pred_check
      _
    $region15: #{cspsppf_forward.5} parent=1 // pred_check_branch
      %49 = sbr.rel (0) target = $region17
    $region16: #{cspsppf_forward.5} parent=1 // pred_region
      %s51 = ssub.s32 16, 16
      %52 = vsyncadd [#allocation9], %s51
      %s54 = sshll.u32 [#allocation8], 4
      %s55 = int_to_ptr.vmem [resolvable:$true] %s54
      %57 = dma.hbm_to_vmem [thread:$0]  %s3, 16, %s55, [#allocation9]
    $region17: #{cspsppf_forward.5} parent=1 // pred_fallthru
      _
    // Predicated region
    $region18: #{cspsppf_forward.5} parent=1 // pred_check
      _
    $region19: #{cspsppf_forward.5} parent=1 // pred_check_branch
      %59 = sbr.rel (0) target = $region21
    $region20: #{cspsppf_forward.5} parent=1 // pred_region
      %60 = dma.done [#allocation3], 4096
    $region21: #{cspsppf_forward.5} parent=1 // pred_fallthru
      _
    // Predicated region
    $region22: #{cspsppf_forward.5} parent=1 // pred_check
      _
    $region23: #{cspsppf_forward.5} parent=1 // pred_check_branch
      %62 = sbr.rel (0) target = $region25
    $region24: #{cspsppf_forward.5} parent=1 // pred_region
      %63 = dma.done [#allocation6], 32
    $region25: #{cspsppf_forward.5} parent=1 // pred_fallthru
      _
    // Predicated region
    $region26: #{cspsppf_forward.5} parent=1 // pred_check
      _
    $region27: #{cspsppf_forward.5} parent=1 // pred_check_branch
      %65 = sbr.rel (0) target = $region29
    $region28: #{cspsppf_forward.5} parent=1 // pred_region
      %66 = dma.done [#allocation6], 16
    $region29: #{cspsppf_forward.5} parent=1 // pred_fallthru
      _
    // Predicated region
    $region30: #{cspsppf_forward.5} parent=1 // pred_check
      _
    $region31: #{cspsppf_forward.5} parent=1 // pred_check_branch
      %68 = sbr.rel (0) target = $region33
    $region32: #{cspsppf_forward.5} parent=1 // pred_region
      %69 = dma.done [#allocation9], 16
    $region33: #{cspsppf_forward.5} parent=1 // pred_fallthru
      _
    %v71 = vld [vmem:[#allocation2] sm:$0xf]
    %v72 = vld [vmem:[#allocation2 + $0x4] sm:$0xf]
    %v73 = vld [vmem:[#allocation2 + $0x8] sm:$0xf]
    %v74 = vld [vmem:[#allocation2 + $0xc] sm:$0xf]
    %v75 = vld [vmem:[#allocation2 + $0x10] sm:$0xf]
    %v76 = vld [vmem:[#allocation2 + $0x14] sm:$0xf]
    %v77 = vld [vmem:[#allocation2 + $0x18] sm:$0xf]
    %v78 = vld [vmem:[#allocation2 + $0x1c] sm:$0xf]
    %v79 = vld [vmem:[#allocation2 + $0x20] sm:$0xf]
    %v80 = vld [vmem:[#allocation2 + $0x24] sm:$0xf]
    %v81 = vld [vmem:[#allocation2 + $0x28] sm:$0xf]
    %v82 = vld [vmem:[#allocation2 + $0x2c] sm:$0xf]
    %v83 = vld [vmem:[#allocation2 + $0x30] sm:$0xf]
    %v84 = vld [vmem:[#allocation2 + $0x34] sm:$0xf]
    %v85 = vld [vmem:[#allocation2 + $0x38] sm:$0xf]
    %v86 = vld [vmem:[#allocation2 + $0x3c] sm:$0xf]
    %v87 = vld [vmem:[#allocation2 + $0x40] sm:$0xf]
    %v88 = vld [vmem:[#allocation2 + $0x44] sm:$0xf]
    %v89 = vld [vmem:[#allocation2 + $0x48] sm:$0xf]
    %v90 = vld [vmem:[#allocation2 + $0x4c] sm:$0xf]
    %v91 = vld [vmem:[#allocation2 + $0x50] sm:$0xf]
    %v92 = vld [vmem:[#allocation2 + $0x54] sm:$0xf]
    %v93 = vld [vmem:[#allocation2 + $0x58] sm:$0xf]
    %v94 = vld [vmem:[#allocation2 + $0x5c] sm:$0xf]
    %v95 = vld [vmem:[#allocation2 + $0x60] sm:$0xf]
    %v96 = vld [vmem:[#allocation2 + $0x64] sm:$0xf]
    %v97 = vld [vmem:[#allocation2 + $0x68] sm:$0xf]
    %v98 = vld [vmem:[#allocation2 + $0x6c] sm:$0xf]
    %v99 = vld [vmem:[#allocation2 + $0x70] sm:$0xf]
    %v100 = vld [vmem:[#allocation2 + $0x74] sm:$0xf]
    %v101 = vld [vmem:[#allocation2 + $0x78] sm:$0xf]
    %v102 = vld [vmem:[#allocation2 + $0x7c] sm:$0xf]
    %v103 = vld [vmem:[#allocation2 + $0x80] sm:$0xf]
    %v104 = vld [vmem:[#allocation2 + $0x84] sm:$0xf]
    %v105 = vld [vmem:[#allocation2 + $0x88] sm:$0xf]
    %v106 = vld [vmem:[#allocation2 + $0x8c] sm:$0xf]
    %v107 = vld [vmem:[#allocation2 + $0x90] sm:$0xf]
    %v108 = vld [vmem:[#allocation2 + $0x94] sm:$0xf]
    %v109 = vld [vmem:[#allocation2 + $0x98] sm:$0xf]
    %v110 = vld [vmem:[#allocation2 + $0x9c] sm:$0xf]
    %v111 = vld [vmem:[#allocation2 + $0xa0] sm:$0xf]
    %v112 = vld [vmem:[#allocation2 + $0xa4] sm:$0xf]
    %v113 = vld [vmem:[#allocation2 + $0xa8] sm:$0xf]
    %v114 = vld [vmem:[#allocation2 + $0xac] sm:$0xf]
    %v115 = vld [vmem:[#allocation2 + $0xb0] sm:$0xf]
    %v116 = vld [vmem:[#allocation2 + $0xb4] sm:$0xf]
    %v117 = vld [vmem:[#allocation2 + $0xb8] sm:$0xf]
    %v118 = vld [vmem:[#allocation2 + $0xbc] sm:$0xf]
    %v119 = vld [vmem:[#allocation2 + $0xc0] sm:$0xf]
    %v120 = vld [vmem:[#allocation2 + $0xc4] sm:$0xf]
    %v121 = vld [vmem:[#allocation2 + $0xc8] sm:$0xf]
    %v122 = vld [vmem:[#allocation2 + $0xcc] sm:$0xf]
    %v123 = vld [vmem:[#allocation2 + $0xd0] sm:$0xf]
    %v124 = vld [vmem:[#allocation2 + $0xd4] sm:$0xf]
    %v125 = vld [vmem:[#allocation2 + $0xd8] sm:$0xf]
    %v126 = vld [vmem:[#allocation2 + $0xdc] sm:$0xf]
    %v127 = vld [vmem:[#allocation2 + $0xe0] sm:$0xf]
    %v128 = vld [vmem:[#allocation2 + $0xe4] sm:$0xf]
    %v129 = vld [vmem:[#allocation2 + $0xe8] sm:$0xf]
    %v130 = vld [vmem:[#allocation2 + $0xec] sm:$0xf]
    %v131 = vld [vmem:[#allocation2 + $0xf0] sm:$0xf]
    %v132 = vld [vmem:[#allocation2 + $0xf4] sm:$0xf]
    %v133 = vld [vmem:[#allocation2 + $0xf8] sm:$0xf]
    %v134 = vld [vmem:[#allocation2 + $0xfc] sm:$0xf]
    %v135 = vld [vmem:[#allocation5] sm:$0x3]
    %v200 = vunpack.c.l.b16 %v71
    %v201 = vunpack.c.l.b16 %v72
    %v202 = vunpack.c.l.b16 %v73
    %v203 = vunpack.c.l.b16 %v74
    %v204 = vunpack.c.l.b16 %v75
    %v205 = vunpack.c.l.b16 %v76
    %v206 = vunpack.c.l.b16 %v77
    %v207 = vunpack.c.l.b16 %v78
    %v208 = vunpack.c.l.b16 %v79
    %v209 = vunpack.c.l.b16 %v80
    %v210 = vunpack.c.l.b16 %v81
    %v211 = vunpack.c.l.b16 %v82
    %v212 = vunpack.c.l.b16 %v83
    %v213 = vunpack.c.l.b16 %v84
    %v214 = vunpack.c.l.b16 %v85
    %v215 = vunpack.c.l.b16 %v86
    %v216 = vunpack.c.l.b16 %v87
    %v217 = vunpack.c.l.b16 %v88
    %v218 = vunpack.c.l.b16 %v89
    %v219 = vunpack.c.l.b16 %v90
    %v220 = vunpack.c.l.b16 %v91
    %v221 = vunpack.c.l.b16 %v92
    %v222 = vunpack.c.l.b16 %v93
    %v223 = vunpack.c.l.b16 %v94
    %v224 = vunpack.c.l.b16 %v95
    %v225 = vunpack.c.l.b16 %v96
    %v226 = vunpack.c.l.b16 %v97
    %v227 = vunpack.c.l.b16 %v98
    %v228 = vunpack.c.l.b16 %v99
    %v229 = vunpack.c.l.b16 %v100
    %v230 = vunpack.c.l.b16 %v101
    %v231 = vunpack.c.l.b16 %v102
    %v232 = vunpack.c.l.b16 %v103
    %v233 = vunpack.c.l.b16 %v104
    %v234 = vunpack.c.l.b16 %v105
    %v235 = vunpack.c.l.b16 %v106
    %v236 = vunpack.c.l.b16 %v107
    %v237 = vunpack.c.l.b16 %v108
    %v238 = vunpack.c.l.b16 %v109
    %v239 = vunpack.c.l.b16 %v110
    %v240 = vunpack.c.l.b16 %v111
    %v241 = vunpack.c.l.b16 %v112
    %v242 = vunpack.c.l.b16 %v113
    %v243 = vunpack.c.l.b16 %v114
    %v244 = vunpack.c.l.b16 %v115
    %v245 = vunpack.c.l.b16 %v116
    %v246 = vunpack.c.l.b16 %v117
    %v247 = vunpack.c.l.b16 %v118
    %v248 = vunpack.c.l.b16 %v119
    %v249 = vunpack.c.l.b16 %v120
    %v250 = vunpack.c.l.b16 %v121
    %v251 = vunpack.c.l.b16 %v122
    %v252 = vunpack.c.l.b16 %v123
    %v253 = vunpack.c.l.b16 %v124
    %v254 = vunpack.c.l.b16 %v125
    %v255 = vunpack.c.l.b16 %v126
    %v256 = vunpack.c.l.b16 %v127
    %v257 = vunpack.c.l.b16 %v128
    %v258 = vunpack.c.l.b16 %v129
    %v259 = vunpack.c.l.b16 %v130
    %v260 = vunpack.c.l.b16 %v131
    %v261 = vunpack.c.l.b16 %v132
    %v262 = vunpack.c.l.b16 %v133
    %v263 = vunpack.c.l.b16 %v134
    %v264 = vpack.c.b16 %v201, %v200
    %v265 = vpack.c.b16 %v203, %v202
    %v266 = vpack.c.b16 %v205, %v204
    %v267 = vpack.c.b16 %v207, %v206
    %v268 = vpack.c.b16 %v209, %v208
    %v269 = vpack.c.b16 %v211, %v210
    %v270 = vpack.c.b16 %v213, %v212
    %v271 = vpack.c.b16 %v215, %v214
    %v272 = vpack.c.b16 %v217, %v216
    %v273 = vpack.c.b16 %v219, %v218
    %v274 = vpack.c.b16 %v221, %v220
    %v275 = vpack.c.b16 %v223, %v222
    %v276 = vpack.c.b16 %v225, %v224
    %v277 = vpack.c.b16 %v227, %v226
    %v278 = vpack.c.b16 %v229, %v228
    %v279 = vpack.c.b16 %v231, %v230
    %v280 = vpack.c.b16 %v233, %v232
    %v281 = vpack.c.b16 %v235, %v234
    %v282 = vpack.c.b16 %v237, %v236
    %v283 = vpack.c.b16 %v239, %v238
    %v284 = vpack.c.b16 %v241, %v240
    %v285 = vpack.c.b16 %v243, %v242
    %v286 = vpack.c.b16 %v245, %v244
    %v287 = vpack.c.b16 %v247, %v246
    %v288 = vpack.c.b16 %v249, %v248
    %v289 = vpack.c.b16 %v251, %v250
    %v290 = vpack.c.b16 %v253, %v252
    %v291 = vpack.c.b16 %v255, %v254
    %v292 = vpack.c.b16 %v257, %v256
    %v293 = vpack.c.b16 %v259, %v258
    %v294 = vpack.c.b16 %v261, %v260
    %v295 = vpack.c.b16 %v263, %v262
    %vm296 = vcmask 31744
    %v298 = vsel %vm296, %v264, 0
    %v301 = vsel %vm296, %v265, 0
    %v304 = vsel %vm296, %v266, 0
    %v307 = vsel %vm296, %v267, 0
    %v310 = vsel %vm296, %v268, 0
    %v313 = vsel %vm296, %v269, 0
    %v316 = vsel %vm296, %v270, 0
    %v319 = vsel %vm296, %v271, 0
    %v322 = vsel %vm296, %v272, 0
    %v325 = vsel %vm296, %v273, 0
    %v328 = vsel %vm296, %v274, 0
    %v331 = vsel %vm296, %v275, 0
    %v334 = vsel %vm296, %v276, 0
    %v337 = vsel %vm296, %v277, 0
    %v340 = vsel %vm296, %v278, 0
    %v343 = vsel %vm296, %v279, 0
    %v346 = vsel %vm296, %v280, 0
    %v349 = vsel %vm296, %v281, 0
    %v352 = vsel %vm296, %v282, 0
    %v355 = vsel %vm296, %v283, 0
    %v358 = vsel %vm296, %v284, 0
    %v361 = vsel %vm296, %v285, 0
    %v364 = vsel %vm296, %v286, 0
    %v367 = vsel %vm296, %v287, 0
    %v370 = vsel %vm296, %v288, 0
    %v373 = vsel %vm296, %v289, 0
    %v376 = vsel %vm296, %v290, 0
    %v379 = vsel %vm296, %v291, 0
    %v382 = vsel %vm296, %v292, 0
    %v385 = vsel %vm296, %v293, 0
    %v388 = vsel %vm296, %v294, 0
    %v391 = vsel %vm296, %v295, 0
    %vm393 = vcmask 1041408
    %v395 = vsel %vm393, %v135, 0
    %397 = vmatprep.subr.bf16.mxu0 0
    %398 = vmatpush1.bf16.msra.mxu0 %v395
    %399 = vmatprep.subr.bf16.mxu0 0
    %400 = vmatpush1.bf16.msra.mxu0 0
    %401 = vmatprep.subr.bf16.mxu0 0
    %402 = vmatpush1.bf16.msra.mxu0 0
    %403 = vmatprep.subr.bf16.mxu0 0
    %404 = vmatpush1.bf16.msra.mxu0 0
    %405 = vmatprep.subr.bf16.mxu0 0
    %406 = vmatpush1.bf16.msra.mxu0 0
    %407 = vmatprep.subr.bf16.mxu0 0
    %408 = vmatpush1.bf16.msra.mxu0 0
    %409 = vmatprep.subr.bf16.mxu0 0
    %410 = vmatpush1.bf16.msra.mxu0 0
    %411 = vmatprep.subr.bf16.mxu0 0
    %412 = vmatpush1.bf16.msra.mxu0 0
    %413 = vmatprep.subr.bf16.mxu0 0
    %414 = vmatpush1.bf16.msra.mxu0 0
    %415 = vmatprep.subr.bf16.mxu0 0
    %416 = vmatpush1.bf16.msra.mxu0 0
    %417 = vmatprep.subr.bf16.mxu0 0
    %418 = vmatpush1.bf16.msra.mxu0 0
    %419 = vmatprep.subr.bf16.mxu0 0
    %420 = vmatpush1.bf16.msra.mxu0 0
    %421 = vmatprep.subr.bf16.mxu0 0
    %422 = vmatpush1.bf16.msra.mxu0 0
    %423 = vmatprep.subr.bf16.mxu0 0
    %424 = vmatpush1.bf16.msra.mxu0 0
    %425 = vmatprep.subr.bf16.mxu0 0
    %426 = vmatpush1.bf16.msra.mxu0 0
    %427 = vmatprep.subr.bf16.mxu0 0
    %428 = vmatpush1.bf16.msra.mxu0 0
    %429 = vmatprep.mubr.bf16.mxu0 0
    %430 = vmatmul.mubr.bf16.gmra.mrb[0].mxu0 %v298
    %v431 = vpop.f32.mrb[0].mxu0
    %v432 = vadd.f32 0.0, %v431
    %v433 = vpop.f32.mrb[0].mxu0
    %v434 = vpop.f32.mrb[0].mxu0
    %v435 = vadd.f32 0.0, %v434
    %v436 = vpop.f32.mrb[0].mxu0
    %437 = vmatprep.mubr.bf16.mxu0 0
    %438 = vmatmul.mubr.bf16.gmra.mrb[0].mxu0 %v301
    %v439 = vpop.f32.mrb[0].mxu0
    %v440 = vadd.f32 0.0, %v439
    %v441 = vpop.f32.mrb[0].mxu0
    %v442 = vpop.f32.mrb[0].mxu0
    %v443 = vadd.f32 0.0, %v442
    %v444 = vpop.f32.mrb[0].mxu0
    %445 = vmatprep.mubr.bf16.mxu0 0
    %446 = vmatmul.mubr.bf16.gmra.mrb[0].mxu0 %v304
    %v447 = vpop.f32.mrb[0].mxu0
    %v448 = vadd.f32 0.0, %v447
    %v449 = vpop.f32.mrb[0].mxu0
    %v450 = vpop.f32.mrb[0].mxu0
    %v451 = vadd.f32 0.0, %v450
    %v452 = vpop.f32.mrb[0].mxu0
    %453 = vmatprep.mubr.bf16.mxu0 0
    %454 = vmatmul.mubr.bf16.gmra.mrb[0].mxu0 %v307
    %v455 = vpop.f32.mrb[0].mxu0
    %v456 = vadd.f32 0.0, %v455
    %v457 = vpop.f32.mrb[0].mxu0
    %v458 = vpop.f32.mrb[0].mxu0
    %v459 = vadd.f32 0.0, %v458
    %v460 = vpop.f32.mrb[0].mxu0
    %461 = vmatprep.mubr.bf16.mxu0 0
    %462 = vmatmul.mubr.bf16.gmra.mrb[0].mxu0 %v310
    %v463 = vpop.f32.mrb[0].mxu0
    %v464 = vadd.f32 0.0, %v463
    %v465 = vpop.f32.mrb[0].mxu0
    %v466 = vpop.f32.mrb[0].mxu0
    %v467 = vadd.f32 0.0, %v466
    %v468 = vpop.f32.mrb[0].mxu0
    %469 = vmatprep.mubr.bf16.mxu0 0
    %470 = vmatmul.mubr.bf16.gmra.mrb[0].mxu0 %v313
    %v471 = vpop.f32.mrb[0].mxu0
    %v472 = vadd.f32 0.0, %v471
    %v473 = vpop.f32.mrb[0].mxu0
    %v474 = vpop.f32.mrb[0].mxu0
    %v475 = vadd.f32 0.0, %v474
    %v476 = vpop.f32.mrb[0].mxu0
    %477 = vmatprep.mubr.bf16.mxu0 0
    %478 = vmatmul.mubr.bf16.gmra.mrb[0].mxu0 %v316
    %v479 = vpop.f32.mrb[0].mxu0
    %v480 = vadd.f32 0.0, %v479
    %v481 = vpop.f32.mrb[0].mxu0
    %v482 = vpop.f32.mrb[0].mxu0
    %v483 = vadd.f32 0.0, %v482
    %v484 = vpop.f32.mrb[0].mxu0
    %485 = vmatprep.mubr.bf16.mxu0 0
    %486 = vmatmul.mubr.bf16.gmra.mrb[0].mxu0 %v319
    %v487 = vpop.f32.mrb[0].mxu0
    %v488 = vadd.f32 0.0, %v487
    %v489 = vpop.f32.mrb[0].mxu0
    %v490 = vpop.f32.mrb[0].mxu0
    %v491 = vadd.f32 0.0, %v490
    %v492 = vpop.f32.mrb[0].mxu0
    %493 = vmatprep.mubr.bf16.mxu0 0
    %494 = vmatmul.mubr.bf16.gmra.mrb[0].mxu0 %v322
    %v495 = vpop.f32.mrb[0].mxu0
    %v496 = vadd.f32 0.0, %v495
    %v497 = vpop.f32.mrb[0].mxu0
    %v498 = vpop.f32.mrb[0].mxu0
    %v499 = vadd.f32 0.0, %v498
    %v500 = vpop.f32.mrb[0].mxu0
    %501 = vmatprep.mubr.bf16.mxu0 0
    %502 = vmatmul.mubr.bf16.gmra.mrb[0].mxu0 %v325
    %v503 = vpop.f32.mrb[0].mxu0
    %v504 = vadd.f32 0.0, %v503
    %v505 = vpop.f32.mrb[0].mxu0
    %v506 = vpop.f32.mrb[0].mxu0
    %v507 = vadd.f32 0.0, %v506
    %v508 = vpop.f32.mrb[0].mxu0
    %509 = vmatprep.mubr.bf16.mxu0 0
    %510 = vmatmul.mubr.bf16.gmra.mrb[0].mxu0 %v328
    %v511 = vpop.f32.mrb[0].mxu0
    %v512 = vadd.f32 0.0, %v511
    %v513 = vpop.f32.mrb[0].mxu0
    %v514 = vpop.f32.mrb[0].mxu0
    %v515 = vadd.f32 0.0, %v514
    %v516 = vpop.f32.mrb[0].mxu0
    %517 = vmatprep.mubr.bf16.mxu0 0
    %518 = vmatmul.mubr.bf16.gmra.mrb[0].mxu0 %v331
    %v519 = vpop.f32.mrb[0].mxu0
    %v520 = vadd.f32 0.0, %v519
    %v521 = vpop.f32.mrb[0].mxu0
    %v522 = vpop.f32.mrb[0].mxu0
    %v523 = vadd.f32 0.0, %v522
    %v524 = vpop.f32.mrb[0].mxu0
    %525 = vmatprep.mubr.bf16.mxu0 0
    %526 = vmatmul.mubr.bf16.gmra.mrb[0].mxu0 %v334
    %v527 = vpop.f32.mrb[0].mxu0
    %v528 = vadd.f32 0.0, %v527
    %v529 = vpop.f32.mrb[0].mxu0
    %v530 = vpop.f32.mrb[0].mxu0
    %v531 = vadd.f32 0.0, %v530
    %v532 = vpop.f32.mrb[0].mxu0
    %533 = vmatprep.mubr.bf16.mxu0 0
    %534 = vmatmul.mubr.bf16.gmra.mrb[0].mxu0 %v337
    %v535 = vpop.f32.mrb[0].mxu0
    %v536 = vadd.f32 0.0, %v535
    %v537 = vpop.f32.mrb[0].mxu0
    %v538 = vpop.f32.mrb[0].mxu0
    %v539 = vadd.f32 0.0, %v538
    %v540 = vpop.f32.mrb[0].mxu0
    %541 = vmatprep.mubr.bf16.mxu0 0
    %542 = vmatmul.mubr.bf16.gmra.mrb[0].mxu0 %v340
    %v543 = vpop.f32.mrb[0].mxu0
    %v544 = vadd.f32 0.0, %v543
    %v545 = vpop.f32.mrb[0].mxu0
    %v546 = vpop.f32.mrb[0].mxu0
    %v547 = vadd.f32 0.0, %v546
    %v548 = vpop.f32.mrb[0].mxu0
    %549 = vmatprep.mubr.bf16.mxu0 0
    %550 = vmatmul.mubr.bf16.gmra.mrb[0].mxu0 %v343
    %v551 = vpop.f32.mrb[0].mxu0
    %v552 = vadd.f32 0.0, %v551
    %v553 = vpop.f32.mrb[0].mxu0
    %v554 = vpop.f32.mrb[0].mxu0
    %v555 = vadd.f32 0.0, %v554
    %v556 = vpop.f32.mrb[0].mxu0
    %557 = vmatprep.mubr.bf16.mxu0 0
    %558 = vmatmul.mubr.bf16.gmra.mrb[0].mxu0 %v346
    %v559 = vpop.f32.mrb[0].mxu0
    %v560 = vadd.f32 0.0, %v559
    %v561 = vpop.f32.mrb[0].mxu0
    %v562 = vpop.f32.mrb[0].mxu0
    %v563 = vadd.f32 0.0, %v562
    %v564 = vpop.f32.mrb[0].mxu0
    %565 = vmatprep.mubr.bf16.mxu0 0
    %566 = vmatmul.mubr.bf16.gmra.mrb[0].mxu0 %v349
    %v567 = vpop.f32.mrb[0].mxu0
    %v568 = vadd.f32 0.0, %v567
    %v569 = vpop.f32.mrb[0].mxu0
    %v570 = vpop.f32.mrb[0].mxu0
    %v571 = vadd.f32 0.0, %v570
    %v572 = vpop.f32.mrb[0].mxu0
    %573 = vmatprep.mubr.bf16.mxu0 0
    %574 = vmatmul.mubr.bf16.gmra.mrb[0].mxu0 %v352
    %v575 = vpop.f32.mrb[0].mxu0
    %v576 = vadd.f32 0.0, %v575
    %v577 = vpop.f32.mrb[0].mxu0
    %v578 = vpop.f32.mrb[0].mxu0
    %v579 = vadd.f32 0.0, %v578
    %v580 = vpop.f32.mrb[0].mxu0
    %581 = vmatprep.mubr.bf16.mxu0 0
    %582 = vmatmul.mubr.bf16.gmra.mrb[0].mxu0 %v355
    %v583 = vpop.f32.mrb[0].mxu0
    %v584 = vadd.f32 0.0, %v583
    %v585 = vpop.f32.mrb[0].mxu0
    %v586 = vpop.f32.mrb[0].mxu0
    %v587 = vadd.f32 0.0, %v586
    %v588 = vpop.f32.mrb[0].mxu0
    %589 = vmatprep.mubr.bf16.mxu0 0
    %590 = vmatmul.mubr.bf16.gmra.mrb[0].mxu0 %v358
    %v591 = vpop.f32.mrb[0].mxu0
    %v592 = vadd.f32 0.0, %v591
    %v593 = vpop.f32.mrb[0].mxu0
    %v594 = vpop.f32.mrb[0].mxu0
    %v595 = vadd.f32 0.0, %v594
    %v596 = vpop.f32.mrb[0].mxu0
    %597 = vmatprep.mubr.bf16.mxu0 0
    %598 = vmatmul.mubr.bf16.gmra.mrb[0].mxu0 %v361
    %v599 = vpop.f32.mrb[0].mxu0
    %v600 = vadd.f32 0.0, %v599
    %v601 = vpop.f32.mrb[0].mxu0
    %v602 = vpop.f32.mrb[0].mxu0
    %v603 = vadd.f32 0.0, %v602
    %v604 = vpop.f32.mrb[0].mxu0
    %605 = vmatprep.mubr.bf16.mxu0 0
    %606 = vmatmul.mubr.bf16.gmra.mrb[0].mxu0 %v364
    %v607 = vpop.f32.mrb[0].mxu0
    %v608 = vadd.f32 0.0, %v607
    %v609 = vpop.f32.mrb[0].mxu0
    %v610 = vpop.f32.mrb[0].mxu0
    %v611 = vadd.f32 0.0, %v610
    %v612 = vpop.f32.mrb[0].mxu0
    %613 = vmatprep.mubr.bf16.mxu0 0
    %614 = vmatmul.mubr.bf16.gmra.mrb[0].mxu0 %v367
    %v615 = vpop.f32.mrb[0].mxu0
    %v616 = vadd.f32 0.0, %v615
    %v617 = vpop.f32.mrb[0].mxu0
    %v618 = vpop.f32.mrb[0].mxu0
    %v619 = vadd.f32 0.0, %v618
    %v620 = vpop.f32.mrb[0].mxu0
    %621 = vmatprep.mubr.bf16.mxu0 0
    %622 = vmatmul.mubr.bf16.gmra.mrb[0].mxu0 %v370
    %v623 = vpop.f32.mrb[0].mxu0
    %v624 = vadd.f32 0.0, %v623
    %v625 = vpop.f32.mrb[0].mxu0
    %v626 = vpop.f32.mrb[0].mxu0
    %v627 = vadd.f32 0.0, %v626
    %v628 = vpop.f32.mrb[0].mxu0
    %629 = vmatprep.mubr.bf16.mxu0 0
    %630 = vmatmul.mubr.bf16.gmra.mrb[0].mxu0 %v373
    %v631 = vpop.f32.mrb[0].mxu0
    %v632 = vadd.f32 0.0, %v631
    %v633 = vpop.f32.mrb[0].mxu0
    %v634 = vpop.f32.mrb[0].mxu0
    %v635 = vadd.f32 0.0, %v634
    %v636 = vpop.f32.mrb[0].mxu0
    %637 = vmatprep.mubr.bf16.mxu0 0
    %638 = vmatmul.mubr.bf16.gmra.mrb[0].mxu0 %v376
    %v639 = vpop.f32.mrb[0].mxu0
    %v640 = vadd.f32 0.0, %v639
    %v641 = vpop.f32.mrb[0].mxu0
    %v642 = vpop.f32.mrb[0].mxu0
    %v643 = vadd.f32 0.0, %v642
    %v644 = vpop.f32.mrb[0].mxu0
    %645 = vmatprep.mubr.bf16.mxu0 0
    %646 = vmatmul.mubr.bf16.gmra.mrb[0].mxu0 %v379
    %v647 = vpop.f32.mrb[0].mxu0
    %v648 = vadd.f32 0.0, %v647
    %v649 = vpop.f32.mrb[0].mxu0
    %v650 = vpop.f32.mrb[0].mxu0
    %v651 = vadd.f32 0.0, %v650
    %v652 = vpop.f32.mrb[0].mxu0
    %653 = vmatprep.mubr.bf16.mxu0 0
    %654 = vmatmul.mubr.bf16.gmra.mrb[0].mxu0 %v382
    %v655 = vpop.f32.mrb[0].mxu0
    %v656 = vadd.f32 0.0, %v655
    %v657 = vpop.f32.mrb[0].mxu0
    %v658 = vpop.f32.mrb[0].mxu0
    %v659 = vadd.f32 0.0, %v658
    %v660 = vpop.f32.mrb[0].mxu0
    %661 = vmatprep.mubr.bf16.mxu0 0
    %662 = vmatmul.mubr.bf16.gmra.mrb[0].mxu0 %v385
    %v663 = vpop.f32.mrb[0].mxu0
    %v664 = vadd.f32 0.0, %v663
    %v665 = vpop.f32.mrb[0].mxu0
    %v666 = vpop.f32.mrb[0].mxu0
    %v667 = vadd.f32 0.0, %v666
    %v668 = vpop.f32.mrb[0].mxu0
    %669 = vmatprep.mubr.bf16.mxu0 0
    %670 = vmatmul.mubr.bf16.gmra.mrb[0].mxu0 %v388
    %v671 = vpop.f32.mrb[0].mxu0
    %v672 = vadd.f32 0.0, %v671
    %v673 = vpop.f32.mrb[0].mxu0
    %v674 = vpop.f32.mrb[0].mxu0
    %v675 = vadd.f32 0.0, %v674
    %v676 = vpop.f32.mrb[0].mxu0
    %677 = vmatprep.mubr.bf16.mxu0 0
    %678 = vmatmul.mubr.bf16.gmra.mrb[0].mxu0 %v391
    %v679 = vpop.f32.mrb[0].mxu0
    %v680 = vadd.f32 0.0, %v679
    %v681 = vpop.f32.mrb[0].mxu0
    %v682 = vpop.f32.mrb[0].mxu0
    %v683 = vadd.f32 0.0, %v682
    %v684 = vpop.f32.mrb[0].mxu0
    %685 = vdwg.mxu0
    %v686 = vld [vmem:[#allocation7] sm:$0x1]
    %v688 = vlaneseq
    %v689 = vshrl.u32 %v688, 7
    %v690 = vsub.s32 0, %v689
    %v691 = vrot.slane %v686, %v690
    %v693 = vmul.f32 %v432, %v691
    %v694 = vmul.f32 %v435, %v691
    %v695 = vmul.f32 %v440, %v691
    %v696 = vmul.f32 %v443, %v691
    %v697 = vmul.f32 %v448, %v691
    %v698 = vmul.f32 %v451, %v691
    %v699 = vmul.f32 %v456, %v691
    %v700 = vmul.f32 %v459, %v691
    %v701 = vmul.f32 %v464, %v691
    %v702 = vmul.f32 %v467, %v691
    %v703 = vmul.f32 %v472, %v691
    %v704 = vmul.f32 %v475, %v691
    %v705 = vmul.f32 %v480, %v691
    %v706 = vmul.f32 %v483, %v691
    %v707 = vmul.f32 %v488, %v691
    %v708 = vmul.f32 %v491, %v691
    %v709 = vmul.f32 %v496, %v691
    %v710 = vmul.f32 %v499, %v691
    %v711 = vmul.f32 %v504, %v691
    %v712 = vmul.f32 %v507, %v691
    %v713 = vmul.f32 %v512, %v691
    %v714 = vmul.f32 %v515, %v691
    %v715 = vmul.f32 %v520, %v691
    %v716 = vmul.f32 %v523, %v691
    %v717 = vmul.f32 %v528, %v691
    %v718 = vmul.f32 %v531, %v691
    %v719 = vmul.f32 %v536, %v691
    %v720 = vmul.f32 %v539, %v691
    %v721 = vmul.f32 %v544, %v691
    %v722 = vmul.f32 %v547, %v691
    %v723 = vmul.f32 %v552, %v691
    %v724 = vmul.f32 %v555, %v691
    %v725 = vmul.f32 %v560, %v691
    %v726 = vmul.f32 %v563, %v691
    %v727 = vmul.f32 %v568, %v691
    %v728 = vmul.f32 %v571, %v691
    %v729 = vmul.f32 %v576, %v691
    %v730 = vmul.f32 %v579, %v691
    %v731 = vmul.f32 %v584, %v691
    %v732 = vmul.f32 %v587, %v691
    %v733 = vmul.f32 %v592, %v691
    %v734 = vmul.f32 %v595, %v691
    %v735 = vmul.f32 %v600, %v691
    %v736 = vmul.f32 %v603, %v691
    %v737 = vmul.f32 %v608, %v691
    %v738 = vmul.f32 %v611, %v691
    %v739 = vmul.f32 %v616, %v691
    %v740 = vmul.f32 %v619, %v691
    %v741 = vmul.f32 %v624, %v691
    %v742 = vmul.f32 %v627, %v691
    %v743 = vmul.f32 %v632, %v691
    %v744 = vmul.f32 %v635, %v691
    %v745 = vmul.f32 %v640, %v691
    %v746 = vmul.f32 %v643, %v691
    %v747 = vmul.f32 %v648, %v691
    %v748 = vmul.f32 %v651, %v691
    %v749 = vmul.f32 %v656, %v691
    %v750 = vmul.f32 %v659, %v691
    %v751 = vmul.f32 %v664, %v691
    %v752 = vmul.f32 %v667, %v691
    %v753 = vmul.f32 %v672, %v691
    %v754 = vmul.f32 %v675, %v691
    %v755 = vmul.f32 %v680, %v691
    %v756 = vmul.f32 %v683, %v691
    %v757 = vld [vmem:[#allocation8] sm:$0x1]
    %v759 = vlaneseq
    %v760 = vshrl.u32 %v759, 7
    %v761 = vsub.s32 0, %v760
    %v762 = vrot.slane %v757, %v761
    %v764 = vadd.f32 %v693, %v762
    %v765 = vadd.f32 %v694, %v762
    %v766 = vadd.f32 %v695, %v762
    %v767 = vadd.f32 %v696, %v762
    %v768 = vadd.f32 %v697, %v762
    %v769 = vadd.f32 %v698, %v762
    %v770 = vadd.f32 %v699, %v762
    %v771 = vadd.f32 %v700, %v762
    %v772 = vadd.f32 %v701, %v762
    %v773 = vadd.f32 %v702, %v762
    %v774 = vadd.f32 %v703, %v762
    %v775 = vadd.f32 %v704, %v762
    %v776 = vadd.f32 %v705, %v762
    %v777 = vadd.f32 %v706, %v762
    %v778 = vadd.f32 %v707, %v762
    %v779 = vadd.f32 %v708, %v762
    %v780 = vadd.f32 %v709, %v762
    %v781 = vadd.f32 %v710, %v762
    %v782 = vadd.f32 %v711, %v762
    %v783 = vadd.f32 %v712, %v762
    %v784 = vadd.f32 %v713, %v762
    %v785 = vadd.f32 %v714, %v762
    %v786 = vadd.f32 %v715, %v762
    %v787 = vadd.f32 %v716, %v762
    %v788 = vadd.f32 %v717, %v762
    %v789 = vadd.f32 %v718, %v762
    %v790 = vadd.f32 %v719, %v762
    %v791 = vadd.f32 %v720, %v762
    %v792 = vadd.f32 %v721, %v762
    %v793 = vadd.f32 %v722, %v762
    %v794 = vadd.f32 %v723, %v762
    %v795 = vadd.f32 %v724, %v762
    %v796 = vadd.f32 %v725, %v762
    %v797 = vadd.f32 %v726, %v762
    %v798 = vadd.f32 %v727, %v762
    %v799 = vadd.f32 %v728, %v762
    %v800 = vadd.f32 %v729, %v762
    %v801 = vadd.f32 %v730, %v762
    %v802 = vadd.f32 %v731, %v762
    %v803 = vadd.f32 %v732, %v762
    %v804 = vadd.f32 %v733, %v762
    %v805 = vadd.f32 %v734, %v762
    %v806 = vadd.f32 %v735, %v762
    %v807 = vadd.f32 %v736, %v762
    %v808 = vadd.f32 %v737, %v762
    %v809 = vadd.f32 %v738, %v762
    %v810 = vadd.f32 %v739, %v762
    %v811 = vadd.f32 %v740, %v762
    %v812 = vadd.f32 %v741, %v762
    %v813 = vadd.f32 %v742, %v762
    %v814 = vadd.f32 %v743, %v762
    %v815 = vadd.f32 %v744, %v762
    %v816 = vadd.f32 %v745, %v762
    %v817 = vadd.f32 %v746, %v762
    %v818 = vadd.f32 %v747, %v762
    %v819 = vadd.f32 %v748, %v762
    %v820 = vadd.f32 %v749, %v762
    %v821 = vadd.f32 %v750, %v762
    %v822 = vadd.f32 %v751, %v762
    %v823 = vadd.f32 %v752, %v762
    %v824 = vadd.f32 %v753, %v762
    %v825 = vadd.f32 %v754, %v762
    %v826 = vadd.f32 %v755, %v762
    %v827 = vadd.f32 %v756, %v762
    %v828 = vsub.f32 0.0, %v764
    %v829 = vsub.f32 0.0, %v765
    %v830 = vsub.f32 0.0, %v766
    %v831 = vsub.f32 0.0, %v767
    %v832 = vsub.f32 0.0, %v768
    %v833 = vsub.f32 0.0, %v769
    %v834 = vsub.f32 0.0, %v770
    %v835 = vsub.f32 0.0, %v771
    %v836 = vsub.f32 0.0, %v772
    %v837 = vsub.f32 0.0, %v773
    %v838 = vsub.f32 0.0, %v774
    %v839 = vsub.f32 0.0, %v775
    %v840 = vsub.f32 0.0, %v776
    %v841 = vsub.f32 0.0, %v777
    %v842 = vsub.f32 0.0, %v778
    %v843 = vsub.f32 0.0, %v779
    %v844 = vsub.f32 0.0, %v780
    %v845 = vsub.f32 0.0, %v781
    %v846 = vsub.f32 0.0, %v782
    %v847 = vsub.f32 0.0, %v783
    %v848 = vsub.f32 0.0, %v784
    %v849 = vsub.f32 0.0, %v785
    %v850 = vsub.f32 0.0, %v786
    %v851 = vsub.f32 0.0, %v787
    %v852 = vsub.f32 0.0, %v788
    %v853 = vsub.f32 0.0, %v789
    %v854 = vsub.f32 0.0, %v790
    %v855 = vsub.f32 0.0, %v791
    %v856 = vsub.f32 0.0, %v792
    %v857 = vsub.f32 0.0, %v793
    %v858 = vsub.f32 0.0, %v794
    %v859 = vsub.f32 0.0, %v795
    %v860 = vsub.f32 0.0, %v796
    %v861 = vsub.f32 0.0, %v797
    %v862 = vsub.f32 0.0, %v798
    %v863 = vsub.f32 0.0, %v799
    %v864 = vsub.f32 0.0, %v800
    %v865 = vsub.f32 0.0, %v801
    %v866 = vsub.f32 0.0, %v802
    %v867 = vsub.f32 0.0, %v803
    %v868 = vsub.f32 0.0, %v804
    %v869 = vsub.f32 0.0, %v805
    %v870 = vsub.f32 0.0, %v806
    %v871 = vsub.f32 0.0, %v807
    %v872 = vsub.f32 0.0, %v808
    %v873 = vsub.f32 0.0, %v809
    %v874 = vsub.f32 0.0, %v810
    %v875 = vsub.f32 0.0, %v811
    %v876 = vsub.f32 0.0, %v812
    %v877 = vsub.f32 0.0, %v813
    %v878 = vsub.f32 0.0, %v814
    %v879 = vsub.f32 0.0, %v815
    %v880 = vsub.f32 0.0, %v816
    %v881 = vsub.f32 0.0, %v817
    %v882 = vsub.f32 0.0, %v818
    %v883 = vsub.f32 0.0, %v819
    %v884 = vsub.f32 0.0, %v820
    %v885 = vsub.f32 0.0, %v821
    %v886 = vsub.f32 0.0, %v822
    %v887 = vsub.f32 0.0, %v823
    %v888 = vsub.f32 0.0, %v824
    %v889 = vsub.f32 0.0, %v825
    %v890 = vsub.f32 0.0, %v826
    %v891 = vsub.f32 0.0, %v827
    %v892 = vmul.f32 %v828, 1.442695
    %v893 = vpow.pop %v892
    %v894 = vmul.f32 %v829, 1.442695
    %v895 = vpow.pop %v894
    %v896 = vmul.f32 %v830, 1.442695
    %v897 = vpow.pop %v896
    %v898 = vmul.f32 %v831, 1.442695
    %v899 = vpow.pop %v898
    %v900 = vmul.f32 %v832, 1.442695
    %v901 = vpow.pop %v900
    %v902 = vmul.f32 %v833, 1.442695
    %v903 = vpow.pop %v902
    %v904 = vmul.f32 %v834, 1.442695
    %v905 = vpow.pop %v904
    %v906 = vmul.f32 %v835, 1.442695
    %v907 = vpow.pop %v906
    %v908 = vmul.f32 %v836, 1.442695
    %v909 = vpow.pop %v908
    %v910 = vmul.f32 %v837, 1.442695
    %v911 = vpow.pop %v910
    %v912 = vmul.f32 %v838, 1.442695
    %v913 = vpow.pop %v912
    %v914 = vmul.f32 %v839, 1.442695
    %v915 = vpow.pop %v914
    %v916 = vmul.f32 %v840, 1.442695
    %v917 = vpow.pop %v916
    %v918 = vmul.f32 %v841, 1.442695
    %v919 = vpow.pop %v918
    %v920 = vmul.f32 %v842, 1.442695
    %v921 = vpow.pop %v920
    %v922 = vmul.f32 %v843, 1.442695
    %v923 = vpow.pop %v922
    %v924 = vmul.f32 %v844, 1.442695
    %v925 = vpow.pop %v924
    %v926 = vmul.f32 %v845, 1.442695
    %v927 = vpow.pop %v926
    %v928 = vmul.f32 %v846, 1.442695
    %v929 = vpow.pop %v928
    %v930 = vmul.f32 %v847, 1.442695
    %v931 = vpow.pop %v930
    %v932 = vmul.f32 %v848, 1.442695
    %v933 = vpow.pop %v932
    %v934 = vmul.f32 %v849, 1.442695
    %v935 = vpow.pop %v934
    %v936 = vmul.f32 %v850, 1.442695
    %v937 = vpow.pop %v936
    %v938 = vmul.f32 %v851, 1.442695
    %v939 = vpow.pop %v938
    %v940 = vmul.f32 %v852, 1.442695
    %v941 = vpow.pop %v940
    %v942 = vmul.f32 %v853, 1.442695
    %v943 = vpow.pop %v942
    %v944 = vmul.f32 %v854, 1.442695
    %v945 = vpow.pop %v944
    %v946 = vmul.f32 %v855, 1.442695
    %v947 = vpow.pop %v946
    %v948 = vmul.f32 %v856, 1.442695
    %v949 = vpow.pop %v948
    %v950 = vmul.f32 %v857, 1.442695
    %v951 = vpow.pop %v950
    %v952 = vmul.f32 %v858, 1.442695
    %v953 = vpow.pop %v952
    %v954 = vmul.f32 %v859, 1.442695
    %v955 = vpow.pop %v954
    %v956 = vmul.f32 %v860, 1.442695
    %v957 = vpow.pop %v956
    %v958 = vmul.f32 %v861, 1.442695
    %v959 = vpow.pop %v958
    %v960 = vmul.f32 %v862, 1.442695
    %v961 = vpow.pop %v960
    %v962 = vmul.f32 %v863, 1.442695
    %v963 = vpow.pop %v962
    %v964 = vmul.f32 %v864, 1.442695
    %v965 = vpow.pop %v964
    %v966 = vmul.f32 %v865, 1.442695
    %v967 = vpow.pop %v966
    %v968 = vmul.f32 %v866, 1.442695
    %v969 = vpow.pop %v968
    %v970 = vmul.f32 %v867, 1.442695
    %v971 = vpow.pop %v970
    %v972 = vmul.f32 %v868, 1.442695
    %v973 = vpow.pop %v972
    %v974 = vmul.f32 %v869, 1.442695
    %v975 = vpow.pop %v974
    %v976 = vmul.f32 %v870, 1.442695
    %v977 = vpow.pop %v976
    %v978 = vmul.f32 %v871, 1.442695
    %v979 = vpow.pop %v978
    %v980 = vmul.f32 %v872, 1.442695
    %v981 = vpow.pop %v980
    %v982 = vmul.f32 %v873, 1.442695
    %v983 = vpow.pop %v982
    %v984 = vmul.f32 %v874, 1.442695
    %v985 = vpow.pop %v984
    %v986 = vmul.f32 %v875, 1.442695
    %v987 = vpow.pop %v986
    %v988 = vmul.f32 %v876, 1.442695
    %v989 = vpow.pop %v988
    %v990 = vmul.f32 %v877, 1.442695
    %v991 = vpow.pop %v990
    %v992 = vmul.f32 %v878, 1.442695
    %v993 = vpow.pop %v992
    %v994 = vmul.f32 %v879, 1.442695
    %v995 = vpow.pop %v994
    %v996 = vmul.f32 %v880, 1.442695
    %v997 = vpow.pop %v996
    %v998 = vmul.f32 %v881, 1.442695
    %v999 = vpow.pop %v998
    %v1000 = vmul.f32 %v882, 1.442695
    %v1001 = vpow.pop %v1000
    %v1002 = vmul.f32 %v883, 1.442695
    %v1003 = vpow.pop %v1002
    %v1004 = vmul.f32 %v884, 1.442695
    %v1005 = vpow.pop %v1004
    %v1006 = vmul.f32 %v885, 1.442695
    %v1007 = vpow.pop %v1006
    %v1008 = vmul.f32 %v886, 1.442695
    %v1009 = vpow.pop %v1008
    %v1010 = vmul.f32 %v887, 1.442695
    %v1011 = vpow.pop %v1010
    %v1012 = vmul.f32 %v888, 1.442695
    %v1013 = vpow.pop %v1012
    %v1014 = vmul.f32 %v889, 1.442695
    %v1015 = vpow.pop %v1014
    %v1016 = vmul.f32 %v890, 1.442695
    %v1017 = vpow.pop %v1016
    %v1018 = vmul.f32 %v891, 1.442695
    %v1019 = vpow.pop %v1018
    %v1020 = vadd.f32 %v893, 1.0
    %v1021 = vadd.f32 %v895, 1.0
    %v1022 = vadd.f32 %v897, 1.0
    %v1023 = vadd.f32 %v899, 1.0
    %v1024 = vadd.f32 %v901, 1.0
    %v1025 = vadd.f32 %v903, 1.0
    %v1026 = vadd.f32 %v905, 1.0
    %v1027 = vadd.f32 %v907, 1.0
    %v1028 = vadd.f32 %v909, 1.0
    %v1029 = vadd.f32 %v911, 1.0
    %v1030 = vadd.f32 %v913, 1.0
    %v1031 = vadd.f32 %v915, 1.0
    %v1032 = vadd.f32 %v917, 1.0
    %v1033 = vadd.f32 %v919, 1.0
    %v1034 = vadd.f32 %v921, 1.0
    %v1035 = vadd.f32 %v923, 1.0
    %v1036 = vadd.f32 %v925, 1.0
    %v1037 = vadd.f32 %v927, 1.0
    %v1038 = vadd.f32 %v929, 1.0
    %v1039 = vadd.f32 %v931, 1.0
    %v1040 = vadd.f32 %v933, 1.0
    %v1041 = vadd.f32 %v935, 1.0
    %v1042 = vadd.f32 %v937, 1.0
    %v1043 = vadd.f32 %v939, 1.0
    %v1044 = vadd.f32 %v941, 1.0
    %v1045 = vadd.f32 %v943, 1.0
    %v1046 = vadd.f32 %v945, 1.0
    %v1047 = vadd.f32 %v947, 1.0
    %v1048 = vadd.f32 %v949, 1.0
    %v1049 = vadd.f32 %v951, 1.0
    %v1050 = vadd.f32 %v953, 1.0
    %v1051 = vadd.f32 %v955, 1.0
    %v1052 = vadd.f32 %v957, 1.0
    %v1053 = vadd.f32 %v959, 1.0
    %v1054 = vadd.f32 %v961, 1.0
    %v1055 = vadd.f32 %v963, 1.0
    %v1056 = vadd.f32 %v965, 1.0
    %v1057 = vadd.f32 %v967, 1.0
    %v1058 = vadd.f32 %v969, 1.0
    %v1059 = vadd.f32 %v971, 1.0
    %v1060 = vadd.f32 %v973, 1.0
    %v1061 = vadd.f32 %v975, 1.0
    %v1062 = vadd.f32 %v977, 1.0
    %v1063 = vadd.f32 %v979, 1.0
    %v1064 = vadd.f32 %v981, 1.0
    %v1065 = vadd.f32 %v983, 1.0
    %v1066 = vadd.f32 %v985, 1.0
    %v1067 = vadd.f32 %v987, 1.0
    %v1068 = vadd.f32 %v989, 1.0
    %v1069 = vadd.f32 %v991, 1.0
    %v1070 = vadd.f32 %v993, 1.0
    %v1071 = vadd.f32 %v995, 1.0
    %v1072 = vadd.f32 %v997, 1.0
    %v1073 = vadd.f32 %v999, 1.0
    %v1074 = vadd.f32 %v1001, 1.0
    %v1075 = vadd.f32 %v1003, 1.0
    %v1076 = vadd.f32 %v1005, 1.0
    %v1077 = vadd.f32 %v1007, 1.0
    %v1078 = vadd.f32 %v1009, 1.0
    %v1079 = vadd.f32 %v1011, 1.0
    %v1080 = vadd.f32 %v1013, 1.0
    %v1081 = vadd.f32 %v1015, 1.0
    %v1082 = vadd.f32 %v1017, 1.0
    %v1083 = vadd.f32 %v1019, 1.0
    %v1084 = vrcp.pop %v1020
    %v1085 = vmul.f32 1.0, %v1084
    %v1086 = vrcp.pop %v1021
    %v1087 = vmul.f32 1.0, %v1086
    %v1088 = vrcp.pop %v1022
    %v1089 = vmul.f32 1.0, %v1088
    %v1090 = vrcp.pop %v1023
    %v1091 = vmul.f32 1.0, %v1090
    %v1092 = vrcp.pop %v1024
    %v1093 = vmul.f32 1.0, %v1092
    %v1094 = vrcp.pop %v1025
    %v1095 = vmul.f32 1.0, %v1094
    %v1096 = vrcp.pop %v1026
    %v1097 = vmul.f32 1.0, %v1096
    %v1098 = vrcp.pop %v1027
    %v1099 = vmul.f32 1.0, %v1098
    %v1100 = vrcp.pop %v1028
    %v1101 = vmul.f32 1.0, %v1100
    %v1102 = vrcp.pop %v1029
    %v1103 = vmul.f32 1.0, %v1102
    %v1104 = vrcp.pop %v1030
    %v1105 = vmul.f32 1.0, %v1104
    %v1106 = vrcp.pop %v1031
    %v1107 = vmul.f32 1.0, %v1106
    %v1108 = vrcp.pop %v1032
    %v1109 = vmul.f32 1.0, %v1108
    %v1110 = vrcp.pop %v1033
    %v1111 = vmul.f32 1.0, %v1110
    %v1112 = vrcp.pop %v1034
    %v1113 = vmul.f32 1.0, %v1112
    %v1114 = vrcp.pop %v1035
    %v1115 = vmul.f32 1.0, %v1114
    %v1116 = vrcp.pop %v1036
    %v1117 = vmul.f32 1.0, %v1116
    %v1118 = vrcp.pop %v1037
    %v1119 = vmul.f32 1.0, %v1118
    %v1120 = vrcp.pop %v1038
    %v1121 = vmul.f32 1.0, %v1120
    %v1122 = vrcp.pop %v1039
    %v1123 = vmul.f32 1.0, %v1122
    %v1124 = vrcp.pop %v1040
    %v1125 = vmul.f32 1.0, %v1124
    %v1126 = vrcp.pop %v1041
    %v1127 = vmul.f32 1.0, %v1126
    %v1128 = vrcp.pop %v1042
    %v1129 = vmul.f32 1.0, %v1128
    %v1130 = vrcp.pop %v1043
    %v1131 = vmul.f32 1.0, %v1130
    %v1132 = vrcp.pop %v1044
    %v1133 = vmul.f32 1.0, %v1132
    %v1134 = vrcp.pop %v1045
    %v1135 = vmul.f32 1.0, %v1134
    %v1136 = vrcp.pop %v1046
    %v1137 = vmul.f32 1.0, %v1136
    %v1138 = vrcp.pop %v1047
    %v1139 = vmul.f32 1.0, %v1138
    %v1140 = vrcp.pop %v1048
    %v1141 = vmul.f32 1.0, %v1140
    %v1142 = vrcp.pop %v1049
    %v1143 = vmul.f32 1.0, %v1142
    %v1144 = vrcp.pop %v1050
    %v1145 = vmul.f32 1.0, %v1144
    %v1146 = vrcp.pop %v1051
    %v1147 = vmul.f32 1.0, %v1146
    %v1148 = vrcp.pop %v1052
    %v1149 = vmul.f32 1.0, %v1148
    %v1150 = vrcp.pop %v1053
    %v1151 = vmul.f32 1.0, %v1150
    %v1152 = vrcp.pop %v1054
    %v1153 = vmul.f32 1.0, %v1152
    %v1154 = vrcp.pop %v1055
    %v1155 = vmul.f32 1.0, %v1154
    %v1156 = vrcp.pop %v1056
    %v1157 = vmul.f32 1.0, %v1156
    %v1158 = vrcp.pop %v1057
    %v1159 = vmul.f32 1.0, %v1158
    %v1160 = vrcp.pop %v1058
    %v1161 = vmul.f32 1.0, %v1160
    %v1162 = vrcp.pop %v1059
    %v1163 = vmul.f32 1.0, %v1162
    %v1164 = vrcp.pop %v1060
    %v1165 = vmul.f32 1.0, %v1164
    %v1166 = vrcp.pop %v1061
    %v1167 = vmul.f32 1.0, %v1166
    %v1168 = vrcp.pop %v1062
    %v1169 = vmul.f32 1.0, %v1168
    %v1170 = vrcp.pop %v1063
    %v1171 = vmul.f32 1.0, %v1170
    %v1172 = vrcp.pop %v1064
    %v1173 = vmul.f32 1.0, %v1172
    %v1174 = vrcp.pop %v1065
    %v1175 = vmul.f32 1.0, %v1174
    %v1176 = vrcp.pop %v1066
    %v1177 = vmul.f32 1.0, %v1176
    %v1178 = vrcp.pop %v1067
    %v1179 = vmul.f32 1.0, %v1178
    %v1180 = vrcp.pop %v1068
    %v1181 = vmul.f32 1.0, %v1180
    %v1182 = vrcp.pop %v1069
    %v1183 = vmul.f32 1.0, %v1182
    %v1184 = vrcp.pop %v1070
    %v1185 = vmul.f32 1.0, %v1184
    %v1186 = vrcp.pop %v1071
    %v1187 = vmul.f32 1.0, %v1186
    %v1188 = vrcp.pop %v1072
    %v1189 = vmul.f32 1.0, %v1188
    %v1190 = vrcp.pop %v1073
    %v1191 = vmul.f32 1.0, %v1190
    %v1192 = vrcp.pop %v1074
    %v1193 = vmul.f32 1.0, %v1192
    %v1194 = vrcp.pop %v1075
    %v1195 = vmul.f32 1.0, %v1194
    %v1196 = vrcp.pop %v1076
    %v1197 = vmul.f32 1.0, %v1196
    %v1198 = vrcp.pop %v1077
    %v1199 = vmul.f32 1.0, %v1198
    %v1200 = vrcp.pop %v1078
    %v1201 = vmul.f32 1.0, %v1200
    %v1202 = vrcp.pop %v1079
    %v1203 = vmul.f32 1.0, %v1202
    %v1204 = vrcp.pop %v1080
    %v1205 = vmul.f32 1.0, %v1204
    %v1206 = vrcp.pop %v1081
    %v1207 = vmul.f32 1.0, %v1206
    %v1208 = vrcp.pop %v1082
    %v1209 = vmul.f32 1.0, %v1208
    %v1210 = vrcp.pop %v1083
    %v1211 = vmul.f32 1.0, %v1210
    %v1212 = vmul.f32 %v764, %v1085
    %v1213 = vmul.f32 %v765, %v1087
    %v1214 = vmul.f32 %v766, %v1089
    %v1215 = vmul.f32 %v767, %v1091
    %v1216 = vmul.f32 %v768, %v1093
    %v1217 = vmul.f32 %v769, %v1095
    %v1218 = vmul.f32 %v770, %v1097
    %v1219 = vmul.f32 %v771, %v1099
    %v1220 = vmul.f32 %v772, %v1101
    %v1221 = vmul.f32 %v773, %v1103
    %v1222 = vmul.f32 %v774, %v1105
    %v1223 = vmul.f32 %v775, %v1107
    %v1224 = vmul.f32 %v776, %v1109
    %v1225 = vmul.f32 %v777, %v1111
    %v1226 = vmul.f32 %v778, %v1113
    %v1227 = vmul.f32 %v779, %v1115
    %v1228 = vmul.f32 %v780, %v1117
    %v1229 = vmul.f32 %v781, %v1119
    %v1230 = vmul.f32 %v782, %v1121
    %v1231 = vmul.f32 %v783, %v1123
    %v1232 = vmul.f32 %v784, %v1125
    %v1233 = vmul.f32 %v785, %v1127
    %v1234 = vmul.f32 %v786, %v1129
    %v1235 = vmul.f32 %v787, %v1131
    %v1236 = vmul.f32 %v788, %v1133
    %v1237 = vmul.f32 %v789, %v1135
    %v1238 = vmul.f32 %v790, %v1137
    %v1239 = vmul.f32 %v791, %v1139
    %v1240 = vmul.f32 %v792, %v1141
    %v1241 = vmul.f32 %v793, %v1143
    %v1242 = vmul.f32 %v794, %v1145
    %v1243 = vmul.f32 %v795, %v1147
    %v1244 = vmul.f32 %v796, %v1149
    %v1245 = vmul.f32 %v797, %v1151
    %v1246 = vmul.f32 %v798, %v1153
    %v1247 = vmul.f32 %v799, %v1155
    %v1248 = vmul.f32 %v800, %v1157
    %v1249 = vmul.f32 %v801, %v1159
    %v1250 = vmul.f32 %v802, %v1161
    %v1251 = vmul.f32 %v803, %v1163
    %v1252 = vmul.f32 %v804, %v1165
    %v1253 = vmul.f32 %v805, %v1167
    %v1254 = vmul.f32 %v806, %v1169
    %v1255 = vmul.f32 %v807, %v1171
    %v1256 = vmul.f32 %v808, %v1173
    %v1257 = vmul.f32 %v809, %v1175
    %v1258 = vmul.f32 %v810, %v1177
    %v1259 = vmul.f32 %v811, %v1179
    %v1260 = vmul.f32 %v812, %v1181
    %v1261 = vmul.f32 %v813, %v1183
    %v1262 = vmul.f32 %v814, %v1185
    %v1263 = vmul.f32 %v815, %v1187
    %v1264 = vmul.f32 %v816, %v1189
    %v1265 = vmul.f32 %v817, %v1191
    %v1266 = vmul.f32 %v818, %v1193
    %v1267 = vmul.f32 %v819, %v1195
    %v1268 = vmul.f32 %v820, %v1197
    %v1269 = vmul.f32 %v821, %v1199
    %v1270 = vmul.f32 %v822, %v1201
    %v1271 = vmul.f32 %v823, %v1203
    %v1272 = vmul.f32 %v824, %v1205
    %v1273 = vmul.f32 %v825, %v1207
    %v1274 = vmul.f32 %v826, %v1209
    %v1275 = vmul.f32 %v827, %v1211
    %v1276 = vpack.c.bf16 %v1213, %v1212
    %v1277 = vpack.c.bf16 %v1215, %v1214
    %v1278 = vpack.c.bf16 %v1217, %v1216
    %v1279 = vpack.c.bf16 %v1219, %v1218
    %v1280 = vpack.c.bf16 %v1221, %v1220
    %v1281 = vpack.c.bf16 %v1223, %v1222
    %v1282 = vpack.c.bf16 %v1225, %v1224
    %v1283 = vpack.c.bf16 %v1227, %v1226
    %v1284 = vpack.c.bf16 %v1229, %v1228
    %v1285 = vpack.c.bf16 %v1231, %v1230
    %v1286 = vpack.c.bf16 %v1233, %v1232
    %v1287 = vpack.c.bf16 %v1235, %v1234
    %v1288 = vpack.c.bf16 %v1237, %v1236
    %v1289 = vpack.c.bf16 %v1239, %v1238
    %v1290 = vpack.c.bf16 %v1241, %v1240
    %v1291 = vpack.c.bf16 %v1243, %v1242
    %v1292 = vpack.c.bf16 %v1245, %v1244
    %v1293 = vpack.c.bf16 %v1247, %v1246
    %v1294 = vpack.c.bf16 %v1249, %v1248
    %v1295 = vpack.c.bf16 %v1251, %v1250
    %v1296 = vpack.c.bf16 %v1253, %v1252
    %v1297 = vpack.c.bf16 %v1255, %v1254
    %v1298 = vpack.c.bf16 %v1257, %v1256
    %v1299 = vpack.c.bf16 %v1259, %v1258
    %v1300 = vpack.c.bf16 %v1261, %v1260
    %v1301 = vpack.c.bf16 %v1263, %v1262
    %v1302 = vpack.c.bf16 %v1265, %v1264
    %v1303 = vpack.c.bf16 %v1267, %v1266
    %v1304 = vpack.c.bf16 %v1269, %v1268
    %v1305 = vpack.c.bf16 %v1271, %v1270
    %v1306 = vpack.c.bf16 %v1273, %v1272
    %v1307 = vpack.c.bf16 %v1275, %v1274
    %v1340 = vunpack.c.l.b16 %v1276
    %v1341 = vunpack.c.h.b16 %v1276
    %v1342 = vunpack.c.l.b16 %v1277
    %v1343 = vunpack.c.h.b16 %v1277
    %v1344 = vunpack.c.l.b16 %v1278
    %v1345 = vunpack.c.h.b16 %v1278
    %v1346 = vunpack.c.l.b16 %v1279
    %v1347 = vunpack.c.h.b16 %v1279
    %v1348 = vunpack.c.l.b16 %v1280
    %v1349 = vunpack.c.h.b16 %v1280
    %v1350 = vunpack.c.l.b16 %v1281
    %v1351 = vunpack.c.h.b16 %v1281
    %v1352 = vunpack.c.l.b16 %v1282
    %v1353 = vunpack.c.h.b16 %v1282
    %v1354 = vunpack.c.l.b16 %v1283
    %v1355 = vunpack.c.h.b16 %v1283
    %v1356 = vunpack.c.l.b16 %v1284
    %v1357 = vunpack.c.h.b16 %v1284
    %v1358 = vunpack.c.l.b16 %v1285
    %v1359 = vunpack.c.h.b16 %v1285
    %v1360 = vunpack.c.l.b16 %v1286
    %v1361 = vunpack.c.h.b16 %v1286
    %v1362 = vunpack.c.l.b16 %v1287
    %v1363 = vunpack.c.h.b16 %v1287
    %v1364 = vunpack.c.l.b16 %v1288
    %v1365 = vunpack.c.h.b16 %v1288
    %v1366 = vunpack.c.l.b16 %v1289
    %v1367 = vunpack.c.h.b16 %v1289
    %v1368 = vunpack.c.l.b16 %v1290
    %v1369 = vunpack.c.h.b16 %v1290
    %v1370 = vunpack.c.l.b16 %v1291
    %v1371 = vunpack.c.h.b16 %v1291
    %v1372 = vunpack.c.l.b16 %v1292
    %v1373 = vunpack.c.h.b16 %v1292
    %v1374 = vunpack.c.l.b16 %v1293
    %v1375 = vunpack.c.h.b16 %v1293
    %v1376 = vunpack.c.l.b16 %v1294
    %v1377 = vunpack.c.h.b16 %v1294
    %v1378 = vunpack.c.l.b16 %v1295
    %v1379 = vunpack.c.h.b16 %v1295
    %v1380 = vunpack.c.l.b16 %v1296
    %v1381 = vunpack.c.h.b16 %v1296
    %v1382 = vunpack.c.l.b16 %v1297
    %v1383 = vunpack.c.h.b16 %v1297
    %v1384 = vunpack.c.l.b16 %v1298
    %v1385 = vunpack.c.h.b16 %v1298
    %v1386 = vunpack.c.l.b16 %v1299
    %v1387 = vunpack.c.h.b16 %v1299
    %v1388 = vunpack.c.l.b16 %v1300
    %v1389 = vunpack.c.h.b16 %v1300
    %v1390 = vunpack.c.l.b16 %v1301
    %v1391 = vunpack.c.h.b16 %v1301
    %v1392 = vunpack.c.l.b16 %v1302
    %v1393 = vunpack.c.h.b16 %v1302
    %v1394 = vunpack.c.l.b16 %v1303
    %v1395 = vunpack.c.h.b16 %v1303
    %v1396 = vunpack.c.l.b16 %v1304
    %v1397 = vunpack.c.h.b16 %v1304
    %v1398 = vunpack.c.l.b16 %v1305
    %v1399 = vunpack.c.h.b16 %v1305
    %v1400 = vunpack.c.l.b16 %v1306
    %v1401 = vunpack.c.h.b16 %v1306
    %v1402 = vunpack.c.l.b16 %v1307
    %v1403 = vunpack.c.h.b16 %v1307
    %v1404 = vpack.c.b16 %v1340, %v1340
    %v1405 = vpack.c.b16 %v1341, %v1341
    %v1406 = vpack.c.b16 %v1342, %v1342
    %v1407 = vpack.c.b16 %v1343, %v1343
    %v1408 = vpack.c.b16 %v1344, %v1344
    %v1409 = vpack.c.b16 %v1345, %v1345
    %v1410 = vpack.c.b16 %v1346, %v1346
    %v1411 = vpack.c.b16 %v1347, %v1347
    %v1412 = vpack.c.b16 %v1348, %v1348
    %v1413 = vpack.c.b16 %v1349, %v1349
    %v1414 = vpack.c.b16 %v1350, %v1350
    %v1415 = vpack.c.b16 %v1351, %v1351
    %v1416 = vpack.c.b16 %v1352, %v1352
    %v1417 = vpack.c.b16 %v1353, %v1353
    %v1418 = vpack.c.b16 %v1354, %v1354
    %v1419 = vpack.c.b16 %v1355, %v1355
    %v1420 = vpack.c.b16 %v1356, %v1356
    %v1421 = vpack.c.b16 %v1357, %v1357
    %v1422 = vpack.c.b16 %v1358, %v1358
    %v1423 = vpack.c.b16 %v1359, %v1359
    %v1424 = vpack.c.b16 %v1360, %v1360
    %v1425 = vpack.c.b16 %v1361, %v1361
    %v1426 = vpack.c.b16 %v1362, %v1362
    %v1427 = vpack.c.b16 %v1363, %v1363
    %v1428 = vpack.c.b16 %v1364, %v1364
    %v1429 = vpack.c.b16 %v1365, %v1365
    %v1430 = vpack.c.b16 %v1366, %v1366
    %v1431 = vpack.c.b16 %v1367, %v1367
    %v1432 = vpack.c.b16 %v1368, %v1368
    %v1433 = vpack.c.b16 %v1369, %v1369
    %v1434 = vpack.c.b16 %v1370, %v1370
    %v1435 = vpack.c.b16 %v1371, %v1371
    %v1436 = vpack.c.b16 %v1372, %v1372
    %v1437 = vpack.c.b16 %v1373, %v1373
    %v1438 = vpack.c.b16 %v1374, %v1374
    %v1439 = vpack.c.b16 %v1375, %v1375
    %v1440 = vpack.c.b16 %v1376, %v1376
    %v1441 = vpack.c.b16 %v1377, %v1377
    %v1442 = vpack.c.b16 %v1378, %v1378
    %v1443 = vpack.c.b16 %v1379, %v1379
    %v1444 = vpack.c.b16 %v1380, %v1380
    %v1445 = vpack.c.b16 %v1381, %v1381
    %v1446 = vpack.c.b16 %v1382, %v1382
    %v1447 = vpack.c.b16 %v1383, %v1383
    %v1448 = vpack.c.b16 %v1384, %v1384
    %v1449 = vpack.c.b16 %v1385, %v1385
    %v1450 = vpack.c.b16 %v1386, %v1386
    %v1451 = vpack.c.b16 %v1387, %v1387
    %v1452 = vpack.c.b16 %v1388, %v1388
    %v1453 = vpack.c.b16 %v1389, %v1389
    %v1454 = vpack.c.b16 %v1390, %v1390
    %v1455 = vpack.c.b16 %v1391, %v1391
    %v1456 = vpack.c.b16 %v1392, %v1392
    %v1457 = vpack.c.b16 %v1393, %v1393
    %v1458 = vpack.c.b16 %v1394, %v1394
    %v1459 = vpack.c.b16 %v1395, %v1395
    %v1460 = vpack.c.b16 %v1396, %v1396
    %v1461 = vpack.c.b16 %v1397, %v1397
    %v1462 = vpack.c.b16 %v1398, %v1398
    %v1463 = vpack.c.b16 %v1399, %v1399
    %v1464 = vpack.c.b16 %v1400, %v1400
    %v1465 = vpack.c.b16 %v1401, %v1401
    %v1466 = vpack.c.b16 %v1402, %v1402
    %v1467 = vpack.c.b16 %v1403, %v1403
    %vm1532 = vcmask 27648
    %1533 = vst.msk [vmem:[#allocation10] sm:$0xf] %vm1532, %v1404
    %1534 = vst.msk [vmem:[#allocation10 + $0x4] sm:$0xf] %vm1532, %v1405
    %1535 = vst.msk [vmem:[#allocation10 + $0x8] sm:$0xf] %vm1532, %v1406
    %1536 = vst.msk [vmem:[#allocation10 + $0xc] sm:$0xf] %vm1532, %v1407
    %1537 = vst.msk [vmem:[#allocation10 + $0x10] sm:$0xf] %vm1532, %v1408
    %1538 = vst.msk [vmem:[#allocation10 + $0x14] sm:$0xf] %vm1532, %v1409
    %1539 = vst.msk [vmem:[#allocation10 + $0x18] sm:$0xf] %vm1532, %v1410
    %1540 = vst.msk [vmem:[#allocation10 + $0x1c] sm:$0xf] %vm1532, %v1411
    %1541 = vst.msk [vmem:[#allocation10 + $0x20] sm:$0xf] %vm1532, %v1412
    %1542 = vst.msk [vmem:[#allocation10 + $0x24] sm:$0xf] %vm1532, %v1413
    %1543 = vst.msk [vmem:[#allocation10 + $0x28] sm:$0xf] %vm1532, %v1414
    %1544 = vst.msk [vmem:[#allocation10 + $0x2c] sm:$0xf] %vm1532, %v1415
    %1545 = vst.msk [vmem:[#allocation10 + $0x30] sm:$0xf] %vm1532, %v1416
    %1546 = vst.msk [vmem:[#allocation10 + $0x34] sm:$0xf] %vm1532, %v1417
    %1547 = vst.msk [vmem:[#allocation10 + $0x38] sm:$0xf] %vm1532, %v1418
    %1548 = vst.msk [vmem:[#allocation10 + $0x3c] sm:$0xf] %vm1532, %v1419
    %1549 = vst.msk [vmem:[#allocation10 + $0x40] sm:$0xf] %vm1532, %v1420
    %1550 = vst.msk [vmem:[#allocation10 + $0x44] sm:$0xf] %vm1532, %v1421
    %1551 = vst.msk [vmem:[#allocation10 + $0x48] sm:$0xf] %vm1532, %v1422
    %1552 = vst.msk [vmem:[#allocation10 + $0x4c] sm:$0xf] %vm1532, %v1423
    %1553 = vst.msk [vmem:[#allocation10 + $0x50] sm:$0xf] %vm1532, %v1424
    %1554 = vst.msk [vmem:[#allocation10 + $0x54] sm:$0xf] %vm1532, %v1425
    %1555 = vst.msk [vmem:[#allocation10 + $0x58] sm:$0xf] %vm1532, %v1426
    %1556 = vst.msk [vmem:[#allocation10 + $0x5c] sm:$0xf] %vm1532, %v1427
    %1557 = vst.msk [vmem:[#allocation10 + $0x60] sm:$0xf] %vm1532, %v1428
    %1558 = vst.msk [vmem:[#allocation10 + $0x64] sm:$0xf] %vm1532, %v1429
    %1559 = vst.msk [vmem:[#allocation10 + $0x68] sm:$0xf] %vm1532, %v1430
    %1560 = vst.msk [vmem:[#allocation10 + $0x6c] sm:$0xf] %vm1532, %v1431
    %1561 = vst.msk [vmem:[#allocation10 + $0x70] sm:$0xf] %vm1532, %v1432
    %1562 = vst.msk [vmem:[#allocation10 + $0x74] sm:$0xf] %vm1532, %v1433
    %1563 = vst.msk [vmem:[#allocation10 + $0x78] sm:$0xf] %vm1532, %v1434
    %1564 = vst.msk [vmem:[#allocation10 + $0x7c] sm:$0xf] %vm1532, %v1435
    %1565 = vst.msk [vmem:[#allocation10 + $0x80] sm:$0xf] %vm1532, %v1436
    %1566 = vst.msk [vmem:[#allocation10 + $0x84] sm:$0xf] %vm1532, %v1437
    %1567 = vst.msk [vmem:[#allocation10 + $0x88] sm:$0xf] %vm1532, %v1438
    %1568 = vst.msk [vmem:[#allocation10 + $0x8c] sm:$0xf] %vm1532, %v1439
    %1569 = vst.msk [vmem:[#allocation10 + $0x90] sm:$0xf] %vm1532, %v1440
    %1570 = vst.msk [vmem:[#allocation10 + $0x94] sm:$0xf] %vm1532, %v1441
    %1571 = vst.msk [vmem:[#allocation10 + $0x98] sm:$0xf] %vm1532, %v1442
    %1572 = vst.msk [vmem:[#allocation10 + $0x9c] sm:$0xf] %vm1532, %v1443
    %1573 = vst.msk [vmem:[#allocation10 + $0xa0] sm:$0xf] %vm1532, %v1444
    %1574 = vst.msk [vmem:[#allocation10 + $0xa4] sm:$0xf] %vm1532, %v1445
    %1575 = vst.msk [vmem:[#allocation10 + $0xa8] sm:$0xf] %vm1532, %v1446
    %1576 = vst.msk [vmem:[#allocation10 + $0xac] sm:$0xf] %vm1532, %v1447
    %1577 = vst.msk [vmem:[#allocation10 + $0xb0] sm:$0xf] %vm1532, %v1448
    %1578 = vst.msk [vmem:[#allocation10 + $0xb4] sm:$0xf] %vm1532, %v1449
    %1579 = vst.msk [vmem:[#allocation10 + $0xb8] sm:$0xf] %vm1532, %v1450
    %1580 = vst.msk [vmem:[#allocation10 + $0xbc] sm:$0xf] %vm1532, %v1451
    %1581 = vst.msk [vmem:[#allocation10 + $0xc0] sm:$0xf] %vm1532, %v1452
    %1582 = vst.msk [vmem:[#allocation10 + $0xc4] sm:$0xf] %vm1532, %v1453
    %1583 = vst.msk [vmem:[#allocation10 + $0xc8] sm:$0xf] %vm1532, %v1454
    %1584 = vst.msk [vmem:[#allocation10 + $0xcc] sm:$0xf] %vm1532, %v1455
    %1585 = vst.msk [vmem:[#allocation10 + $0xd0] sm:$0xf] %vm1532, %v1456
    %1586 = vst.msk [vmem:[#allocation10 + $0xd4] sm:$0xf] %vm1532, %v1457
    %1587 = vst.msk [vmem:[#allocation10 + $0xd8] sm:$0xf] %vm1532, %v1458
    %1588 = vst.msk [vmem:[#allocation10 + $0xdc] sm:$0xf] %vm1532, %v1459
    %1589 = vst.msk [vmem:[#allocation10 + $0xe0] sm:$0xf] %vm1532, %v1460
    %1590 = vst.msk [vmem:[#allocation10 + $0xe4] sm:$0xf] %vm1532, %v1461
    %1591 = vst.msk [vmem:[#allocation10 + $0xe8] sm:$0xf] %vm1532, %v1462
    %1592 = vst.msk [vmem:[#allocation10 + $0xec] sm:$0xf] %vm1532, %v1463
    %1593 = vst.msk [vmem:[#allocation10 + $0xf0] sm:$0xf] %vm1532, %v1464
    %1594 = vst.msk [vmem:[#allocation10 + $0xf4] sm:$0xf] %vm1532, %v1465
    %1595 = vst.msk [vmem:[#allocation10 + $0xf8] sm:$0xf] %vm1532, %v1466
    %1596 = vst.msk [vmem:[#allocation10 + $0xfc] sm:$0xf] %vm1532, %v1467
    %1597 = vrot.lane.b32.xlu0 %v1404, 124
    %v1598 = vpop.permute.xlu0 %1597
    %1599 = vrot.lane.b32.xlu0 %v1405, 124
    %v1600 = vpop.permute.xlu0 %1599
    %1601 = vrot.lane.b32.xlu0 %v1406, 124
    %v1602 = vpop.permute.xlu0 %1601
    %1603 = vrot.lane.b32.xlu0 %v1407, 124
    %v1604 = vpop.permute.xlu0 %1603
    %1605 = vrot.lane.b32.xlu0 %v1408, 124
    %v1606 = vpop.permute.xlu0 %1605
    %1607 = vrot.lane.b32.xlu0 %v1409, 124
    %v1608 = vpop.permute.xlu0 %1607
    %1609 = vrot.lane.b32.xlu0 %v1410, 124
    %v1610 = vpop.permute.xlu0 %1609
    %1611 = vrot.lane.b32.xlu0 %v1411, 124
    %v1612 = vpop.permute.xlu0 %1611
    %1613 = vrot.lane.b32.xlu0 %v1412, 124
    %v1614 = vpop.permute.xlu0 %1613
    %1615 = vrot.lane.b32.xlu0 %v1413, 124
    %v1616 = vpop.permute.xlu0 %1615
    %1617 = vrot.lane.b32.xlu0 %v1414, 124
    %v1618 = vpop.permute.xlu0 %1617
    %1619 = vrot.lane.b32.xlu0 %v1415, 124
    %v1620 = vpop.permute.xlu0 %1619
    %1621 = vrot.lane.b32.xlu0 %v1416, 124
    %v1622 = vpop.permute.xlu0 %1621
    %1623 = vrot.lane.b32.xlu0 %v1417, 124
    %v1624 = vpop.permute.xlu0 %1623
    %1625 = vrot.lane.b32.xlu0 %v1418, 124
    %v1626 = vpop.permute.xlu0 %1625
    %1627 = vrot.lane.b32.xlu0 %v1419, 124
    %v1628 = vpop.permute.xlu0 %1627
    %1629 = vrot.lane.b32.xlu0 %v1420, 124
    %v1630 = vpop.permute.xlu0 %1629
    %1631 = vrot.lane.b32.xlu0 %v1421, 124
    %v1632 = vpop.permute.xlu0 %1631
    %1633 = vrot.lane.b32.xlu0 %v1422, 124
    %v1634 = vpop.permute.xlu0 %1633
    %1635 = vrot.lane.b32.xlu0 %v1423, 124
    %v1636 = vpop.permute.xlu0 %1635
    %1637 = vrot.lane.b32.xlu0 %v1424, 124
    %v1638 = vpop.permute.xlu0 %1637
    %1639 = vrot.lane.b32.xlu0 %v1425, 124
    %v1640 = vpop.permute.xlu0 %1639
    %1641 = vrot.lane.b32.xlu0 %v1426, 124
    %v1642 = vpop.permute.xlu0 %1641
    %1643 = vrot.lane.b32.xlu0 %v1427, 124
    %v1644 = vpop.permute.xlu0 %1643
    %1645 = vrot.lane.b32.xlu0 %v1428, 124
    %v1646 = vpop.permute.xlu0 %1645
    %1647 = vrot.lane.b32.xlu0 %v1429, 124
    %v1648 = vpop.permute.xlu0 %1647
    %1649 = vrot.lane.b32.xlu0 %v1430, 124
    %v1650 = vpop.permute.xlu0 %1649
    %1651 = vrot.lane.b32.xlu0 %v1431, 124
    %v1652 = vpop.permute.xlu0 %1651
    %1653 = vrot.lane.b32.xlu0 %v1432, 124
    %v1654 = vpop.permute.xlu0 %1653
    %1655 = vrot.lane.b32.xlu0 %v1433, 124
    %v1656 = vpop.permute.xlu0 %1655
    %1657 = vrot.lane.b32.xlu0 %v1434, 124
    %v1658 = vpop.permute.xlu0 %1657
    %1659 = vrot.lane.b32.xlu0 %v1435, 124
    %v1660 = vpop.permute.xlu0 %1659
    %1661 = vrot.lane.b32.xlu0 %v1436, 124
    %v1662 = vpop.permute.xlu0 %1661
    %1663 = vrot.lane.b32.xlu0 %v1437, 124
    %v1664 = vpop.permute.xlu0 %1663
    %1665 = vrot.lane.b32.xlu0 %v1438, 124
    %v1666 = vpop.permute.xlu0 %1665
    %1667 = vrot.lane.b32.xlu0 %v1439, 124
    %v1668 = vpop.permute.xlu0 %1667
    %1669 = vrot.lane.b32.xlu0 %v1440, 124
    %v1670 = vpop.permute.xlu0 %1669
    %1671 = vrot.lane.b32.xlu0 %v1441, 124
    %v1672 = vpop.permute.xlu0 %1671
    %1673 = vrot.lane.b32.xlu0 %v1442, 124
    %v1674 = vpop.permute.xlu0 %1673
    %1675 = vrot.lane.b32.xlu0 %v1443, 124
    %v1676 = vpop.permute.xlu0 %1675
    %1677 = vrot.lane.b32.xlu0 %v1444, 124
    %v1678 = vpop.permute.xlu0 %1677
    %1679 = vrot.lane.b32.xlu0 %v1445, 124
    %v1680 = vpop.permute.xlu0 %1679
    %1681 = vrot.lane.b32.xlu0 %v1446, 124
    %v1682 = vpop.permute.xlu0 %1681
    %1683 = vrot.lane.b32.xlu0 %v1447, 124
    %v1684 = vpop.permute.xlu0 %1683
    %1685 = vrot.lane.b32.xlu0 %v1448, 124
    %v1686 = vpop.permute.xlu0 %1685
    %1687 = vrot.lane.b32.xlu0 %v1449, 124
    %v1688 = vpop.permute.xlu0 %1687
    %1689 = vrot.lane.b32.xlu0 %v1450, 124
    %v1690 = vpop.permute.xlu0 %1689
    %1691 = vrot.lane.b32.xlu0 %v1451, 124
    %v1692 = vpop.permute.xlu0 %1691
    %1693 = vrot.lane.b32.xlu0 %v1452, 124
    %v1694 = vpop.permute.xlu0 %1693
    %1695 = vrot.lane.b32.xlu0 %v1453, 124
    %v1696 = vpop.permute.xlu0 %1695
    %1697 = vrot.lane.b32.xlu0 %v1454, 124
    %v1698 = vpop.permute.xlu0 %1697
    %1699 = vrot.lane.b32.xlu0 %v1455, 124
    %v1700 = vpop.permute.xlu0 %1699
    %1701 = vrot.lane.b32.xlu0 %v1456, 124
    %v1702 = vpop.permute.xlu0 %1701
    %1703 = vrot.lane.b32.xlu0 %v1457, 124
    %v1704 = vpop.permute.xlu0 %1703
    %1705 = vrot.lane.b32.xlu0 %v1458, 124
    %v1706 = vpop.permute.xlu0 %1705
    %1707 = vrot.lane.b32.xlu0 %v1459, 124
    %v1708 = vpop.permute.xlu0 %1707
    %1709 = vrot.lane.b32.xlu0 %v1460, 124
    %v1710 = vpop.permute.xlu0 %1709
    %1711 = vrot.lane.b32.xlu0 %v1461, 124
    %v1712 = vpop.permute.xlu0 %1711
    %1713 = vrot.lane.b32.xlu0 %v1462, 124
    %v1714 = vpop.permute.xlu0 %1713
    %1715 = vrot.lane.b32.xlu0 %v1463, 124
    %v1716 = vpop.permute.xlu0 %1715
    %1717 = vrot.lane.b32.xlu0 %v1464, 124
    %v1718 = vpop.permute.xlu0 %1717
    %1719 = vrot.lane.b32.xlu0 %v1465, 124
    %v1720 = vpop.permute.xlu0 %1719
    %1721 = vrot.lane.b32.xlu0 %v1466, 124
    %v1722 = vpop.permute.xlu0 %1721
    %1723 = vrot.lane.b32.xlu0 %v1467, 124
    %v1724 = vpop.permute.xlu0 %1723
    %1789 = vst.msk [vmem:[#allocation11] sm:$0xf] %vm1532, %v1598
    %1790 = vst.msk [vmem:[#allocation11 + $0x4] sm:$0xf] %vm1532, %v1600
    %1791 = vst.msk [vmem:[#allocation11 + $0x8] sm:$0xf] %vm1532, %v1602
    %1792 = vst.msk [vmem:[#allocation11 + $0xc] sm:$0xf] %vm1532, %v1604
    %1793 = vst.msk [vmem:[#allocation11 + $0x10] sm:$0xf] %vm1532, %v1606
    %1794 = vst.msk [vmem:[#allocation11 + $0x14] sm:$0xf] %vm1532, %v1608
    %1795 = vst.msk [vmem:[#allocation11 + $0x18] sm:$0xf] %vm1532, %v1610
    %1796 = vst.msk [vmem:[#allocation11 + $0x1c] sm:$0xf] %vm1532, %v1612
    %1797 = vst.msk [vmem:[#allocation11 + $0x20] sm:$0xf] %vm1532, %v1614
    %1798 = vst.msk [vmem:[#allocation11 + $0x24] sm:$0xf] %vm1532, %v1616
    %1799 = vst.msk [vmem:[#allocation11 + $0x28] sm:$0xf] %vm1532, %v1618
    %1800 = vst.msk [vmem:[#allocation11 + $0x2c] sm:$0xf] %vm1532, %v1620
    %1801 = vst.msk [vmem:[#allocation11 + $0x30] sm:$0xf] %vm1532, %v1622
    %1802 = vst.msk [vmem:[#allocation11 + $0x34] sm:$0xf] %vm1532, %v1624
    %1803 = vst.msk [vmem:[#allocation11 + $0x38] sm:$0xf] %vm1532, %v1626
    %1804 = vst.msk [vmem:[#allocation11 + $0x3c] sm:$0xf] %vm1532, %v1628
    %1805 = vst.msk [vmem:[#allocation11 + $0x40] sm:$0xf] %vm1532, %v1630
    %1806 = vst.msk [vmem:[#allocation11 + $0x44] sm:$0xf] %vm1532, %v1632
    %1807 = vst.msk [vmem:[#allocation11 + $0x48] sm:$0xf] %vm1532, %v1634
    %1808 = vst.msk [vmem:[#allocation11 + $0x4c] sm:$0xf] %vm1532, %v1636
    %1809 = vst.msk [vmem:[#allocation11 + $0x50] sm:$0xf] %vm1532, %v1638
    %1810 = vst.msk [vmem:[#allocation11 + $0x54] sm:$0xf] %vm1532, %v1640
    %1811 = vst.msk [vmem:[#allocation11 + $0x58] sm:$0xf] %vm1532, %v1642
    %1812 = vst.msk [vmem:[#allocation11 + $0x5c] sm:$0xf] %vm1532, %v1644
    %1813 = vst.msk [vmem:[#allocation11 + $0x60] sm:$0xf] %vm1532, %v1646
    %1814 = vst.msk [vmem:[#allocation11 + $0x64] sm:$0xf] %vm1532, %v1648
    %1815 = vst.msk [vmem:[#allocation11 + $0x68] sm:$0xf] %vm1532, %v1650
    %1816 = vst.msk [vmem:[#allocation11 + $0x6c] sm:$0xf] %vm1532, %v1652
    %1817 = vst.msk [vmem:[#allocation11 + $0x70] sm:$0xf] %vm1532, %v1654
    %1818 = vst.msk [vmem:[#allocation11 + $0x74] sm:$0xf] %vm1532, %v1656
    %1819 = vst.msk [vmem:[#allocation11 + $0x78] sm:$0xf] %vm1532, %v1658
    %1820 = vst.msk [vmem:[#allocation11 + $0x7c] sm:$0xf] %vm1532, %v1660
    %1821 = vst.msk [vmem:[#allocation11 + $0x80] sm:$0xf] %vm1532, %v1662
    %1822 = vst.msk [vmem:[#allocation11 + $0x84] sm:$0xf] %vm1532, %v1664
    %1823 = vst.msk [vmem:[#allocation11 + $0x88] sm:$0xf] %vm1532, %v1666
    %1824 = vst.msk [vmem:[#allocation11 + $0x8c] sm:$0xf] %vm1532, %v1668
    %1825 = vst.msk [vmem:[#allocation11 + $0x90] sm:$0xf] %vm1532, %v1670
    %1826 = vst.msk [vmem:[#allocation11 + $0x94] sm:$0xf] %vm1532, %v1672
    %1827 = vst.msk [vmem:[#allocation11 + $0x98] sm:$0xf] %vm1532, %v1674
    %1828 = vst.msk [vmem:[#allocation11 + $0x9c] sm:$0xf] %vm1532, %v1676
    %1829 = vst.msk [vmem:[#allocation11 + $0xa0] sm:$0xf] %vm1532, %v1678
    %1830 = vst.msk [vmem:[#allocation11 + $0xa4] sm:$0xf] %vm1532, %v1680
    %1831 = vst.msk [vmem:[#allocation11 + $0xa8] sm:$0xf] %vm1532, %v1682
    %1832 = vst.msk [vmem:[#allocation11 + $0xac] sm:$0xf] %vm1532, %v1684
    %1833 = vst.msk [vmem:[#allocation11 + $0xb0] sm:$0xf] %vm1532, %v1686
    %1834 = vst.msk [vmem:[#allocation11 + $0xb4] sm:$0xf] %vm1532, %v1688
    %1835 = vst.msk [vmem:[#allocation11 + $0xb8] sm:$0xf] %vm1532, %v1690
    %1836 = vst.msk [vmem:[#allocation11 + $0xbc] sm:$0xf] %vm1532, %v1692
    %1837 = vst.msk [vmem:[#allocation11 + $0xc0] sm:$0xf] %vm1532, %v1694
    %1838 = vst.msk [vmem:[#allocation11 + $0xc4] sm:$0xf] %vm1532, %v1696
    %1839 = vst.msk [vmem:[#allocation11 + $0xc8] sm:$0xf] %vm1532, %v1698
    %1840 = vst.msk [vmem:[#allocation11 + $0xcc] sm:$0xf] %vm1532, %v1700
    %1841 = vst.msk [vmem:[#allocation11 + $0xd0] sm:$0xf] %vm1532, %v1702
    %1842 = vst.msk [vmem:[#allocation11 + $0xd4] sm:$0xf] %vm1532, %v1704
    %1843 = vst.msk [vmem:[#allocation11 + $0xd8] sm:$0xf] %vm1532, %v1706
    %1844 = vst.msk [vmem:[#allocation11 + $0xdc] sm:$0xf] %vm1532, %v1708
    %1845 = vst.msk [vmem:[#allocation11 + $0xe0] sm:$0xf] %vm1532, %v1710
    %1846 = vst.msk [vmem:[#allocation11 + $0xe4] sm:$0xf] %vm1532, %v1712
    %1847 = vst.msk [vmem:[#allocation11 + $0xe8] sm:$0xf] %vm1532, %v1714
    %1848 = vst.msk [vmem:[#allocation11 + $0xec] sm:$0xf] %vm1532, %v1716
    %1849 = vst.msk [vmem:[#allocation11 + $0xf0] sm:$0xf] %vm1532, %v1718
    %1850 = vst.msk [vmem:[#allocation11 + $0xf4] sm:$0xf] %vm1532, %v1720
    %1851 = vst.msk [vmem:[#allocation11 + $0xf8] sm:$0xf] %vm1532, %v1722
    %1852 = vst.msk [vmem:[#allocation11 + $0xfc] sm:$0xf] %vm1532, %v1724
    // Predicated region
    $region34: #{cspsppf_forward.5} parent=1 // pred_check
      _
    $region35: #{cspsppf_forward.5} parent=1 // pred_check_branch
      %1854 = sbr.rel (0) target = $region37
    $region36: #{cspsppf_forward.5} parent=1 // pred_region
      %s1856 = ssub.s32 4096, 4096
      %1857 = vsyncadd [#allocation4], %s1856
      %s1858 = sshll.u32 [#allocation10], 4
      %s1859 = int_to_ptr.vmem [resolvable:$true] %s1858
      %1864 = dma.vmem_to_hbm [thread:$0]  %s1859, 4096, %s4, [#allocation4], 64, 64, 4
    $region37: #{cspsppf_forward.5} parent=1 // pred_fallthru
      _
    // Predicated region
    $region38: #{cspsppf_forward.5} parent=1 // pred_check
      _
    $region39: #{cspsppf_forward.5} parent=1 // pred_check_branch
      %1866 = sbr.rel (0) target = $region41
    $region40: #{cspsppf_forward.5} parent=1 // pred_region
      %s1868 = ssub.s32 4096, 4096
      %1869 = vsyncadd [#allocation12], %s1868
      %s1870 = sshll.u32 [#allocation11], 4
      %s1871 = int_to_ptr.vmem [resolvable:$true] %s1870
      %1876 = dma.vmem_to_hbm [thread:$0]  %s1871, 4096, %s5, [#allocation12], 64, 64, 4
    $region41: #{cspsppf_forward.5} parent=1 // pred_fallthru
      _
    // Predicated region
    $region42: #{cspsppf_forward.5} parent=1 // pred_check
      _
    $region43: #{cspsppf_forward.5} parent=1 // pred_check_branch
      %1878 = sbr.rel (0) target = $region45
    $region44: #{cspsppf_forward.5} parent=1 // pred_region
      %1879 = dma.done [#allocation4], 4096
    $region45: #{cspsppf_forward.5} parent=1 // pred_fallthru
      _
    // Predicated region
    $region46: #{cspsppf_forward.5} parent=1 // pred_check
      _
    $region47: #{cspsppf_forward.5} parent=1 // pred_check_branch
      %1881 = sbr.rel (0) target = $region49
    $region48: #{cspsppf_forward.5} parent=1 // pred_region
      %1882 = dma.done [#allocation12], 4096
    $region49: #{cspsppf_forward.5} parent=1 // pred_fallthru
      _
    %1883 = vsyncpa [#allocation3], 1
    %1884 = vsyncpa [#allocation6], 1
    %1885 = vsyncpa [#allocation9], 1
    %1886 = vsyncpa [#allocation4], 1
    %1887 = vsyncpa [#allocation12], 1

// kernel: cspsppf_forward.6
$region0: #{cspsppf_forward.6}
  #allocation0 [shape = 'u32[]', space=smem, size = 0x4, offset = 0x4, fixed_abs, tag = 'smem constant byte address 0x4 - core index']
  #allocation1 [shape = 'u32[144,128]{1,0:T(1,128)}', space=vmem, size = 0x12000, scoped, tag = 'internal scratch']
  %s0 = inlined_call_operand.hbm [shape: bf16[2,16,16,4], index: 0, kind: input, shape index: {}]
  %s1 = inlined_call_operand.hbm [shape: bf16[9,4,4], index: 1, kind: input, shape index: {}]
  %s2 = inlined_call_operand.hbm [shape: f32[1,4], index: 2, kind: input, shape index: {}]
  %s3 = inlined_call_operand.hbm [shape: f32[1,4], index: 3, kind: input, shape index: {}]
  %s4 = inlined_call_operand.hbm [shape: bf16[2,16,16,4], index: 4, kind: output, shape index: {}]
  %s5 = sld [smem:[#allocation0]]
  $region65: #{cspsppf_forward.6} parent=0
    _
  %s7 = ssub.s32 1, %s5
  %s8 = scalar_select 0, %s7, %s5
  $region1: #{cspsppf_forward.6} parent=0
    #allocation2 [shape = 'u8[131072]{0}', space=vmem, size = 0x20000, scoped, tag = 'input window, operand 0']
    #allocation3 [shape = 's32[2]{0}', space=sflag, size = 0x8, scoped, tag = 'scoped memory for cspsppf_forward.6']
    #allocation4 [shape = 's32[2]{0}', space=sflag, size = 0x8, scoped, tag = 'scoped memory for cspsppf_forward.6']
    #allocation5 [shape = 'u8[9216]{0}', space=vmem, size = 0x2400, scoped, tag = 'input window, operand 1, single buffered']
    #allocation6 [shape = 's32[1]{0}', space=sflag, size = 0x4, scoped, tag = 'scoped memory for cspsppf_forward.6']
    #allocation7 [shape = 'u8[512]{0}', space=vmem, size = 0x400, scoped, tag = 'input window, operand 2, single buffered']
    #allocation8 [shape = 'u8[512]{0}', space=vmem, size = 0x400, scoped, tag = 'input window, operand 3, single buffered']
    #allocation9 [shape = 's32[1]{0}', space=sflag, size = 0x4, scoped, tag = 'scoped memory for cspsppf_forward.6']
    #allocation10 [shape = 'u8[131072]{0}', space=vmem, size = 0x20000, scoped, tag = 'output window, operand 0']
    %9 = vsyncpa [#allocation3], 0
    %s10 = scalar_lea.sflag [#allocation3], 1
    %11 = vsyncpa %s10, 0
    %12 = vsyncpa [#allocation6], 0
    %13 = vsyncpa [#allocation9], 0
    %14 = vsyncpa [#allocation4], 0
    %s15 = scalar_lea.sflag [#allocation4], 1
    %16 = vsyncpa %s15, 0
    loop: start=0, step=1, limit=4
    $region2: #{cspsppf_forward.6} parent=1 // loop_pre_header
      _
    $region3: #{cspsppf_forward.6} parent=1 // loop_header
      %s18 = sphi 0, %s22
      %p19 = scmp.ge.s32.totalorder %s18, 4
      %s28 = sphi 0, %s30
      %s31 = sphi 0, %s28
      %s32 = sphi 0, %s31
      %s48 = sphi 0, %s32
      %s52 = sphi 0, %s52
      %s54 = sphi 0, %s52
      %s55 = sphi 0, %s54
      %s69 = sphi 0, %s55
      %s73 = sphi 0, %s73
      %s75 = sphi 0, %s73
      %s76 = sphi 0, %s75
      %s90 = sphi 0, %s76
      %s94 = sphi 0, %s94
      %s96 = sphi 0, %s94
      %s97 = sphi 0, %s96
      %s111 = sphi 0, %s97
      %s117 = sphi 0, %s119
      %s120 = sphi 0, %s117
      %s121 = sphi 0, %s120
      %s137 = sphi 0, %s121
    $region4: #{cspsppf_forward.6} parent=1 // loop_header_branch
      %21 = sbr.rel (%p19) target = $region8
    $region5: #{cspsppf_forward.6} parent=1 // loop_body
      %s23 = ssub.s32 %s18, 1
      %s24 = ssub.s32 %s18, 2
      %s25 = sadd.s32 %s18, 1
      %s26 = ssub.s32 %s18, %s25
      %p27 = scmp.eq.s32.totalorder %s26, 0
      %s29 = sadd.s32 %s28, 1
      %s30 = scalar_select %p27, %s28, %s29
      %p33 = pneg %p27
      %p34 = scmp.eq.s32.totalorder %s18, 1
      %p35 = por %p33, %p34
      %p36 = scmp.ne.s32.totalorder %s28, %s31
      %p37 = scmp.eq.s32.totalorder %s18, 0
      %p38 = por %p36, %p37
      %p39 = scmp.ne.s32.totalorder %s28, %s31
      %p40 = scmp.eq.s32.totalorder %s23, 1
      %p41 = por %p39, %p40
      %p42 = scmp.ne.s32.totalorder %s31, %s32
      %p43 = scmp.eq.s32.totalorder %s23, 0
      %p44 = por %p42, %p43
      %p45 = scmp.ne.s32.totalorder %s31, %s32
      %p46 = scmp.eq.s32.totalorder %s24, 1
      %p47 = por %p45, %p46
      %p49 = scmp.ne.s32.totalorder %s32, %s48
      %p50 = scmp.eq.s32.totalorder %s24, 0
      %p51 = por %p49, %p50
      %s53 = sadd.s32 %s52, 1
      %p56 = scmp.eq.s32.totalorder %s18, 1
      %p57 = scmp.ne.s32.totalorder %s52, %s54
      %p58 = scmp.eq.s32.totalorder %s18, 0
      %p59 = por %p57, %p58
      %p60 = scmp.ne.s32.totalorder %s52, %s54
      %p61 = scmp.eq.s32.totalorder %s23, 1
      %p62 = por %p60, %p61
      %p63 = scmp.ne.s32.totalorder %s54, %s55
      %p64 = scmp.eq.s32.totalorder %s23, 0
      %p65 = por %p63, %p64
      %p66 = scmp.ne.s32.totalorder %s54, %s55
      %p67 = scmp.eq.s32.totalorder %s24, 1
      %p68 = por %p66, %p67
      %p70 = scmp.ne.s32.totalorder %s55, %s69
      %p71 = scmp.eq.s32.totalorder %s24, 0
      %p72 = por %p70, %p71
      %s74 = sadd.s32 %s73, 1
      %p77 = scmp.eq.s32.totalorder %s18, 1
      %p78 = scmp.ne.s32.totalorder %s73, %s75
      %p79 = scmp.eq.s32.totalorder %s18, 0
      %p80 = por %p78, %p79
      %p81 = scmp.ne.s32.totalorder %s73, %s75
      %p82 = scmp.eq.s32.totalorder %s23, 1
      %p83 = por %p81, %p82
      %p84 = scmp.ne.s32.totalorder %s75, %s76
      %p85 = scmp.eq.s32.totalorder %s23, 0
      %p86 = por %p84, %p85
      %p87 = scmp.ne.s32.totalorder %s75, %s76
      %p88 = scmp.eq.s32.totalorder %s24, 1
      %p89 = por %p87, %p88
      %p91 = scmp.ne.s32.totalorder %s76, %s90
      %p92 = scmp.eq.s32.totalorder %s24, 0
      %p93 = por %p91, %p92
      %s95 = sadd.s32 %s94, 1
      %p98 = scmp.eq.s32.totalorder %s18, 1
      %p99 = scmp.ne.s32.totalorder %s94, %s96
      %p100 = scmp.eq.s32.totalorder %s18, 0
      %p101 = por %p99, %p100
      %p102 = scmp.ne.s32.totalorder %s94, %s96
      %p103 = scmp.eq.s32.totalorder %s23, 1
      %p104 = por %p102, %p103
      %p105 = scmp.ne.s32.totalorder %s96, %s97
      %p106 = scmp.eq.s32.totalorder %s23, 0
      %p107 = por %p105, %p106
      %p108 = scmp.ne.s32.totalorder %s96, %s97
      %p109 = scmp.eq.s32.totalorder %s24, 1
      %p110 = por %p108, %p109
      %p112 = scmp.ne.s32.totalorder %s97, %s111
      %p113 = scmp.eq.s32.totalorder %s24, 0
      %p114 = por %p112, %p113
      %s115 = ssub.s32 %s18, %s25
      %p116 = scmp.eq.s32.totalorder %s115, 0
      %s118 = sadd.s32 %s117, 1
      %s119 = scalar_select %p116, %s117, %s118
      %p122 = pneg %p116
      %p123 = scmp.eq.s32.totalorder %s18, 1
      %p124 = por %p122, %p123
      %p125 = scmp.ne.s32.totalorder %s117, %s120
      %p126 = scmp.eq.s32.totalorder %s18, 0
      %p127 = por %p125, %p126
      %p128 = scmp.ne.s32.totalorder %s117, %s120
      %p129 = scmp.eq.s32.totalorder %s23, 1
      %p130 = por %p128, %p129
      %p131 = scmp.ne.s32.totalorder %s120, %s121
      %p132 = scmp.eq.s32.totalorder %s23, 0
      %p133 = por %p131, %p132
      %p134 = scmp.ne.s32.totalorder %s120, %s121
      %p135 = scmp.eq.s32.totalorder %s24, 1
      %p136 = por %p134, %p135
      %p138 = scmp.ne.s32.totalorder %s121, %s137
      %p139 = scmp.eq.s32.totalorder %s24, 0
      %p140 = por %p138, %p139
      %p141 = scmp.le.s32.totalorder 1, %s18
      %p142 = scmp.lt.s32.totalorder %s18, 3
      %p143 = pnand %p141, %p142
      %p144 = pneg %p143
      // Predicated region
      $region9: #{cspsppf_forward.6} parent=5 // pred_check
        _
      $region10: #{cspsppf_forward.6} parent=5 // pred_check_branch
        %146 = sbr.rel (%p143) target = $region12
      $region11: #{cspsppf_forward.6} parent=5 // pred_region
        %s147 = ssub.s32 %s18, 1
        // Predicated region
        $region13: #{cspsppf_forward.6} parent=11 // pred_check
          %p148 = pneg %p65
        $region14: #{cspsppf_forward.6} parent=11 // pred_check_branch
          %150 = sbr.rel (%p148) target = $region16
        $region15: #{cspsppf_forward.6} parent=11 // pred_region
          %s152 = ssub.s32 288, 288
          %153 = vsyncadd [#allocation6], %s152
          %s154 = sshll.u32 [#allocation5], 4
          %s155 = int_to_ptr.vmem [resolvable:$true] %s154
          %160 = dma.hbm_to_vmem [thread:$0]  %s1, 288, %s155, [#allocation6], 32, 32, 2
        $region16: #{cspsppf_forward.6} parent=11 // pred_fallthru
          _
        // Predicated region
        $region17: #{cspsppf_forward.6} parent=11 // pred_check
          %p161 = pneg %p86
        $region18: #{cspsppf_forward.6} parent=11 // pred_check_branch
          %163 = sbr.rel (%p161) target = $region20
        $region19: #{cspsppf_forward.6} parent=11 // pred_region
          %s165 = ssub.s32 16, 16
          %166 = vsyncadd [#allocation6], %s165
          %s168 = sshll.u32 [#allocation7], 4
          %s169 = int_to_ptr.vmem [resolvable:$true] %s168
          %171 = dma.hbm_to_vmem [thread:$0]  %s2, 16, %s169, [#allocation6]
        $region20: #{cspsppf_forward.6} parent=11 // pred_fallthru
          _
        // Predicated region
        $region21: #{cspsppf_forward.6} parent=11 // pred_check
          %p172 = pneg %p107
        $region22: #{cspsppf_forward.6} parent=11 // pred_check_branch
          %174 = sbr.rel (%p172) target = $region24
        $region23: #{cspsppf_forward.6} parent=11 // pred_region
          %s176 = ssub.s32 16, 16
          %177 = vsyncadd [#allocation9], %s176
          %s179 = sshll.u32 [#allocation8], 4
          %s180 = int_to_ptr.vmem [resolvable:$true] %s179
          %182 = dma.hbm_to_vmem [thread:$0]  %s3, 16, %s180, [#allocation9]
        $region24: #{cspsppf_forward.6} parent=11 // pred_fallthru
          _
      $region12: #{cspsppf_forward.6} parent=5 // pred_fallthru
        _
      %p183 = scmp.lt.s32.totalorder %s18, 2
      // Predicated region
      $region25: #{cspsppf_forward.6} parent=5 // pred_check
        %p184 = pneg %p183
      $region26: #{cspsppf_forward.6} parent=5 // pred_check_branch
        %186 = sbr.rel (%p184) target = $region28
      $region27: #{cspsppf_forward.6} parent=5 // pred_region
        // Predicated region
        $region29: #{cspsppf_forward.6} parent=27 // pred_check
          %p187 = pneg %p38
        $region30: #{cspsppf_forward.6} parent=27 // pred_check_branch
          %189 = sbr.rel (%p187) target = $region32
        $region31: #{cspsppf_forward.6} parent=27 // pred_region
          %s190 = sand.u32 %s28, 1
          %s191 = scalar_lea.sflag [#allocation3], %s190
          %s192 = sand.u32 %s28, 1
          %s193 = smul.addr %s192, 128
          %s194 = scalar_lea.vmem [#allocation2], %s193
          %s196 = ssub.s32 2048, 2048
          %197 = vsyncadd %s191, %s196
          %s198 = smul.addr %s18, 32
          %s199 = smul.addr %s198, 64
          %s200 = scalar_lea.hbm %s0, %s199
          %s201 = sshll.u32 %s194, 4
          %s202 = int_to_ptr.vmem [resolvable:$true] %s201
          %207 = dma.hbm_to_vmem [thread:$0]  %s200, 2048, %s202, %s191, 64, 64, 4
        $region32: #{cspsppf_forward.6} parent=27 // pred_fallthru
          _
      $region28: #{cspsppf_forward.6} parent=5 // pred_fallthru
        _
      %p208 = scmp.le.s32.totalorder 1, %s18
      %p209 = scmp.lt.s32.totalorder %s18, 3
      %p210 = pnand %p208, %p209
      %p211 = pneg %p210
      // Predicated region
      $region33: #{cspsppf_forward.6} parent=5 // pred_check
        _
      $region34: #{cspsppf_forward.6} parent=5 // pred_check_branch
        %213 = sbr.rel (%p210) target = $region36
      $region35: #{cspsppf_forward.6} parent=5 // pred_region
        %s214 = ssub.s32 %s18, 1
        %s215 = sand.u32 %s31, 1
        %s216 = scalar_lea.sflag [#allocation3], %s215
        %s217 = sand.u32 %s31, 1
        %s218 = smul.addr %s217, 128
        %s219 = scalar_lea.vmem [#allocation2], %s218
        // Predicated region
        $region37: #{cspsppf_forward.6} parent=35 // pred_check
          %p220 = pneg %p44
        $region38: #{cspsppf_forward.6} parent=35 // pred_check_branch
          %222 = sbr.rel (%p220) target = $region40
        $region39: #{cspsppf_forward.6} parent=35 // pred_region
          %223 = dma.done %s216, 2048
        $region40: #{cspsppf_forward.6} parent=35 // pred_fallthru
          _
        // Predicated region
        $region41: #{cspsppf_forward.6} parent=35 // pred_check
          %p224 = pneg %p65
        $region42: #{cspsppf_forward.6} parent=35 // pred_check_branch
          %226 = sbr.rel (%p224) target = $region44
        $region43: #{cspsppf_forward.6} parent=35 // pred_region
          %227 = dma.done [#allocation6], 288
        $region44: #{cspsppf_forward.6} parent=35 // pred_fallthru
          _
        // Predicated region
        $region45: #{cspsppf_forward.6} parent=35 // pred_check
          %p228 = pneg %p86
        $region46: #{cspsppf_forward.6} parent=35 // pred_check_branch
          %230 = sbr.rel (%p228) target = $region48
        $region47: #{cspsppf_forward.6} parent=35 // pred_region
          %231 = dma.done [#allocation6], 16
        $region48: #{cspsppf_forward.6} parent=35 // pred_fallthru
          _
        // Predicated region
        $region49: #{cspsppf_forward.6} parent=35 // pred_check
          %p232 = pneg %p107
        $region50: #{cspsppf_forward.6} parent=35 // pred_check_branch
          %234 = sbr.rel (%p232) target = $region52
        $region51: #{cspsppf_forward.6} parent=35 // pred_region
          %235 = dma.done [#allocation9], 16
        $region52: #{cspsppf_forward.6} parent=35 // pred_fallthru
          _
        %s236 = sand.u32 %s31, 1
        %s237 = scalar_lea.sflag [#allocation3], %s236
        %s238 = sand.u32 %s31, 1
        %s239 = smul.addr %s238, 128
        %s240 = scalar_lea.vmem [#allocation2], %s239
        %p241 = pneg %p44
        %p242 = pneg %p41
        %p243 = pneg %p65
        %p244 = pneg %p62
        %p245 = pneg %p86
        %p246 = pneg %p83
        %p247 = pneg %p107
        %p248 = pneg %p104
        %p249 = pneg %p133
        %p250 = pneg %p130
        %s251 = sand.u32 %s120, 1
        %s252 = scalar_lea.sflag [#allocation4], %s251
        %s253 = sand.u32 %s120, 1
        %s254 = smul.addr %s253, 128
        %s255 = scalar_lea.vmem [#allocation10], %s254
        %v257 = vld [vmem:[%s219] sm:$0xf]
        %v258 = vld [vmem:[%s219 + $0x4] sm:$0xf]
        %v259 = vld [vmem:[%s219 + $0x8] sm:$0xf]
        %v260 = vld [vmem:[%s219 + $0xc] sm:$0xf]
        %v261 = vld [vmem:[%s219 + $0x10] sm:$0xf]
        %v262 = vld [vmem:[%s219 + $0x14] sm:$0xf]
        %v263 = vld [vmem:[%s219 + $0x18] sm:$0xf]
        %v264 = vld [vmem:[%s219 + $0x1c] sm:$0xf]
        %v265 = vld [vmem:[%s219 + $0x20] sm:$0xf]
        %v266 = vld [vmem:[%s219 + $0x24] sm:$0xf]
        %v267 = vld [vmem:[%s219 + $0x28] sm:$0xf]
        %v268 = vld [vmem:[%s219 + $0x2c] sm:$0xf]
        %v269 = vld [vmem:[%s219 + $0x30] sm:$0xf]
        %v270 = vld [vmem:[%s219 + $0x34] sm:$0xf]
        %v271 = vld [vmem:[%s219 + $0x38] sm:$0xf]
        %v272 = vld [vmem:[%s219 + $0x3c] sm:$0xf]
        %v273 = vld [vmem:[%s219 + $0x40] sm:$0xf]
        %v274 = vld [vmem:[%s219 + $0x44] sm:$0xf]
        %v275 = vld [vmem:[%s219 + $0x48] sm:$0xf]
        %v276 = vld [vmem:[%s219 + $0x4c] sm:$0xf]
        %v277 = vld [vmem:[%s219 + $0x50] sm:$0xf]
        %v278 = vld [vmem:[%s219 + $0x54] sm:$0xf]
        %v279 = vld [vmem:[%s219 + $0x58] sm:$0xf]
        %v280 = vld [vmem:[%s219 + $0x5c] sm:$0xf]
        %v281 = vld [vmem:[%s219 + $0x60] sm:$0xf]
        %v282 = vld [vmem:[%s219 + $0x64] sm:$0xf]
        %v283 = vld [vmem:[%s219 + $0x68] sm:$0xf]
        %v284 = vld [vmem:[%s219 + $0x6c] sm:$0xf]
        %v285 = vld [vmem:[%s219 + $0x70] sm:$0xf]
        %v286 = vld [vmem:[%s219 + $0x74] sm:$0xf]
        %v287 = vld [vmem:[%s219 + $0x78] sm:$0xf]
        %v288 = vld [vmem:[%s219 + $0x7c] sm:$0xf]
        %v289 = vunpack.c.l.bf16 %v257
        %v290 = vunpack.c.l.bf16 %v258
        %v291 = vunpack.c.l.bf16 %v259
        %v292 = vunpack.c.l.bf16 %v260
        %v293 = vunpack.c.l.bf16 %v261
        %v294 = vunpack.c.l.bf16 %v262
        %v295 = vunpack.c.l.bf16 %v263
        %v296 = vunpack.c.l.bf16 %v264
        %v297 = vunpack.c.l.bf16 %v265
        %v298 = vunpack.c.l.bf16 %v266
        %v299 = vunpack.c.l.bf16 %v267
        %v300 = vunpack.c.l.bf16 %v268
        %v301 = vunpack.c.l.bf16 %v269
        %v302 = vunpack.c.l.bf16 %v270
        %v303 = vunpack.c.l.bf16 %v271
        %v304 = vunpack.c.l.bf16 %v272
        %v305 = vunpack.c.l.bf16 %v273
        %v306 = vunpack.c.l.bf16 %v274
        %v307 = vunpack.c.l.bf16 %v275
        %v308 = vunpack.c.l.bf16 %v276
        %v309 = vunpack.c.l.bf16 %v277
        %v310 = vunpack.c.l.bf16 %v278
        %v311 = vunpack.c.l.bf16 %v279
        %v312 = vunpack.c.l.bf16 %v280
        %v313 = vunpack.c.l.bf16 %v281
        %v314 = vunpack.c.l.bf16 %v282
        %v315 = vunpack.c.l.bf16 %v283
        %v316 = vunpack.c.l.bf16 %v284
        %v317 = vunpack.c.l.bf16 %v285
        %v318 = vunpack.c.l.bf16 %v286
        %v319 = vunpack.c.l.bf16 %v287
        %v320 = vunpack.c.l.bf16 %v288
        %vm353 = vcmask 1040384
        %v354 = vrot.slane %v289, 7
        %v355 = vrot.slane %v290, 7
        %v356 = vsel %vm353, %v354, %v355
        %v357 = vrot.slane %v291, 7
        %v358 = vrot.slane %v292, 7
        %v359 = vsel %vm353, %v357, %v358
        %v360 = vrot.slane %v293, 7
        %v361 = vrot.slane %v294, 7
        %v362 = vsel %vm353, %v360, %v361
        %v363 = vrot.slane %v295, 7
        %v364 = vrot.slane %v296, 7
        %v365 = vsel %vm353, %v363, %v364
        %v366 = vrot.slane %v297, 7
        %v367 = vrot.slane %v298, 7
        %v368 = vsel %vm353, %v366, %v367
        %v369 = vrot.slane %v299, 7
        %v370 = vrot.slane %v300, 7
        %v371 = vsel %vm353, %v369, %v370
        %v372 = vrot.slane %v301, 7
        %v373 = vrot.slane %v302, 7
        %v374 = vsel %vm353, %v372, %v373
        %v375 = vrot.slane %v303, 7
        %v376 = vrot.slane %v304, 7
        %v377 = vsel %vm353, %v375, %v376
        %v378 = vrot.slane %v305, 7
        %v379 = vrot.slane %v306, 7
        %v380 = vsel %vm353, %v378, %v379
        %v381 = vrot.slane %v307, 7
        %v382 = vrot.slane %v308, 7
        %v383 = vsel %vm353, %v381, %v382
        %v384 = vrot.slane %v309, 7
        %v385 = vrot.slane %v310, 7
        %v386 = vsel %vm353, %v384, %v385
        %v387 = vrot.slane %v311, 7
        %v388 = vrot.slane %v312, 7
        %v389 = vsel %vm353, %v387, %v388
        %v390 = vrot.slane %v313, 7
        %v391 = vrot.slane %v314, 7
        %v392 = vsel %vm353, %v390, %v391
        %v393 = vrot.slane %v315, 7
        %v394 = vrot.slane %v316, 7
        %v395 = vsel %vm353, %v393, %v394
        %v396 = vrot.slane %v317, 7
        %v397 = vrot.slane %v318, 7
        %v398 = vsel %vm353, %v396, %v397
        %v399 = vrot.slane %v319, 7
        %v400 = vrot.slane %v320, 7
        %v401 = vsel %vm353, %v399, %v400
        %v450 = vsel %vm353, 0.0, %v354
        %v451 = vsel %vm353, 0.0, %v357
        %v452 = vsel %vm353, 0.0, %v360
        %v453 = vsel %vm353, 0.0, %v363
        %v454 = vsel %vm353, 0.0, %v366
        %v455 = vsel %vm353, 0.0, %v369
        %v456 = vsel %vm353, 0.0, %v372
        %v457 = vsel %vm353, 0.0, %v375
        %v458 = vsel %vm353, 0.0, %v378
        %v459 = vsel %vm353, 0.0, %v381
        %v460 = vsel %vm353, 0.0, %v384
        %v461 = vsel %vm353, 0.0, %v387
        %v462 = vsel %vm353, 0.0, %v390
        %v463 = vsel %vm353, 0.0, %v393
        %v464 = vsel %vm353, 0.0, %v396
        %v465 = vsel %vm353, 0.0, %v399
        %v466 = vsel %vm353, %v355, 0.0
        %v467 = vsel %vm353, %v358, 0.0
        %v468 = vsel %vm353, %v361, 0.0
        %v469 = vsel %vm353, %v364, 0.0
        %v470 = vsel %vm353, %v367, 0.0
        %v471 = vsel %vm353, %v370, 0.0
        %v472 = vsel %vm353, %v373, 0.0
        %v473 = vsel %vm353, %v376, 0.0
        %v474 = vsel %vm353, %v379, 0.0
        %v475 = vsel %vm353, %v382, 0.0
        %v476 = vsel %vm353, %v385, 0.0
        %v477 = vsel %vm353, %v388, 0.0
        %v478 = vsel %vm353, %v391, 0.0
        %v479 = vsel %vm353, %v394, 0.0
        %v480 = vsel %vm353, %v397, 0.0
        %v481 = vsel %vm353, %v400, 0.0
        %v482 = vpack.c.bf16 0.0, 0.0
        %v483 = vpack.c.bf16 %v356, %v450
        %v484 = vpack.c.bf16 %v359, %v451
        %v485 = vpack.c.bf16 %v362, %v452
        %v486 = vpack.c.bf16 %v365, %v453
        %v487 = vpack.c.bf16 %v368, %v454
        %v488 = vpack.c.bf16 %v371, %v455
        %v489 = vpack.c.bf16 %v374, %v456
        %v490 = vpack.c.bf16 %v377, %v457
        %v491 = vpack.c.bf16 %v380, %v458
        %v492 = vpack.c.bf16 %v383, %v459
        %v493 = vpack.c.bf16 %v386, %v460
        %v494 = vpack.c.bf16 %v389, %v461
        %v495 = vpack.c.bf16 %v392, %v462
        %v496 = vpack.c.bf16 %v395, %v463
        %v497 = vpack.c.bf16 %v398, %v464
        %v498 = vld [vmem:[#allocation5] sm:$0x3]
        %vm530 = vcmask 1046528
        %v531 = vrot.slane 0.0, 1
        %v532 = vsel %vm530, %v531, %v531
        %v533 = vrot.slane %v450, 1
        %v534 = vrot.slane %v356, 1
        %v535 = vsel %vm530, %v533, %v534
        %v536 = vrot.slane %v466, 1
        %v537 = vsel %vm530, %v534, %v536
        %v538 = vrot.slane %v451, 1
        %v539 = vrot.slane %v359, 1
        %v540 = vsel %vm530, %v538, %v539
        %v541 = vrot.slane %v467, 1
        %v542 = vsel %vm530, %v539, %v541
        %v543 = vrot.slane %v452, 1
        %v544 = vrot.slane %v362, 1
        %v545 = vsel %vm530, %v543, %v544
        %v546 = vrot.slane %v468, 1
        %v547 = vsel %vm530, %v544, %v546
        %v548 = vrot.slane %v453, 1
        %v549 = vrot.slane %v365, 1
        %v550 = vsel %vm530, %v548, %v549
        %v551 = vrot.slane %v469, 1
        %v552 = vsel %vm530, %v549, %v551
        %v553 = vrot.slane %v454, 1
        %v554 = vrot.slane %v368, 1
        %v555 = vsel %vm530, %v553, %v554
        %v556 = vrot.slane %v470, 1
        %v557 = vsel %vm530, %v554, %v556
        %v558 = vrot.slane %v455, 1
        %v559 = vrot.slane %v371, 1
        %v560 = vsel %vm530, %v558, %v559
        %v561 = vrot.slane %v471, 1
        %v562 = vsel %vm530, %v559, %v561
        %v563 = vrot.slane %v456, 1
        %v564 = vrot.slane %v374, 1
        %v565 = vsel %vm530, %v563, %v564
        %v566 = vrot.slane %v472, 1
        %v567 = vsel %vm530, %v564, %v566
        %v568 = vrot.slane %v457, 1
        %v569 = vrot.slane %v377, 1
        %v570 = vsel %vm530, %v568, %v569
        %v571 = vrot.slane %v473, 1
        %v572 = vsel %vm530, %v569, %v571
        %v573 = vrot.slane %v458, 1
        %v574 = vrot.slane %v380, 1
        %v575 = vsel %vm530, %v573, %v574
        %v576 = vrot.slane %v474, 1
        %v577 = vsel %vm530, %v574, %v576
        %v578 = vrot.slane %v459, 1
        %v579 = vrot.slane %v383, 1
        %v580 = vsel %vm530, %v578, %v579
        %v581 = vrot.slane %v475, 1
        %v582 = vsel %vm530, %v579, %v581
        %v583 = vrot.slane %v460, 1
        %v584 = vrot.slane %v386, 1
        %v585 = vsel %vm530, %v583, %v584
        %v586 = vrot.slane %v476, 1
        %v587 = vsel %vm530, %v584, %v586
        %v588 = vrot.slane %v461, 1
        %v589 = vrot.slane %v389, 1
        %v590 = vsel %vm530, %v588, %v589
        %v591 = vrot.slane %v477, 1
        %v592 = vsel %vm530, %v589, %v591
        %v593 = vrot.slane %v462, 1
        %v594 = vrot.slane %v392, 1
        %v595 = vsel %vm530, %v593, %v594
        %v596 = vrot.slane %v478, 1
        %v597 = vsel %vm530, %v594, %v596
        %v598 = vrot.slane %v463, 1
        %v599 = vrot.slane %v395, 1
        %v600 = vsel %vm530, %v598, %v599
        %v601 = vrot.slane %v479, 1
        %v602 = vsel %vm530, %v599, %v601
        %v603 = vrot.slane %v464, 1
        %v604 = vrot.slane %v398, 1
        %v605 = vsel %vm530, %v603, %v604
        %v606 = vrot.slane %v480, 1
        %v607 = vsel %vm530, %v604, %v606
        %v639 = vpack.c.bf16 %v532, %v532
        %v640 = vpack.c.bf16 %v537, %v535
        %v641 = vpack.c.bf16 %v542, %v540
        %v642 = vpack.c.bf16 %v547, %v545
        %v643 = vpack.c.bf16 %v552, %v550
        %v644 = vpack.c.bf16 %v557, %v555
        %v645 = vpack.c.bf16 %v562, %v560
        %v646 = vpack.c.bf16 %v567, %v565
        %v647 = vpack.c.bf16 %v572, %v570
        %v648 = vpack.c.bf16 %v577, %v575
        %v649 = vpack.c.bf16 %v582, %v580
        %v650 = vpack.c.bf16 %v587, %v585
        %v651 = vpack.c.bf16 %v592, %v590
        %v652 = vpack.c.bf16 %v597, %v595
        %v653 = vpack.c.bf16 %v602, %v600
        %v654 = vpack.c.bf16 %v607, %v605
        %s655 = scalar_lea.vmem [#allocation5], 2
        %v656 = vld [vmem:[%s655] sm:$0x3]
        %vm657 = vcmask 31744
        %v659 = vsel %vm657, %v639, 0
        %v662 = vsel %vm657, %v640, 0
        %v665 = vsel %vm657, %v641, 0
        %v668 = vsel %vm657, %v642, 0
        %v671 = vsel %vm657, %v643, 0
        %v674 = vsel %vm657, %v644, 0
        %v677 = vsel %vm657, %v645, 0
        %v680 = vsel %vm657, %v646, 0
        %v683 = vsel %vm657, %v647, 0
        %v686 = vsel %vm657, %v648, 0
        %v689 = vsel %vm657, %v649, 0
        %v692 = vsel %vm657, %v650, 0
        %v695 = vsel %vm657, %v651, 0
        %v698 = vsel %vm657, %v652, 0
        %v701 = vsel %vm657, %v653, 0
        %v704 = vsel %vm657, %v654, 0
        %vm706 = vcmask 1041408
        %v708 = vsel %vm706, %v656, 0
        %710 = vmatprep.subr.bf16.mxu0 0
        %711 = vmatpush1.bf16.msra.mxu0 %v708
        %712 = vmatprep.subr.bf16.mxu0 0
        %713 = vmatpush1.bf16.msra.mxu0 0
        %714 = vmatprep.subr.bf16.mxu0 0
        %715 = vmatpush1.bf16.msra.mxu0 0
        %716 = vmatprep.subr.bf16.mxu0 0
        %717 = vmatpush1.bf16.msra.mxu0 0
        %718 = vmatprep.subr.bf16.mxu0 0
        %719 = vmatpush1.bf16.msra.mxu0 0
        %720 = vmatprep.subr.bf16.mxu0 0
        %721 = vmatpush1.bf16.msra.mxu0 0
        %722 = vmatprep.subr.bf16.mxu0 0
        %723 = vmatpush1.bf16.msra.mxu0 0
        %724 = vmatprep.subr.bf16.mxu0 0
        %725 = vmatpush1.bf16.msra.mxu0 0
        %726 = vmatprep.subr.bf16.mxu0 0
        %727 = vmatpush1.bf16.msra.mxu0 0
        %728 = vmatprep.subr.bf16.mxu0 0
        %729 = vmatpush1.bf16.msra.mxu0 0
        %730 = vmatprep.subr.bf16.mxu0 0
        %731 = vmatpush1.bf16.msra.mxu0 0
        %732 = vmatprep.subr.bf16.mxu0 0
        %733 = vmatpush1.bf16.msra.mxu0 0
        %734 = vmatprep.subr.bf16.mxu0 0
        %735 = vmatpush1.bf16.msra.mxu0 0
        %736 = vmatprep.subr.bf16.mxu0 0
        %737 = vmatpush1.bf16.msra.mxu0 0
        %738 = vmatprep.subr.bf16.mxu0 0
        %739 = vmatpush1.bf16.msra.mxu0 0
        %740 = vmatprep.subr.bf16.mxu0 0
        %741 = vmatpush1.bf16.msra.mxu0 0
        %742 = vmatprep.mubr.bf16.mxu0 0
        %743 = vmatmul.mubr.bf16.gmra.mrb[0].mxu0 %v659
        %v744 = vpop.f32.mrb[0].mxu0
        %v745 = vadd.f32 0.0, %v744
        %v746 = vpop.f32.mrb[0].mxu0
        %v747 = vpop.f32.mrb[0].mxu0
        %v748 = vadd.f32 0.0, %v747
        %v749 = vpop.f32.mrb[0].mxu0
        %750 = vmatprep.mubr.bf16.mxu0 0
        %751 = vmatmul.mubr.bf16.gmra.mrb[0].mxu0 %v662
        %v752 = vpop.f32.mrb[0].mxu0
        %v753 = vadd.f32 0.0, %v752
        %v754 = vpop.f32.mrb[0].mxu0
        %v755 = vpop.f32.mrb[0].mxu0
        %v756 = vadd.f32 0.0, %v755
        %v757 = vpop.f32.mrb[0].mxu0
        %758 = vmatprep.mubr.bf16.mxu0 0
        %759 = vmatmul.mubr.bf16.gmra.mrb[0].mxu0 %v665
        %v760 = vpop.f32.mrb[0].mxu0
        %v761 = vadd.f32 0.0, %v760
        %v762 = vpop.f32.mrb[0].mxu0
        %v763 = vpop.f32.mrb[0].mxu0
        %v764 = vadd.f32 0.0, %v763
        %v765 = vpop.f32.mrb[0].mxu0
        %766 = vmatprep.mubr.bf16.mxu0 0
        %767 = vmatmul.mubr.bf16.gmra.mrb[0].mxu0 %v668
        %v768 = vpop.f32.mrb[0].mxu0
        %v769 = vadd.f32 0.0, %v768
        %v770 = vpop.f32.mrb[0].mxu0
        %v771 = vpop.f32.mrb[0].mxu0
        %v772 = vadd.f32 0.0, %v771
        %v773 = vpop.f32.mrb[0].mxu0
        %774 = vmatprep.mubr.bf16.mxu0 0
        %775 = vmatmul.mubr.bf16.gmra.mrb[0].mxu0 %v671
        %v776 = vpop.f32.mrb[0].mxu0
        %v777 = vadd.f32 0.0, %v776
        %v778 = vpop.f32.mrb[0].mxu0
        %v779 = vpop.f32.mrb[0].mxu0
        %v780 = vadd.f32 0.0, %v779
        %v781 = vpop.f32.mrb[0].mxu0
        %782 = vmatprep.mubr.bf16.mxu0 0
        %783 = vmatmul.mubr.bf16.gmra.mrb[0].mxu0 %v674
        %v784 = vpop.f32.mrb[0].mxu0
        %v785 = vadd.f32 0.0, %v784
        %v786 = vpop.f32.mrb[0].mxu0
        %v787 = vpop.f32.mrb[0].mxu0
        %v788 = vadd.f32 0.0, %v787
        %v789 = vpop.f32.mrb[0].mxu0
        %790 = vmatprep.mubr.bf16.mxu0 0
        %791 = vmatmul.mubr.bf16.gmra.mrb[0].mxu0 %v677
        %v792 = vpop.f32.mrb[0].mxu0
        %v793 = vadd.f32 0.0, %v792
        %v794 = vpop.f32.mrb[0].mxu0
        %v795 = vpop.f32.mrb[0].mxu0
        %v796 = vadd.f32 0.0, %v795
        %v797 = vpop.f32.mrb[0].mxu0
        %798 = vmatprep.mubr.bf16.mxu0 0
        %799 = vmatmul.mubr.bf16.gmra.mrb[0].mxu0 %v680
        %v800 = vpop.f32.mrb[0].mxu0
        %v801 = vadd.f32 0.0, %v800
        %v802 = vpop.f32.mrb[0].mxu0
        %v803 = vpop.f32.mrb[0].mxu0
        %v804 = vadd.f32 0.0, %v803
        %v805 = vpop.f32.mrb[0].mxu0
        %806 = vmatprep.mubr.bf16.mxu0 0
        %807 = vmatmul.mubr.bf16.gmra.mrb[0].mxu0 %v683
        %v808 = vpop.f32.mrb[0].mxu0
        %v809 = vadd.f32 0.0, %v808
        %v810 = vpop.f32.mrb[0].mxu0
        %v811 = vpop.f32.mrb[0].mxu0
        %v812 = vadd.f32 0.0, %v811
        %v813 = vpop.f32.mrb[0].mxu0
        %814 = vmatprep.mubr.bf16.mxu0 0
        %815 = vmatmul.mubr.bf16.gmra.mrb[0].mxu0 %v686
        %v816 = vpop.f32.mrb[0].mxu0
        %v817 = vadd.f32 0.0, %v816
        %v818 = vpop.f32.mrb[0].mxu0
        %v819 = vpop.f32.mrb[0].mxu0
        %v820 = vadd.f32 0.0, %v819
        %v821 = vpop.f32.mrb[0].mxu0
        %822 = vmatprep.mubr.bf16.mxu0 0
        %823 = vmatmul.mubr.bf16.gmra.mrb[0].mxu0 %v689
        %v824 = vpop.f32.mrb[0].mxu0
        %v825 = vadd.f32 0.0, %v824
        %v826 = vpop.f32.mrb[0].mxu0
        %v827 = vpop.f32.mrb[0].mxu0
        %v828 = vadd.f32 0.0, %v827
        %v829 = vpop.f32.mrb[0].mxu0
        %830 = vmatprep.mubr.bf16.mxu0 0
        %831 = vmatmul.mubr.bf16.gmra.mrb[0].mxu0 %v692
        %v832 = vpop.f32.mrb[0].mxu0
        %v833 = vadd.f32 0.0, %v832
        %v834 = vpop.f32.mrb[0].mxu0
        %v835 = vpop.f32.mrb[0].mxu0
        %v836 = vadd.f32 0.0, %v835
        %v837 = vpop.f32.mrb[0].mxu0
        %838 = vmatprep.mubr.bf16.mxu0 0
        %839 = vmatmul.mubr.bf16.gmra.mrb[0].mxu0 %v695
        %v840 = vpop.f32.mrb[0].mxu0
        %v841 = vadd.f32 0.0, %v840
        %v842 = vpop.f32.mrb[0].mxu0
        %v843 = vpop.f32.mrb[0].mxu0
        %v844 = vadd.f32 0.0, %v843
        %v845 = vpop.f32.mrb[0].mxu0
        %846 = vmatprep.mubr.bf16.mxu0 0
        %847 = vmatmul.mubr.bf16.gmra.mrb[0].mxu0 %v698
        %v848 = vpop.f32.mrb[0].mxu0
        %v849 = vadd.f32 0.0, %v848
        %v850 = vpop.f32.mrb[0].mxu0
        %v851 = vpop.f32.mrb[0].mxu0
        %v852 = vadd.f32 0.0, %v851
        %v853 = vpop.f32.mrb[0].mxu0
        %854 = vmatprep.mubr.bf16.mxu0 0
        %855 = vmatmul.mubr.bf16.gmra.mrb[0].mxu0 %v701
        %v856 = vpop.f32.mrb[0].mxu0
        %v857 = vadd.f32 0.0, %v856
        %v858 = vpop.f32.mrb[0].mxu0
        %v859 = vpop.f32.mrb[0].mxu0
        %v860 = vadd.f32 0.0, %v859
        %v861 = vpop.f32.mrb[0].mxu0
        %862 = vmatprep.mubr.bf16.mxu0 0
        %863 = vmatmul.mubr.bf16.gmra.mrb[0].mxu0 %v704
        %v864 = vpop.f32.mrb[0].mxu0
        %v865 = vadd.f32 0.0, %v864
        %v866 = vpop.f32.mrb[0].mxu0
        %v867 = vpop.f32.mrb[0].mxu0
        %v868 = vadd.f32 0.0, %v867
        %v869 = vpop.f32.mrb[0].mxu0
        %870 = vdwg.mxu0
        %v872 = vsel %vm657, %v482, 0
        %v875 = vsel %vm657, %v483, 0
        %v878 = vsel %vm657, %v484, 0
        %v881 = vsel %vm657, %v485, 0
        %v884 = vsel %vm657, %v486, 0
        %v887 = vsel %vm657, %v487, 0
        %v890 = vsel %vm657, %v488, 0
        %v893 = vsel %vm657, %v489, 0
        %v896 = vsel %vm657, %v490, 0
        %v899 = vsel %vm657, %v491, 0
        %v902 = vsel %vm657, %v492, 0
        %v905 = vsel %vm657, %v493, 0
        %v908 = vsel %vm657, %v494, 0
        %v911 = vsel %vm657, %v495, 0
        %v914 = vsel %vm657, %v496, 0
        %v917 = vsel %vm657, %v497, 0
        %v920 = vsel %vm706, %v498, 0
        %922 = vmatprep.subr.bf16.mxu0 0
        %923 = vmatpush1.bf16.msra.mxu0 %v920
        %924 = vmatprep.subr.bf16.mxu0 0
        %925 = vmatpush1.bf16.msra.mxu0 0
        %926 = vmatprep.subr.bf16.mxu0 0
        %927 = vmatpush1.bf16.msra.mxu0 0
        %928 = vmatprep.subr.bf16.mxu0 0
        %929 = vmatpush1.bf16.msra.mxu0 0
        %930 = vmatprep.subr.bf16.mxu0 0
        %931 = vmatpush1.bf16.msra.mxu0 0
        %932 = vmatprep.subr.bf16.mxu0 0
        %933 = vmatpush1.bf16.msra.mxu0 0
        %934 = vmatprep.subr.bf16.mxu0 0
        %935 = vmatpush1.bf16.msra.mxu0 0
        %936 = vmatprep.subr.bf16.mxu0 0
        %937 = vmatpush1.bf16.msra.mxu0 0
        %938 = vmatprep.subr.bf16.mxu0 0
        %939 = vmatpush1.bf16.msra.mxu0 0
        %940 = vmatprep.subr.bf16.mxu0 0
        %941 = vmatpush1.bf16.msra.mxu0 0
        %942 = vmatprep.subr.bf16.mxu0 0
        %943 = vmatpush1.bf16.msra.mxu0 0
        %944 = vmatprep.subr.bf16.mxu0 0
        %945 = vmatpush1.bf16.msra.mxu0 0
        %946 = vmatprep.subr.bf16.mxu0 0
        %947 = vmatpush1.bf16.msra.mxu0 0
        %948 = vmatprep.subr.bf16.mxu0 0
        %949 = vmatpush1.bf16.msra.mxu0 0
        %950 = vmatprep.subr.bf16.mxu0 0
        %951 = vmatpush1.bf16.msra.mxu0 0
        %952 = vmatprep.subr.bf16.mxu0 0
        %953 = vmatpush1.bf16.msra.mxu0 0
        %954 = vmatprep.mubr.bf16.mxu0 0
        %955 = vmatmul.mubr.bf16.gmra.mrb[0].mxu0 %v872
        %v956 = vpop.f32.mrb[0].mxu0
        %v957 = vadd.f32 %v745, %v956
        %v958 = vpop.f32.mrb[0].mxu0
        %v959 = vpop.f32.mrb[0].mxu0
        %v960 = vadd.f32 %v748, %v959
        %v961 = vpop.f32.mrb[0].mxu0
        %962 = vmatprep.mubr.bf16.mxu0 0
        %963 = vmatmul.mubr.bf16.gmra.mrb[0].mxu0 %v875
        %v964 = vpop.f32.mrb[0].mxu0
        %v965 = vadd.f32 %v753, %v964
        %v966 = vpop.f32.mrb[0].mxu0
        %v967 = vpop.f32.mrb[0].mxu0
        %v968 = vadd.f32 %v756, %v967
        %v969 = vpop.f32.mrb[0].mxu0
        %970 = vmatprep.mubr.bf16.mxu0 0
        %971 = vmatmul.mubr.bf16.gmra.mrb[0].mxu0 %v878
        %v972 = vpop.f32.mrb[0].mxu0
        %v973 = vadd.f32 %v761, %v972
        %v974 = vpop.f32.mrb[0].mxu0
        %v975 = vpop.f32.mrb[0].mxu0
        %v976 = vadd.f32 %v764, %v975
        %v977 = vpop.f32.mrb[0].mxu0
        %978 = vmatprep.mubr.bf16.mxu0 0
        %979 = vmatmul.mubr.bf16.gmra.mrb[0].mxu0 %v881
        %v980 = vpop.f32.mrb[0].mxu0
        %v981 = vadd.f32 %v769, %v980
        %v982 = vpop.f32.mrb[0].mxu0
        %v983 = vpop.f32.mrb[0].mxu0
        %v984 = vadd.f32 %v772, %v983
        %v985 = vpop.f32.mrb[0].mxu0
        %986 = vmatprep.mubr.bf16.mxu0 0
        %987 = vmatmul.mubr.bf16.gmra.mrb[0].mxu0 %v884
        %v988 = vpop.f32.mrb[0].mxu0
        %v989 = vadd.f32 %v777, %v988
        %v990 = vpop.f32.mrb[0].mxu0
        %v991 = vpop.f32.mrb[0].mxu0
        %v992 = vadd.f32 %v780, %v991
        %v993 = vpop.f32.mrb[0].mxu0
        %994 = vmatprep.mubr.bf16.mxu0 0
        %995 = vmatmul.mubr.bf16.gmra.mrb[0].mxu0 %v887
        %v996 = vpop.f32.mrb[0].mxu0
        %v997 = vadd.f32 %v785, %v996
        %v998 = vpop.f32.mrb[0].mxu0
        %v999 = vpop.f32.mrb[0].mxu0
        %v1000 = vadd.f32 %v788, %v999
        %v1001 = vpop.f32.mrb[0].mxu0
        %1002 = vmatprep.mubr.bf16.mxu0 0
        %1003 = vmatmul.mubr.bf16.gmra.mrb[0].mxu0 %v890
        %v1004 = vpop.f32.mrb[0].mxu0
        %v1005 = vadd.f32 %v793, %v1004
        %v1006 = vpop.f32.mrb[0].mxu0
        %v1007 = vpop.f32.mrb[0].mxu0
        %v1008 = vadd.f32 %v796, %v1007
        %v1009 = vpop.f32.mrb[0].mxu0
        %1010 = vmatprep.mubr.bf16.mxu0 0
        %1011 = vmatmul.mubr.bf16.gmra.mrb[0].mxu0 %v893
        %v1012 = vpop.f32.mrb[0].mxu0
        %v1013 = vadd.f32 %v801, %v1012
        %v1014 = vpop.f32.mrb[0].mxu0
        %v1015 = vpop.f32.mrb[0].mxu0
        %v1016 = vadd.f32 %v804, %v1015
        %v1017 = vpop.f32.mrb[0].mxu0
        %1018 = vmatprep.mubr.bf16.mxu0 0
        %1019 = vmatmul.mubr.bf16.gmra.mrb[0].mxu0 %v896
        %v1020 = vpop.f32.mrb[0].mxu0
        %v1021 = vadd.f32 %v809, %v1020
        %v1022 = vpop.f32.mrb[0].mxu0
        %v1023 = vpop.f32.mrb[0].mxu0
        %v1024 = vadd.f32 %v812, %v1023
        %v1025 = vpop.f32.mrb[0].mxu0
        %1026 = vmatprep.mubr.bf16.mxu0 0
        %1027 = vmatmul.mubr.bf16.gmra.mrb[0].mxu0 %v899
        %v1028 = vpop.f32.mrb[0].mxu0
        %v1029 = vadd.f32 %v817, %v1028
        %v1030 = vpop.f32.mrb[0].mxu0
        %v1031 = vpop.f32.mrb[0].mxu0
        %v1032 = vadd.f32 %v820, %v1031
        %v1033 = vpop.f32.mrb[0].mxu0
        %1034 = vmatprep.mubr.bf16.mxu0 0
        %1035 = vmatmul.mubr.bf16.gmra.mrb[0].mxu0 %v902
        %v1036 = vpop.f32.mrb[0].mxu0
        %v1037 = vadd.f32 %v825, %v1036
        %v1038 = vpop.f32.mrb[0].mxu0
        %v1039 = vpop.f32.mrb[0].mxu0
        %v1040 = vadd.f32 %v828, %v1039
        %v1041 = vpop.f32.mrb[0].mxu0
        %1042 = vmatprep.mubr.bf16.mxu0 0
        %1043 = vmatmul.mubr.bf16.gmra.mrb[0].mxu0 %v905
        %v1044 = vpop.f32.mrb[0].mxu0
        %v1045 = vadd.f32 %v833, %v1044
        %v1046 = vpop.f32.mrb[0].mxu0
        %v1047 = vpop.f32.mrb[0].mxu0
        %v1048 = vadd.f32 %v836, %v1047
        %v1049 = vpop.f32.mrb[0].mxu0
        %1050 = vmatprep.mubr.bf16.mxu0 0
        %1051 = vmatmul.mubr.bf16.gmra.mrb[0].mxu0 %v908
        %v1052 = vpop.f32.mrb[0].mxu0
        %v1053 = vadd.f32 %v841, %v1052
        %v1054 = vpop.f32.mrb[0].mxu0
        %v1055 = vpop.f32.mrb[0].mxu0
        %v1056 = vadd.f32 %v844, %v1055
        %v1057 = vpop.f32.mrb[0].mxu0
        %1058 = vmatprep.mubr.bf16.mxu0 0
        %1059 = vmatmul.mubr.bf16.gmra.mrb[0].mxu0 %v911
        %v1060 = vpop.f32.mrb[0].mxu0
        %v1061 = vadd.f32 %v849, %v1060
        %v1062 = vpop.f32.mrb[0].mxu0
        %v1063 = vpop.f32.mrb[0].mxu0
        %v1064 = vadd.f32 %v852, %v1063
        %v1065 = vpop.f32.mrb[0].mxu0
        %1066 = vmatprep.mubr.bf16.mxu0 0
        %1067 = vmatmul.mubr.bf16.gmra.mrb[0].mxu0 %v914
        %v1068 = vpop.f32.mrb[0].mxu0
        %v1069 = vadd.f32 %v857, %v1068
        %v1070 = vpop.f32.mrb[0].mxu0
        %v1071 = vpop.f32.mrb[0].mxu0
        %v1072 = vadd.f32 %v860, %v1071
        %v1073 = vpop.f32.mrb[0].mxu0
        %1074 = vmatprep.mubr.bf16.mxu0 0
        %1075 = vmatmul.mubr.bf16.gmra.mrb[0].mxu0 %v917
        %v1076 = vpop.f32.mrb[0].mxu0
        %v1077 = vadd.f32 %v865, %v1076
        %v1078 = vpop.f32.mrb[0].mxu0
        %v1079 = vpop.f32.mrb[0].mxu0
        %v1080 = vadd.f32 %v868, %v1079
        %v1081 = vpop.f32.mrb[0].mxu0
        %1082 = vdwg.mxu0
        %vm1083 = vcmask 1045504
        %v1084 = vrot.slane 0.0, 2
        %v1085 = vsel %vm1083, %v1084, %v1084
        %v1086 = vrot.slane %v450, 2
        %v1087 = vrot.slane %v356, 2
        %v1088 = vsel %vm1083, %v1086, %v1087
        %v1089 = vrot.slane %v466, 2
        %v1090 = vsel %vm1083, %v1087, %v1089
        %v1091 = vrot.slane %v451, 2
        %v1092 = vrot.slane %v359, 2
        %v1093 = vsel %vm1083, %v1091, %v1092
        %v1094 = vrot.slane %v467, 2
        %v1095 = vsel %vm1083, %v1092, %v1094
        %v1096 = vrot.slane %v452, 2
        %v1097 = vrot.slane %v362, 2
        %v1098 = vsel %vm1083, %v1096, %v1097
        %v1099 = vrot.slane %v468, 2
        %v1100 = vsel %vm1083, %v1097, %v1099
        %v1101 = vrot.slane %v453, 2
        %v1102 = vrot.slane %v365, 2
        %v1103 = vsel %vm1083, %v1101, %v1102
        %v1104 = vrot.slane %v469, 2
        %v1105 = vsel %vm1083, %v1102, %v1104
        %v1106 = vrot.slane %v454, 2
        %v1107 = vrot.slane %v368, 2
        %v1108 = vsel %vm1083, %v1106, %v1107
        %v1109 = vrot.slane %v470, 2
        %v1110 = vsel %vm1083, %v1107, %v1109
        %v1111 = vrot.slane %v455, 2
        %v1112 = vrot.slane %v371, 2
        %v1113 = vsel %vm1083, %v1111, %v1112
        %v1114 = vrot.slane %v471, 2
        %v1115 = vsel %vm1083, %v1112, %v1114
        %v1116 = vrot.slane %v456, 2
        %v1117 = vrot.slane %v374, 2
        %v1118 = vsel %vm1083, %v1116, %v1117
        %v1119 = vrot.slane %v472, 2
        %v1120 = vsel %vm1083, %v1117, %v1119
        %v1121 = vrot.slane %v457, 2
        %v1122 = vrot.slane %v377, 2
        %v1123 = vsel %vm1083, %v1121, %v1122
        %v1124 = vrot.slane %v473, 2
        %v1125 = vsel %vm1083, %v1122, %v1124
        %v1126 = vrot.slane %v458, 2
        %v1127 = vrot.slane %v380, 2
        %v1128 = vsel %vm1083, %v1126, %v1127
        %v1129 = vrot.slane %v474, 2
        %v1130 = vsel %vm1083, %v1127, %v1129
        %v1131 = vrot.slane %v459, 2
        %v1132 = vrot.slane %v383, 2
        %v1133 = vsel %vm1083, %v1131, %v1132
        %v1134 = vrot.slane %v475, 2
        %v1135 = vsel %vm1083, %v1132, %v1134
        %v1136 = vrot.slane %v460, 2
        %v1137 = vrot.slane %v386, 2
        %v1138 = vsel %vm1083, %v1136, %v1137
        %v1139 = vrot.slane %v476, 2
        %v1140 = vsel %vm1083, %v1137, %v1139
        %v1141 = vrot.slane %v461, 2
        %v1142 = vrot.slane %v389, 2
        %v1143 = vsel %vm1083, %v1141, %v1142
        %v1144 = vrot.slane %v477, 2
        %v1145 = vsel %vm1083, %v1142, %v1144
        %v1146 = vrot.slane %v462, 2
        %v1147 = vrot.slane %v392, 2
        %v1148 = vsel %vm1083, %v1146, %v1147
        %v1149 = vrot.slane %v478, 2
        %v1150 = vsel %vm1083, %v1147, %v1149
        %v1151 = vrot.slane %v463, 2
        %v1152 = vrot.slane %v395, 2
        %v1153 = vsel %vm1083, %v1151, %v1152
        %v1154 = vrot.slane %v479, 2
        %v1155 = vsel %vm1083, %v1152, %v1154
        %v1156 = vrot.slane %v464, 2
        %v1157 = vrot.slane %v398, 2
        %v1158 = vsel %vm1083, %v1156, %v1157
        %v1159 = vrot.slane %v480, 2
        %v1160 = vsel %vm1083, %v1157, %v1159
        %v1192 = vpack.c.bf16 %v1085, %v1085
        %v1193 = vpack.c.bf16 %v1090, %v1088
        %v1194 = vpack.c.bf16 %v1095, %v1093
        %v1195 = vpack.c.bf16 %v1100, %v1098
        %v1196 = vpack.c.bf16 %v1105, %v1103
        %v1197 = vpack.c.bf16 %v1110, %v1108
        %v1198 = vpack.c.bf16 %v1115, %v1113
        %v1199 = vpack.c.bf16 %v1120, %v1118
        %v1200 = vpack.c.bf16 %v1125, %v1123
        %v1201 = vpack.c.bf16 %v1130, %v1128
        %v1202 = vpack.c.bf16 %v1135, %v1133
        %v1203 = vpack.c.bf16 %v1140, %v1138
        %v1204 = vpack.c.bf16 %v1145, %v1143
        %v1205 = vpack.c.bf16 %v1150, %v1148
        %v1206 = vpack.c.bf16 %v1155, %v1153
        %v1207 = vpack.c.bf16 %v1160, %v1158
        %s1208 = scalar_lea.vmem [#allocation5], 4
        %v1209 = vld [vmem:[%s1208] sm:$0x3]
        %v1211 = vsel %vm657, %v1192, 0
        %v1214 = vsel %vm657, %v1193, 0
        %v1217 = vsel %vm657, %v1194, 0
        %v1220 = vsel %vm657, %v1195, 0
        %v1223 = vsel %vm657, %v1196, 0
        %v1226 = vsel %vm657, %v1197, 0
        %v1229 = vsel %vm657, %v1198, 0
        %v1232 = vsel %vm657, %v1199, 0
        %v1235 = vsel %vm657, %v1200, 0
        %v1238 = vsel %vm657, %v1201, 0
        %v1241 = vsel %vm657, %v1202, 0
        %v1244 = vsel %vm657, %v1203, 0
        %v1247 = vsel %vm657, %v1204, 0
        %v1250 = vsel %vm657, %v1205, 0
        %v1253 = vsel %vm657, %v1206, 0
        %v1256 = vsel %vm657, %v1207, 0
        %v1259 = vsel %vm706, %v1209, 0
        %1261 = vmatprep.subr.bf16.mxu0 0
        %1262 = vmatpush1.bf16.msra.mxu0 %v1259
        %1263 = vmatprep.subr.bf16.mxu0 0
        %1264 = vmatpush1.bf16.msra.mxu0 0
        %1265 = vmatprep.subr.bf16.mxu0 0
        %1266 = vmatpush1.bf16.msra.mxu0 0
        %1267 = vmatprep.subr.bf16.mxu0 0
        %1268 = vmatpush1.bf16.msra.mxu0 0
        %1269 = vmatprep.subr.bf16.mxu0 0
        %1270 = vmatpush1.bf16.msra.mxu0 0
        %1271 = vmatprep.subr.bf16.mxu0 0
        %1272 = vmatpush1.bf16.msra.mxu0 0
        %1273 = vmatprep.subr.bf16.mxu0 0
        %1274 = vmatpush1.bf16.msra.mxu0 0
        %1275 = vmatprep.subr.bf16.mxu0 0
        %1276 = vmatpush1.bf16.msra.mxu0 0
        %1277 = vmatprep.subr.bf16.mxu0 0
        %1278 = vmatpush1.bf16.msra.mxu0 0
        %1279 = vmatprep.subr.bf16.mxu0 0
        %1280 = vmatpush1.bf16.msra.mxu0 0
        %1281 = vmatprep.subr.bf16.mxu0 0
        %1282 = vmatpush1.bf16.msra.mxu0 0
        %1283 = vmatprep.subr.bf16.mxu0 0
        %1284 = vmatpush1.bf16.msra.mxu0 0
        %1285 = vmatprep.subr.bf16.mxu0 0
        %1286 = vmatpush1.bf16.msra.mxu0 0
        %1287 = vmatprep.subr.bf16.mxu0 0
        %1288 = vmatpush1.bf16.msra.mxu0 0
        %1289 = vmatprep.subr.bf16.mxu0 0
        %1290 = vmatpush1.bf16.msra.mxu0 0
        %1291 = vmatprep.subr.bf16.mxu0 0
        %1292 = vmatpush1.bf16.msra.mxu0 0
        %1293 = vmatprep.mubr.bf16.mxu0 0
        %1294 = vmatmul.mubr.bf16.gmra.mrb[0].mxu0 %v1211
        %v1295 = vpop.f32.mrb[0].mxu0
        %v1296 = vadd.f32 0.0, %v1295
        %v1297 = vpop.f32.mrb[0].mxu0
        %v1298 = vpop.f32.mrb[0].mxu0
        %v1299 = vadd.f32 0.0, %v1298
        %v1300 = vpop.f32.mrb[0].mxu0
        %1301 = vmatprep.mubr.bf16.mxu0 0
        %1302 = vmatmul.mubr.bf16.gmra.mrb[0].mxu0 %v1214
        %v1303 = vpop.f32.mrb[0].mxu0
        %v1304 = vadd.f32 0.0, %v1303
        %v1305 = vpop.f32.mrb[0].mxu0
        %v1306 = vpop.f32.mrb[0].mxu0
        %v1307 = vadd.f32 0.0, %v1306
        %v1308 = vpop.f32.mrb[0].mxu0
        %1309 = vmatprep.mubr.bf16.mxu0 0
        %1310 = vmatmul.mubr.bf16.gmra.mrb[0].mxu0 %v1217
        %v1311 = vpop.f32.mrb[0].mxu0
        %v1312 = vadd.f32 0.0, %v1311
        %v1313 = vpop.f32.mrb[0].mxu0
        %v1314 = vpop.f32.mrb[0].mxu0
        %v1315 = vadd.f32 0.0, %v1314
        %v1316 = vpop.f32.mrb[0].mxu0
        %1317 = vmatprep.mubr.bf16.mxu0 0
        %1318 = vmatmul.mubr.bf16.gmra.mrb[0].mxu0 %v1220
        %v1319 = vpop.f32.mrb[0].mxu0
        %v1320 = vadd.f32 0.0, %v1319
        %v1321 = vpop.f32.mrb[0].mxu0
        %v1322 = vpop.f32.mrb[0].mxu0
        %v1323 = vadd.f32 0.0, %v1322
        %v1324 = vpop.f32.mrb[0].mxu0
        %1325 = vmatprep.mubr.bf16.mxu0 0
        %1326 = vmatmul.mubr.bf16.gmra.mrb[0].mxu0 %v1223
        %v1327 = vpop.f32.mrb[0].mxu0
        %v1328 = vadd.f32 0.0, %v1327
        %v1329 = vpop.f32.mrb[0].mxu0
        %v1330 = vpop.f32.mrb[0].mxu0
        %v1331 = vadd.f32 0.0, %v1330
        %v1332 = vpop.f32.mrb[0].mxu0
        %1333 = vmatprep.mubr.bf16.mxu0 0
        %1334 = vmatmul.mubr.bf16.gmra.mrb[0].mxu0 %v1226
        %v1335 = vpop.f32.mrb[0].mxu0
        %v1336 = vadd.f32 0.0, %v1335
        %v1337 = vpop.f32.mrb[0].mxu0
        %v1338 = vpop.f32.mrb[0].mxu0
        %v1339 = vadd.f32 0.0, %v1338
        %v1340 = vpop.f32.mrb[0].mxu0
        %1341 = vmatprep.mubr.bf16.mxu0 0
        %1342 = vmatmul.mubr.bf16.gmra.mrb[0].mxu0 %v1229
        %v1343 = vpop.f32.mrb[0].mxu0
        %v1344 = vadd.f32 0.0, %v1343
        %v1345 = vpop.f32.mrb[0].mxu0
        %v1346 = vpop.f32.mrb[0].mxu0
        %v1347 = vadd.f32 0.0, %v1346
        %v1348 = vpop.f32.mrb[0].mxu0
        %1349 = vmatprep.mubr.bf16.mxu0 0
        %1350 = vmatmul.mubr.bf16.gmra.mrb[0].mxu0 %v1232
        %v1351 = vpop.f32.mrb[0].mxu0
        %v1352 = vadd.f32 0.0, %v1351
        %v1353 = vpop.f32.mrb[0].mxu0
        %v1354 = vpop.f32.mrb[0].mxu0
        %v1355 = vadd.f32 0.0, %v1354
        %v1356 = vpop.f32.mrb[0].mxu0
        %1357 = vmatprep.mubr.bf16.mxu0 0
        %1358 = vmatmul.mubr.bf16.gmra.mrb[0].mxu0 %v1235
        %v1359 = vpop.f32.mrb[0].mxu0
        %v1360 = vadd.f32 0.0, %v1359
        %v1361 = vpop.f32.mrb[0].mxu0
        %v1362 = vpop.f32.mrb[0].mxu0
        %v1363 = vadd.f32 0.0, %v1362
        %v1364 = vpop.f32.mrb[0].mxu0
        %1365 = vmatprep.mubr.bf16.mxu0 0
        %1366 = vmatmul.mubr.bf16.gmra.mrb[0].mxu0 %v1238
        %v1367 = vpop.f32.mrb[0].mxu0
        %v1368 = vadd.f32 0.0, %v1367
        %v1369 = vpop.f32.mrb[0].mxu0
        %v1370 = vpop.f32.mrb[0].mxu0
        %v1371 = vadd.f32 0.0, %v1370
        %v1372 = vpop.f32.mrb[0].mxu0
        %1373 = vmatprep.mubr.bf16.mxu0 0
        %1374 = vmatmul.mubr.bf16.gmra.mrb[0].mxu0 %v1241
        %v1375 = vpop.f32.mrb[0].mxu0
        %v1376 = vadd.f32 0.0, %v1375
        %v1377 = vpop.f32.mrb[0].mxu0
        %v1378 = vpop.f32.mrb[0].mxu0
        %v1379 = vadd.f32 0.0, %v1378
        %v1380 = vpop.f32.mrb[0].mxu0
        %1381 = vmatprep.mubr.bf16.mxu0 0
        %1382 = vmatmul.mubr.bf16.gmra.mrb[0].mxu0 %v1244
        %v1383 = vpop.f32.mrb[0].mxu0
        %v1384 = vadd.f32 0.0, %v1383
        %v1385 = vpop.f32.mrb[0].mxu0
        %v1386 = vpop.f32.mrb[0].mxu0
        %v1387 = vadd.f32 0.0, %v1386
        %v1388 = vpop.f32.mrb[0].mxu0
        %1389 = vmatprep.mubr.bf16.mxu0 0
        %1390 = vmatmul.mubr.bf16.gmra.mrb[0].mxu0 %v1247
        %v1391 = vpop.f32.mrb[0].mxu0
        %v1392 = vadd.f32 0.0, %v1391
        %v1393 = vpop.f32.mrb[0].mxu0
        %v1394 = vpop.f32.mrb[0].mxu0
        %v1395 = vadd.f32 0.0, %v1394
        %v1396 = vpop.f32.mrb[0].mxu0
        %1397 = vmatprep.mubr.bf16.mxu0 0
        %1398 = vmatmul.mubr.bf16.gmra.mrb[0].mxu0 %v1250
        %v1399 = vpop.f32.mrb[0].mxu0
        %v1400 = vadd.f32 0.0, %v1399
        %v1401 = vpop.f32.mrb[0].mxu0
        %v1402 = vpop.f32.mrb[0].mxu0
        %v1403 = vadd.f32 0.0, %v1402
        %v1404 = vpop.f32.mrb[0].mxu0
        %1405 = vmatprep.mubr.bf16.mxu0 0
        %1406 = vmatmul.mubr.bf16.gmra.mrb[0].mxu0 %v1253
        %v1407 = vpop.f32.mrb[0].mxu0
        %v1408 = vadd.f32 0.0, %v1407
        %v1409 = vpop.f32.mrb[0].mxu0
        %v1410 = vpop.f32.mrb[0].mxu0
        %v1411 = vadd.f32 0.0, %v1410
        %v1412 = vpop.f32.mrb[0].mxu0
        %1413 = vmatprep.mubr.bf16.mxu0 0
        %1414 = vmatmul.mubr.bf16.gmra.mrb[0].mxu0 %v1256
        %v1415 = vpop.f32.mrb[0].mxu0
        %v1416 = vadd.f32 0.0, %v1415
        %v1417 = vpop.f32.mrb[0].mxu0
        %v1418 = vpop.f32.mrb[0].mxu0
        %v1419 = vadd.f32 0.0, %v1418
        %v1420 = vpop.f32.mrb[0].mxu0
        %1421 = vdwg.mxu0
        %v1422 = vadd.f32 %v957, %v1296
        %v1423 = vadd.f32 %v960, %v1299
        %v1424 = vadd.f32 %v965, %v1304
        %v1425 = vadd.f32 %v968, %v1307
        %v1426 = vadd.f32 %v973, %v1312
        %v1427 = vadd.f32 %v976, %v1315
        %v1428 = vadd.f32 %v981, %v1320
        %v1429 = vadd.f32 %v984, %v1323
        %v1430 = vadd.f32 %v989, %v1328
        %v1431 = vadd.f32 %v992, %v1331
        %v1432 = vadd.f32 %v997, %v1336
        %v1433 = vadd.f32 %v1000, %v1339
        %v1434 = vadd.f32 %v1005, %v1344
        %v1435 = vadd.f32 %v1008, %v1347
        %v1436 = vadd.f32 %v1013, %v1352
        %v1437 = vadd.f32 %v1016, %v1355
        %v1438 = vadd.f32 %v1021, %v1360
        %v1439 = vadd.f32 %v1024, %v1363
        %v1440 = vadd.f32 %v1029, %v1368
        %v1441 = vadd.f32 %v1032, %v1371
        %v1442 = vadd.f32 %v1037, %v1376
        %v1443 = vadd.f32 %v1040, %v1379
        %v1444 = vadd.f32 %v1045, %v1384
        %v1445 = vadd.f32 %v1048, %v1387
        %v1446 = vadd.f32 %v1053, %v1392
        %v1447 = vadd.f32 %v1056, %v1395
        %v1448 = vadd.f32 %v1061, %v1400
        %v1449 = vadd.f32 %v1064, %v1403
        %v1450 = vadd.f32 %v1069, %v1408
        %v1451 = vadd.f32 %v1072, %v1411
        %v1452 = vadd.f32 %v1077, %v1416
        %v1453 = vadd.f32 %v1080, %v1419
        %v1454 = vpack.c.bf16 %v401, %v465
        %s1455 = scalar_lea.vmem [#allocation5], 6
        %v1456 = vld [vmem:[%s1455] sm:$0x3]
        %v1458 = vsel %vm657, %v1454, 0
        %v1461 = vsel %vm706, %v1456, 0
        %1463 = vmatprep.subr.bf16.mxu0 0
        %1464 = vmatpush1.bf16.msra.mxu0 %v1461
        %1465 = vmatprep.subr.bf16.mxu0 0
        %1466 = vmatpush1.bf16.msra.mxu0 0
        %1467 = vmatprep.subr.bf16.mxu0 0
        %1468 = vmatpush1.bf16.msra.mxu0 0
        %1469 = vmatprep.subr.bf16.mxu0 0
        %1470 = vmatpush1.bf16.msra.mxu0 0
        %1471 = vmatprep.subr.bf16.mxu0 0
        %1472 = vmatpush1.bf16.msra.mxu0 0
        %1473 = vmatprep.subr.bf16.mxu0 0
        %1474 = vmatpush1.bf16.msra.mxu0 0
        %1475 = vmatprep.subr.bf16.mxu0 0
        %1476 = vmatpush1.bf16.msra.mxu0 0
        %1477 = vmatprep.subr.bf16.mxu0 0
        %1478 = vmatpush1.bf16.msra.mxu0 0
        %1479 = vmatprep.subr.bf16.mxu0 0
        %1480 = vmatpush1.bf16.msra.mxu0 0
        %1481 = vmatprep.subr.bf16.mxu0 0
        %1482 = vmatpush1.bf16.msra.mxu0 0
        %1483 = vmatprep.subr.bf16.mxu0 0
        %1484 = vmatpush1.bf16.msra.mxu0 0
        %1485 = vmatprep.subr.bf16.mxu0 0
        %1486 = vmatpush1.bf16.msra.mxu0 0
        %1487 = vmatprep.subr.bf16.mxu0 0
        %1488 = vmatpush1.bf16.msra.mxu0 0
        %1489 = vmatprep.subr.bf16.mxu0 0
        %1490 = vmatpush1.bf16.msra.mxu0 0
        %1491 = vmatprep.subr.bf16.mxu0 0
        %1492 = vmatpush1.bf16.msra.mxu0 0
        %1493 = vmatprep.subr.bf16.mxu0 0
        %1494 = vmatpush1.bf16.msra.mxu0 0
        %1495 = vmatprep.mubr.bf16.mxu0 0
        %1496 = vmatmul.mubr.bf16.gmra.mrb[0].mxu0 %v875
        %v1497 = vpop.f32.mrb[0].mxu0
        %v1498 = vadd.f32 0.0, %v1497
        %v1499 = vpop.f32.mrb[0].mxu0
        %v1500 = vpop.f32.mrb[0].mxu0
        %v1501 = vadd.f32 0.0, %v1500
        %v1502 = vpop.f32.mrb[0].mxu0
        %1503 = vmatprep.mubr.bf16.mxu0 0
        %1504 = vmatmul.mubr.bf16.gmra.mrb[0].mxu0 %v878
        %v1505 = vpop.f32.mrb[0].mxu0
        %v1506 = vadd.f32 0.0, %v1505
        %v1507 = vpop.f32.mrb[0].mxu0
        %v1508 = vpop.f32.mrb[0].mxu0
        %v1509 = vadd.f32 0.0, %v1508
        %v1510 = vpop.f32.mrb[0].mxu0
        %1511 = vmatprep.mubr.bf16.mxu0 0
        %1512 = vmatmul.mubr.bf16.gmra.mrb[0].mxu0 %v881
        %v1513 = vpop.f32.mrb[0].mxu0
        %v1514 = vadd.f32 0.0, %v1513
        %v1515 = vpop.f32.mrb[0].mxu0
        %v1516 = vpop.f32.mrb[0].mxu0
        %v1517 = vadd.f32 0.0, %v1516
        %v1518 = vpop.f32.mrb[0].mxu0
        %1519 = vmatprep.mubr.bf16.mxu0 0
        %1520 = vmatmul.mubr.bf16.gmra.mrb[0].mxu0 %v884
        %v1521 = vpop.f32.mrb[0].mxu0
        %v1522 = vadd.f32 0.0, %v1521
        %v1523 = vpop.f32.mrb[0].mxu0
        %v1524 = vpop.f32.mrb[0].mxu0
        %v1525 = vadd.f32 0.0, %v1524
        %v1526 = vpop.f32.mrb[0].mxu0
        %1527 = vmatprep.mubr.bf16.mxu0 0
        %1528 = vmatmul.mubr.bf16.gmra.mrb[0].mxu0 %v887
        %v1529 = vpop.f32.mrb[0].mxu0
        %v1530 = vadd.f32 0.0, %v1529
        %v1531 = vpop.f32.mrb[0].mxu0
        %v1532 = vpop.f32.mrb[0].mxu0
        %v1533 = vadd.f32 0.0, %v1532
        %v1534 = vpop.f32.mrb[0].mxu0
        %1535 = vmatprep.mubr.bf16.mxu0 0
        %1536 = vmatmul.mubr.bf16.gmra.mrb[0].mxu0 %v890
        %v1537 = vpop.f32.mrb[0].mxu0
        %v1538 = vadd.f32 0.0, %v1537
        %v1539 = vpop.f32.mrb[0].mxu0
        %v1540 = vpop.f32.mrb[0].mxu0
        %v1541 = vadd.f32 0.0, %v1540
        %v1542 = vpop.f32.mrb[0].mxu0
        %1543 = vmatprep.mubr.bf16.mxu0 0
        %1544 = vmatmul.mubr.bf16.gmra.mrb[0].mxu0 %v893
        %v1545 = vpop.f32.mrb[0].mxu0
        %v1546 = vadd.f32 0.0, %v1545
        %v1547 = vpop.f32.mrb[0].mxu0
        %v1548 = vpop.f32.mrb[0].mxu0
        %v1549 = vadd.f32 0.0, %v1548
        %v1550 = vpop.f32.mrb[0].mxu0
        %1551 = vmatprep.mubr.bf16.mxu0 0
        %1552 = vmatmul.mubr.bf16.gmra.mrb[0].mxu0 %v896
        %v1553 = vpop.f32.mrb[0].mxu0
        %v1554 = vadd.f32 0.0, %v1553
        %v1555 = vpop.f32.mrb[0].mxu0
        %v1556 = vpop.f32.mrb[0].mxu0
        %v1557 = vadd.f32 0.0, %v1556
        %v1558 = vpop.f32.mrb[0].mxu0
        %1559 = vmatprep.mubr.bf16.mxu0 0
        %1560 = vmatmul.mubr.bf16.gmra.mrb[0].mxu0 %v899
        %v1561 = vpop.f32.mrb[0].mxu0
        %v1562 = vadd.f32 0.0, %v1561
        %v1563 = vpop.f32.mrb[0].mxu0
        %v1564 = vpop.f32.mrb[0].mxu0
        %v1565 = vadd.f32 0.0, %v1564
        %v1566 = vpop.f32.mrb[0].mxu0
        %1567 = vmatprep.mubr.bf16.mxu0 0
        %1568 = vmatmul.mubr.bf16.gmra.mrb[0].mxu0 %v902
        %v1569 = vpop.f32.mrb[0].mxu0
        %v1570 = vadd.f32 0.0, %v1569
        %v1571 = vpop.f32.mrb[0].mxu0
        %v1572 = vpop.f32.mrb[0].mxu0
        %v1573 = vadd.f32 0.0, %v1572
        %v1574 = vpop.f32.mrb[0].mxu0
        %1575 = vmatprep.mubr.bf16.mxu0 0
        %1576 = vmatmul.mubr.bf16.gmra.mrb[0].mxu0 %v905
        %v1577 = vpop.f32.mrb[0].mxu0
        %v1578 = vadd.f32 0.0, %v1577
        %v1579 = vpop.f32.mrb[0].mxu0
        %v1580 = vpop.f32.mrb[0].mxu0
        %v1581 = vadd.f32 0.0, %v1580
        %v1582 = vpop.f32.mrb[0].mxu0
        %1583 = vmatprep.mubr.bf16.mxu0 0
        %1584 = vmatmul.mubr.bf16.gmra.mrb[0].mxu0 %v908
        %v1585 = vpop.f32.mrb[0].mxu0
        %v1586 = vadd.f32 0.0, %v1585
        %v1587 = vpop.f32.mrb[0].mxu0
        %v1588 = vpop.f32.mrb[0].mxu0
        %v1589 = vadd.f32 0.0, %v1588
        %v1590 = vpop.f32.mrb[0].mxu0
        %1591 = vmatprep.mubr.bf16.mxu0 0
        %1592 = vmatmul.mubr.bf16.gmra.mrb[0].mxu0 %v911
        %v1593 = vpop.f32.mrb[0].mxu0
        %v1594 = vadd.f32 0.0, %v1593
        %v1595 = vpop.f32.mrb[0].mxu0
        %v1596 = vpop.f32.mrb[0].mxu0
        %v1597 = vadd.f32 0.0, %v1596
        %v1598 = vpop.f32.mrb[0].mxu0
        %1599 = vmatprep.mubr.bf16.mxu0 0
        %1600 = vmatmul.mubr.bf16.gmra.mrb[0].mxu0 %v914
        %v1601 = vpop.f32.mrb[0].mxu0
        %v1602 = vadd.f32 0.0, %v1601
        %v1603 = vpop.f32.mrb[0].mxu0
        %v1604 = vpop.f32.mrb[0].mxu0
        %v1605 = vadd.f32 0.0, %v1604
        %v1606 = vpop.f32.mrb[0].mxu0
        %1607 = vmatprep.mubr.bf16.mxu0 0
        %1608 = vmatmul.mubr.bf16.gmra.mrb[0].mxu0 %v917
        %v1609 = vpop.f32.mrb[0].mxu0
        %v1610 = vadd.f32 0.0, %v1609
        %v1611 = vpop.f32.mrb[0].mxu0
        %v1612 = vpop.f32.mrb[0].mxu0
        %v1613 = vadd.f32 0.0, %v1612
        %v1614 = vpop.f32.mrb[0].mxu0
        %1615 = vmatprep.mubr.bf16.mxu0 0
        %1616 = vmatmul.mubr.bf16.gmra.mrb[0].mxu0 %v1458
        %v1617 = vpop.f32.mrb[0].mxu0
        %v1618 = vadd.f32 0.0, %v1617
        %v1619 = vpop.f32.mrb[0].mxu0
        %v1620 = vpop.f32.mrb[0].mxu0
        %v1621 = vadd.f32 0.0, %v1620
        %v1622 = vpop.f32.mrb[0].mxu0
        %1623 = vdwg.mxu0
        %v1624 = vadd.f32 %v1422, %v1498
        %v1625 = vadd.f32 %v1423, %v1501
        %v1626 = vadd.f32 %v1424, %v1506
        %v1627 = vadd.f32 %v1425, %v1509
        %v1628 = vadd.f32 %v1426, %v1514
        %v1629 = vadd.f32 %v1427, %v1517
        %v1630 = vadd.f32 %v1428, %v1522
        %v1631 = vadd.f32 %v1429, %v1525
        %v1632 = vadd.f32 %v1430, %v1530
        %v1633 = vadd.f32 %v1431, %v1533
        %v1634 = vadd.f32 %v1432, %v1538
        %v1635 = vadd.f32 %v1433, %v1541
        %v1636 = vadd.f32 %v1434, %v1546
        %v1637 = vadd.f32 %v1435, %v1549
        %v1638 = vadd.f32 %v1436, %v1554
        %v1639 = vadd.f32 %v1437, %v1557
        %v1640 = vadd.f32 %v1438, %v1562
        %v1641 = vadd.f32 %v1439, %v1565
        %v1642 = vadd.f32 %v1440, %v1570
        %v1643 = vadd.f32 %v1441, %v1573
        %v1644 = vadd.f32 %v1442, %v1578
        %v1645 = vadd.f32 %v1443, %v1581
        %v1646 = vadd.f32 %v1444, %v1586
        %v1647 = vadd.f32 %v1445, %v1589
        %v1648 = vadd.f32 %v1446, %v1594
        %v1649 = vadd.f32 %v1447, %v1597
        %v1650 = vadd.f32 %v1448, %v1602
        %v1651 = vadd.f32 %v1449, %v1605
        %v1652 = vadd.f32 %v1450, %v1610
        %v1653 = vadd.f32 %v1451, %v1613
        %v1654 = vadd.f32 %v1452, %v1618
        %v1655 = vadd.f32 %v1453, %v1621
        %v1658 = vrot.slane %v465, 1
        %v1659 = vrot.slane %v401, 1
        %v1660 = vsel %vm530, %v1658, %v1659
        %v1661 = vrot.slane %v481, 1
        %v1662 = vsel %vm530, %v1659, %v1661
        %v1665 = vpack.c.bf16 %v1662, %v1660
        %s1666 = scalar_lea.vmem [#allocation5], 8
        %v1667 = vld [vmem:[%s1666] sm:$0x3]
        %v1669 = vsel %vm657, %v1665, 0
        %v1672 = vsel %vm706, %v1667, 0
        %1674 = vmatprep.subr.bf16.mxu0 0
        %1675 = vmatpush1.bf16.msra.mxu0 %v1672
        %1676 = vmatprep.subr.bf16.mxu0 0
        %1677 = vmatpush1.bf16.msra.mxu0 0
        %1678 = vmatprep.subr.bf16.mxu0 0
        %1679 = vmatpush1.bf16.msra.mxu0 0
        %1680 = vmatprep.subr.bf16.mxu0 0
        %1681 = vmatpush1.bf16.msra.mxu0 0
        %1682 = vmatprep.subr.bf16.mxu0 0
        %1683 = vmatpush1.bf16.msra.mxu0 0
        %1684 = vmatprep.subr.bf16.mxu0 0
        %1685 = vmatpush1.bf16.msra.mxu0 0
        %1686 = vmatprep.subr.bf16.mxu0 0
        %1687 = vmatpush1.bf16.msra.mxu0 0
        %1688 = vmatprep.subr.bf16.mxu0 0
        %1689 = vmatpush1.bf16.msra.mxu0 0
        %1690 = vmatprep.subr.bf16.mxu0 0
        %1691 = vmatpush1.bf16.msra.mxu0 0
        %1692 = vmatprep.subr.bf16.mxu0 0
        %1693 = vmatpush1.bf16.msra.mxu0 0
        %1694 = vmatprep.subr.bf16.mxu0 0
        %1695 = vmatpush1.bf16.msra.mxu0 0
        %1696 = vmatprep.subr.bf16.mxu0 0
        %1697 = vmatpush1.bf16.msra.mxu0 0
        %1698 = vmatprep.subr.bf16.mxu0 0
        %1699 = vmatpush1.bf16.msra.mxu0 0
        %1700 = vmatprep.subr.bf16.mxu0 0
        %1701 = vmatpush1.bf16.msra.mxu0 0
        %1702 = vmatprep.subr.bf16.mxu0 0
        %1703 = vmatpush1.bf16.msra.mxu0 0
        %1704 = vmatprep.subr.bf16.mxu0 0
        %1705 = vmatpush1.bf16.msra.mxu0 0
        %1706 = vmatprep.mubr.bf16.mxu0 0
        %1707 = vmatmul.mubr.bf16.gmra.mrb[0].mxu0 %v662
        %v1708 = vpop.f32.mrb[0].mxu0
        %v1709 = vadd.f32 0.0, %v1708
        %v1710 = vpop.f32.mrb[0].mxu0
        %v1711 = vpop.f32.mrb[0].mxu0
        %v1712 = vadd.f32 0.0, %v1711
        %v1713 = vpop.f32.mrb[0].mxu0
        %1714 = vmatprep.mubr.bf16.mxu0 0
        %1715 = vmatmul.mubr.bf16.gmra.mrb[0].mxu0 %v665
        %v1716 = vpop.f32.mrb[0].mxu0
        %v1717 = vadd.f32 0.0, %v1716
        %v1718 = vpop.f32.mrb[0].mxu0
        %v1719 = vpop.f32.mrb[0].mxu0
        %v1720 = vadd.f32 0.0, %v1719
        %v1721 = vpop.f32.mrb[0].mxu0
        %1722 = vmatprep.mubr.bf16.mxu0 0
        %1723 = vmatmul.mubr.bf16.gmra.mrb[0].mxu0 %v668
        %v1724 = vpop.f32.mrb[0].mxu0
        %v1725 = vadd.f32 0.0, %v1724
        %v1726 = vpop.f32.mrb[0].mxu0
        %v1727 = vpop.f32.mrb[0].mxu0
        %v1728 = vadd.f32 0.0, %v1727
        %v1729 = vpop.f32.mrb[0].mxu0
        %1730 = vmatprep.mubr.bf16.mxu0 0
        %1731 = vmatmul.mubr.bf16.gmra.mrb[0].mxu0 %v671
        %v1732 = vpop.f32.mrb[0].mxu0
        %v1733 = vadd.f32 0.0, %v1732
        %v1734 = vpop.f32.mrb[0].mxu0
        %v1735 = vpop.f32.mrb[0].mxu0
        %v1736 = vadd.f32 0.0, %v1735
        %v1737 = vpop.f32.mrb[0].mxu0
        %1738 = vmatprep.mubr.bf16.mxu0 0
        %1739 = vmatmul.mubr.bf16.gmra.mrb[0].mxu0 %v674
        %v1740 = vpop.f32.mrb[0].mxu0
        %v1741 = vadd.f32 0.0, %v1740
        %v1742 = vpop.f32.mrb[0].mxu0
        %v1743 = vpop.f32.mrb[0].mxu0
        %v1744 = vadd.f32 0.0, %v1743
        %v1745 = vpop.f32.mrb[0].mxu0
        %1746 = vmatprep.mubr.bf16.mxu0 0
        %1747 = vmatmul.mubr.bf16.gmra.mrb[0].mxu0 %v677
        %v1748 = vpop.f32.mrb[0].mxu0
        %v1749 = vadd.f32 0.0, %v1748
        %v1750 = vpop.f32.mrb[0].mxu0
        %v1751 = vpop.f32.mrb[0].mxu0
        %v1752 = vadd.f32 0.0, %v1751
        %v1753 = vpop.f32.mrb[0].mxu0
        %1754 = vmatprep.mubr.bf16.mxu0 0
        %1755 = vmatmul.mubr.bf16.gmra.mrb[0].mxu0 %v680
        %v1756 = vpop.f32.mrb[0].mxu0
        %v1757 = vadd.f32 0.0, %v1756
        %v1758 = vpop.f32.mrb[0].mxu0
        %v1759 = vpop.f32.mrb[0].mxu0
        %v1760 = vadd.f32 0.0, %v1759
        %v1761 = vpop.f32.mrb[0].mxu0
        %1762 = vmatprep.mubr.bf16.mxu0 0
        %1763 = vmatmul.mubr.bf16.gmra.mrb[0].mxu0 %v683
        %v1764 = vpop.f32.mrb[0].mxu0
        %v1765 = vadd.f32 0.0, %v1764
        %v1766 = vpop.f32.mrb[0].mxu0
        %v1767 = vpop.f32.mrb[0].mxu0
        %v1768 = vadd.f32 0.0, %v1767
        %v1769 = vpop.f32.mrb[0].mxu0
        %1770 = vmatprep.mubr.bf16.mxu0 0
        %1771 = vmatmul.mubr.bf16.gmra.mrb[0].mxu0 %v686
        %v1772 = vpop.f32.mrb[0].mxu0
        %v1773 = vadd.f32 0.0, %v1772
        %v1774 = vpop.f32.mrb[0].mxu0
        %v1775 = vpop.f32.mrb[0].mxu0
        %v1776 = vadd.f32 0.0, %v1775
        %v1777 = vpop.f32.mrb[0].mxu0
        %1778 = vmatprep.mubr.bf16.mxu0 0
        %1779 = vmatmul.mubr.bf16.gmra.mrb[0].mxu0 %v689
        %v1780 = vpop.f32.mrb[0].mxu0
        %v1781 = vadd.f32 0.0, %v1780
        %v1782 = vpop.f32.mrb[0].mxu0
        %v1783 = vpop.f32.mrb[0].mxu0
        %v1784 = vadd.f32 0.0, %v1783
        %v1785 = vpop.f32.mrb[0].mxu0
        %1786 = vmatprep.mubr.bf16.mxu0 0
        %1787 = vmatmul.mubr.bf16.gmra.mrb[0].mxu0 %v692
        %v1788 = vpop.f32.mrb[0].mxu0
        %v1789 = vadd.f32 0.0, %v1788
        %v1790 = vpop.f32.mrb[0].mxu0
        %v1791 = vpop.f32.mrb[0].mxu0
        %v1792 = vadd.f32 0.0, %v1791
        %v1793 = vpop.f32.mrb[0].mxu0
        %1794 = vmatprep.mubr.bf16.mxu0 0
        %1795 = vmatmul.mubr.bf16.gmra.mrb[0].mxu0 %v695
        %v1796 = vpop.f32.mrb[0].mxu0
        %v1797 = vadd.f32 0.0, %v1796
        %v1798 = vpop.f32.mrb[0].mxu0
        %v1799 = vpop.f32.mrb[0].mxu0
        %v1800 = vadd.f32 0.0, %v1799
        %v1801 = vpop.f32.mrb[0].mxu0
        %1802 = vmatprep.mubr.bf16.mxu0 0
        %1803 = vmatmul.mubr.bf16.gmra.mrb[0].mxu0 %v698
        %v1804 = vpop.f32.mrb[0].mxu0
        %v1805 = vadd.f32 0.0, %v1804
        %v1806 = vpop.f32.mrb[0].mxu0
        %v1807 = vpop.f32.mrb[0].mxu0
        %v1808 = vadd.f32 0.0, %v1807
        %v1809 = vpop.f32.mrb[0].mxu0
        %1810 = vmatprep.mubr.bf16.mxu0 0
        %1811 = vmatmul.mubr.bf16.gmra.mrb[0].mxu0 %v701
        %v1812 = vpop.f32.mrb[0].mxu0
        %v1813 = vadd.f32 0.0, %v1812
        %v1814 = vpop.f32.mrb[0].mxu0
        %v1815 = vpop.f32.mrb[0].mxu0
        %v1816 = vadd.f32 0.0, %v1815
        %v1817 = vpop.f32.mrb[0].mxu0
        %1818 = vmatprep.mubr.bf16.mxu0 0
        %1819 = vmatmul.mubr.bf16.gmra.mrb[0].mxu0 %v704
        %v1820 = vpop.f32.mrb[0].mxu0
        %v1821 = vadd.f32 0.0, %v1820
        %v1822 = vpop.f32.mrb[0].mxu0
        %v1823 = vpop.f32.mrb[0].mxu0
        %v1824 = vadd.f32 0.0, %v1823
        %v1825 = vpop.f32.mrb[0].mxu0
        %1826 = vmatprep.mubr.bf16.mxu0 0
        %1827 = vmatmul.mubr.bf16.gmra.mrb[0].mxu0 %v1669
        %v1828 = vpop.f32.mrb[0].mxu0
        %v1829 = vadd.f32 0.0, %v1828
        %v1830 = vpop.f32.mrb[0].mxu0
        %v1831 = vpop.f32.mrb[0].mxu0
        %v1832 = vadd.f32 0.0, %v1831
        %v1833 = vpop.f32.mrb[0].mxu0
        %1834 = vdwg.mxu0
        %v1835 = vadd.f32 %v1624, %v1709
        %v1836 = vadd.f32 %v1625, %v1712
        %v1837 = vadd.f32 %v1626, %v1717
        %v1838 = vadd.f32 %v1627, %v1720
        %v1839 = vadd.f32 %v1628, %v1725
        %v1840 = vadd.f32 %v1629, %v1728
        %v1841 = vadd.f32 %v1630, %v1733
        %v1842 = vadd.f32 %v1631, %v1736
        %v1843 = vadd.f32 %v1632, %v1741
        %v1844 = vadd.f32 %v1633, %v1744
        %v1845 = vadd.f32 %v1634, %v1749
        %v1846 = vadd.f32 %v1635, %v1752
        %v1847 = vadd.f32 %v1636, %v1757
        %v1848 = vadd.f32 %v1637, %v1760
        %v1849 = vadd.f32 %v1638, %v1765
        %v1850 = vadd.f32 %v1639, %v1768
        %v1851 = vadd.f32 %v1640, %v1773
        %v1852 = vadd.f32 %v1641, %v1776
        %v1853 = vadd.f32 %v1642, %v1781
        %v1854 = vadd.f32 %v1643, %v1784
        %v1855 = vadd.f32 %v1644, %v1789
        %v1856 = vadd.f32 %v1645, %v1792
        %v1857 = vadd.f32 %v1646, %v1797
        %v1858 = vadd.f32 %v1647, %v1800
        %v1859 = vadd.f32 %v1648, %v1805
        %v1860 = vadd.f32 %v1649, %v1808
        %v1861 = vadd.f32 %v1650, %v1813
        %v1862 = vadd.f32 %v1651, %v1816
        %v1863 = vadd.f32 %v1652, %v1821
        %v1864 = vadd.f32 %v1653, %v1824
        %v1865 = vadd.f32 %v1654, %v1829
        %v1866 = vadd.f32 %v1655, %v1832
        %v1867 = vrot.slane %v465, 2
        %v1868 = vrot.slane %v401, 2
        %v1869 = vsel %vm1083, %v1867, %v1868
        %v1870 = vrot.slane %v481, 2
        %v1871 = vsel %vm1083, %v1868, %v1870
        %v1874 = vpack.c.bf16 %v1871, %v1869
        %s1875 = scalar_lea.vmem [#allocation5], 10
        %v1876 = vld [vmem:[%s1875] sm:$0x3]
        %v1878 = vsel %vm657, %v1874, 0
        %v1881 = vsel %vm706, %v1876, 0
        %1883 = vmatprep.subr.bf16.mxu0 0
        %1884 = vmatpush1.bf16.msra.mxu0 %v1881
        %1885 = vmatprep.subr.bf16.mxu0 0
        %1886 = vmatpush1.bf16.msra.mxu0 0
        %1887 = vmatprep.subr.bf16.mxu0 0
        %1888 = vmatpush1.bf16.msra.mxu0 0
        %1889 = vmatprep.subr.bf16.mxu0 0
        %1890 = vmatpush1.bf16.msra.mxu0 0
        %1891 = vmatprep.subr.bf16.mxu0 0
        %1892 = vmatpush1.bf16.msra.mxu0 0
        %1893 = vmatprep.subr.bf16.mxu0 0
        %1894 = vmatpush1.bf16.msra.mxu0 0
        %1895 = vmatprep.subr.bf16.mxu0 0
        %1896 = vmatpush1.bf16.msra.mxu0 0
        %1897 = vmatprep.subr.bf16.mxu0 0
        %1898 = vmatpush1.bf16.msra.mxu0 0
        %1899 = vmatprep.subr.bf16.mxu0 0
        %1900 = vmatpush1.bf16.msra.mxu0 0
        %1901 = vmatprep.subr.bf16.mxu0 0
        %1902 = vmatpush1.bf16.msra.mxu0 0
        %1903 = vmatprep.subr.bf16.mxu0 0
        %1904 = vmatpush1.bf16.msra.mxu0 0
        %1905 = vmatprep.subr.bf16.mxu0 0
        %1906 = vmatpush1.bf16.msra.mxu0 0
        %1907 = vmatprep.subr.bf16.mxu0 0
        %1908 = vmatpush1.bf16.msra.mxu0 0
        %1909 = vmatprep.subr.bf16.mxu0 0
        %1910 = vmatpush1.bf16.msra.mxu0 0
        %1911 = vmatprep.subr.bf16.mxu0 0
        %1912 = vmatpush1.bf16.msra.mxu0 0
        %1913 = vmatprep.subr.bf16.mxu0 0
        %1914 = vmatpush1.bf16.msra.mxu0 0
        %1915 = vmatprep.mubr.bf16.mxu0 0
        %1916 = vmatmul.mubr.bf16.gmra.mrb[0].mxu0 %v1214
        %v1917 = vpop.f32.mrb[0].mxu0
        %v1918 = vadd.f32 0.0, %v1917
        %v1919 = vpop.f32.mrb[0].mxu0
        %v1920 = vpop.f32.mrb[0].mxu0
        %v1921 = vadd.f32 0.0, %v1920
        %v1922 = vpop.f32.mrb[0].mxu0
        %1923 = vmatprep.mubr.bf16.mxu0 0
        %1924 = vmatmul.mubr.bf16.gmra.mrb[0].mxu0 %v1217
        %v1925 = vpop.f32.mrb[0].mxu0
        %v1926 = vadd.f32 0.0, %v1925
        %v1927 = vpop.f32.mrb[0].mxu0
        %v1928 = vpop.f32.mrb[0].mxu0
        %v1929 = vadd.f32 0.0, %v1928
        %v1930 = vpop.f32.mrb[0].mxu0
        %1931 = vmatprep.mubr.bf16.mxu0 0
        %1932 = vmatmul.mubr.bf16.gmra.mrb[0].mxu0 %v1220
        %v1933 = vpop.f32.mrb[0].mxu0
        %v1934 = vadd.f32 0.0, %v1933
        %v1935 = vpop.f32.mrb[0].mxu0
        %v1936 = vpop.f32.mrb[0].mxu0
        %v1937 = vadd.f32 0.0, %v1936
        %v1938 = vpop.f32.mrb[0].mxu0
        %1939 = vmatprep.mubr.bf16.mxu0 0
        %1940 = vmatmul.mubr.bf16.gmra.mrb[0].mxu0 %v1223
        %v1941 = vpop.f32.mrb[0].mxu0
        %v1942 = vadd.f32 0.0, %v1941
        %v1943 = vpop.f32.mrb[0].mxu0
        %v1944 = vpop.f32.mrb[0].mxu0
        %v1945 = vadd.f32 0.0, %v1944
        %v1946 = vpop.f32.mrb[0].mxu0
        %1947 = vmatprep.mubr.bf16.mxu0 0
        %1948 = vmatmul.mubr.bf16.gmra.mrb[0].mxu0 %v1226
        %v1949 = vpop.f32.mrb[0].mxu0
        %v1950 = vadd.f32 0.0, %v1949
        %v1951 = vpop.f32.mrb[0].mxu0
        %v1952 = vpop.f32.mrb[0].mxu0
        %v1953 = vadd.f32 0.0, %v1952
        %v1954 = vpop.f32.mrb[0].mxu0
        %1955 = vmatprep.mubr.bf16.mxu0 0
        %1956 = vmatmul.mubr.bf16.gmra.mrb[0].mxu0 %v1229
        %v1957 = vpop.f32.mrb[0].mxu0
        %v1958 = vadd.f32 0.0, %v1957
        %v1959 = vpop.f32.mrb[0].mxu0
        %v1960 = vpop.f32.mrb[0].mxu0
        %v1961 = vadd.f32 0.0, %v1960
        %v1962 = vpop.f32.mrb[0].mxu0
        %1963 = vmatprep.mubr.bf16.mxu0 0
        %1964 = vmatmul.mubr.bf16.gmra.mrb[0].mxu0 %v1232
        %v1965 = vpop.f32.mrb[0].mxu0
        %v1966 = vadd.f32 0.0, %v1965
        %v1967 = vpop.f32.mrb[0].mxu0
        %v1968 = vpop.f32.mrb[0].mxu0
        %v1969 = vadd.f32 0.0, %v1968
        %v1970 = vpop.f32.mrb[0].mxu0
        %1971 = vmatprep.mubr.bf16.mxu0 0
        %1972 = vmatmul.mubr.bf16.gmra.mrb[0].mxu0 %v1235
        %v1973 = vpop.f32.mrb[0].mxu0
        %v1974 = vadd.f32 0.0, %v1973
        %v1975 = vpop.f32.mrb[0].mxu0
        %v1976 = vpop.f32.mrb[0].mxu0
        %v1977 = vadd.f32 0.0, %v1976
        %v1978 = vpop.f32.mrb[0].mxu0
        %1979 = vmatprep.mubr.bf16.mxu0 0
        %1980 = vmatmul.mubr.bf16.gmra.mrb[0].mxu0 %v1238
        %v1981 = vpop.f32.mrb[0].mxu0
        %v1982 = vadd.f32 0.0, %v1981
        %v1983 = vpop.f32.mrb[0].mxu0
        %v1984 = vpop.f32.mrb[0].mxu0
        %v1985 = vadd.f32 0.0, %v1984
        %v1986 = vpop.f32.mrb[0].mxu0
        %1987 = vmatprep.mubr.bf16.mxu0 0
        %1988 = vmatmul.mubr.bf16.gmra.mrb[0].mxu0 %v1241
        %v1989 = vpop.f32.mrb[0].mxu0
        %v1990 = vadd.f32 0.0, %v1989
        %v1991 = vpop.f32.mrb[0].mxu0
        %v1992 = vpop.f32.mrb[0].mxu0
        %v1993 = vadd.f32 0.0, %v1992
        %v1994 = vpop.f32.mrb[0].mxu0
        %1995 = vmatprep.mubr.bf16.mxu0 0
        %1996 = vmatmul.mubr.bf16.gmra.mrb[0].mxu0 %v1244
        %v1997 = vpop.f32.mrb[0].mxu0
        %v1998 = vadd.f32 0.0, %v1997
        %v1999 = vpop.f32.mrb[0].mxu0
        %v2000 = vpop.f32.mrb[0].mxu0
        %v2001 = vadd.f32 0.0, %v2000
        %v2002 = vpop.f32.mrb[0].mxu0
        %2003 = vmatprep.mubr.bf16.mxu0 0
        %2004 = vmatmul.mubr.bf16.gmra.mrb[0].mxu0 %v1247
        %v2005 = vpop.f32.mrb[0].mxu0
        %v2006 = vadd.f32 0.0, %v2005
        %v2007 = vpop.f32.mrb[0].mxu0
        %v2008 = vpop.f32.mrb[0].mxu0
        %v2009 = vadd.f32 0.0, %v2008
        %v2010 = vpop.f32.mrb[0].mxu0
        %2011 = vmatprep.mubr.bf16.mxu0 0
        %2012 = vmatmul.mubr.bf16.gmra.mrb[0].mxu0 %v1250
        %v2013 = vpop.f32.mrb[0].mxu0
        %v2014 = vadd.f32 0.0, %v2013
        %v2015 = vpop.f32.mrb[0].mxu0
        %v2016 = vpop.f32.mrb[0].mxu0
        %v2017 = vadd.f32 0.0, %v2016
        %v2018 = vpop.f32.mrb[0].mxu0
        %2019 = vmatprep.mubr.bf16.mxu0 0
        %2020 = vmatmul.mubr.bf16.gmra.mrb[0].mxu0 %v1253
        %v2021 = vpop.f32.mrb[0].mxu0
        %v2022 = vadd.f32 0.0, %v2021
        %v2023 = vpop.f32.mrb[0].mxu0
        %v2024 = vpop.f32.mrb[0].mxu0
        %v2025 = vadd.f32 0.0, %v2024
        %v2026 = vpop.f32.mrb[0].mxu0
        %2027 = vmatprep.mubr.bf16.mxu0 0
        %2028 = vmatmul.mubr.bf16.gmra.mrb[0].mxu0 %v1256
        %v2029 = vpop.f32.mrb[0].mxu0
        %v2030 = vadd.f32 0.0, %v2029
        %v2031 = vpop.f32.mrb[0].mxu0
        %v2032 = vpop.f32.mrb[0].mxu0
        %v2033 = vadd.f32 0.0, %v2032
        %v2034 = vpop.f32.mrb[0].mxu0
        %2035 = vmatprep.mubr.bf16.mxu0 0
        %2036 = vmatmul.mubr.bf16.gmra.mrb[0].mxu0 %v1878
        %v2037 = vpop.f32.mrb[0].mxu0
        %v2038 = vadd.f32 0.0, %v2037
        %v2039 = vpop.f32.mrb[0].mxu0
        %v2040 = vpop.f32.mrb[0].mxu0
        %v2041 = vadd.f32 0.0, %v2040
        %v2042 = vpop.f32.mrb[0].mxu0
        %2043 = vdwg.mxu0
        %v2044 = vadd.f32 %v1835, %v1918
        %v2045 = vadd.f32 %v1836, %v1921
        %v2046 = vadd.f32 %v1837, %v1926
        %v2047 = vadd.f32 %v1838, %v1929
        %v2048 = vadd.f32 %v1839, %v1934
        %v2049 = vadd.f32 %v1840, %v1937
        %v2050 = vadd.f32 %v1841, %v1942
        %v2051 = vadd.f32 %v1842, %v1945
        %v2052 = vadd.f32 %v1843, %v1950
        %v2053 = vadd.f32 %v1844, %v1953
        %v2054 = vadd.f32 %v1845, %v1958
        %v2055 = vadd.f32 %v1846, %v1961
        %v2056 = vadd.f32 %v1847, %v1966
        %v2057 = vadd.f32 %v1848, %v1969
        %v2058 = vadd.f32 %v1849, %v1974
        %v2059 = vadd.f32 %v1850, %v1977
        %v2060 = vadd.f32 %v1851, %v1982
        %v2061 = vadd.f32 %v1852, %v1985
        %v2062 = vadd.f32 %v1853, %v1990
        %v2063 = vadd.f32 %v1854, %v1993
        %v2064 = vadd.f32 %v1855, %v1998
        %v2065 = vadd.f32 %v1856, %v2001
        %v2066 = vadd.f32 %v1857, %v2006
        %v2067 = vadd.f32 %v1858, %v2009
        %v2068 = vadd.f32 %v1859, %v2014
        %v2069 = vadd.f32 %v1860, %v2017
        %v2070 = vadd.f32 %v1861, %v2022
        %v2071 = vadd.f32 %v1862, %v2025
        %v2072 = vadd.f32 %v1863, %v2030
        %v2073 = vadd.f32 %v1864, %v2033
        %v2074 = vadd.f32 %v1865, %v2038
        %v2075 = vadd.f32 %v1866, %v2041
        %s2076 = scalar_lea.vmem [#allocation5], 12
        %v2077 = vld [vmem:[%s2076] sm:$0x3]
        %v2079 = vsel %vm706, %v2077, 0
        %2081 = vmatprep.subr.bf16.mxu0 0
        %2082 = vmatpush1.bf16.msra.mxu0 %v2079
        %2083 = vmatprep.subr.bf16.mxu0 0
        %2084 = vmatpush1.bf16.msra.mxu0 0
        %2085 = vmatprep.subr.bf16.mxu0 0
        %2086 = vmatpush1.bf16.msra.mxu0 0
        %2087 = vmatprep.subr.bf16.mxu0 0
        %2088 = vmatpush1.bf16.msra.mxu0 0
        %2089 = vmatprep.subr.bf16.mxu0 0
        %2090 = vmatpush1.bf16.msra.mxu0 0
        %2091 = vmatprep.subr.bf16.mxu0 0
        %2092 = vmatpush1.bf16.msra.mxu0 0
        %2093 = vmatprep.subr.bf16.mxu0 0
        %2094 = vmatpush1.bf16.msra.mxu0 0
        %2095 = vmatprep.subr.bf16.mxu0 0
        %2096 = vmatpush1.bf16.msra.mxu0 0
        %2097 = vmatprep.subr.bf16.mxu0 0
        %2098 = vmatpush1.bf16.msra.mxu0 0
        %2099 = vmatprep.subr.bf16.mxu0 0
        %2100 = vmatpush1.bf16.msra.mxu0 0
        %2101 = vmatprep.subr.bf16.mxu0 0
        %2102 = vmatpush1.bf16.msra.mxu0 0
        %2103 = vmatprep.subr.bf16.mxu0 0
        %2104 = vmatpush1.bf16.msra.mxu0 0
        %2105 = vmatprep.subr.bf16.mxu0 0
        %2106 = vmatpush1.bf16.msra.mxu0 0
        %2107 = vmatprep.subr.bf16.mxu0 0
        %2108 = vmatpush1.bf16.msra.mxu0 0
        %2109 = vmatprep.subr.bf16.mxu0 0
        %2110 = vmatpush1.bf16.msra.mxu0 0
        %2111 = vmatprep.subr.bf16.mxu0 0
        %2112 = vmatpush1.bf16.msra.mxu0 0
        %2113 = vmatprep.mubr.bf16.mxu0 0
        %2114 = vmatmul.mubr.bf16.gmra.mrb[0].mxu0 %v878
        %v2115 = vpop.f32.mrb[0].mxu0
        %v2116 = vadd.f32 0.0, %v2115
        %v2117 = vpop.f32.mrb[0].mxu0
        %v2118 = vpop.f32.mrb[0].mxu0
        %v2119 = vadd.f32 0.0, %v2118
        %v2120 = vpop.f32.mrb[0].mxu0
        %2121 = vmatprep.mubr.bf16.mxu0 0
        %2122 = vmatmul.mubr.bf16.gmra.mrb[0].mxu0 %v881
        %v2123 = vpop.f32.mrb[0].mxu0
        %v2124 = vadd.f32 0.0, %v2123
        %v2125 = vpop.f32.mrb[0].mxu0
        %v2126 = vpop.f32.mrb[0].mxu0
        %v2127 = vadd.f32 0.0, %v2126
        %v2128 = vpop.f32.mrb[0].mxu0
        %2129 = vmatprep.mubr.bf16.mxu0 0
        %2130 = vmatmul.mubr.bf16.gmra.mrb[0].mxu0 %v884
        %v2131 = vpop.f32.mrb[0].mxu0
        %v2132 = vadd.f32 0.0, %v2131
        %v2133 = vpop.f32.mrb[0].mxu0
        %v2134 = vpop.f32.mrb[0].mxu0
        %v2135 = vadd.f32 0.0, %v2134
        %v2136 = vpop.f32.mrb[0].mxu0
        %2137 = vmatprep.mubr.bf16.mxu0 0
        %2138 = vmatmul.mubr.bf16.gmra.mrb[0].mxu0 %v887
        %v2139 = vpop.f32.mrb[0].mxu0
        %v2140 = vadd.f32 0.0, %v2139
        %v2141 = vpop.f32.mrb[0].mxu0
        %v2142 = vpop.f32.mrb[0].mxu0
        %v2143 = vadd.f32 0.0, %v2142
        %v2144 = vpop.f32.mrb[0].mxu0
        %2145 = vmatprep.mubr.bf16.mxu0 0
        %2146 = vmatmul.mubr.bf16.gmra.mrb[0].mxu0 %v890
        %v2147 = vpop.f32.mrb[0].mxu0
        %v2148 = vadd.f32 0.0, %v2147
        %v2149 = vpop.f32.mrb[0].mxu0
        %v2150 = vpop.f32.mrb[0].mxu0
        %v2151 = vadd.f32 0.0, %v2150
        %v2152 = vpop.f32.mrb[0].mxu0
        %2153 = vmatprep.mubr.bf16.mxu0 0
        %2154 = vmatmul.mubr.bf16.gmra.mrb[0].mxu0 %v893
        %v2155 = vpop.f32.mrb[0].mxu0
        %v2156 = vadd.f32 0.0, %v2155
        %v2157 = vpop.f32.mrb[0].mxu0
        %v2158 = vpop.f32.mrb[0].mxu0
        %v2159 = vadd.f32 0.0, %v2158
        %v2160 = vpop.f32.mrb[0].mxu0
        %2161 = vmatprep.mubr.bf16.mxu0 0
        %2162 = vmatmul.mubr.bf16.gmra.mrb[0].mxu0 %v896
        %v2163 = vpop.f32.mrb[0].mxu0
        %v2164 = vadd.f32 0.0, %v2163
        %v2165 = vpop.f32.mrb[0].mxu0
        %v2166 = vpop.f32.mrb[0].mxu0
        %v2167 = vadd.f32 0.0, %v2166
        %v2168 = vpop.f32.mrb[0].mxu0
        %2169 = vmatprep.mubr.bf16.mxu0 0
        %2170 = vmatmul.mubr.bf16.gmra.mrb[0].mxu0 %v899
        %v2171 = vpop.f32.mrb[0].mxu0
        %v2172 = vadd.f32 0.0, %v2171
        %v2173 = vpop.f32.mrb[0].mxu0
        %v2174 = vpop.f32.mrb[0].mxu0
        %v2175 = vadd.f32 0.0, %v2174
        %v2176 = vpop.f32.mrb[0].mxu0
        %2177 = vmatprep.mubr.bf16.mxu0 0
        %2178 = vmatmul.mubr.bf16.gmra.mrb[0].mxu0 %v902
        %v2179 = vpop.f32.mrb[0].mxu0
        %v2180 = vadd.f32 0.0, %v2179
        %v2181 = vpop.f32.mrb[0].mxu0
        %v2182 = vpop.f32.mrb[0].mxu0
        %v2183 = vadd.f32 0.0, %v2182
        %v2184 = vpop.f32.mrb[0].mxu0
        %2185 = vmatprep.mubr.bf16.mxu0 0
        %2186 = vmatmul.mubr.bf16.gmra.mrb[0].mxu0 %v905
        %v2187 = vpop.f32.mrb[0].mxu0
        %v2188 = vadd.f32 0.0, %v2187
        %v2189 = vpop.f32.mrb[0].mxu0
        %v2190 = vpop.f32.mrb[0].mxu0
        %v2191 = vadd.f32 0.0, %v2190
        %v2192 = vpop.f32.mrb[0].mxu0
        %2193 = vmatprep.mubr.bf16.mxu0 0
        %2194 = vmatmul.mubr.bf16.gmra.mrb[0].mxu0 %v908
        %v2195 = vpop.f32.mrb[0].mxu0
        %v2196 = vadd.f32 0.0, %v2195
        %v2197 = vpop.f32.mrb[0].mxu0
        %v2198 = vpop.f32.mrb[0].mxu0
        %v2199 = vadd.f32 0.0, %v2198
        %v2200 = vpop.f32.mrb[0].mxu0
        %2201 = vmatprep.mubr.bf16.mxu0 0
        %2202 = vmatmul.mubr.bf16.gmra.mrb[0].mxu0 %v911
        %v2203 = vpop.f32.mrb[0].mxu0
        %v2204 = vadd.f32 0.0, %v2203
        %v2205 = vpop.f32.mrb[0].mxu0
        %v2206 = vpop.f32.mrb[0].mxu0
        %v2207 = vadd.f32 0.0, %v2206
        %v2208 = vpop.f32.mrb[0].mxu0
        %2209 = vmatprep.mubr.bf16.mxu0 0
        %2210 = vmatmul.mubr.bf16.gmra.mrb[0].mxu0 %v914
        %v2211 = vpop.f32.mrb[0].mxu0
        %v2212 = vadd.f32 0.0, %v2211
        %v2213 = vpop.f32.mrb[0].mxu0
        %v2214 = vpop.f32.mrb[0].mxu0
        %v2215 = vadd.f32 0.0, %v2214
        %v2216 = vpop.f32.mrb[0].mxu0
        %2217 = vmatprep.mubr.bf16.mxu0 0
        %2218 = vmatmul.mubr.bf16.gmra.mrb[0].mxu0 %v917
        %v2219 = vpop.f32.mrb[0].mxu0
        %v2220 = vadd.f32 0.0, %v2219
        %v2221 = vpop.f32.mrb[0].mxu0
        %v2222 = vpop.f32.mrb[0].mxu0
        %v2223 = vadd.f32 0.0, %v2222
        %v2224 = vpop.f32.mrb[0].mxu0
        %2225 = vmatprep.mubr.bf16.mxu0 0
        %2226 = vmatmul.mubr.bf16.gmra.mrb[0].mxu0 %v1458
        %v2227 = vpop.f32.mrb[0].mxu0
        %v2228 = vadd.f32 0.0, %v2227
        %v2229 = vpop.f32.mrb[0].mxu0
        %v2230 = vpop.f32.mrb[0].mxu0
        %v2231 = vadd.f32 0.0, %v2230
        %v2232 = vpop.f32.mrb[0].mxu0
        %2233 = vmatprep.mubr.bf16.mxu0 0
        %2234 = vmatmul.mubr.bf16.gmra.mrb[0].mxu0 %v872
        %v2235 = vpop.f32.mrb[0].mxu0
        %v2236 = vadd.f32 0.0, %v2235
        %v2237 = vpop.f32.mrb[0].mxu0
        %v2238 = vpop.f32.mrb[0].mxu0
        %v2239 = vadd.f32 0.0, %v2238
        %v2240 = vpop.f32.mrb[0].mxu0
        %2241 = vdwg.mxu0
        %v2242 = vadd.f32 %v2044, %v2116
        %v2243 = vadd.f32 %v2045, %v2119
        %v2244 = vadd.f32 %v2046, %v2124
        %v2245 = vadd.f32 %v2047, %v2127
        %v2246 = vadd.f32 %v2048, %v2132
        %v2247 = vadd.f32 %v2049, %v2135
        %v2248 = vadd.f32 %v2050, %v2140
        %v2249 = vadd.f32 %v2051, %v2143
        %v2250 = vadd.f32 %v2052, %v2148
        %v2251 = vadd.f32 %v2053, %v2151
        %v2252 = vadd.f32 %v2054, %v2156
        %v2253 = vadd.f32 %v2055, %v2159
        %v2254 = vadd.f32 %v2056, %v2164
        %v2255 = vadd.f32 %v2057, %v2167
        %v2256 = vadd.f32 %v2058, %v2172
        %v2257 = vadd.f32 %v2059, %v2175
        %v2258 = vadd.f32 %v2060, %v2180
        %v2259 = vadd.f32 %v2061, %v2183
        %v2260 = vadd.f32 %v2062, %v2188
        %v2261 = vadd.f32 %v2063, %v2191
        %v2262 = vadd.f32 %v2064, %v2196
        %v2263 = vadd.f32 %v2065, %v2199
        %v2264 = vadd.f32 %v2066, %v2204
        %v2265 = vadd.f32 %v2067, %v2207
        %v2266 = vadd.f32 %v2068, %v2212
        %v2267 = vadd.f32 %v2069, %v2215
        %v2268 = vadd.f32 %v2070, %v2220
        %v2269 = vadd.f32 %v2071, %v2223
        %v2270 = vadd.f32 %v2072, %v2228
        %v2271 = vadd.f32 %v2073, %v2231
        %v2272 = vadd.f32 %v2074, %v2236
        %v2273 = vadd.f32 %v2075, %v2239
        %s2274 = scalar_lea.vmem [#allocation5], 14
        %v2275 = vld [vmem:[%s2274] sm:$0x3]
        %v2277 = vsel %vm706, %v2275, 0
        %2279 = vmatprep.subr.bf16.mxu0 0
        %2280 = vmatpush1.bf16.msra.mxu0 %v2277
        %2281 = vmatprep.subr.bf16.mxu0 0
        %2282 = vmatpush1.bf16.msra.mxu0 0
        %2283 = vmatprep.subr.bf16.mxu0 0
        %2284 = vmatpush1.bf16.msra.mxu0 0
        %2285 = vmatprep.subr.bf16.mxu0 0
        %2286 = vmatpush1.bf16.msra.mxu0 0
        %2287 = vmatprep.subr.bf16.mxu0 0
        %2288 = vmatpush1.bf16.msra.mxu0 0
        %2289 = vmatprep.subr.bf16.mxu0 0
        %2290 = vmatpush1.bf16.msra.mxu0 0
        %2291 = vmatprep.subr.bf16.mxu0 0
        %2292 = vmatpush1.bf16.msra.mxu0 0
        %2293 = vmatprep.subr.bf16.mxu0 0
        %2294 = vmatpush1.bf16.msra.mxu0 0
        %2295 = vmatprep.subr.bf16.mxu0 0
        %2296 = vmatpush1.bf16.msra.mxu0 0
        %2297 = vmatprep.subr.bf16.mxu0 0
        %2298 = vmatpush1.bf16.msra.mxu0 0
        %2299 = vmatprep.subr.bf16.mxu0 0
        %2300 = vmatpush1.bf16.msra.mxu0 0
        %2301 = vmatprep.subr.bf16.mxu0 0
        %2302 = vmatpush1.bf16.msra.mxu0 0
        %2303 = vmatprep.subr.bf16.mxu0 0
        %2304 = vmatpush1.bf16.msra.mxu0 0
        %2305 = vmatprep.subr.bf16.mxu0 0
        %2306 = vmatpush1.bf16.msra.mxu0 0
        %2307 = vmatprep.subr.bf16.mxu0 0
        %2308 = vmatpush1.bf16.msra.mxu0 0
        %2309 = vmatprep.subr.bf16.mxu0 0
        %2310 = vmatpush1.bf16.msra.mxu0 0
        %2311 = vmatprep.mubr.bf16.mxu0 0
        %2312 = vmatmul.mubr.bf16.gmra.mrb[0].mxu0 %v665
        %v2313 = vpop.f32.mrb[0].mxu0
        %v2314 = vadd.f32 0.0, %v2313
        %v2315 = vpop.f32.mrb[0].mxu0
        %v2316 = vpop.f32.mrb[0].mxu0
        %v2317 = vadd.f32 0.0, %v2316
        %v2318 = vpop.f32.mrb[0].mxu0
        %2319 = vmatprep.mubr.bf16.mxu0 0
        %2320 = vmatmul.mubr.bf16.gmra.mrb[0].mxu0 %v668
        %v2321 = vpop.f32.mrb[0].mxu0
        %v2322 = vadd.f32 0.0, %v2321
        %v2323 = vpop.f32.mrb[0].mxu0
        %v2324 = vpop.f32.mrb[0].mxu0
        %v2325 = vadd.f32 0.0, %v2324
        %v2326 = vpop.f32.mrb[0].mxu0
        %2327 = vmatprep.mubr.bf16.mxu0 0
        %2328 = vmatmul.mubr.bf16.gmra.mrb[0].mxu0 %v671
        %v2329 = vpop.f32.mrb[0].mxu0
        %v2330 = vadd.f32 0.0, %v2329
        %v2331 = vpop.f32.mrb[0].mxu0
        %v2332 = vpop.f32.mrb[0].mxu0
        %v2333 = vadd.f32 0.0, %v2332
        %v2334 = vpop.f32.mrb[0].mxu0
        %2335 = vmatprep.mubr.bf16.mxu0 0
        %2336 = vmatmul.mubr.bf16.gmra.mrb[0].mxu0 %v674
        %v2337 = vpop.f32.mrb[0].mxu0
        %v2338 = vadd.f32 0.0, %v2337
        %v2339 = vpop.f32.mrb[0].mxu0
        %v2340 = vpop.f32.mrb[0].mxu0
        %v2341 = vadd.f32 0.0, %v2340
        %v2342 = vpop.f32.mrb[0].mxu0
        %2343 = vmatprep.mubr.bf16.mxu0 0
        %2344 = vmatmul.mubr.bf16.gmra.mrb[0].mxu0 %v677
        %v2345 = vpop.f32.mrb[0].mxu0
        %v2346 = vadd.f32 0.0, %v2345
        %v2347 = vpop.f32.mrb[0].mxu0
        %v2348 = vpop.f32.mrb[0].mxu0
        %v2349 = vadd.f32 0.0, %v2348
        %v2350 = vpop.f32.mrb[0].mxu0
        %2351 = vmatprep.mubr.bf16.mxu0 0
        %2352 = vmatmul.mubr.bf16.gmra.mrb[0].mxu0 %v680
        %v2353 = vpop.f32.mrb[0].mxu0
        %v2354 = vadd.f32 0.0, %v2353
        %v2355 = vpop.f32.mrb[0].mxu0
        %v2356 = vpop.f32.mrb[0].mxu0
        %v2357 = vadd.f32 0.0, %v2356
        %v2358 = vpop.f32.mrb[0].mxu0
        %2359 = vmatprep.mubr.bf16.mxu0 0
        %2360 = vmatmul.mubr.bf16.gmra.mrb[0].mxu0 %v683
        %v2361 = vpop.f32.mrb[0].mxu0
        %v2362 = vadd.f32 0.0, %v2361
        %v2363 = vpop.f32.mrb[0].mxu0
        %v2364 = vpop.f32.mrb[0].mxu0
        %v2365 = vadd.f32 0.0, %v2364
        %v2366 = vpop.f32.mrb[0].mxu0
        %2367 = vmatprep.mubr.bf16.mxu0 0
        %2368 = vmatmul.mubr.bf16.gmra.mrb[0].mxu0 %v686
        %v2369 = vpop.f32.mrb[0].mxu0
        %v2370 = vadd.f32 0.0, %v2369
        %v2371 = vpop.f32.mrb[0].mxu0
        %v2372 = vpop.f32.mrb[0].mxu0
        %v2373 = vadd.f32 0.0, %v2372
        %v2374 = vpop.f32.mrb[0].mxu0
        %2375 = vmatprep.mubr.bf16.mxu0 0
        %2376 = vmatmul.mubr.bf16.gmra.mrb[0].mxu0 %v689
        %v2377 = vpop.f32.mrb[0].mxu0
        %v2378 = vadd.f32 0.0, %v2377
        %v2379 = vpop.f32.mrb[0].mxu0
        %v2380 = vpop.f32.mrb[0].mxu0
        %v2381 = vadd.f32 0.0, %v2380
        %v2382 = vpop.f32.mrb[0].mxu0
        %2383 = vmatprep.mubr.bf16.mxu0 0
        %2384 = vmatmul.mubr.bf16.gmra.mrb[0].mxu0 %v692
        %v2385 = vpop.f32.mrb[0].mxu0
        %v2386 = vadd.f32 0.0, %v2385
        %v2387 = vpop.f32.mrb[0].mxu0
        %v2388 = vpop.f32.mrb[0].mxu0
        %v2389 = vadd.f32 0.0, %v2388
        %v2390 = vpop.f32.mrb[0].mxu0
        %2391 = vmatprep.mubr.bf16.mxu0 0
        %2392 = vmatmul.mubr.bf16.gmra.mrb[0].mxu0 %v695
        %v2393 = vpop.f32.mrb[0].mxu0
        %v2394 = vadd.f32 0.0, %v2393
        %v2395 = vpop.f32.mrb[0].mxu0
        %v2396 = vpop.f32.mrb[0].mxu0
        %v2397 = vadd.f32 0.0, %v2396
        %v2398 = vpop.f32.mrb[0].mxu0
        %2399 = vmatprep.mubr.bf16.mxu0 0
        %2400 = vmatmul.mubr.bf16.gmra.mrb[0].mxu0 %v698
        %v2401 = vpop.f32.mrb[0].mxu0
        %v2402 = vadd.f32 0.0, %v2401
        %v2403 = vpop.f32.mrb[0].mxu0
        %v2404 = vpop.f32.mrb[0].mxu0
        %v2405 = vadd.f32 0.0, %v2404
        %v2406 = vpop.f32.mrb[0].mxu0
        %2407 = vmatprep.mubr.bf16.mxu0 0
        %2408 = vmatmul.mubr.bf16.gmra.mrb[0].mxu0 %v701
        %v2409 = vpop.f32.mrb[0].mxu0
        %v2410 = vadd.f32 0.0, %v2409
        %v2411 = vpop.f32.mrb[0].mxu0
        %v2412 = vpop.f32.mrb[0].mxu0
        %v2413 = vadd.f32 0.0, %v2412
        %v2414 = vpop.f32.mrb[0].mxu0
        %2415 = vmatprep.mubr.bf16.mxu0 0
        %2416 = vmatmul.mubr.bf16.gmra.mrb[0].mxu0 %v704
        %v2417 = vpop.f32.mrb[0].mxu0
        %v2418 = vadd.f32 0.0, %v2417
        %v2419 = vpop.f32.mrb[0].mxu0
        %v2420 = vpop.f32.mrb[0].mxu0
        %v2421 = vadd.f32 0.0, %v2420
        %v2422 = vpop.f32.mrb[0].mxu0
        %2423 = vmatprep.mubr.bf16.mxu0 0
        %2424 = vmatmul.mubr.bf16.gmra.mrb[0].mxu0 %v1669
        %v2425 = vpop.f32.mrb[0].mxu0
        %v2426 = vadd.f32 0.0, %v2425
        %v2427 = vpop.f32.mrb[0].mxu0
        %v2428 = vpop.f32.mrb[0].mxu0
        %v2429 = vadd.f32 0.0, %v2428
        %v2430 = vpop.f32.mrb[0].mxu0
        %2431 = vmatprep.mubr.bf16.mxu0 0
        %2432 = vmatmul.mubr.bf16.gmra.mrb[0].mxu0 %v659
        %v2433 = vpop.f32.mrb[0].mxu0
        %v2434 = vadd.f32 0.0, %v2433
        %v2435 = vpop.f32.mrb[0].mxu0
        %v2436 = vpop.f32.mrb[0].mxu0
        %v2437 = vadd.f32 0.0, %v2436
        %v2438 = vpop.f32.mrb[0].mxu0
        %2439 = vdwg.mxu0
        %v2440 = vadd.f32 %v2242, %v2314
        %v2441 = vadd.f32 %v2243, %v2317
        %v2442 = vadd.f32 %v2244, %v2322
        %v2443 = vadd.f32 %v2245, %v2325
        %v2444 = vadd.f32 %v2246, %v2330
        %v2445 = vadd.f32 %v2247, %v2333
        %v2446 = vadd.f32 %v2248, %v2338
        %v2447 = vadd.f32 %v2249, %v2341
        %v2448 = vadd.f32 %v2250, %v2346
        %v2449 = vadd.f32 %v2251, %v2349
        %v2450 = vadd.f32 %v2252, %v2354
        %v2451 = vadd.f32 %v2253, %v2357
        %v2452 = vadd.f32 %v2254, %v2362
        %v2453 = vadd.f32 %v2255, %v2365
        %v2454 = vadd.f32 %v2256, %v2370
        %v2455 = vadd.f32 %v2257, %v2373
        %v2456 = vadd.f32 %v2258, %v2378
        %v2457 = vadd.f32 %v2259, %v2381
        %v2458 = vadd.f32 %v2260, %v2386
        %v2459 = vadd.f32 %v2261, %v2389
        %v2460 = vadd.f32 %v2262, %v2394
        %v2461 = vadd.f32 %v2263, %v2397
        %v2462 = vadd.f32 %v2264, %v2402
        %v2463 = vadd.f32 %v2265, %v2405
        %v2464 = vadd.f32 %v2266, %v2410
        %v2465 = vadd.f32 %v2267, %v2413
        %v2466 = vadd.f32 %v2268, %v2418
        %v2467 = vadd.f32 %v2269, %v2421
        %v2468 = vadd.f32 %v2270, %v2426
        %v2469 = vadd.f32 %v2271, %v2429
        %v2470 = vadd.f32 %v2272, %v2434
        %v2471 = vadd.f32 %v2273, %v2437
        %s2472 = scalar_lea.vmem [#allocation5], 16
        %v2473 = vld [vmem:[%s2472] sm:$0x3]
        %v2475 = vsel %vm706, %v2473, 0
        %2477 = vmatprep.subr.bf16.mxu0 0
        %2478 = vmatpush1.bf16.msra.mxu0 %v2475
        %2479 = vmatprep.subr.bf16.mxu0 0
        %2480 = vmatpush1.bf16.msra.mxu0 0
        %2481 = vmatprep.subr.bf16.mxu0 0
        %2482 = vmatpush1.bf16.msra.mxu0 0
        %2483 = vmatprep.subr.bf16.mxu0 0
        %2484 = vmatpush1.bf16.msra.mxu0 0
        %2485 = vmatprep.subr.bf16.mxu0 0
        %2486 = vmatpush1.bf16.msra.mxu0 0
        %2487 = vmatprep.subr.bf16.mxu0 0
        %2488 = vmatpush1.bf16.msra.mxu0 0
        %2489 = vmatprep.subr.bf16.mxu0 0
        %2490 = vmatpush1.bf16.msra.mxu0 0
        %2491 = vmatprep.subr.bf16.mxu0 0
        %2492 = vmatpush1.bf16.msra.mxu0 0
        %2493 = vmatprep.subr.bf16.mxu0 0
        %2494 = vmatpush1.bf16.msra.mxu0 0
        %2495 = vmatprep.subr.bf16.mxu0 0
        %2496 = vmatpush1.bf16.msra.mxu0 0
        %2497 = vmatprep.subr.bf16.mxu0 0
        %2498 = vmatpush1.bf16.msra.mxu0 0
        %2499 = vmatprep.subr.bf16.mxu0 0
        %2500 = vmatpush1.bf16.msra.mxu0 0
        %2501 = vmatprep.subr.bf16.mxu0 0
        %2502 = vmatpush1.bf16.msra.mxu0 0
        %2503 = vmatprep.subr.bf16.mxu0 0
        %2504 = vmatpush1.bf16.msra.mxu0 0
        %2505 = vmatprep.subr.bf16.mxu0 0
        %2506 = vmatpush1.bf16.msra.mxu0 0
        %2507 = vmatprep.subr.bf16.mxu0 0
        %2508 = vmatpush1.bf16.msra.mxu0 0
        %2509 = vmatprep.mubr.bf16.mxu0 0
        %2510 = vmatmul.mubr.bf16.gmra.mrb[0].mxu0 %v1217
        %v2511 = vpop.f32.mrb[0].mxu0
        %v2512 = vadd.f32 0.0, %v2511
        %v2513 = vpop.f32.mrb[0].mxu0
        %v2514 = vpop.f32.mrb[0].mxu0
        %v2515 = vadd.f32 0.0, %v2514
        %v2516 = vpop.f32.mrb[0].mxu0
        %2517 = vmatprep.mubr.bf16.mxu0 0
        %2518 = vmatmul.mubr.bf16.gmra.mrb[0].mxu0 %v1220
        %v2519 = vpop.f32.mrb[0].mxu0
        %v2520 = vadd.f32 0.0, %v2519
        %v2521 = vpop.f32.mrb[0].mxu0
        %v2522 = vpop.f32.mrb[0].mxu0
        %v2523 = vadd.f32 0.0, %v2522
        %v2524 = vpop.f32.mrb[0].mxu0
        %2525 = vmatprep.mubr.bf16.mxu0 0
        %2526 = vmatmul.mubr.bf16.gmra.mrb[0].mxu0 %v1223
        %v2527 = vpop.f32.mrb[0].mxu0
        %v2528 = vadd.f32 0.0, %v2527
        %v2529 = vpop.f32.mrb[0].mxu0
        %v2530 = vpop.f32.mrb[0].mxu0
        %v2531 = vadd.f32 0.0, %v2530
        %v2532 = vpop.f32.mrb[0].mxu0
        %2533 = vmatprep.mubr.bf16.mxu0 0
        %2534 = vmatmul.mubr.bf16.gmra.mrb[0].mxu0 %v1226
        %v2535 = vpop.f32.mrb[0].mxu0
        %v2536 = vadd.f32 0.0, %v2535
        %v2537 = vpop.f32.mrb[0].mxu0
        %v2538 = vpop.f32.mrb[0].mxu0
        %v2539 = vadd.f32 0.0, %v2538
        %v2540 = vpop.f32.mrb[0].mxu0
        %2541 = vmatprep.mubr.bf16.mxu0 0
        %2542 = vmatmul.mubr.bf16.gmra.mrb[0].mxu0 %v1229
        %v2543 = vpop.f32.mrb[0].mxu0
        %v2544 = vadd.f32 0.0, %v2543
        %v2545 = vpop.f32.mrb[0].mxu0
        %v2546 = vpop.f32.mrb[0].mxu0
        %v2547 = vadd.f32 0.0, %v2546
        %v2548 = vpop.f32.mrb[0].mxu0
        %2549 = vmatprep.mubr.bf16.mxu0 0
        %2550 = vmatmul.mubr.bf16.gmra.mrb[0].mxu0 %v1232
        %v2551 = vpop.f32.mrb[0].mxu0
        %v2552 = vadd.f32 0.0, %v2551
        %v2553 = vpop.f32.mrb[0].mxu0
        %v2554 = vpop.f32.mrb[0].mxu0
        %v2555 = vadd.f32 0.0, %v2554
        %v2556 = vpop.f32.mrb[0].mxu0
        %2557 = vmatprep.mubr.bf16.mxu0 0
        %2558 = vmatmul.mubr.bf16.gmra.mrb[0].mxu0 %v1235
        %v2559 = vpop.f32.mrb[0].mxu0
        %v2560 = vadd.f32 0.0, %v2559
        %v2561 = vpop.f32.mrb[0].mxu0
        %v2562 = vpop.f32.mrb[0].mxu0
        %v2563 = vadd.f32 0.0, %v2562
        %v2564 = vpop.f32.mrb[0].mxu0
        %2565 = vmatprep.mubr.bf16.mxu0 0
        %2566 = vmatmul.mubr.bf16.gmra.mrb[0].mxu0 %v1238
        %v2567 = vpop.f32.mrb[0].mxu0
        %v2568 = vadd.f32 0.0, %v2567
        %v2569 = vpop.f32.mrb[0].mxu0
        %v2570 = vpop.f32.mrb[0].mxu0
        %v2571 = vadd.f32 0.0, %v2570
        %v2572 = vpop.f32.mrb[0].mxu0
        %2573 = vmatprep.mubr.bf16.mxu0 0
        %2574 = vmatmul.mubr.bf16.gmra.mrb[0].mxu0 %v1241
        %v2575 = vpop.f32.mrb[0].mxu0
        %v2576 = vadd.f32 0.0, %v2575
        %v2577 = vpop.f32.mrb[0].mxu0
        %v2578 = vpop.f32.mrb[0].mxu0
        %v2579 = vadd.f32 0.0, %v2578
        %v2580 = vpop.f32.mrb[0].mxu0
        %2581 = vmatprep.mubr.bf16.mxu0 0
        %2582 = vmatmul.mubr.bf16.gmra.mrb[0].mxu0 %v1244
        %v2583 = vpop.f32.mrb[0].mxu0
        %v2584 = vadd.f32 0.0, %v2583
        %v2585 = vpop.f32.mrb[0].mxu0
        %v2586 = vpop.f32.mrb[0].mxu0
        %v2587 = vadd.f32 0.0, %v2586
        %v2588 = vpop.f32.mrb[0].mxu0
        %2589 = vmatprep.mubr.bf16.mxu0 0
        %2590 = vmatmul.mubr.bf16.gmra.mrb[0].mxu0 %v1247
        %v2591 = vpop.f32.mrb[0].mxu0
        %v2592 = vadd.f32 0.0, %v2591
        %v2593 = vpop.f32.mrb[0].mxu0
        %v2594 = vpop.f32.mrb[0].mxu0
        %v2595 = vadd.f32 0.0, %v2594
        %v2596 = vpop.f32.mrb[0].mxu0
        %2597 = vmatprep.mubr.bf16.mxu0 0
        %2598 = vmatmul.mubr.bf16.gmra.mrb[0].mxu0 %v1250
        %v2599 = vpop.f32.mrb[0].mxu0
        %v2600 = vadd.f32 0.0, %v2599
        %v2601 = vpop.f32.mrb[0].mxu0
        %v2602 = vpop.f32.mrb[0].mxu0
        %v2603 = vadd.f32 0.0, %v2602
        %v2604 = vpop.f32.mrb[0].mxu0
        %2605 = vmatprep.mubr.bf16.mxu0 0
        %2606 = vmatmul.mubr.bf16.gmra.mrb[0].mxu0 %v1253
        %v2607 = vpop.f32.mrb[0].mxu0
        %v2608 = vadd.f32 0.0, %v2607
        %v2609 = vpop.f32.mrb[0].mxu0
        %v2610 = vpop.f32.mrb[0].mxu0
        %v2611 = vadd.f32 0.0, %v2610
        %v2612 = vpop.f32.mrb[0].mxu0
        %2613 = vmatprep.mubr.bf16.mxu0 0
        %2614 = vmatmul.mubr.bf16.gmra.mrb[0].mxu0 %v1256
        %v2615 = vpop.f32.mrb[0].mxu0
        %v2616 = vadd.f32 0.0, %v2615
        %v2617 = vpop.f32.mrb[0].mxu0
        %v2618 = vpop.f32.mrb[0].mxu0
        %v2619 = vadd.f32 0.0, %v2618
        %v2620 = vpop.f32.mrb[0].mxu0
        %2621 = vmatprep.mubr.bf16.mxu0 0
        %2622 = vmatmul.mubr.bf16.gmra.mrb[0].mxu0 %v1878
        %v2623 = vpop.f32.mrb[0].mxu0
        %v2624 = vadd.f32 0.0, %v2623
        %v2625 = vpop.f32.mrb[0].mxu0
        %v2626 = vpop.f32.mrb[0].mxu0
        %v2627 = vadd.f32 0.0, %v2626
        %v2628 = vpop.f32.mrb[0].mxu0
        %2629 = vmatprep.mubr.bf16.mxu0 0
        %2630 = vmatmul.mubr.bf16.gmra.mrb[0].mxu0 %v1211
        %v2631 = vpop.f32.mrb[0].mxu0
        %v2632 = vadd.f32 0.0, %v2631
        %v2633 = vpop.f32.mrb[0].mxu0
        %v2634 = vpop.f32.mrb[0].mxu0
        %v2635 = vadd.f32 0.0, %v2634
        %v2636 = vpop.f32.mrb[0].mxu0
        %2637 = vdwg.mxu0
        %v2638 = vadd.f32 %v2440, %v2512
        %v2639 = vadd.f32 %v2441, %v2515
        %v2640 = vadd.f32 %v2442, %v2520
        %v2641 = vadd.f32 %v2443, %v2523
        %v2642 = vadd.f32 %v2444, %v2528
        %v2643 = vadd.f32 %v2445, %v2531
        %v2644 = vadd.f32 %v2446, %v2536
        %v2645 = vadd.f32 %v2447, %v2539
        %v2646 = vadd.f32 %v2448, %v2544
        %v2647 = vadd.f32 %v2449, %v2547
        %v2648 = vadd.f32 %v2450, %v2552
        %v2649 = vadd.f32 %v2451, %v2555
        %v2650 = vadd.f32 %v2452, %v2560
        %v2651 = vadd.f32 %v2453, %v2563
        %v2652 = vadd.f32 %v2454, %v2568
        %v2653 = vadd.f32 %v2455, %v2571
        %v2654 = vadd.f32 %v2456, %v2576
        %v2655 = vadd.f32 %v2457, %v2579
        %v2656 = vadd.f32 %v2458, %v2584
        %v2657 = vadd.f32 %v2459, %v2587
        %v2658 = vadd.f32 %v2460, %v2592
        %v2659 = vadd.f32 %v2461, %v2595
        %v2660 = vadd.f32 %v2462, %v2600
        %v2661 = vadd.f32 %v2463, %v2603
        %v2662 = vadd.f32 %v2464, %v2608
        %v2663 = vadd.f32 %v2465, %v2611
        %v2664 = vadd.f32 %v2466, %v2616
        %v2665 = vadd.f32 %v2467, %v2619
        %v2666 = vadd.f32 %v2468, %v2624
        %v2667 = vadd.f32 %v2469, %v2627
        %v2668 = vadd.f32 %v2470, %v2632
        %v2669 = vadd.f32 %v2471, %v2635
        %v2670 = vld [vmem:[#allocation7] sm:$0x1]
        %v2672 = vlaneseq
        %v2673 = vshrl.u32 %v2672, 7
        %v2674 = vsub.s32 0, %v2673
        %v2675 = vrot.slane %v2670, %v2674
        %v2677 = vmul.f32 %v2638, %v2675
        %v2678 = vmul.f32 %v2639, %v2675
        %v2679 = vmul.f32 %v2640, %v2675
        %v2680 = vmul.f32 %v2641, %v2675
        %v2681 = vmul.f32 %v2642, %v2675
        %v2682 = vmul.f32 %v2643, %v2675
        %v2683 = vmul.f32 %v2644, %v2675
        %v2684 = vmul.f32 %v2645, %v2675
        %v2685 = vmul.f32 %v2646, %v2675
        %v2686 = vmul.f32 %v2647, %v2675
        %v2687 = vmul.f32 %v2648, %v2675
        %v2688 = vmul.f32 %v2649, %v2675
        %v2689 = vmul.f32 %v2650, %v2675
        %v2690 = vmul.f32 %v2651, %v2675
        %v2691 = vmul.f32 %v2652, %v2675
        %v2692 = vmul.f32 %v2653, %v2675
        %v2693 = vmul.f32 %v2654, %v2675
        %v2694 = vmul.f32 %v2655, %v2675
        %v2695 = vmul.f32 %v2656, %v2675
        %v2696 = vmul.f32 %v2657, %v2675
        %v2697 = vmul.f32 %v2658, %v2675
        %v2698 = vmul.f32 %v2659, %v2675
        %v2699 = vmul.f32 %v2660, %v2675
        %v2700 = vmul.f32 %v2661, %v2675
        %v2701 = vmul.f32 %v2662, %v2675
        %v2702 = vmul.f32 %v2663, %v2675
        %v2703 = vmul.f32 %v2664, %v2675
        %v2704 = vmul.f32 %v2665, %v2675
        %v2705 = vmul.f32 %v2666, %v2675
        %v2706 = vmul.f32 %v2667, %v2675
        %v2707 = vmul.f32 %v2668, %v2675
        %v2708 = vmul.f32 %v2669, %v2675
        %v2709 = vld [vmem:[#allocation8] sm:$0x1]
        %v2711 = vlaneseq
        %v2712 = vshrl.u32 %v2711, 7
        %v2713 = vsub.s32 0, %v2712
        %v2714 = vrot.slane %v2709, %v2713
        %v2716 = vadd.f32 %v2677, %v2714
        %v2717 = vadd.f32 %v2678, %v2714
        %v2718 = vadd.f32 %v2679, %v2714
        %v2719 = vadd.f32 %v2680, %v2714
        %v2720 = vadd.f32 %v2681, %v2714
        %v2721 = vadd.f32 %v2682, %v2714
        %v2722 = vadd.f32 %v2683, %v2714
        %v2723 = vadd.f32 %v2684, %v2714
        %v2724 = vadd.f32 %v2685, %v2714
        %v2725 = vadd.f32 %v2686, %v2714
        %v2726 = vadd.f32 %v2687, %v2714
        %v2727 = vadd.f32 %v2688, %v2714
        %v2728 = vadd.f32 %v2689, %v2714
        %v2729 = vadd.f32 %v2690, %v2714
        %v2730 = vadd.f32 %v2691, %v2714
        %v2731 = vadd.f32 %v2692, %v2714
        %v2732 = vadd.f32 %v2693, %v2714
        %v2733 = vadd.f32 %v2694, %v2714
        %v2734 = vadd.f32 %v2695, %v2714
        %v2735 = vadd.f32 %v2696, %v2714
        %v2736 = vadd.f32 %v2697, %v2714
        %v2737 = vadd.f32 %v2698, %v2714
        %v2738 = vadd.f32 %v2699, %v2714
        %v2739 = vadd.f32 %v2700, %v2714
        %v2740 = vadd.f32 %v2701, %v2714
        %v2741 = vadd.f32 %v2702, %v2714
        %v2742 = vadd.f32 %v2703, %v2714
        %v2743 = vadd.f32 %v2704, %v2714
        %v2744 = vadd.f32 %v2705, %v2714
        %v2745 = vadd.f32 %v2706, %v2714
        %v2746 = vadd.f32 %v2707, %v2714
        %v2747 = vadd.f32 %v2708, %v2714
        %v2748 = vsub.f32 0.0, %v2716
        %v2749 = vsub.f32 0.0, %v2717
        %v2750 = vsub.f32 0.0, %v2718
        %v2751 = vsub.f32 0.0, %v2719
        %v2752 = vsub.f32 0.0, %v2720
        %v2753 = vsub.f32 0.0, %v2721
        %v2754 = vsub.f32 0.0, %v2722
        %v2755 = vsub.f32 0.0, %v2723
        %v2756 = vsub.f32 0.0, %v2724
        %v2757 = vsub.f32 0.0, %v2725
        %v2758 = vsub.f32 0.0, %v2726
        %v2759 = vsub.f32 0.0, %v2727
        %v2760 = vsub.f32 0.0, %v2728
        %v2761 = vsub.f32 0.0, %v2729
        %v2762 = vsub.f32 0.0, %v2730
        %v2763 = vsub.f32 0.0, %v2731
        %v2764 = vsub.f32 0.0, %v2732
        %v2765 = vsub.f32 0.0, %v2733
        %v2766 = vsub.f32 0.0, %v2734
        %v2767 = vsub.f32 0.0, %v2735
        %v2768 = vsub.f32 0.0, %v2736
        %v2769 = vsub.f32 0.0, %v2737
        %v2770 = vsub.f32 0.0, %v2738
        %v2771 = vsub.f32 0.0, %v2739
        %v2772 = vsub.f32 0.0, %v2740
        %v2773 = vsub.f32 0.0, %v2741
        %v2774 = vsub.f32 0.0, %v2742
        %v2775 = vsub.f32 0.0, %v2743
        %v2776 = vsub.f32 0.0, %v2744
        %v2777 = vsub.f32 0.0, %v2745
        %v2778 = vsub.f32 0.0, %v2746
        %v2779 = vsub.f32 0.0, %v2747
        %v2780 = vmul.f32 %v2748, 1.442695
        %v2781 = vpow.pop %v2780
        %v2782 = vmul.f32 %v2749, 1.442695
        %v2783 = vpow.pop %v2782
        %v2784 = vmul.f32 %v2750, 1.442695
        %v2785 = vpow.pop %v2784
        %v2786 = vmul.f32 %v2751, 1.442695
        %v2787 = vpow.pop %v2786
        %v2788 = vmul.f32 %v2752, 1.442695
        %v2789 = vpow.pop %v2788
        %v2790 = vmul.f32 %v2753, 1.442695
        %v2791 = vpow.pop %v2790
        %v2792 = vmul.f32 %v2754, 1.442695
        %v2793 = vpow.pop %v2792
        %v2794 = vmul.f32 %v2755, 1.442695
        %v2795 = vpow.pop %v2794
        %v2796 = vmul.f32 %v2756, 1.442695
        %v2797 = vpow.pop %v2796
        %v2798 = vmul.f32 %v2757, 1.442695
        %v2799 = vpow.pop %v2798
        %v2800 = vmul.f32 %v2758, 1.442695
        %v2801 = vpow.pop %v2800
        %v2802 = vmul.f32 %v2759, 1.442695
        %v2803 = vpow.pop %v2802
        %v2804 = vmul.f32 %v2760, 1.442695
        %v2805 = vpow.pop %v2804
        %v2806 = vmul.f32 %v2761, 1.442695
        %v2807 = vpow.pop %v2806
        %v2808 = vmul.f32 %v2762, 1.442695
        %v2809 = vpow.pop %v2808
        %v2810 = vmul.f32 %v2763, 1.442695
        %v2811 = vpow.pop %v2810
        %v2812 = vmul.f32 %v2764, 1.442695
        %v2813 = vpow.pop %v2812
        %v2814 = vmul.f32 %v2765, 1.442695
        %v2815 = vpow.pop %v2814
        %v2816 = vmul.f32 %v2766, 1.442695
        %v2817 = vpow.pop %v2816
        %v2818 = vmul.f32 %v2767, 1.442695
        %v2819 = vpow.pop %v2818
        %v2820 = vmul.f32 %v2768, 1.442695
        %v2821 = vpow.pop %v2820
        %v2822 = vmul.f32 %v2769, 1.442695
        %v2823 = vpow.pop %v2822
        %v2824 = vmul.f32 %v2770, 1.442695
        %v2825 = vpow.pop %v2824
        %v2826 = vmul.f32 %v2771, 1.442695
        %v2827 = vpow.pop %v2826
        %v2828 = vmul.f32 %v2772, 1.442695
        %v2829 = vpow.pop %v2828
        %v2830 = vmul.f32 %v2773, 1.442695
        %v2831 = vpow.pop %v2830
        %v2832 = vmul.f32 %v2774, 1.442695
        %v2833 = vpow.pop %v2832
        %v2834 = vmul.f32 %v2775, 1.442695
        %v2835 = vpow.pop %v2834
        %v2836 = vmul.f32 %v2776, 1.442695
        %v2837 = vpow.pop %v2836
        %v2838 = vmul.f32 %v2777, 1.442695
        %v2839 = vpow.pop %v2838
        %v2840 = vmul.f32 %v2778, 1.442695
        %v2841 = vpow.pop %v2840
        %v2842 = vmul.f32 %v2779, 1.442695
        %v2843 = vpow.pop %v2842
        %v2844 = vadd.f32 %v2781, 1.0
        %v2845 = vadd.f32 %v2783, 1.0
        %v2846 = vadd.f32 %v2785, 1.0
        %v2847 = vadd.f32 %v2787, 1.0
        %v2848 = vadd.f32 %v2789, 1.0
        %v2849 = vadd.f32 %v2791, 1.0
        %v2850 = vadd.f32 %v2793, 1.0
        %v2851 = vadd.f32 %v2795, 1.0
        %v2852 = vadd.f32 %v2797, 1.0
        %v2853 = vadd.f32 %v2799, 1.0
        %v2854 = vadd.f32 %v2801, 1.0
        %v2855 = vadd.f32 %v2803, 1.0
        %v2856 = vadd.f32 %v2805, 1.0
        %v2857 = vadd.f32 %v2807, 1.0
        %v2858 = vadd.f32 %v2809, 1.0
        %v2859 = vadd.f32 %v2811, 1.0
        %v2860 = vadd.f32 %v2813, 1.0
        %v2861 = vadd.f32 %v2815, 1.0
        %v2862 = vadd.f32 %v2817, 1.0
        %v2863 = vadd.f32 %v2819, 1.0
        %v2864 = vadd.f32 %v2821, 1.0
        %v2865 = vadd.f32 %v2823, 1.0
        %v2866 = vadd.f32 %v2825, 1.0
        %v2867 = vadd.f32 %v2827, 1.0
        %v2868 = vadd.f32 %v2829, 1.0
        %v2869 = vadd.f32 %v2831, 1.0
        %v2870 = vadd.f32 %v2833, 1.0
        %v2871 = vadd.f32 %v2835, 1.0
        %v2872 = vadd.f32 %v2837, 1.0
        %v2873 = vadd.f32 %v2839, 1.0
        %v2874 = vadd.f32 %v2841, 1.0
        %v2875 = vadd.f32 %v2843, 1.0
        %v2876 = vrcp.pop %v2844
        %v2877 = vmul.f32 1.0, %v2876
        %v2878 = vrcp.pop %v2845
        %v2879 = vmul.f32 1.0, %v2878
        %v2880 = vrcp.pop %v2846
        %v2881 = vmul.f32 1.0, %v2880
        %v2882 = vrcp.pop %v2847
        %v2883 = vmul.f32 1.0, %v2882
        %v2884 = vrcp.pop %v2848
        %v2885 = vmul.f32 1.0, %v2884
        %v2886 = vrcp.pop %v2849
        %v2887 = vmul.f32 1.0, %v2886
        %v2888 = vrcp.pop %v2850
        %v2889 = vmul.f32 1.0, %v2888
        %v2890 = vrcp.pop %v2851
        %v2891 = vmul.f32 1.0, %v2890
        %v2892 = vrcp.pop %v2852
        %v2893 = vmul.f32 1.0, %v2892
        %v2894 = vrcp.pop %v2853
        %v2895 = vmul.f32 1.0, %v2894
        %v2896 = vrcp.pop %v2854
        %v2897 = vmul.f32 1.0, %v2896
        %v2898 = vrcp.pop %v2855
        %v2899 = vmul.f32 1.0, %v2898
        %v2900 = vrcp.pop %v2856
        %v2901 = vmul.f32 1.0, %v2900
        %v2902 = vrcp.pop %v2857
        %v2903 = vmul.f32 1.0, %v2902
        %v2904 = vrcp.pop %v2858
        %v2905 = vmul.f32 1.0, %v2904
        %v2906 = vrcp.pop %v2859
        %v2907 = vmul.f32 1.0, %v2906
        %v2908 = vrcp.pop %v2860
        %v2909 = vmul.f32 1.0, %v2908
        %v2910 = vrcp.pop %v2861
        %v2911 = vmul.f32 1.0, %v2910
        %v2912 = vrcp.pop %v2862
        %v2913 = vmul.f32 1.0, %v2912
        %v2914 = vrcp.pop %v2863
        %v2915 = vmul.f32 1.0, %v2914
        %v2916 = vrcp.pop %v2864
        %v2917 = vmul.f32 1.0, %v2916
        %v2918 = vrcp.pop %v2865
        %v2919 = vmul.f32 1.0, %v2918
        %v2920 = vrcp.pop %v2866
        %v2921 = vmul.f32 1.0, %v2920
        %v2922 = vrcp.pop %v2867
        %v2923 = vmul.f32 1.0, %v2922
        %v2924 = vrcp.pop %v2868
        %v2925 = vmul.f32 1.0, %v2924
        %v2926 = vrcp.pop %v2869
        %v2927 = vmul.f32 1.0, %v2926
        %v2928 = vrcp.pop %v2870
        %v2929 = vmul.f32 1.0, %v2928
        %v2930 = vrcp.pop %v2871
        %v2931 = vmul.f32 1.0, %v2930
        %v2932 = vrcp.pop %v2872
        %v2933 = vmul.f32 1.0, %v2932
        %v2934 = vrcp.pop %v2873
        %v2935 = vmul.f32 1.0, %v2934
        %v2936 = vrcp.pop %v2874
        %v2937 = vmul.f32 1.0, %v2936
        %v2938 = vrcp.pop %v2875
        %v2939 = vmul.f32 1.0, %v2938
        %v2940 = vmul.f32 %v2716, %v2877
        %v2941 = vmul.f32 %v2717, %v2879
        %v2942 = vmul.f32 %v2718, %v2881
        %v2943 = vmul.f32 %v2719, %v2883
        %v2944 = vmul.f32 %v2720, %v2885
        %v2945 = vmul.f32 %v2721, %v2887
        %v2946 = vmul.f32 %v2722, %v2889
        %v2947 = vmul.f32 %v2723, %v2891
        %v2948 = vmul.f32 %v2724, %v2893
        %v2949 = vmul.f32 %v2725, %v2895
        %v2950 = vmul.f32 %v2726, %v2897
        %v2951 = vmul.f32 %v2727, %v2899
        %v2952 = vmul.f32 %v2728, %v2901
        %v2953 = vmul.f32 %v2729, %v2903
        %v2954 = vmul.f32 %v2730, %v2905
        %v2955 = vmul.f32 %v2731, %v2907
        %v2956 = vmul.f32 %v2732, %v2909
        %v2957 = vmul.f32 %v2733, %v2911
        %v2958 = vmul.f32 %v2734, %v2913
        %v2959 = vmul.f32 %v2735, %v2915
        %v2960 = vmul.f32 %v2736, %v2917
        %v2961 = vmul.f32 %v2737, %v2919
        %v2962 = vmul.f32 %v2738, %v2921
        %v2963 = vmul.f32 %v2739, %v2923
        %v2964 = vmul.f32 %v2740, %v2925
        %v2965 = vmul.f32 %v2741, %v2927
        %v2966 = vmul.f32 %v2742, %v2929
        %v2967 = vmul.f32 %v2743, %v2931
        %v2968 = vmul.f32 %v2744, %v2933
        %v2969 = vmul.f32 %v2745, %v2935
        %v2970 = vmul.f32 %v2746, %v2937
        %v2971 = vmul.f32 %v2747, %v2939
        %v2972 = vpack.c.bf16 %v2941, %v2940
        %v2973 = vpack.c.bf16 %v2943, %v2942
        %v2974 = vpack.c.bf16 %v2945, %v2944
        %v2975 = vpack.c.bf16 %v2947, %v2946
        %v2976 = vpack.c.bf16 %v2949, %v2948
        %v2977 = vpack.c.bf16 %v2951, %v2950
        %v2978 = vpack.c.bf16 %v2953, %v2952
        %v2979 = vpack.c.bf16 %v2955, %v2954
        %v2980 = vpack.c.bf16 %v2957, %v2956
        %v2981 = vpack.c.bf16 %v2959, %v2958
        %v2982 = vpack.c.bf16 %v2961, %v2960
        %v2983 = vpack.c.bf16 %v2963, %v2962
        %v2984 = vpack.c.bf16 %v2965, %v2964
        %v2985 = vpack.c.bf16 %v2967, %v2966
        %v2986 = vpack.c.bf16 %v2969, %v2968
        %v2987 = vpack.c.bf16 %v2971, %v2970
        %v3004 = vunpack.c.l.b16 %v2972
        %v3005 = vunpack.c.h.b16 %v2972
        %v3006 = vunpack.c.l.b16 %v2973
        %v3007 = vunpack.c.h.b16 %v2973
        %v3008 = vunpack.c.l.b16 %v2974
        %v3009 = vunpack.c.h.b16 %v2974
        %v3010 = vunpack.c.l.b16 %v2975
        %v3011 = vunpack.c.h.b16 %v2975
        %v3012 = vunpack.c.l.b16 %v2976
        %v3013 = vunpack.c.h.b16 %v2976
        %v3014 = vunpack.c.l.b16 %v2977
        %v3015 = vunpack.c.h.b16 %v2977
        %v3016 = vunpack.c.l.b16 %v2978
        %v3017 = vunpack.c.h.b16 %v2978
        %v3018 = vunpack.c.l.b16 %v2979
        %v3019 = vunpack.c.h.b16 %v2979
        %v3020 = vunpack.c.l.b16 %v2980
        %v3021 = vunpack.c.h.b16 %v2980
        %v3022 = vunpack.c.l.b16 %v2981
        %v3023 = vunpack.c.h.b16 %v2981
        %v3024 = vunpack.c.l.b16 %v2982
        %v3025 = vunpack.c.h.b16 %v2982
        %v3026 = vunpack.c.l.b16 %v2983
        %v3027 = vunpack.c.h.b16 %v2983
        %v3028 = vunpack.c.l.b16 %v2984
        %v3029 = vunpack.c.h.b16 %v2984
        %v3030 = vunpack.c.l.b16 %v2985
        %v3031 = vunpack.c.h.b16 %v2985
        %v3032 = vunpack.c.l.b16 %v2986
        %v3033 = vunpack.c.h.b16 %v2986
        %v3034 = vunpack.c.l.b16 %v2987
        %v3035 = vunpack.c.h.b16 %v2987
        %v3036 = vpack.c.b16 %v3004, %v3004
        %v3037 = vpack.c.b16 %v3005, %v3005
        %v3038 = vpack.c.b16 %v3006, %v3006
        %v3039 = vpack.c.b16 %v3007, %v3007
        %v3040 = vpack.c.b16 %v3008, %v3008
        %v3041 = vpack.c.b16 %v3009, %v3009
        %v3042 = vpack.c.b16 %v3010, %v3010
        %v3043 = vpack.c.b16 %v3011, %v3011
        %v3044 = vpack.c.b16 %v3012, %v3012
        %v3045 = vpack.c.b16 %v3013, %v3013
        %v3046 = vpack.c.b16 %v3014, %v3014
        %v3047 = vpack.c.b16 %v3015, %v3015
        %v3048 = vpack.c.b16 %v3016, %v3016
        %v3049 = vpack.c.b16 %v3017, %v3017
        %v3050 = vpack.c.b16 %v3018, %v3018
        %v3051 = vpack.c.b16 %v3019, %v3019
        %v3052 = vpack.c.b16 %v3020, %v3020
        %v3053 = vpack.c.b16 %v3021, %v3021
        %v3054 = vpack.c.b16 %v3022, %v3022
        %v3055 = vpack.c.b16 %v3023, %v3023
        %v3056 = vpack.c.b16 %v3024, %v3024
        %v3057 = vpack.c.b16 %v3025, %v3025
        %v3058 = vpack.c.b16 %v3026, %v3026
        %v3059 = vpack.c.b16 %v3027, %v3027
        %v3060 = vpack.c.b16 %v3028, %v3028
        %v3061 = vpack.c.b16 %v3029, %v3029
        %v3062 = vpack.c.b16 %v3030, %v3030
        %v3063 = vpack.c.b16 %v3031, %v3031
        %v3064 = vpack.c.b16 %v3032, %v3032
        %v3065 = vpack.c.b16 %v3033, %v3033
        %v3066 = vpack.c.b16 %v3034, %v3034
        %v3067 = vpack.c.b16 %v3035, %v3035
        %vm3100 = vcmask 27648
        %3101 = vst.msk [vmem:[%s255] sm:$0xf] %vm3100, %v3036
        %3102 = vst.msk [vmem:[%s255 + $0x4] sm:$0xf] %vm3100, %v3037
        %3103 = vst.msk [vmem:[%s255 + $0x8] sm:$0xf] %vm3100, %v3038
        %3104 = vst.msk [vmem:[%s255 + $0xc] sm:$0xf] %vm3100, %v3039
        %3105 = vst.msk [vmem:[%s255 + $0x10] sm:$0xf] %vm3100, %v3040
        %3106 = vst.msk [vmem:[%s255 + $0x14] sm:$0xf] %vm3100, %v3041
        %3107 = vst.msk [vmem:[%s255 + $0x18] sm:$0xf] %vm3100, %v3042
        %3108 = vst.msk [vmem:[%s255 + $0x1c] sm:$0xf] %vm3100, %v3043
        %3109 = vst.msk [vmem:[%s255 + $0x20] sm:$0xf] %vm3100, %v3044
        %3110 = vst.msk [vmem:[%s255 + $0x24] sm:$0xf] %vm3100, %v3045
        %3111 = vst.msk [vmem:[%s255 + $0x28] sm:$0xf] %vm3100, %v3046
        %3112 = vst.msk [vmem:[%s255 + $0x2c] sm:$0xf] %vm3100, %v3047
        %3113 = vst.msk [vmem:[%s255 + $0x30] sm:$0xf] %vm3100, %v3048
        %3114 = vst.msk [vmem:[%s255 + $0x34] sm:$0xf] %vm3100, %v3049
        %3115 = vst.msk [vmem:[%s255 + $0x38] sm:$0xf] %vm3100, %v3050
        %3116 = vst.msk [vmem:[%s255 + $0x3c] sm:$0xf] %vm3100, %v3051
        %3117 = vst.msk [vmem:[%s255 + $0x40] sm:$0xf] %vm3100, %v3052
        %3118 = vst.msk [vmem:[%s255 + $0x44] sm:$0xf] %vm3100, %v3053
        %3119 = vst.msk [vmem:[%s255 + $0x48] sm:$0xf] %vm3100, %v3054
        %3120 = vst.msk [vmem:[%s255 + $0x4c] sm:$0xf] %vm3100, %v3055
        %3121 = vst.msk [vmem:[%s255 + $0x50] sm:$0xf] %vm3100, %v3056
        %3122 = vst.msk [vmem:[%s255 + $0x54] sm:$0xf] %vm3100, %v3057
        %3123 = vst.msk [vmem:[%s255 + $0x58] sm:$0xf] %vm3100, %v3058
        %3124 = vst.msk [vmem:[%s255 + $0x5c] sm:$0xf] %vm3100, %v3059
        %3125 = vst.msk [vmem:[%s255 + $0x60] sm:$0xf] %vm3100, %v3060
        %3126 = vst.msk [vmem:[%s255 + $0x64] sm:$0xf] %vm3100, %v3061
        %3127 = vst.msk [vmem:[%s255 + $0x68] sm:$0xf] %vm3100, %v3062
        %3128 = vst.msk [vmem:[%s255 + $0x6c] sm:$0xf] %vm3100, %v3063
        %3129 = vst.msk [vmem:[%s255 + $0x70] sm:$0xf] %vm3100, %v3064
        %3130 = vst.msk [vmem:[%s255 + $0x74] sm:$0xf] %vm3100, %v3065
        %3131 = vst.msk [vmem:[%s255 + $0x78] sm:$0xf] %vm3100, %v3066
        %3132 = vst.msk [vmem:[%s255 + $0x7c] sm:$0xf] %vm3100, %v3067
        %s3133 = sand.u32 %s120, 1
        %s3134 = scalar_lea.sflag [#allocation4], %s3133
        %s3135 = sand.u32 %s120, 1
        %s3136 = smul.addr %s3135, 128
        %s3137 = scalar_lea.vmem [#allocation10], %s3136
        // Predicated region
        $region53: #{cspsppf_forward.6} parent=35 // pred_check
          %p3138 = pneg %p130
        $region54: #{cspsppf_forward.6} parent=35 // pred_check_branch
          %3140 = sbr.rel (%p3138) target = $region56
        $region55: #{cspsppf_forward.6} parent=35 // pred_region
          %s3142 = ssub.s32 2048, 2048
          %3143 = vsyncadd %s3134, %s3142
          %s3144 = smul.addr %s23, 32
          %s3145 = smul.addr %s3144, 64
          %s3146 = scalar_lea.hbm %s4, %s3145
          %s3147 = sshll.u32 %s3137, 4
          %s3148 = int_to_ptr.vmem [resolvable:$true] %s3147
          %3153 = dma.vmem_to_hbm [thread:$0]  %s3148, 2048, %s3146, %s3134, 64, 64, 4
        $region56: #{cspsppf_forward.6} parent=35 // pred_fallthru
          _
      $region36: #{cspsppf_forward.6} parent=5 // pred_fallthru
        _
      %p3154 = scmp.le.s32.totalorder 2, %s18
      // Predicated region
      $region57: #{cspsppf_forward.6} parent=5 // pred_check
        %p3155 = pneg %p3154
      $region58: #{cspsppf_forward.6} parent=5 // pred_check_branch
        %3157 = sbr.rel (%p3155) target = $region60
      $region59: #{cspsppf_forward.6} parent=5 // pred_region
        %s3158 = ssub.s32 %s18, 2
        // Predicated region
        $region61: #{cspsppf_forward.6} parent=59 // pred_check
          %p3159 = pneg %p136
        $region62: #{cspsppf_forward.6} parent=59 // pred_check_branch
          %3161 = sbr.rel (%p3159) target = $region64
        $region63: #{cspsppf_forward.6} parent=59 // pred_region
          %s3162 = sand.u32 %s121, 1
          %s3163 = scalar_lea.sflag [#allocation4], %s3162
          %s3164 = sand.u32 %s121, 1
          %s3165 = smul.addr %s3164, 128
          %s3166 = scalar_lea.vmem [#allocation10], %s3165
          %3167 = dma.done %s3163, 2048
        $region64: #{cspsppf_forward.6} parent=59 // pred_fallthru
          _
      $region60: #{cspsppf_forward.6} parent=5 // pred_fallthru
        _
    $region6: #{cspsppf_forward.6} parent=1 // loop_footer
      %s22 = sadd.s32 1, %s18
    $region7: #{cspsppf_forward.6} parent=1 // loop_footer_branch
      %17 = sbr.rel target = $region3
    $region8: #{cspsppf_forward.6} parent=1 // loop_exit
      _
    %3168 = vsyncpa [#allocation3], 1
    %s3169 = scalar_lea.sflag [#allocation3], 1
    %3170 = vsyncpa %s3169, 1
    %3171 = vsyncpa [#allocation6], 1
    %3172 = vsyncpa [#allocation9], 1
    %3173 = vsyncpa [#allocation4], 1
    %s3174 = scalar_lea.sflag [#allocation4], 1
    %3175 = vsyncpa %s3174, 1

// kernel: cspsppf_forward.9
$region0: #{cspsppf_forward.9}
  #allocation0 [shape = 'u32[]', space=smem, size = 0x4, offset = 0x4, fixed_abs, tag = 'smem constant byte address 0x4 - core index']
  #allocation1 [shape = 'u32[144,128]{1,0:T(1,128)}', space=vmem, size = 0x12000, scoped, tag = 'internal scratch']
  %s0 = inlined_call_operand.hbm [shape: bf16[512,4], index: 0, kind: input, shape index: {}]
  %s1 = inlined_call_operand.hbm [shape: bf16[512,4], index: 1, kind: input, shape index: {}]
  %s2 = inlined_call_operand.hbm [shape: bf16[4,8], index: 2, kind: input, shape index: {}]
  %s3 = inlined_call_operand.hbm [shape: bf16[4,8], index: 3, kind: input, shape index: {}]
  %s4 = inlined_call_operand.hbm [shape: f32[1,8], index: 4, kind: input, shape index: {}]
  %s5 = inlined_call_operand.hbm [shape: f32[1,8], index: 5, kind: input, shape index: {}]
  %s6 = inlined_call_operand.hbm [shape: f32[512,8], index: 6, kind: output, shape index: {}]
  %s7 = sld [smem:[#allocation0]]
  $region58: #{cspsppf_forward.9} parent=0
    _
  %s9 = ssub.s32 1, %s7
  %s10 = scalar_select 0, %s9, %s7
  $region1: #{cspsppf_forward.9} parent=0
    #allocation2 [shape = 'u8[131072]{0}', space=vmem, size = 0x20000, scoped, tag = 'input window, operand 0, single buffered']
    #allocation3 [shape = 's32[1]{0}', space=sflag, size = 0x4, scoped, tag = 'scoped memory for cspsppf_forward.9']
    #allocation4 [shape = 's32[1]{0}', space=sflag, size = 0x4, scoped, tag = 'scoped memory for cspsppf_forward.9']
    #allocation5 [shape = 'u8[131072]{0}', space=vmem, size = 0x20000, scoped, tag = 'input window, operand 1, single buffered']
    #allocation6 [shape = 's32[1]{0}', space=sflag, size = 0x4, scoped, tag = 'scoped memory for cspsppf_forward.9']
    #allocation7 [shape = 'u8[1024]{0}', space=vmem, size = 0x400, scoped, tag = 'input window, operand 2, single buffered']
    #allocation8 [shape = 'u8[1024]{0}', space=vmem, size = 0x400, scoped, tag = 'input window, operand 3, single buffered']
    #allocation9 [shape = 's32[1]{0}', space=sflag, size = 0x4, scoped, tag = 'scoped memory for cspsppf_forward.9']
    #allocation10 [shape = 'u8[512]{0}', space=vmem, size = 0x400, scoped, tag = 'input window, operand 4, single buffered']
    #allocation11 [shape = 'u8[512]{0}', space=vmem, size = 0x400, scoped, tag = 'input window, operand 5, single buffered']
    #allocation12 [shape = 's32[1]{0}', space=sflag, size = 0x4, scoped, tag = 'scoped memory for cspsppf_forward.9']
    #allocation13 [shape = 'u8[262144]{0}', space=vmem, size = 0x40000, scoped, tag = 'output window, operand 0, single buffered']
    %11 = vsyncpa [#allocation3], 0
    %12 = vsyncpa [#allocation6], 0
    %13 = vsyncpa [#allocation9], 0
    %14 = vsyncpa [#allocation12], 0
    %15 = vsyncpa [#allocation4], 0
    // Predicated region
    $region2: #{cspsppf_forward.9} parent=1 // pred_check
      _
    $region3: #{cspsppf_forward.9} parent=1 // pred_check_branch
      %17 = sbr.rel (0) target = $region5
    $region4: #{cspsppf_forward.9} parent=1 // pred_region
      %s19 = ssub.s32 4096, 4096
      %20 = vsyncadd [#allocation3], %s19
      %s21 = sshll.u32 [#allocation2], 4
      %s22 = int_to_ptr.vmem [resolvable:$true] %s21
      %27 = dma.hbm_to_vmem [thread:$0]  %s0, 4096, %s22, [#allocation3], 64, 64, 4
    $region5: #{cspsppf_forward.9} parent=1 // pred_fallthru
      _
    // Predicated region
    $region6: #{cspsppf_forward.9} parent=1 // pred_check
      _
    $region7: #{cspsppf_forward.9} parent=1 // pred_check_branch
      %29 = sbr.rel (0) target = $region9
    $region8: #{cspsppf_forward.9} parent=1 // pred_region
      %s31 = ssub.s32 4096, 4096
      %32 = vsyncadd [#allocation6], %s31
      %s33 = sshll.u32 [#allocation5], 4
      %s34 = int_to_ptr.vmem [resolvable:$true] %s33
      %39 = dma.hbm_to_vmem [thread:$0]  %s1, 4096, %s34, [#allocation6], 64, 64, 4
    $region9: #{cspsppf_forward.9} parent=1 // pred_fallthru
      _
    // Predicated region
    $region10: #{cspsppf_forward.9} parent=1 // pred_check
      _
    $region11: #{cspsppf_forward.9} parent=1 // pred_check_branch
      %41 = sbr.rel (0) target = $region13
    $region12: #{cspsppf_forward.9} parent=1 // pred_region
      %s43 = ssub.s32 32, 32
      %44 = vsyncadd [#allocation6], %s43
      %s46 = sshll.u32 [#allocation7], 4
      %s47 = int_to_ptr.vmem [resolvable:$true] %s46
      %49 = dma.hbm_to_vmem [thread:$0]  %s2, 32, %s47, [#allocation6]
    $region13: #{cspsppf_forward.9} parent=1 // pred_fallthru
      _
    // Predicated region
    $region14: #{cspsppf_forward.9} parent=1 // pred_check
      _
    $region15: #{cspsppf_forward.9} parent=1 // pred_check_branch
      %51 = sbr.rel (0) target = $region17
    $region16: #{cspsppf_forward.9} parent=1 // pred_region
      %s53 = ssub.s32 32, 32
      %54 = vsyncadd [#allocation9], %s53
      %s56 = sshll.u32 [#allocation8], 4
      %s57 = int_to_ptr.vmem [resolvable:$true] %s56
      %59 = dma.hbm_to_vmem [thread:$0]  %s3, 32, %s57, [#allocation9]
    $region17: #{cspsppf_forward.9} parent=1 // pred_fallthru
      _
    // Predicated region
    $region18: #{cspsppf_forward.9} parent=1 // pred_check
      _
    $region19: #{cspsppf_forward.9} parent=1 // pred_check_branch
      %61 = sbr.rel (0) target = $region21
    $region20: #{cspsppf_forward.9} parent=1 // pred_region
      %s63 = ssub.s32 16, 16
      %64 = vsyncadd [#allocation9], %s63
      %s66 = sshll.u32 [#allocation10], 4
      %s67 = int_to_ptr.vmem [resolvable:$true] %s66
      %69 = dma.hbm_to_vmem [thread:$0]  %s4, 16, %s67, [#allocation9]
    $region21: #{cspsppf_forward.9} parent=1 // pred_fallthru
      _
    // Predicated region
    $region22: #{cspsppf_forward.9} parent=1 // pred_check
      _
    $region23: #{cspsppf_forward.9} parent=1 // pred_check_branch
      %71 = sbr.rel (0) target = $region25
    $region24: #{cspsppf_forward.9} parent=1 // pred_region
      %s73 = ssub.s32 16, 16
      %74 = vsyncadd [#allocation12], %s73
      %s76 = sshll.u32 [#allocation11], 4
      %s77 = int_to_ptr.vmem [resolvable:$true] %s76
      %79 = dma.hbm_to_vmem [thread:$0]  %s5, 16, %s77, [#allocation12]
    $region25: #{cspsppf_forward.9} parent=1 // pred_fallthru
      _
    // Predicated region
    $region26: #{cspsppf_forward.9} parent=1 // pred_check
      _
    $region27: #{cspsppf_forward.9} parent=1 // pred_check_branch
      %81 = sbr.rel (0) target = $region29
    $region28: #{cspsppf_forward.9} parent=1 // pred_region
      %82 = dma.done [#allocation3], 4096
    $region29: #{cspsppf_forward.9} parent=1 // pred_fallthru
      _
    // Predicated region
    $region30: #{cspsppf_forward.9} parent=1 // pred_check
      _
    $region31: #{cspsppf_forward.9} parent=1 // pred_check_branch
      %84 = sbr.rel (0) target = $region33
    $region32: #{cspsppf_forward.9} parent=1 // pred_region
      %85 = dma.done [#allocation6], 4096
    $region33: #{cspsppf_forward.9} parent=1 // pred_fallthru
      _
    // Predicated region
    $region34: #{cspsppf_forward.9} parent=1 // pred_check
      _
    $region35: #{cspsppf_forward.9} parent=1 // pred_check_branch
      %87 = sbr.rel (0) target = $region37
    $region36: #{cspsppf_forward.9} parent=1 // pred_region
      %88 = dma.done [#allocation6], 32
    $region37: #{cspsppf_forward.9} parent=1 // pred_fallthru
      _
    // Predicated region
    $region38: #{cspsppf_forward.9} parent=1 // pred_check
      _
    $region39: #{cspsppf_forward.9} parent=1 // pred_check_branch
      %90 = sbr.rel (0) target = $region41
    $region40: #{cspsppf_forward.9} parent=1 // pred_region
      %91 = dma.done [#allocation9], 32
    $region41: #{cspsppf_forward.9} parent=1 // pred_fallthru
      _
    // Predicated region
    $region42: #{cspsppf_forward.9} parent=1 // pred_check
      _
    $region43: #{cspsppf_forward.9} parent=1 // pred_check_branch
      %93 = sbr.rel (0) target = $region45
    $region44: #{cspsppf_forward.9} parent=1 // pred_region
      %94 = dma.done [#allocation9], 16
    $region45: #{cspsppf_forward.9} parent=1 // pred_fallthru
      _
    // Predicated region
    $region46: #{cspsppf_forward.9} parent=1 // pred_check
      _
    $region47: #{cspsppf_forward.9} parent=1 // pred_check_branch
      %96 = sbr.rel (0) target = $region49
    $region48: #{cspsppf_forward.9} parent=1 // pred_region
      %97 = dma.done [#allocation12], 16
    $region49: #{cspsppf_forward.9} parent=1 // pred_fallthru
      _
    %v99 = vld [vmem:[#allocation2] sm:$0xf]
    %v100 = vld [vmem:[#allocation2 + $0x4] sm:$0xf]
    %v101 = vld [vmem:[#allocation2 + $0x8] sm:$0xf]
    %v102 = vld [vmem:[#allocation2 + $0xc] sm:$0xf]
    %v103 = vld [vmem:[#allocation2 + $0x10] sm:$0xf]
    %v104 = vld [vmem:[#allocation2 + $0x14] sm:$0xf]
    %v105 = vld [vmem:[#allocation2 + $0x18] sm:$0xf]
    %v106 = vld [vmem:[#allocation2 + $0x1c] sm:$0xf]
    %v107 = vld [vmem:[#allocation2 + $0x20] sm:$0xf]
    %v108 = vld [vmem:[#allocation2 + $0x24] sm:$0xf]
    %v109 = vld [vmem:[#allocation2 + $0x28] sm:$0xf]
    %v110 = vld [vmem:[#allocation2 + $0x2c] sm:$0xf]
    %v111 = vld [vmem:[#allocation2 + $0x30] sm:$0xf]
    %v112 = vld [vmem:[#allocation2 + $0x34] sm:$0xf]
    %v113 = vld [vmem:[#allocation2 + $0x38] sm:$0xf]
    %v114 = vld [vmem:[#allocation2 + $0x3c] sm:$0xf]
    %v115 = vld [vmem:[#allocation2 + $0x40] sm:$0xf]
    %v116 = vld [vmem:[#allocation2 + $0x44] sm:$0xf]
    %v117 = vld [vmem:[#allocation2 + $0x48] sm:$0xf]
    %v118 = vld [vmem:[#allocation2 + $0x4c] sm:$0xf]
    %v119 = vld [vmem:[#allocation2 + $0x50] sm:$0xf]
    %v120 = vld [vmem:[#allocation2 + $0x54] sm:$0xf]
    %v121 = vld [vmem:[#allocation2 + $0x58] sm:$0xf]
    %v122 = vld [vmem:[#allocation2 + $0x5c] sm:$0xf]
    %v123 = vld [vmem:[#allocation2 + $0x60] sm:$0xf]
    %v124 = vld [vmem:[#allocation2 + $0x64] sm:$0xf]
    %v125 = vld [vmem:[#allocation2 + $0x68] sm:$0xf]
    %v126 = vld [vmem:[#allocation2 + $0x6c] sm:$0xf]
    %v127 = vld [vmem:[#allocation2 + $0x70] sm:$0xf]
    %v128 = vld [vmem:[#allocation2 + $0x74] sm:$0xf]
    %v129 = vld [vmem:[#allocation2 + $0x78] sm:$0xf]
    %v130 = vld [vmem:[#allocation2 + $0x7c] sm:$0xf]
    %v131 = vld [vmem:[#allocation2 + $0x80] sm:$0xf]
    %v132 = vld [vmem:[#allocation2 + $0x84] sm:$0xf]
    %v133 = vld [vmem:[#allocation2 + $0x88] sm:$0xf]
    %v134 = vld [vmem:[#allocation2 + $0x8c] sm:$0xf]
    %v135 = vld [vmem:[#allocation2 + $0x90] sm:$0xf]
    %v136 = vld [vmem:[#allocation2 + $0x94] sm:$0xf]
    %v137 = vld [vmem:[#allocation2 + $0x98] sm:$0xf]
    %v138 = vld [vmem:[#allocation2 + $0x9c] sm:$0xf]
    %v139 = vld [vmem:[#allocation2 + $0xa0] sm:$0xf]
    %v140 = vld [vmem:[#allocation2 + $0xa4] sm:$0xf]
    %v141 = vld [vmem:[#allocation2 + $0xa8] sm:$0xf]
    %v142 = vld [vmem:[#allocation2 + $0xac] sm:$0xf]
    %v143 = vld [vmem:[#allocation2 + $0xb0] sm:$0xf]
    %v144 = vld [vmem:[#allocation2 + $0xb4] sm:$0xf]
    %v145 = vld [vmem:[#allocation2 + $0xb8] sm:$0xf]
    %v146 = vld [vmem:[#allocation2 + $0xbc] sm:$0xf]
    %v147 = vld [vmem:[#allocation2 + $0xc0] sm:$0xf]
    %v148 = vld [vmem:[#allocation2 + $0xc4] sm:$0xf]
    %v149 = vld [vmem:[#allocation2 + $0xc8] sm:$0xf]
    %v150 = vld [vmem:[#allocation2 + $0xcc] sm:$0xf]
    %v151 = vld [vmem:[#allocation2 + $0xd0] sm:$0xf]
    %v152 = vld [vmem:[#allocation2 + $0xd4] sm:$0xf]
    %v153 = vld [vmem:[#allocation2 + $0xd8] sm:$0xf]
    %v154 = vld [vmem:[#allocation2 + $0xdc] sm:$0xf]
    %v155 = vld [vmem:[#allocation2 + $0xe0] sm:$0xf]
    %v156 = vld [vmem:[#allocation2 + $0xe4] sm:$0xf]
    %v157 = vld [vmem:[#allocation2 + $0xe8] sm:$0xf]
    %v158 = vld [vmem:[#allocation2 + $0xec] sm:$0xf]
    %v159 = vld [vmem:[#allocation2 + $0xf0] sm:$0xf]
    %v160 = vld [vmem:[#allocation2 + $0xf4] sm:$0xf]
    %v161 = vld [vmem:[#allocation2 + $0xf8] sm:$0xf]
    %v162 = vld [vmem:[#allocation2 + $0xfc] sm:$0xf]
    %v163 = vld [vmem:[#allocation7] sm:$0x3]
    %v164 = vld [vmem:[#allocation5] sm:$0xf]
    %v165 = vld [vmem:[#allocation5 + $0x4] sm:$0xf]
    %v166 = vld [vmem:[#allocation5 + $0x8] sm:$0xf]
    %v167 = vld [vmem:[#allocation5 + $0xc] sm:$0xf]
    %v168 = vld [vmem:[#allocation5 + $0x10] sm:$0xf]
    %v169 = vld [vmem:[#allocation5 + $0x14] sm:$0xf]
    %v170 = vld [vmem:[#allocation5 + $0x18] sm:$0xf]
    %v171 = vld [vmem:[#allocation5 + $0x1c] sm:$0xf]
    %v172 = vld [vmem:[#allocation5 + $0x20] sm:$0xf]
    %v173 = vld [vmem:[#allocation5 + $0x24] sm:$0xf]
    %v174 = vld [vmem:[#allocation5 + $0x28] sm:$0xf]
    %v175 = vld [vmem:[#allocation5 + $0x2c] sm:$0xf]
    %v176 = vld [vmem:[#allocation5 + $0x30] sm:$0xf]
    %v177 = vld [vmem:[#allocation5 + $0x34] sm:$0xf]
    %v178 = vld [vmem:[#allocation5 + $0x38] sm:$0xf]
    %v179 = vld [vmem:[#allocation5 + $0x3c] sm:$0xf]
    %v180 = vld [vmem:[#allocation5 + $0x40] sm:$0xf]
    %v181 = vld [vmem:[#allocation5 + $0x44] sm:$0xf]
    %v182 = vld [vmem:[#allocation5 + $0x48] sm:$0xf]
    %v183 = vld [vmem:[#allocation5 + $0x4c] sm:$0xf]
    %v184 = vld [vmem:[#allocation5 + $0x50] sm:$0xf]
    %v185 = vld [vmem:[#allocation5 + $0x54] sm:$0xf]
    %v186 = vld [vmem:[#allocation5 + $0x58] sm:$0xf]
    %v187 = vld [vmem:[#allocation5 + $0x5c] sm:$0xf]
    %v188 = vld [vmem:[#allocation5 + $0x60] sm:$0xf]
    %v189 = vld [vmem:[#allocation5 + $0x64] sm:$0xf]
    %v190 = vld [vmem:[#allocation5 + $0x68] sm:$0xf]
    %v191 = vld [vmem:[#allocation5 + $0x6c] sm:$0xf]
    %v192 = vld [vmem:[#allocation5 + $0x70] sm:$0xf]
    %v193 = vld [vmem:[#allocation5 + $0x74] sm:$0xf]
    %v194 = vld [vmem:[#allocation5 + $0x78] sm:$0xf]
    %v195 = vld [vmem:[#allocation5 + $0x7c] sm:$0xf]
    %v196 = vld [vmem:[#allocation5 + $0x80] sm:$0xf]
    %v197 = vld [vmem:[#allocation5 + $0x84] sm:$0xf]
    %v198 = vld [vmem:[#allocation5 + $0x88] sm:$0xf]
    %v199 = vld [vmem:[#allocation5 + $0x8c] sm:$0xf]
    %v200 = vld [vmem:[#allocation5 + $0x90] sm:$0xf]
    %v201 = vld [vmem:[#allocation5 + $0x94] sm:$0xf]
    %v202 = vld [vmem:[#allocation5 + $0x98] sm:$0xf]
    %v203 = vld [vmem:[#allocation5 + $0x9c] sm:$0xf]
    %v204 = vld [vmem:[#allocation5 + $0xa0] sm:$0xf]
    %v205 = vld [vmem:[#allocation5 + $0xa4] sm:$0xf]
    %v206 = vld [vmem:[#allocation5 + $0xa8] sm:$0xf]
    %v207 = vld [vmem:[#allocation5 + $0xac] sm:$0xf]
    %v208 = vld [vmem:[#allocation5 + $0xb0] sm:$0xf]
    %v209 = vld [vmem:[#allocation5 + $0xb4] sm:$0xf]
    %v210 = vld [vmem:[#allocation5 + $0xb8] sm:$0xf]
    %v211 = vld [vmem:[#allocation5 + $0xbc] sm:$0xf]
    %v212 = vld [vmem:[#allocation5 + $0xc0] sm:$0xf]
    %v213 = vld [vmem:[#allocation5 + $0xc4] sm:$0xf]
    %v214 = vld [vmem:[#allocation5 + $0xc8] sm:$0xf]
    %v215 = vld [vmem:[#allocation5 + $0xcc] sm:$0xf]
    %v216 = vld [vmem:[#allocation5 + $0xd0] sm:$0xf]
    %v217 = vld [vmem:[#allocation5 + $0xd4] sm:$0xf]
    %v218 = vld [vmem:[#allocation5 + $0xd8] sm:$0xf]
    %v219 = vld [vmem:[#allocation5 + $0xdc] sm:$0xf]
    %v220 = vld [vmem:[#allocation5 + $0xe0] sm:$0xf]
    %v221 = vld [vmem:[#allocation5 + $0xe4] sm:$0xf]
    %v222 = vld [vmem:[#allocation5 + $0xe8] sm:$0xf]
    %v223 = vld [vmem:[#allocation5 + $0xec] sm:$0xf]
    %v224 = vld [vmem:[#allocation5 + $0xf0] sm:$0xf]
    %v225 = vld [vmem:[#allocation5 + $0xf4] sm:$0xf]
    %v226 = vld [vmem:[#allocation5 + $0xf8] sm:$0xf]
    %v227 = vld [vmem:[#allocation5 + $0xfc] sm:$0xf]
    %v228 = vld [vmem:[#allocation8] sm:$0x3]
    %v293 = vunpack.c.l.b16 %v164
    %v294 = vunpack.c.l.b16 %v165
    %v295 = vunpack.c.l.b16 %v166
    %v296 = vunpack.c.l.b16 %v167
    %v297 = vunpack.c.l.b16 %v168
    %v298 = vunpack.c.l.b16 %v169
    %v299 = vunpack.c.l.b16 %v170
    %v300 = vunpack.c.l.b16 %v171
    %v301 = vunpack.c.l.b16 %v172
    %v302 = vunpack.c.l.b16 %v173
    %v303 = vunpack.c.l.b16 %v174
    %v304 = vunpack.c.l.b16 %v175
    %v305 = vunpack.c.l.b16 %v176
    %v306 = vunpack.c.l.b16 %v177
    %v307 = vunpack.c.l.b16 %v178
    %v308 = vunpack.c.l.b16 %v179
    %v309 = vunpack.c.l.b16 %v180
    %v310 = vunpack.c.l.b16 %v181
    %v311 = vunpack.c.l.b16 %v182
    %v312 = vunpack.c.l.b16 %v183
    %v313 = vunpack.c.l.b16 %v184
    %v314 = vunpack.c.l.b16 %v185
    %v315 = vunpack.c.l.b16 %v186
    %v316 = vunpack.c.l.b16 %v187
    %v317 = vunpack.c.l.b16 %v188
    %v318 = vunpack.c.l.b16 %v189
    %v319 = vunpack.c.l.b16 %v190
    %v320 = vunpack.c.l.b16 %v191
    %v321 = vunpack.c.l.b16 %v192
    %v322 = vunpack.c.l.b16 %v193
    %v323 = vunpack.c.l.b16 %v194
    %v324 = vunpack.c.l.b16 %v195
    %v325 = vunpack.c.l.b16 %v196
    %v326 = vunpack.c.l.b16 %v197
    %v327 = vunpack.c.l.b16 %v198
    %v328 = vunpack.c.l.b16 %v199
    %v329 = vunpack.c.l.b16 %v200
    %v330 = vunpack.c.l.b16 %v201
    %v331 = vunpack.c.l.b16 %v202
    %v332 = vunpack.c.l.b16 %v203
    %v333 = vunpack.c.l.b16 %v204
    %v334 = vunpack.c.l.b16 %v205
    %v335 = vunpack.c.l.b16 %v206
    %v336 = vunpack.c.l.b16 %v207
    %v337 = vunpack.c.l.b16 %v208
    %v338 = vunpack.c.l.b16 %v209
    %v339 = vunpack.c.l.b16 %v210
    %v340 = vunpack.c.l.b16 %v211
    %v341 = vunpack.c.l.b16 %v212
    %v342 = vunpack.c.l.b16 %v213
    %v343 = vunpack.c.l.b16 %v214
    %v344 = vunpack.c.l.b16 %v215
    %v345 = vunpack.c.l.b16 %v216
    %v346 = vunpack.c.l.b16 %v217
    %v347 = vunpack.c.l.b16 %v218
    %v348 = vunpack.c.l.b16 %v219
    %v349 = vunpack.c.l.b16 %v220
    %v350 = vunpack.c.l.b16 %v221
    %v351 = vunpack.c.l.b16 %v222
    %v352 = vunpack.c.l.b16 %v223
    %v353 = vunpack.c.l.b16 %v224
    %v354 = vunpack.c.l.b16 %v225
    %v355 = vunpack.c.l.b16 %v226
    %v356 = vunpack.c.l.b16 %v227
    %v357 = vpack.c.b16 %v294, %v293
    %v358 = vpack.c.b16 %v296, %v295
    %v359 = vpack.c.b16 %v298, %v297
    %v360 = vpack.c.b16 %v300, %v299
    %v361 = vpack.c.b16 %v302, %v301
    %v362 = vpack.c.b16 %v304, %v303
    %v363 = vpack.c.b16 %v306, %v305
    %v364 = vpack.c.b16 %v308, %v307
    %v365 = vpack.c.b16 %v310, %v309
    %v366 = vpack.c.b16 %v312, %v311
    %v367 = vpack.c.b16 %v314, %v313
    %v368 = vpack.c.b16 %v316, %v315
    %v369 = vpack.c.b16 %v318, %v317
    %v370 = vpack.c.b16 %v320, %v319
    %v371 = vpack.c.b16 %v322, %v321
    %v372 = vpack.c.b16 %v324, %v323
    %v373 = vpack.c.b16 %v326, %v325
    %v374 = vpack.c.b16 %v328, %v327
    %v375 = vpack.c.b16 %v330, %v329
    %v376 = vpack.c.b16 %v332, %v331
    %v377 = vpack.c.b16 %v334, %v333
    %v378 = vpack.c.b16 %v336, %v335
    %v379 = vpack.c.b16 %v338, %v337
    %v380 = vpack.c.b16 %v340, %v339
    %v381 = vpack.c.b16 %v342, %v341
    %v382 = vpack.c.b16 %v344, %v343
    %v383 = vpack.c.b16 %v346, %v345
    %v384 = vpack.c.b16 %v348, %v347
    %v385 = vpack.c.b16 %v350, %v349
    %v386 = vpack.c.b16 %v352, %v351
    %v387 = vpack.c.b16 %v354, %v353
    %v388 = vpack.c.b16 %v356, %v355
    %vm389 = vcmask 31744
    %v391 = vsel %vm389, %v357, 0
    %v394 = vsel %vm389, %v358, 0
    %v397 = vsel %vm389, %v359, 0
    %v400 = vsel %vm389, %v360, 0
    %v403 = vsel %vm389, %v361, 0
    %v406 = vsel %vm389, %v362, 0
    %v409 = vsel %vm389, %v363, 0
    %v412 = vsel %vm389, %v364, 0
    %v415 = vsel %vm389, %v365, 0
    %v418 = vsel %vm389, %v366, 0
    %v421 = vsel %vm389, %v367, 0
    %v424 = vsel %vm389, %v368, 0
    %v427 = vsel %vm389, %v369, 0
    %v430 = vsel %vm389, %v370, 0
    %v433 = vsel %vm389, %v371, 0
    %v436 = vsel %vm389, %v372, 0
    %v439 = vsel %vm389, %v373, 0
    %v442 = vsel %vm389, %v374, 0
    %v445 = vsel %vm389, %v375, 0
    %v448 = vsel %vm389, %v376, 0
    %v451 = vsel %vm389, %v377, 0
    %v454 = vsel %vm389, %v378, 0
    %v457 = vsel %vm389, %v379, 0
    %v460 = vsel %vm389, %v380, 0
    %v463 = vsel %vm389, %v381, 0
    %v466 = vsel %vm389, %v382, 0
    %v469 = vsel %vm389, %v383, 0
    %v472 = vsel %vm389, %v384, 0
    %v475 = vsel %vm389, %v385, 0
    %v478 = vsel %vm389, %v386, 0
    %v481 = vsel %vm389, %v387, 0
    %v484 = vsel %vm389, %v388, 0
    %vm486 = vcmask 1041408
    %v488 = vsel %vm486, %v228, 0
    %490 = vmatprep.subr.bf16.mxu0 0
    %491 = vmatpush1.bf16.msra.mxu0 %v488
    %492 = vmatprep.subr.bf16.mxu0 0
    %493 = vmatpush1.bf16.msra.mxu0 0
    %494 = vmatprep.subr.bf16.mxu0 0
    %495 = vmatpush1.bf16.msra.mxu0 0
    %496 = vmatprep.subr.bf16.mxu0 0
    %497 = vmatpush1.bf16.msra.mxu0 0
    %498 = vmatprep.subr.bf16.mxu0 0
    %499 = vmatpush1.bf16.msra.mxu0 0
    %500 = vmatprep.subr.bf16.mxu0 0
    %501 = vmatpush1.bf16.msra.mxu0 0
    %502 = vmatprep.subr.bf16.mxu0 0
    %503 = vmatpush1.bf16.msra.mxu0 0
    %504 = vmatprep.subr.bf16.mxu0 0
    %505 = vmatpush1.bf16.msra.mxu0 0
    %506 = vmatprep.subr.bf16.mxu0 0
    %507 = vmatpush1.bf16.msra.mxu0 0
    %508 = vmatprep.subr.bf16.mxu0 0
    %509 = vmatpush1.bf16.msra.mxu0 0
    %510 = vmatprep.subr.bf16.mxu0 0
    %511 = vmatpush1.bf16.msra.mxu0 0
    %512 = vmatprep.subr.bf16.mxu0 0
    %513 = vmatpush1.bf16.msra.mxu0 0
    %514 = vmatprep.subr.bf16.mxu0 0
    %515 = vmatpush1.bf16.msra.mxu0 0
    %516 = vmatprep.subr.bf16.mxu0 0
    %517 = vmatpush1.bf16.msra.mxu0 0
    %518 = vmatprep.subr.bf16.mxu0 0
    %519 = vmatpush1.bf16.msra.mxu0 0
    %520 = vmatprep.subr.bf16.mxu0 0
    %521 = vmatpush1.bf16.msra.mxu0 0
    %522 = vmatprep.mubr.bf16.mxu0 0
    %523 = vmatmul.mubr.bf16.gmra.mrb[0].mxu0 %v391
    %v524 = vpop.f32.mrb[0].mxu0
    %v525 = vadd.f32 0.0, %v524
    %v526 = vpop.f32.mrb[0].mxu0
    %v527 = vpop.f32.mrb[0].mxu0
    %v528 = vadd.f32 0.0, %v527
    %v529 = vpop.f32.mrb[0].mxu0
    %530 = vmatprep.mubr.bf16.mxu0 0
    %531 = vmatmul.mubr.bf16.gmra.mrb[0].mxu0 %v394
    %v532 = vpop.f32.mrb[0].mxu0
    %v533 = vadd.f32 0.0, %v532
    %v534 = vpop.f32.mrb[0].mxu0
    %v535 = vpop.f32.mrb[0].mxu0
    %v536 = vadd.f32 0.0, %v535
    %v537 = vpop.f32.mrb[0].mxu0
    %538 = vmatprep.mubr.bf16.mxu0 0
    %539 = vmatmul.mubr.bf16.gmra.mrb[0].mxu0 %v397
    %v540 = vpop.f32.mrb[0].mxu0
    %v541 = vadd.f32 0.0, %v540
    %v542 = vpop.f32.mrb[0].mxu0
    %v543 = vpop.f32.mrb[0].mxu0
    %v544 = vadd.f32 0.0, %v543
    %v545 = vpop.f32.mrb[0].mxu0
    %546 = vmatprep.mubr.bf16.mxu0 0
    %547 = vmatmul.mubr.bf16.gmra.mrb[0].mxu0 %v400
    %v548 = vpop.f32.mrb[0].mxu0
    %v549 = vadd.f32 0.0, %v548
    %v550 = vpop.f32.mrb[0].mxu0
    %v551 = vpop.f32.mrb[0].mxu0
    %v552 = vadd.f32 0.0, %v551
    %v553 = vpop.f32.mrb[0].mxu0
    %554 = vmatprep.mubr.bf16.mxu0 0
    %555 = vmatmul.mubr.bf16.gmra.mrb[0].mxu0 %v403
    %v556 = vpop.f32.mrb[0].mxu0
    %v557 = vadd.f32 0.0, %v556
    %v558 = vpop.f32.mrb[0].mxu0
    %v559 = vpop.f32.mrb[0].mxu0
    %v560 = vadd.f32 0.0, %v559
    %v561 = vpop.f32.mrb[0].mxu0
    %562 = vmatprep.mubr.bf16.mxu0 0
    %563 = vmatmul.mubr.bf16.gmra.mrb[0].mxu0 %v406
    %v564 = vpop.f32.mrb[0].mxu0
    %v565 = vadd.f32 0.0, %v564
    %v566 = vpop.f32.mrb[0].mxu0
    %v567 = vpop.f32.mrb[0].mxu0
    %v568 = vadd.f32 0.0, %v567
    %v569 = vpop.f32.mrb[0].mxu0
    %570 = vmatprep.mubr.bf16.mxu0 0
    %571 = vmatmul.mubr.bf16.gmra.mrb[0].mxu0 %v409
    %v572 = vpop.f32.mrb[0].mxu0
    %v573 = vadd.f32 0.0, %v572
    %v574 = vpop.f32.mrb[0].mxu0
    %v575 = vpop.f32.mrb[0].mxu0
    %v576 = vadd.f32 0.0, %v575
    %v577 = vpop.f32.mrb[0].mxu0
    %578 = vmatprep.mubr.bf16.mxu0 0
    %579 = vmatmul.mubr.bf16.gmra.mrb[0].mxu0 %v412
    %v580 = vpop.f32.mrb[0].mxu0
    %v581 = vadd.f32 0.0, %v580
    %v582 = vpop.f32.mrb[0].mxu0
    %v583 = vpop.f32.mrb[0].mxu0
    %v584 = vadd.f32 0.0, %v583
    %v585 = vpop.f32.mrb[0].mxu0
    %586 = vmatprep.mubr.bf16.mxu0 0
    %587 = vmatmul.mubr.bf16.gmra.mrb[0].mxu0 %v415
    %v588 = vpop.f32.mrb[0].mxu0
    %v589 = vadd.f32 0.0, %v588
    %v590 = vpop.f32.mrb[0].mxu0
    %v591 = vpop.f32.mrb[0].mxu0
    %v592 = vadd.f32 0.0, %v591
    %v593 = vpop.f32.mrb[0].mxu0
    %594 = vmatprep.mubr.bf16.mxu0 0
    %595 = vmatmul.mubr.bf16.gmra.mrb[0].mxu0 %v418
    %v596 = vpop.f32.mrb[0].mxu0
    %v597 = vadd.f32 0.0, %v596
    %v598 = vpop.f32.mrb[0].mxu0
    %v599 = vpop.f32.mrb[0].mxu0
    %v600 = vadd.f32 0.0, %v599
    %v601 = vpop.f32.mrb[0].mxu0
    %602 = vmatprep.mubr.bf16.mxu0 0
    %603 = vmatmul.mubr.bf16.gmra.mrb[0].mxu0 %v421
    %v604 = vpop.f32.mrb[0].mxu0
    %v605 = vadd.f32 0.0, %v604
    %v606 = vpop.f32.mrb[0].mxu0
    %v607 = vpop.f32.mrb[0].mxu0
    %v608 = vadd.f32 0.0, %v607
    %v609 = vpop.f32.mrb[0].mxu0
    %610 = vmatprep.mubr.bf16.mxu0 0
    %611 = vmatmul.mubr.bf16.gmra.mrb[0].mxu0 %v424
    %v612 = vpop.f32.mrb[0].mxu0
    %v613 = vadd.f32 0.0, %v612
    %v614 = vpop.f32.mrb[0].mxu0
    %v615 = vpop.f32.mrb[0].mxu0
    %v616 = vadd.f32 0.0, %v615
    %v617 = vpop.f32.mrb[0].mxu0
    %618 = vmatprep.mubr.bf16.mxu0 0
    %619 = vmatmul.mubr.bf16.gmra.mrb[0].mxu0 %v427
    %v620 = vpop.f32.mrb[0].mxu0
    %v621 = vadd.f32 0.0, %v620
    %v622 = vpop.f32.mrb[0].mxu0
    %v623 = vpop.f32.mrb[0].mxu0
    %v624 = vadd.f32 0.0, %v623
    %v625 = vpop.f32.mrb[0].mxu0
    %626 = vmatprep.mubr.bf16.mxu0 0
    %627 = vmatmul.mubr.bf16.gmra.mrb[0].mxu0 %v430
    %v628 = vpop.f32.mrb[0].mxu0
    %v629 = vadd.f32 0.0, %v628
    %v630 = vpop.f32.mrb[0].mxu0
    %v631 = vpop.f32.mrb[0].mxu0
    %v632 = vadd.f32 0.0, %v631
    %v633 = vpop.f32.mrb[0].mxu0
    %634 = vmatprep.mubr.bf16.mxu0 0
    %635 = vmatmul.mubr.bf16.gmra.mrb[0].mxu0 %v433
    %v636 = vpop.f32.mrb[0].mxu0
    %v637 = vadd.f32 0.0, %v636
    %v638 = vpop.f32.mrb[0].mxu0
    %v639 = vpop.f32.mrb[0].mxu0
    %v640 = vadd.f32 0.0, %v639
    %v641 = vpop.f32.mrb[0].mxu0
    %642 = vmatprep.mubr.bf16.mxu0 0
    %643 = vmatmul.mubr.bf16.gmra.mrb[0].mxu0 %v436
    %v644 = vpop.f32.mrb[0].mxu0
    %v645 = vadd.f32 0.0, %v644
    %v646 = vpop.f32.mrb[0].mxu0
    %v647 = vpop.f32.mrb[0].mxu0
    %v648 = vadd.f32 0.0, %v647
    %v649 = vpop.f32.mrb[0].mxu0
    %650 = vmatprep.mubr.bf16.mxu0 0
    %651 = vmatmul.mubr.bf16.gmra.mrb[0].mxu0 %v439
    %v652 = vpop.f32.mrb[0].mxu0
    %v653 = vadd.f32 0.0, %v652
    %v654 = vpop.f32.mrb[0].mxu0
    %v655 = vpop.f32.mrb[0].mxu0
    %v656 = vadd.f32 0.0, %v655
    %v657 = vpop.f32.mrb[0].mxu0
    %658 = vmatprep.mubr.bf16.mxu0 0
    %659 = vmatmul.mubr.bf16.gmra.mrb[0].mxu0 %v442
    %v660 = vpop.f32.mrb[0].mxu0
    %v661 = vadd.f32 0.0, %v660
    %v662 = vpop.f32.mrb[0].mxu0
    %v663 = vpop.f32.mrb[0].mxu0
    %v664 = vadd.f32 0.0, %v663
    %v665 = vpop.f32.mrb[0].mxu0
    %666 = vmatprep.mubr.bf16.mxu0 0
    %667 = vmatmul.mubr.bf16.gmra.mrb[0].mxu0 %v445
    %v668 = vpop.f32.mrb[0].mxu0
    %v669 = vadd.f32 0.0, %v668
    %v670 = vpop.f32.mrb[0].mxu0
    %v671 = vpop.f32.mrb[0].mxu0
    %v672 = vadd.f32 0.0, %v671
    %v673 = vpop.f32.mrb[0].mxu0
    %674 = vmatprep.mubr.bf16.mxu0 0
    %675 = vmatmul.mubr.bf16.gmra.mrb[0].mxu0 %v448
    %v676 = vpop.f32.mrb[0].mxu0
    %v677 = vadd.f32 0.0, %v676
    %v678 = vpop.f32.mrb[0].mxu0
    %v679 = vpop.f32.mrb[0].mxu0
    %v680 = vadd.f32 0.0, %v679
    %v681 = vpop.f32.mrb[0].mxu0
    %682 = vmatprep.mubr.bf16.mxu0 0
    %683 = vmatmul.mubr.bf16.gmra.mrb[0].mxu0 %v451
    %v684 = vpop.f32.mrb[0].mxu0
    %v685 = vadd.f32 0.0, %v684
    %v686 = vpop.f32.mrb[0].mxu0
    %v687 = vpop.f32.mrb[0].mxu0
    %v688 = vadd.f32 0.0, %v687
    %v689 = vpop.f32.mrb[0].mxu0
    %690 = vmatprep.mubr.bf16.mxu0 0
    %691 = vmatmul.mubr.bf16.gmra.mrb[0].mxu0 %v454
    %v692 = vpop.f32.mrb[0].mxu0
    %v693 = vadd.f32 0.0, %v692
    %v694 = vpop.f32.mrb[0].mxu0
    %v695 = vpop.f32.mrb[0].mxu0
    %v696 = vadd.f32 0.0, %v695
    %v697 = vpop.f32.mrb[0].mxu0
    %698 = vmatprep.mubr.bf16.mxu0 0
    %699 = vmatmul.mubr.bf16.gmra.mrb[0].mxu0 %v457
    %v700 = vpop.f32.mrb[0].mxu0
    %v701 = vadd.f32 0.0, %v700
    %v702 = vpop.f32.mrb[0].mxu0
    %v703 = vpop.f32.mrb[0].mxu0
    %v704 = vadd.f32 0.0, %v703
    %v705 = vpop.f32.mrb[0].mxu0
    %706 = vmatprep.mubr.bf16.mxu0 0
    %707 = vmatmul.mubr.bf16.gmra.mrb[0].mxu0 %v460
    %v708 = vpop.f32.mrb[0].mxu0
    %v709 = vadd.f32 0.0, %v708
    %v710 = vpop.f32.mrb[0].mxu0
    %v711 = vpop.f32.mrb[0].mxu0
    %v712 = vadd.f32 0.0, %v711
    %v713 = vpop.f32.mrb[0].mxu0
    %714 = vmatprep.mubr.bf16.mxu0 0
    %715 = vmatmul.mubr.bf16.gmra.mrb[0].mxu0 %v463
    %v716 = vpop.f32.mrb[0].mxu0
    %v717 = vadd.f32 0.0, %v716
    %v718 = vpop.f32.mrb[0].mxu0
    %v719 = vpop.f32.mrb[0].mxu0
    %v720 = vadd.f32 0.0, %v719
    %v721 = vpop.f32.mrb[0].mxu0
    %722 = vmatprep.mubr.bf16.mxu0 0
    %723 = vmatmul.mubr.bf16.gmra.mrb[0].mxu0 %v466
    %v724 = vpop.f32.mrb[0].mxu0
    %v725 = vadd.f32 0.0, %v724
    %v726 = vpop.f32.mrb[0].mxu0
    %v727 = vpop.f32.mrb[0].mxu0
    %v728 = vadd.f32 0.0, %v727
    %v729 = vpop.f32.mrb[0].mxu0
    %730 = vmatprep.mubr.bf16.mxu0 0
    %731 = vmatmul.mubr.bf16.gmra.mrb[0].mxu0 %v469
    %v732 = vpop.f32.mrb[0].mxu0
    %v733 = vadd.f32 0.0, %v732
    %v734 = vpop.f32.mrb[0].mxu0
    %v735 = vpop.f32.mrb[0].mxu0
    %v736 = vadd.f32 0.0, %v735
    %v737 = vpop.f32.mrb[0].mxu0
    %738 = vmatprep.mubr.bf16.mxu0 0
    %739 = vmatmul.mubr.bf16.gmra.mrb[0].mxu0 %v472
    %v740 = vpop.f32.mrb[0].mxu0
    %v741 = vadd.f32 0.0, %v740
    %v742 = vpop.f32.mrb[0].mxu0
    %v743 = vpop.f32.mrb[0].mxu0
    %v744 = vadd.f32 0.0, %v743
    %v745 = vpop.f32.mrb[0].mxu0
    %746 = vmatprep.mubr.bf16.mxu0 0
    %747 = vmatmul.mubr.bf16.gmra.mrb[0].mxu0 %v475
    %v748 = vpop.f32.mrb[0].mxu0
    %v749 = vadd.f32 0.0, %v748
    %v750 = vpop.f32.mrb[0].mxu0
    %v751 = vpop.f32.mrb[0].mxu0
    %v752 = vadd.f32 0.0, %v751
    %v753 = vpop.f32.mrb[0].mxu0
    %754 = vmatprep.mubr.bf16.mxu0 0
    %755 = vmatmul.mubr.bf16.gmra.mrb[0].mxu0 %v478
    %v756 = vpop.f32.mrb[0].mxu0
    %v757 = vadd.f32 0.0, %v756
    %v758 = vpop.f32.mrb[0].mxu0
    %v759 = vpop.f32.mrb[0].mxu0
    %v760 = vadd.f32 0.0, %v759
    %v761 = vpop.f32.mrb[0].mxu0
    %762 = vmatprep.mubr.bf16.mxu0 0
    %763 = vmatmul.mubr.bf16.gmra.mrb[0].mxu0 %v481
    %v764 = vpop.f32.mrb[0].mxu0
    %v765 = vadd.f32 0.0, %v764
    %v766 = vpop.f32.mrb[0].mxu0
    %v767 = vpop.f32.mrb[0].mxu0
    %v768 = vadd.f32 0.0, %v767
    %v769 = vpop.f32.mrb[0].mxu0
    %770 = vmatprep.mubr.bf16.mxu0 0
    %771 = vmatmul.mubr.bf16.gmra.mrb[0].mxu0 %v484
    %v772 = vpop.f32.mrb[0].mxu0
    %v773 = vadd.f32 0.0, %v772
    %v774 = vpop.f32.mrb[0].mxu0
    %v775 = vpop.f32.mrb[0].mxu0
    %v776 = vadd.f32 0.0, %v775
    %v777 = vpop.f32.mrb[0].mxu0
    %778 = vdwg.mxu0
    %v843 = vunpack.c.l.b16 %v99
    %v844 = vunpack.c.l.b16 %v100
    %v845 = vunpack.c.l.b16 %v101
    %v846 = vunpack.c.l.b16 %v102
    %v847 = vunpack.c.l.b16 %v103
    %v848 = vunpack.c.l.b16 %v104
    %v849 = vunpack.c.l.b16 %v105
    %v850 = vunpack.c.l.b16 %v106
    %v851 = vunpack.c.l.b16 %v107
    %v852 = vunpack.c.l.b16 %v108
    %v853 = vunpack.c.l.b16 %v109
    %v854 = vunpack.c.l.b16 %v110
    %v855 = vunpack.c.l.b16 %v111
    %v856 = vunpack.c.l.b16 %v112
    %v857 = vunpack.c.l.b16 %v113
    %v858 = vunpack.c.l.b16 %v114
    %v859 = vunpack.c.l.b16 %v115
    %v860 = vunpack.c.l.b16 %v116
    %v861 = vunpack.c.l.b16 %v117
    %v862 = vunpack.c.l.b16 %v118
    %v863 = vunpack.c.l.b16 %v119
    %v864 = vunpack.c.l.b16 %v120
    %v865 = vunpack.c.l.b16 %v121
    %v866 = vunpack.c.l.b16 %v122
    %v867 = vunpack.c.l.b16 %v123
    %v868 = vunpack.c.l.b16 %v124
    %v869 = vunpack.c.l.b16 %v125
    %v870 = vunpack.c.l.b16 %v126
    %v871 = vunpack.c.l.b16 %v127
    %v872 = vunpack.c.l.b16 %v128
    %v873 = vunpack.c.l.b16 %v129
    %v874 = vunpack.c.l.b16 %v130
    %v875 = vunpack.c.l.b16 %v131
    %v876 = vunpack.c.l.b16 %v132
    %v877 = vunpack.c.l.b16 %v133
    %v878 = vunpack.c.l.b16 %v134
    %v879 = vunpack.c.l.b16 %v135
    %v880 = vunpack.c.l.b16 %v136
    %v881 = vunpack.c.l.b16 %v137
    %v882 = vunpack.c.l.b16 %v138
    %v883 = vunpack.c.l.b16 %v139
    %v884 = vunpack.c.l.b16 %v140
    %v885 = vunpack.c.l.b16 %v141
    %v886 = vunpack.c.l.b16 %v142
    %v887 = vunpack.c.l.b16 %v143
    %v888 = vunpack.c.l.b16 %v144
    %v889 = vunpack.c.l.b16 %v145
    %v890 = vunpack.c.l.b16 %v146
    %v891 = vunpack.c.l.b16 %v147
    %v892 = vunpack.c.l.b16 %v148
    %v893 = vunpack.c.l.b16 %v149
    %v894 = vunpack.c.l.b16 %v150
    %v895 = vunpack.c.l.b16 %v151
    %v896 = vunpack.c.l.b16 %v152
    %v897 = vunpack.c.l.b16 %v153
    %v898 = vunpack.c.l.b16 %v154
    %v899 = vunpack.c.l.b16 %v155
    %v900 = vunpack.c.l.b16 %v156
    %v901 = vunpack.c.l.b16 %v157
    %v902 = vunpack.c.l.b16 %v158
    %v903 = vunpack.c.l.b16 %v159
    %v904 = vunpack.c.l.b16 %v160
    %v905 = vunpack.c.l.b16 %v161
    %v906 = vunpack.c.l.b16 %v162
    %v907 = vpack.c.b16 %v844, %v843
    %v908 = vpack.c.b16 %v846, %v845
    %v909 = vpack.c.b16 %v848, %v847
    %v910 = vpack.c.b16 %v850, %v849
    %v911 = vpack.c.b16 %v852, %v851
    %v912 = vpack.c.b16 %v854, %v853
    %v913 = vpack.c.b16 %v856, %v855
    %v914 = vpack.c.b16 %v858, %v857
    %v915 = vpack.c.b16 %v860, %v859
    %v916 = vpack.c.b16 %v862, %v861
    %v917 = vpack.c.b16 %v864, %v863
    %v918 = vpack.c.b16 %v866, %v865
    %v919 = vpack.c.b16 %v868, %v867
    %v920 = vpack.c.b16 %v870, %v869
    %v921 = vpack.c.b16 %v872, %v871
    %v922 = vpack.c.b16 %v874, %v873
    %v923 = vpack.c.b16 %v876, %v875
    %v924 = vpack.c.b16 %v878, %v877
    %v925 = vpack.c.b16 %v880, %v879
    %v926 = vpack.c.b16 %v882, %v881
    %v927 = vpack.c.b16 %v884, %v883
    %v928 = vpack.c.b16 %v886, %v885
    %v929 = vpack.c.b16 %v888, %v887
    %v930 = vpack.c.b16 %v890, %v889
    %v931 = vpack.c.b16 %v892, %v891
    %v932 = vpack.c.b16 %v894, %v893
    %v933 = vpack.c.b16 %v896, %v895
    %v934 = vpack.c.b16 %v898, %v897
    %v935 = vpack.c.b16 %v900, %v899
    %v936 = vpack.c.b16 %v902, %v901
    %v937 = vpack.c.b16 %v904, %v903
    %v938 = vpack.c.b16 %v906, %v905
    %v940 = vsel %vm389, %v907, 0
    %v943 = vsel %vm389, %v908, 0
    %v946 = vsel %vm389, %v909, 0
    %v949 = vsel %vm389, %v910, 0
    %v952 = vsel %vm389, %v911, 0
    %v955 = vsel %vm389, %v912, 0
    %v958 = vsel %vm389, %v913, 0
    %v961 = vsel %vm389, %v914, 0
    %v964 = vsel %vm389, %v915, 0
    %v967 = vsel %vm389, %v916, 0
    %v970 = vsel %vm389, %v917, 0
    %v973 = vsel %vm389, %v918, 0
    %v976 = vsel %vm389, %v919, 0
    %v979 = vsel %vm389, %v920, 0
    %v982 = vsel %vm389, %v921, 0
    %v985 = vsel %vm389, %v922, 0
    %v988 = vsel %vm389, %v923, 0
    %v991 = vsel %vm389, %v924, 0
    %v994 = vsel %vm389, %v925, 0
    %v997 = vsel %vm389, %v926, 0
    %v1000 = vsel %vm389, %v927, 0
    %v1003 = vsel %vm389, %v928, 0
    %v1006 = vsel %vm389, %v929, 0
    %v1009 = vsel %vm389, %v930, 0
    %v1012 = vsel %vm389, %v931, 0
    %v1015 = vsel %vm389, %v932, 0
    %v1018 = vsel %vm389, %v933, 0
    %v1021 = vsel %vm389, %v934, 0
    %v1024 = vsel %vm389, %v935, 0
    %v1027 = vsel %vm389, %v936, 0
    %v1030 = vsel %vm389, %v937, 0
    %v1033 = vsel %vm389, %v938, 0
    %v1036 = vsel %vm486, %v163, 0
    %1038 = vmatprep.subr.bf16.mxu0 0
    %1039 = vmatpush1.bf16.msra.mxu0 %v1036
    %1040 = vmatprep.subr.bf16.mxu0 0
    %1041 = vmatpush1.bf16.msra.mxu0 0
    %1042 = vmatprep.subr.bf16.mxu0 0
    %1043 = vmatpush1.bf16.msra.mxu0 0
    %1044 = vmatprep.subr.bf16.mxu0 0
    %1045 = vmatpush1.bf16.msra.mxu0 0
    %1046 = vmatprep.subr.bf16.mxu0 0
    %1047 = vmatpush1.bf16.msra.mxu0 0
    %1048 = vmatprep.subr.bf16.mxu0 0
    %1049 = vmatpush1.bf16.msra.mxu0 0
    %1050 = vmatprep.subr.bf16.mxu0 0
    %1051 = vmatpush1.bf16.msra.mxu0 0
    %1052 = vmatprep.subr.bf16.mxu0 0
    %1053 = vmatpush1.bf16.msra.mxu0 0
    %1054 = vmatprep.subr.bf16.mxu0 0
    %1055 = vmatpush1.bf16.msra.mxu0 0
    %1056 = vmatprep.subr.bf16.mxu0 0
    %1057 = vmatpush1.bf16.msra.mxu0 0
    %1058 = vmatprep.subr.bf16.mxu0 0
    %1059 = vmatpush1.bf16.msra.mxu0 0
    %1060 = vmatprep.subr.bf16.mxu0 0
    %1061 = vmatpush1.bf16.msra.mxu0 0
    %1062 = vmatprep.subr.bf16.mxu0 0
    %1063 = vmatpush1.bf16.msra.mxu0 0
    %1064 = vmatprep.subr.bf16.mxu0 0
    %1065 = vmatpush1.bf16.msra.mxu0 0
    %1066 = vmatprep.subr.bf16.mxu0 0
    %1067 = vmatpush1.bf16.msra.mxu0 0
    %1068 = vmatprep.subr.bf16.mxu0 0
    %1069 = vmatpush1.bf16.msra.mxu0 0
    %1070 = vmatprep.mubr.bf16.mxu0 0
    %1071 = vmatmul.mubr.bf16.gmra.mrb[0].mxu0 %v940
    %v1072 = vpop.f32.mrb[0].mxu0
    %v1073 = vadd.f32 %v525, %v1072
    %v1074 = vpop.f32.mrb[0].mxu0
    %v1075 = vpop.f32.mrb[0].mxu0
    %v1076 = vadd.f32 %v528, %v1075
    %v1077 = vpop.f32.mrb[0].mxu0
    %1078 = vmatprep.mubr.bf16.mxu0 0
    %1079 = vmatmul.mubr.bf16.gmra.mrb[0].mxu0 %v943
    %v1080 = vpop.f32.mrb[0].mxu0
    %v1081 = vadd.f32 %v533, %v1080
    %v1082 = vpop.f32.mrb[0].mxu0
    %v1083 = vpop.f32.mrb[0].mxu0
    %v1084 = vadd.f32 %v536, %v1083
    %v1085 = vpop.f32.mrb[0].mxu0
    %1086 = vmatprep.mubr.bf16.mxu0 0
    %1087 = vmatmul.mubr.bf16.gmra.mrb[0].mxu0 %v946
    %v1088 = vpop.f32.mrb[0].mxu0
    %v1089 = vadd.f32 %v541, %v1088
    %v1090 = vpop.f32.mrb[0].mxu0
    %v1091 = vpop.f32.mrb[0].mxu0
    %v1092 = vadd.f32 %v544, %v1091
    %v1093 = vpop.f32.mrb[0].mxu0
    %1094 = vmatprep.mubr.bf16.mxu0 0
    %1095 = vmatmul.mubr.bf16.gmra.mrb[0].mxu0 %v949
    %v1096 = vpop.f32.mrb[0].mxu0
    %v1097 = vadd.f32 %v549, %v1096
    %v1098 = vpop.f32.mrb[0].mxu0
    %v1099 = vpop.f32.mrb[0].mxu0
    %v1100 = vadd.f32 %v552, %v1099
    %v1101 = vpop.f32.mrb[0].mxu0
    %1102 = vmatprep.mubr.bf16.mxu0 0
    %1103 = vmatmul.mubr.bf16.gmra.mrb[0].mxu0 %v952
    %v1104 = vpop.f32.mrb[0].mxu0
    %v1105 = vadd.f32 %v557, %v1104
    %v1106 = vpop.f32.mrb[0].mxu0
    %v1107 = vpop.f32.mrb[0].mxu0
    %v1108 = vadd.f32 %v560, %v1107
    %v1109 = vpop.f32.mrb[0].mxu0
    %1110 = vmatprep.mubr.bf16.mxu0 0
    %1111 = vmatmul.mubr.bf16.gmra.mrb[0].mxu0 %v955
    %v1112 = vpop.f32.mrb[0].mxu0
    %v1113 = vadd.f32 %v565, %v1112
    %v1114 = vpop.f32.mrb[0].mxu0
    %v1115 = vpop.f32.mrb[0].mxu0
    %v1116 = vadd.f32 %v568, %v1115
    %v1117 = vpop.f32.mrb[0].mxu0
    %1118 = vmatprep.mubr.bf16.mxu0 0
    %1119 = vmatmul.mubr.bf16.gmra.mrb[0].mxu0 %v958
    %v1120 = vpop.f32.mrb[0].mxu0
    %v1121 = vadd.f32 %v573, %v1120
    %v1122 = vpop.f32.mrb[0].mxu0
    %v1123 = vpop.f32.mrb[0].mxu0
    %v1124 = vadd.f32 %v576, %v1123
    %v1125 = vpop.f32.mrb[0].mxu0
    %1126 = vmatprep.mubr.bf16.mxu0 0
    %1127 = vmatmul.mubr.bf16.gmra.mrb[0].mxu0 %v961
    %v1128 = vpop.f32.mrb[0].mxu0
    %v1129 = vadd.f32 %v581, %v1128
    %v1130 = vpop.f32.mrb[0].mxu0
    %v1131 = vpop.f32.mrb[0].mxu0
    %v1132 = vadd.f32 %v584, %v1131
    %v1133 = vpop.f32.mrb[0].mxu0
    %1134 = vmatprep.mubr.bf16.mxu0 0
    %1135 = vmatmul.mubr.bf16.gmra.mrb[0].mxu0 %v964
    %v1136 = vpop.f32.mrb[0].mxu0
    %v1137 = vadd.f32 %v589, %v1136
    %v1138 = vpop.f32.mrb[0].mxu0
    %v1139 = vpop.f32.mrb[0].mxu0
    %v1140 = vadd.f32 %v592, %v1139
    %v1141 = vpop.f32.mrb[0].mxu0
    %1142 = vmatprep.mubr.bf16.mxu0 0
    %1143 = vmatmul.mubr.bf16.gmra.mrb[0].mxu0 %v967
    %v1144 = vpop.f32.mrb[0].mxu0
    %v1145 = vadd.f32 %v597, %v1144
    %v1146 = vpop.f32.mrb[0].mxu0
    %v1147 = vpop.f32.mrb[0].mxu0
    %v1148 = vadd.f32 %v600, %v1147
    %v1149 = vpop.f32.mrb[0].mxu0
    %1150 = vmatprep.mubr.bf16.mxu0 0
    %1151 = vmatmul.mubr.bf16.gmra.mrb[0].mxu0 %v970
    %v1152 = vpop.f32.mrb[0].mxu0
    %v1153 = vadd.f32 %v605, %v1152
    %v1154 = vpop.f32.mrb[0].mxu0
    %v1155 = vpop.f32.mrb[0].mxu0
    %v1156 = vadd.f32 %v608, %v1155
    %v1157 = vpop.f32.mrb[0].mxu0
    %1158 = vmatprep.mubr.bf16.mxu0 0
    %1159 = vmatmul.mubr.bf16.gmra.mrb[0].mxu0 %v973
    %v1160 = vpop.f32.mrb[0].mxu0
    %v1161 = vadd.f32 %v613, %v1160
    %v1162 = vpop.f32.mrb[0].mxu0
    %v1163 = vpop.f32.mrb[0].mxu0
    %v1164 = vadd.f32 %v616, %v1163
    %v1165 = vpop.f32.mrb[0].mxu0
    %1166 = vmatprep.mubr.bf16.mxu0 0
    %1167 = vmatmul.mubr.bf16.gmra.mrb[0].mxu0 %v976
    %v1168 = vpop.f32.mrb[0].mxu0
    %v1169 = vadd.f32 %v621, %v1168
    %v1170 = vpop.f32.mrb[0].mxu0
    %v1171 = vpop.f32.mrb[0].mxu0
    %v1172 = vadd.f32 %v624, %v1171
    %v1173 = vpop.f32.mrb[0].mxu0
    %1174 = vmatprep.mubr.bf16.mxu0 0
    %1175 = vmatmul.mubr.bf16.gmra.mrb[0].mxu0 %v979
    %v1176 = vpop.f32.mrb[0].mxu0
    %v1177 = vadd.f32 %v629, %v1176
    %v1178 = vpop.f32.mrb[0].mxu0
    %v1179 = vpop.f32.mrb[0].mxu0
    %v1180 = vadd.f32 %v632, %v1179
    %v1181 = vpop.f32.mrb[0].mxu0
    %1182 = vmatprep.mubr.bf16.mxu0 0
    %1183 = vmatmul.mubr.bf16.gmra.mrb[0].mxu0 %v982
    %v1184 = vpop.f32.mrb[0].mxu0
    %v1185 = vadd.f32 %v637, %v1184
    %v1186 = vpop.f32.mrb[0].mxu0
    %v1187 = vpop.f32.mrb[0].mxu0
    %v1188 = vadd.f32 %v640, %v1187
    %v1189 = vpop.f32.mrb[0].mxu0
    %1190 = vmatprep.mubr.bf16.mxu0 0
    %1191 = vmatmul.mubr.bf16.gmra.mrb[0].mxu0 %v985
    %v1192 = vpop.f32.mrb[0].mxu0
    %v1193 = vadd.f32 %v645, %v1192
    %v1194 = vpop.f32.mrb[0].mxu0
    %v1195 = vpop.f32.mrb[0].mxu0
    %v1196 = vadd.f32 %v648, %v1195
    %v1197 = vpop.f32.mrb[0].mxu0
    %1198 = vmatprep.mubr.bf16.mxu0 0
    %1199 = vmatmul.mubr.bf16.gmra.mrb[0].mxu0 %v988
    %v1200 = vpop.f32.mrb[0].mxu0
    %v1201 = vadd.f32 %v653, %v1200
    %v1202 = vpop.f32.mrb[0].mxu0
    %v1203 = vpop.f32.mrb[0].mxu0
    %v1204 = vadd.f32 %v656, %v1203
    %v1205 = vpop.f32.mrb[0].mxu0
    %1206 = vmatprep.mubr.bf16.mxu0 0
    %1207 = vmatmul.mubr.bf16.gmra.mrb[0].mxu0 %v991
    %v1208 = vpop.f32.mrb[0].mxu0
    %v1209 = vadd.f32 %v661, %v1208
    %v1210 = vpop.f32.mrb[0].mxu0
    %v1211 = vpop.f32.mrb[0].mxu0
    %v1212 = vadd.f32 %v664, %v1211
    %v1213 = vpop.f32.mrb[0].mxu0
    %1214 = vmatprep.mubr.bf16.mxu0 0
    %1215 = vmatmul.mubr.bf16.gmra.mrb[0].mxu0 %v994
    %v1216 = vpop.f32.mrb[0].mxu0
    %v1217 = vadd.f32 %v669, %v1216
    %v1218 = vpop.f32.mrb[0].mxu0
    %v1219 = vpop.f32.mrb[0].mxu0
    %v1220 = vadd.f32 %v672, %v1219
    %v1221 = vpop.f32.mrb[0].mxu0
    %1222 = vmatprep.mubr.bf16.mxu0 0
    %1223 = vmatmul.mubr.bf16.gmra.mrb[0].mxu0 %v997
    %v1224 = vpop.f32.mrb[0].mxu0
    %v1225 = vadd.f32 %v677, %v1224
    %v1226 = vpop.f32.mrb[0].mxu0
    %v1227 = vpop.f32.mrb[0].mxu0
    %v1228 = vadd.f32 %v680, %v1227
    %v1229 = vpop.f32.mrb[0].mxu0
    %1230 = vmatprep.mubr.bf16.mxu0 0
    %1231 = vmatmul.mubr.bf16.gmra.mrb[0].mxu0 %v1000
    %v1232 = vpop.f32.mrb[0].mxu0
    %v1233 = vadd.f32 %v685, %v1232
    %v1234 = vpop.f32.mrb[0].mxu0
    %v1235 = vpop.f32.mrb[0].mxu0
    %v1236 = vadd.f32 %v688, %v1235
    %v1237 = vpop.f32.mrb[0].mxu0
    %1238 = vmatprep.mubr.bf16.mxu0 0
    %1239 = vmatmul.mubr.bf16.gmra.mrb[0].mxu0 %v1003
    %v1240 = vpop.f32.mrb[0].mxu0
    %v1241 = vadd.f32 %v693, %v1240
    %v1242 = vpop.f32.mrb[0].mxu0
    %v1243 = vpop.f32.mrb[0].mxu0
    %v1244 = vadd.f32 %v696, %v1243
    %v1245 = vpop.f32.mrb[0].mxu0
    %1246 = vmatprep.mubr.bf16.mxu0 0
    %1247 = vmatmul.mubr.bf16.gmra.mrb[0].mxu0 %v1006
    %v1248 = vpop.f32.mrb[0].mxu0
    %v1249 = vadd.f32 %v701, %v1248
    %v1250 = vpop.f32.mrb[0].mxu0
    %v1251 = vpop.f32.mrb[0].mxu0
    %v1252 = vadd.f32 %v704, %v1251
    %v1253 = vpop.f32.mrb[0].mxu0
    %1254 = vmatprep.mubr.bf16.mxu0 0
    %1255 = vmatmul.mubr.bf16.gmra.mrb[0].mxu0 %v1009
    %v1256 = vpop.f32.mrb[0].mxu0
    %v1257 = vadd.f32 %v709, %v1256
    %v1258 = vpop.f32.mrb[0].mxu0
    %v1259 = vpop.f32.mrb[0].mxu0
    %v1260 = vadd.f32 %v712, %v1259
    %v1261 = vpop.f32.mrb[0].mxu0
    %1262 = vmatprep.mubr.bf16.mxu0 0
    %1263 = vmatmul.mubr.bf16.gmra.mrb[0].mxu0 %v1012
    %v1264 = vpop.f32.mrb[0].mxu0
    %v1265 = vadd.f32 %v717, %v1264
    %v1266 = vpop.f32.mrb[0].mxu0
    %v1267 = vpop.f32.mrb[0].mxu0
    %v1268 = vadd.f32 %v720, %v1267
    %v1269 = vpop.f32.mrb[0].mxu0
    %1270 = vmatprep.mubr.bf16.mxu0 0
    %1271 = vmatmul.mubr.bf16.gmra.mrb[0].mxu0 %v1015
    %v1272 = vpop.f32.mrb[0].mxu0
    %v1273 = vadd.f32 %v725, %v1272
    %v1274 = vpop.f32.mrb[0].mxu0
    %v1275 = vpop.f32.mrb[0].mxu0
    %v1276 = vadd.f32 %v728, %v1275
    %v1277 = vpop.f32.mrb[0].mxu0
    %1278 = vmatprep.mubr.bf16.mxu0 0
    %1279 = vmatmul.mubr.bf16.gmra.mrb[0].mxu0 %v1018
    %v1280 = vpop.f32.mrb[0].mxu0
    %v1281 = vadd.f32 %v733, %v1280
    %v1282 = vpop.f32.mrb[0].mxu0
    %v1283 = vpop.f32.mrb[0].mxu0
    %v1284 = vadd.f32 %v736, %v1283
    %v1285 = vpop.f32.mrb[0].mxu0
    %1286 = vmatprep.mubr.bf16.mxu0 0
    %1287 = vmatmul.mubr.bf16.gmra.mrb[0].mxu0 %v1021
    %v1288 = vpop.f32.mrb[0].mxu0
    %v1289 = vadd.f32 %v741, %v1288
    %v1290 = vpop.f32.mrb[0].mxu0
    %v1291 = vpop.f32.mrb[0].mxu0
    %v1292 = vadd.f32 %v744, %v1291
    %v1293 = vpop.f32.mrb[0].mxu0
    %1294 = vmatprep.mubr.bf16.mxu0 0
    %1295 = vmatmul.mubr.bf16.gmra.mrb[0].mxu0 %v1024
    %v1296 = vpop.f32.mrb[0].mxu0
    %v1297 = vadd.f32 %v749, %v1296
    %v1298 = vpop.f32.mrb[0].mxu0
    %v1299 = vpop.f32.mrb[0].mxu0
    %v1300 = vadd.f32 %v752, %v1299
    %v1301 = vpop.f32.mrb[0].mxu0
    %1302 = vmatprep.mubr.bf16.mxu0 0
    %1303 = vmatmul.mubr.bf16.gmra.mrb[0].mxu0 %v1027
    %v1304 = vpop.f32.mrb[0].mxu0
    %v1305 = vadd.f32 %v757, %v1304
    %v1306 = vpop.f32.mrb[0].mxu0
    %v1307 = vpop.f32.mrb[0].mxu0
    %v1308 = vadd.f32 %v760, %v1307
    %v1309 = vpop.f32.mrb[0].mxu0
    %1310 = vmatprep.mubr.bf16.mxu0 0
    %1311 = vmatmul.mubr.bf16.gmra.mrb[0].mxu0 %v1030
    %v1312 = vpop.f32.mrb[0].mxu0
    %v1313 = vadd.f32 %v765, %v1312
    %v1314 = vpop.f32.mrb[0].mxu0
    %v1315 = vpop.f32.mrb[0].mxu0
    %v1316 = vadd.f32 %v768, %v1315
    %v1317 = vpop.f32.mrb[0].mxu0
    %1318 = vmatprep.mubr.bf16.mxu0 0
    %1319 = vmatmul.mubr.bf16.gmra.mrb[0].mxu0 %v1033
    %v1320 = vpop.f32.mrb[0].mxu0
    %v1321 = vadd.f32 %v773, %v1320
    %v1322 = vpop.f32.mrb[0].mxu0
    %v1323 = vpop.f32.mrb[0].mxu0
    %v1324 = vadd.f32 %v776, %v1323
    %v1325 = vpop.f32.mrb[0].mxu0
    %1326 = vdwg.mxu0
    %v1327 = vld [vmem:[#allocation10] sm:$0x1]
    %v1329 = vlaneseq
    %v1330 = vshrl.u32 %v1329, 7
    %v1331 = vsub.s32 0, %v1330
    %v1332 = vrot.slane %v1327, %v1331
    %v1334 = vmul.f32 %v1073, %v1332
    %v1335 = vmul.f32 %v1076, %v1332
    %v1336 = vmul.f32 %v1081, %v1332
    %v1337 = vmul.f32 %v1084, %v1332
    %v1338 = vmul.f32 %v1089, %v1332
    %v1339 = vmul.f32 %v1092, %v1332
    %v1340 = vmul.f32 %v1097, %v1332
    %v1341 = vmul.f32 %v1100, %v1332
    %v1342 = vmul.f32 %v1105, %v1332
    %v1343 = vmul.f32 %v1108, %v1332
    %v1344 = vmul.f32 %v1113, %v1332
    %v1345 = vmul.f32 %v1116, %v1332
    %v1346 = vmul.f32 %v1121, %v1332
    %v1347 = vmul.f32 %v1124, %v1332
    %v1348 = vmul.f32 %v1129, %v1332
    %v1349 = vmul.f32 %v1132, %v1332
    %v1350 = vmul.f32 %v1137, %v1332
    %v1351 = vmul.f32 %v1140, %v1332
    %v1352 = vmul.f32 %v1145, %v1332
    %v1353 = vmul.f32 %v1148, %v1332
    %v1354 = vmul.f32 %v1153, %v1332
    %v1355 = vmul.f32 %v1156, %v1332
    %v1356 = vmul.f32 %v1161, %v1332
    %v1357 = vmul.f32 %v1164, %v1332
    %v1358 = vmul.f32 %v1169, %v1332
    %v1359 = vmul.f32 %v1172, %v1332
    %v1360 = vmul.f32 %v1177, %v1332
    %v1361 = vmul.f32 %v1180, %v1332
    %v1362 = vmul.f32 %v1185, %v1332
    %v1363 = vmul.f32 %v1188, %v1332
    %v1364 = vmul.f32 %v1193, %v1332
    %v1365 = vmul.f32 %v1196, %v1332
    %v1366 = vmul.f32 %v1201, %v1332
    %v1367 = vmul.f32 %v1204, %v1332
    %v1368 = vmul.f32 %v1209, %v1332
    %v1369 = vmul.f32 %v1212, %v1332
    %v1370 = vmul.f32 %v1217, %v1332
    %v1371 = vmul.f32 %v1220, %v1332
    %v1372 = vmul.f32 %v1225, %v1332
    %v1373 = vmul.f32 %v1228, %v1332
    %v1374 = vmul.f32 %v1233, %v1332
    %v1375 = vmul.f32 %v1236, %v1332
    %v1376 = vmul.f32 %v1241, %v1332
    %v1377 = vmul.f32 %v1244, %v1332
    %v1378 = vmul.f32 %v1249, %v1332
    %v1379 = vmul.f32 %v1252, %v1332
    %v1380 = vmul.f32 %v1257, %v1332
    %v1381 = vmul.f32 %v1260, %v1332
    %v1382 = vmul.f32 %v1265, %v1332
    %v1383 = vmul.f32 %v1268, %v1332
    %v1384 = vmul.f32 %v1273, %v1332
    %v1385 = vmul.f32 %v1276, %v1332
    %v1386 = vmul.f32 %v1281, %v1332
    %v1387 = vmul.f32 %v1284, %v1332
    %v1388 = vmul.f32 %v1289, %v1332
    %v1389 = vmul.f32 %v1292, %v1332
    %v1390 = vmul.f32 %v1297, %v1332
    %v1391 = vmul.f32 %v1300, %v1332
    %v1392 = vmul.f32 %v1305, %v1332
    %v1393 = vmul.f32 %v1308, %v1332
    %v1394 = vmul.f32 %v1313, %v1332
    %v1395 = vmul.f32 %v1316, %v1332
    %v1396 = vmul.f32 %v1321, %v1332
    %v1397 = vmul.f32 %v1324, %v1332
    %v1398 = vld [vmem:[#allocation11] sm:$0x1]
    %v1400 = vlaneseq
    %v1401 = vshrl.u32 %v1400, 7
    %v1402 = vsub.s32 0, %v1401
    %v1403 = vrot.slane %v1398, %v1402
    %v1405 = vadd.f32 %v1334, %v1403
    %v1406 = vadd.f32 %v1335, %v1403
    %v1407 = vadd.f32 %v1336, %v1403
    %v1408 = vadd.f32 %v1337, %v1403
    %v1409 = vadd.f32 %v1338, %v1403
    %v1410 = vadd.f32 %v1339, %v1403
    %v1411 = vadd.f32 %v1340, %v1403
    %v1412 = vadd.f32 %v1341, %v1403
    %v1413 = vadd.f32 %v1342, %v1403
    %v1414 = vadd.f32 %v1343, %v1403
    %v1415 = vadd.f32 %v1344, %v1403
    %v1416 = vadd.f32 %v1345, %v1403
    %v1417 = vadd.f32 %v1346, %v1403
    %v1418 = vadd.f32 %v1347, %v1403
    %v1419 = vadd.f32 %v1348, %v1403
    %v1420 = vadd.f32 %v1349, %v1403
    %v1421 = vadd.f32 %v1350, %v1403
    %v1422 = vadd.f32 %v1351, %v1403
    %v1423 = vadd.f32 %v1352, %v1403
    %v1424 = vadd.f32 %v1353, %v1403
    %v1425 = vadd.f32 %v1354, %v1403
    %v1426 = vadd.f32 %v1355, %v1403
    %v1427 = vadd.f32 %v1356, %v1403
    %v1428 = vadd.f32 %v1357, %v1403
    %v1429 = vadd.f32 %v1358, %v1403
    %v1430 = vadd.f32 %v1359, %v1403
    %v1431 = vadd.f32 %v1360, %v1403
    %v1432 = vadd.f32 %v1361, %v1403
    %v1433 = vadd.f32 %v1362, %v1403
    %v1434 = vadd.f32 %v1363, %v1403
    %v1435 = vadd.f32 %v1364, %v1403
    %v1436 = vadd.f32 %v1365, %v1403
    %v1437 = vadd.f32 %v1366, %v1403
    %v1438 = vadd.f32 %v1367, %v1403
    %v1439 = vadd.f32 %v1368, %v1403
    %v1440 = vadd.f32 %v1369, %v1403
    %v1441 = vadd.f32 %v1370, %v1403
    %v1442 = vadd.f32 %v1371, %v1403
    %v1443 = vadd.f32 %v1372, %v1403
    %v1444 = vadd.f32 %v1373, %v1403
    %v1445 = vadd.f32 %v1374, %v1403
    %v1446 = vadd.f32 %v1375, %v1403
    %v1447 = vadd.f32 %v1376, %v1403
    %v1448 = vadd.f32 %v1377, %v1403
    %v1449 = vadd.f32 %v1378, %v1403
    %v1450 = vadd.f32 %v1379, %v1403
    %v1451 = vadd.f32 %v1380, %v1403
    %v1452 = vadd.f32 %v1381, %v1403
    %v1453 = vadd.f32 %v1382, %v1403
    %v1454 = vadd.f32 %v1383, %v1403
    %v1455 = vadd.f32 %v1384, %v1403
    %v1456 = vadd.f32 %v1385, %v1403
    %v1457 = vadd.f32 %v1386, %v1403
    %v1458 = vadd.f32 %v1387, %v1403
    %v1459 = vadd.f32 %v1388, %v1403
    %v1460 = vadd.f32 %v1389, %v1403
    %v1461 = vadd.f32 %v1390, %v1403
    %v1462 = vadd.f32 %v1391, %v1403
    %v1463 = vadd.f32 %v1392, %v1403
    %v1464 = vadd.f32 %v1393, %v1403
    %v1465 = vadd.f32 %v1394, %v1403
    %v1466 = vadd.f32 %v1395, %v1403
    %v1467 = vadd.f32 %v1396, %v1403
    %v1468 = vadd.f32 %v1397, %v1403
    %v1469 = vsub.f32 0.0, %v1405
    %v1470 = vsub.f32 0.0, %v1406
    %v1471 = vsub.f32 0.0, %v1407
    %v1472 = vsub.f32 0.0, %v1408
    %v1473 = vsub.f32 0.0, %v1409
    %v1474 = vsub.f32 0.0, %v1410
    %v1475 = vsub.f32 0.0, %v1411
    %v1476 = vsub.f32 0.0, %v1412
    %v1477 = vsub.f32 0.0, %v1413
    %v1478 = vsub.f32 0.0, %v1414
    %v1479 = vsub.f32 0.0, %v1415
    %v1480 = vsub.f32 0.0, %v1416
    %v1481 = vsub.f32 0.0, %v1417
    %v1482 = vsub.f32 0.0, %v1418
    %v1483 = vsub.f32 0.0, %v1419
    %v1484 = vsub.f32 0.0, %v1420
    %v1485 = vsub.f32 0.0, %v1421
    %v1486 = vsub.f32 0.0, %v1422
    %v1487 = vsub.f32 0.0, %v1423
    %v1488 = vsub.f32 0.0, %v1424
    %v1489 = vsub.f32 0.0, %v1425
    %v1490 = vsub.f32 0.0, %v1426
    %v1491 = vsub.f32 0.0, %v1427
    %v1492 = vsub.f32 0.0, %v1428
    %v1493 = vsub.f32 0.0, %v1429
    %v1494 = vsub.f32 0.0, %v1430
    %v1495 = vsub.f32 0.0, %v1431
    %v1496 = vsub.f32 0.0, %v1432
    %v1497 = vsub.f32 0.0, %v1433
    %v1498 = vsub.f32 0.0, %v1434
    %v1499 = vsub.f32 0.0, %v1435
    %v1500 = vsub.f32 0.0, %v1436
    %v1501 = vsub.f32 0.0, %v1437
    %v1502 = vsub.f32 0.0, %v1438
    %v1503 = vsub.f32 0.0, %v1439
    %v1504 = vsub.f32 0.0, %v1440
    %v1505 = vsub.f32 0.0, %v1441
    %v1506 = vsub.f32 0.0, %v1442
    %v1507 = vsub.f32 0.0, %v1443
    %v1508 = vsub.f32 0.0, %v1444
    %v1509 = vsub.f32 0.0, %v1445
    %v1510 = vsub.f32 0.0, %v1446
    %v1511 = vsub.f32 0.0, %v1447
    %v1512 = vsub.f32 0.0, %v1448
    %v1513 = vsub.f32 0.0, %v1449
    %v1514 = vsub.f32 0.0, %v1450
    %v1515 = vsub.f32 0.0, %v1451
    %v1516 = vsub.f32 0.0, %v1452
    %v1517 = vsub.f32 0.0, %v1453
    %v1518 = vsub.f32 0.0, %v1454
    %v1519 = vsub.f32 0.0, %v1455
    %v1520 = vsub.f32 0.0, %v1456
    %v1521 = vsub.f32 0.0, %v1457
    %v1522 = vsub.f32 0.0, %v1458
    %v1523 = vsub.f32 0.0, %v1459
    %v1524 = vsub.f32 0.0, %v1460
    %v1525 = vsub.f32 0.0, %v1461
    %v1526 = vsub.f32 0.0, %v1462
    %v1527 = vsub.f32 0.0, %v1463
    %v1528 = vsub.f32 0.0, %v1464
    %v1529 = vsub.f32 0.0, %v1465
    %v1530 = vsub.f32 0.0, %v1466
    %v1531 = vsub.f32 0.0, %v1467
    %v1532 = vsub.f32 0.0, %v1468
    %v1533 = vmul.f32 %v1469, 1.442695
    %v1534 = vpow.pop %v1533
    %v1535 = vmul.f32 %v1470, 1.442695
    %v1536 = vpow.pop %v1535
    %v1537 = vmul.f32 %v1471, 1.442695
    %v1538 = vpow.pop %v1537
    %v1539 = vmul.f32 %v1472, 1.442695
    %v1540 = vpow.pop %v1539
    %v1541 = vmul.f32 %v1473, 1.442695
    %v1542 = vpow.pop %v1541
    %v1543 = vmul.f32 %v1474, 1.442695
    %v1544 = vpow.pop %v1543
    %v1545 = vmul.f32 %v1475, 1.442695
    %v1546 = vpow.pop %v1545
    %v1547 = vmul.f32 %v1476, 1.442695
    %v1548 = vpow.pop %v1547
    %v1549 = vmul.f32 %v1477, 1.442695
    %v1550 = vpow.pop %v1549
    %v1551 = vmul.f32 %v1478, 1.442695
    %v1552 = vpow.pop %v1551
    %v1553 = vmul.f32 %v1479, 1.442695
    %v1554 = vpow.pop %v1553
    %v1555 = vmul.f32 %v1480, 1.442695
    %v1556 = vpow.pop %v1555
    %v1557 = vmul.f32 %v1481, 1.442695
    %v1558 = vpow.pop %v1557
    %v1559 = vmul.f32 %v1482, 1.442695
    %v1560 = vpow.pop %v1559
    %v1561 = vmul.f32 %v1483, 1.442695
    %v1562 = vpow.pop %v1561
    %v1563 = vmul.f32 %v1484, 1.442695
    %v1564 = vpow.pop %v1563
    %v1565 = vmul.f32 %v1485, 1.442695
    %v1566 = vpow.pop %v1565
    %v1567 = vmul.f32 %v1486, 1.442695
    %v1568 = vpow.pop %v1567
    %v1569 = vmul.f32 %v1487, 1.442695
    %v1570 = vpow.pop %v1569
    %v1571 = vmul.f32 %v1488, 1.442695
    %v1572 = vpow.pop %v1571
    %v1573 = vmul.f32 %v1489, 1.442695
    %v1574 = vpow.pop %v1573
    %v1575 = vmul.f32 %v1490, 1.442695
    %v1576 = vpow.pop %v1575
    %v1577 = vmul.f32 %v1491, 1.442695
    %v1578 = vpow.pop %v1577
    %v1579 = vmul.f32 %v1492, 1.442695
    %v1580 = vpow.pop %v1579
    %v1581 = vmul.f32 %v1493, 1.442695
    %v1582 = vpow.pop %v1581
    %v1583 = vmul.f32 %v1494, 1.442695
    %v1584 = vpow.pop %v1583
    %v1585 = vmul.f32 %v1495, 1.442695
    %v1586 = vpow.pop %v1585
    %v1587 = vmul.f32 %v1496, 1.442695
    %v1588 = vpow.pop %v1587
    %v1589 = vmul.f32 %v1497, 1.442695
    %v1590 = vpow.pop %v1589
    %v1591 = vmul.f32 %v1498, 1.442695
    %v1592 = vpow.pop %v1591
    %v1593 = vmul.f32 %v1499, 1.442695
    %v1594 = vpow.pop %v1593
    %v1595 = vmul.f32 %v1500, 1.442695
    %v1596 = vpow.pop %v1595
    %v1597 = vmul.f32 %v1501, 1.442695
    %v1598 = vpow.pop %v1597
    %v1599 = vmul.f32 %v1502, 1.442695
    %v1600 = vpow.pop %v1599
    %v1601 = vmul.f32 %v1503, 1.442695
    %v1602 = vpow.pop %v1601
    %v1603 = vmul.f32 %v1504, 1.442695
    %v1604 = vpow.pop %v1603
    %v1605 = vmul.f32 %v1505, 1.442695
    %v1606 = vpow.pop %v1605
    %v1607 = vmul.f32 %v1506, 1.442695
    %v1608 = vpow.pop %v1607
    %v1609 = vmul.f32 %v1507, 1.442695
    %v1610 = vpow.pop %v1609
    %v1611 = vmul.f32 %v1508, 1.442695
    %v1612 = vpow.pop %v1611
    %v1613 = vmul.f32 %v1509, 1.442695
    %v1614 = vpow.pop %v1613
    %v1615 = vmul.f32 %v1510, 1.442695
    %v1616 = vpow.pop %v1615
    %v1617 = vmul.f32 %v1511, 1.442695
    %v1618 = vpow.pop %v1617
    %v1619 = vmul.f32 %v1512, 1.442695
    %v1620 = vpow.pop %v1619
    %v1621 = vmul.f32 %v1513, 1.442695
    %v1622 = vpow.pop %v1621
    %v1623 = vmul.f32 %v1514, 1.442695
    %v1624 = vpow.pop %v1623
    %v1625 = vmul.f32 %v1515, 1.442695
    %v1626 = vpow.pop %v1625
    %v1627 = vmul.f32 %v1516, 1.442695
    %v1628 = vpow.pop %v1627
    %v1629 = vmul.f32 %v1517, 1.442695
    %v1630 = vpow.pop %v1629
    %v1631 = vmul.f32 %v1518, 1.442695
    %v1632 = vpow.pop %v1631
    %v1633 = vmul.f32 %v1519, 1.442695
    %v1634 = vpow.pop %v1633
    %v1635 = vmul.f32 %v1520, 1.442695
    %v1636 = vpow.pop %v1635
    %v1637 = vmul.f32 %v1521, 1.442695
    %v1638 = vpow.pop %v1637
    %v1639 = vmul.f32 %v1522, 1.442695
    %v1640 = vpow.pop %v1639
    %v1641 = vmul.f32 %v1523, 1.442695
    %v1642 = vpow.pop %v1641
    %v1643 = vmul.f32 %v1524, 1.442695
    %v1644 = vpow.pop %v1643
    %v1645 = vmul.f32 %v1525, 1.442695
    %v1646 = vpow.pop %v1645
    %v1647 = vmul.f32 %v1526, 1.442695
    %v1648 = vpow.pop %v1647
    %v1649 = vmul.f32 %v1527, 1.442695
    %v1650 = vpow.pop %v1649
    %v1651 = vmul.f32 %v1528, 1.442695
    %v1652 = vpow.pop %v1651
    %v1653 = vmul.f32 %v1529, 1.442695
    %v1654 = vpow.pop %v1653
    %v1655 = vmul.f32 %v1530, 1.442695
    %v1656 = vpow.pop %v1655
    %v1657 = vmul.f32 %v1531, 1.442695
    %v1658 = vpow.pop %v1657
    %v1659 = vmul.f32 %v1532, 1.442695
    %v1660 = vpow.pop %v1659
    %v1661 = vadd.f32 %v1534, 1.0
    %v1662 = vadd.f32 %v1536, 1.0
    %v1663 = vadd.f32 %v1538, 1.0
    %v1664 = vadd.f32 %v1540, 1.0
    %v1665 = vadd.f32 %v1542, 1.0
    %v1666 = vadd.f32 %v1544, 1.0
    %v1667 = vadd.f32 %v1546, 1.0
    %v1668 = vadd.f32 %v1548, 1.0
    %v1669 = vadd.f32 %v1550, 1.0
    %v1670 = vadd.f32 %v1552, 1.0
    %v1671 = vadd.f32 %v1554, 1.0
    %v1672 = vadd.f32 %v1556, 1.0
    %v1673 = vadd.f32 %v1558, 1.0
    %v1674 = vadd.f32 %v1560, 1.0
    %v1675 = vadd.f32 %v1562, 1.0
    %v1676 = vadd.f32 %v1564, 1.0
    %v1677 = vadd.f32 %v1566, 1.0
    %v1678 = vadd.f32 %v1568, 1.0
    %v1679 = vadd.f32 %v1570, 1.0
    %v1680 = vadd.f32 %v1572, 1.0
    %v1681 = vadd.f32 %v1574, 1.0
    %v1682 = vadd.f32 %v1576, 1.0
    %v1683 = vadd.f32 %v1578, 1.0
    %v1684 = vadd.f32 %v1580, 1.0
    %v1685 = vadd.f32 %v1582, 1.0
    %v1686 = vadd.f32 %v1584, 1.0
    %v1687 = vadd.f32 %v1586, 1.0
    %v1688 = vadd.f32 %v1588, 1.0
    %v1689 = vadd.f32 %v1590, 1.0
    %v1690 = vadd.f32 %v1592, 1.0
    %v1691 = vadd.f32 %v1594, 1.0
    %v1692 = vadd.f32 %v1596, 1.0
    %v1693 = vadd.f32 %v1598, 1.0
    %v1694 = vadd.f32 %v1600, 1.0
    %v1695 = vadd.f32 %v1602, 1.0
    %v1696 = vadd.f32 %v1604, 1.0
    %v1697 = vadd.f32 %v1606, 1.0
    %v1698 = vadd.f32 %v1608, 1.0
    %v1699 = vadd.f32 %v1610, 1.0
    %v1700 = vadd.f32 %v1612, 1.0
    %v1701 = vadd.f32 %v1614, 1.0
    %v1702 = vadd.f32 %v1616, 1.0
    %v1703 = vadd.f32 %v1618, 1.0
    %v1704 = vadd.f32 %v1620, 1.0
    %v1705 = vadd.f32 %v1622, 1.0
    %v1706 = vadd.f32 %v1624, 1.0
    %v1707 = vadd.f32 %v1626, 1.0
    %v1708 = vadd.f32 %v1628, 1.0
    %v1709 = vadd.f32 %v1630, 1.0
    %v1710 = vadd.f32 %v1632, 1.0
    %v1711 = vadd.f32 %v1634, 1.0
    %v1712 = vadd.f32 %v1636, 1.0
    %v1713 = vadd.f32 %v1638, 1.0
    %v1714 = vadd.f32 %v1640, 1.0
    %v1715 = vadd.f32 %v1642, 1.0
    %v1716 = vadd.f32 %v1644, 1.0
    %v1717 = vadd.f32 %v1646, 1.0
    %v1718 = vadd.f32 %v1648, 1.0
    %v1719 = vadd.f32 %v1650, 1.0
    %v1720 = vadd.f32 %v1652, 1.0
    %v1721 = vadd.f32 %v1654, 1.0
    %v1722 = vadd.f32 %v1656, 1.0
    %v1723 = vadd.f32 %v1658, 1.0
    %v1724 = vadd.f32 %v1660, 1.0
    %v1725 = vrcp.pop %v1661
    %v1726 = vmul.f32 1.0, %v1725
    %v1727 = vrcp.pop %v1662
    %v1728 = vmul.f32 1.0, %v1727
    %v1729 = vrcp.pop %v1663
    %v1730 = vmul.f32 1.0, %v1729
    %v1731 = vrcp.pop %v1664
    %v1732 = vmul.f32 1.0, %v1731
    %v1733 = vrcp.pop %v1665
    %v1734 = vmul.f32 1.0, %v1733
    %v1735 = vrcp.pop %v1666
    %v1736 = vmul.f32 1.0, %v1735
    %v1737 = vrcp.pop %v1667
    %v1738 = vmul.f32 1.0, %v1737
    %v1739 = vrcp.pop %v1668
    %v1740 = vmul.f32 1.0, %v1739
    %v1741 = vrcp.pop %v1669
    %v1742 = vmul.f32 1.0, %v1741
    %v1743 = vrcp.pop %v1670
    %v1744 = vmul.f32 1.0, %v1743
    %v1745 = vrcp.pop %v1671
    %v1746 = vmul.f32 1.0, %v1745
    %v1747 = vrcp.pop %v1672
    %v1748 = vmul.f32 1.0, %v1747
    %v1749 = vrcp.pop %v1673
    %v1750 = vmul.f32 1.0, %v1749
    %v1751 = vrcp.pop %v1674
    %v1752 = vmul.f32 1.0, %v1751
    %v1753 = vrcp.pop %v1675
    %v1754 = vmul.f32 1.0, %v1753
    %v1755 = vrcp.pop %v1676
    %v1756 = vmul.f32 1.0, %v1755
    %v1757 = vrcp.pop %v1677
    %v1758 = vmul.f32 1.0, %v1757
    %v1759 = vrcp.pop %v1678
    %v1760 = vmul.f32 1.0, %v1759
    %v1761 = vrcp.pop %v1679
    %v1762 = vmul.f32 1.0, %v1761
    %v1763 = vrcp.pop %v1680
    %v1764 = vmul.f32 1.0, %v1763
    %v1765 = vrcp.pop %v1681
    %v1766 = vmul.f32 1.0, %v1765
    %v1767 = vrcp.pop %v1682
    %v1768 = vmul.f32 1.0, %v1767
    %v1769 = vrcp.pop %v1683
    %v1770 = vmul.f32 1.0, %v1769
    %v1771 = vrcp.pop %v1684
    %v1772 = vmul.f32 1.0, %v1771
    %v1773 = vrcp.pop %v1685
    %v1774 = vmul.f32 1.0, %v1773
    %v1775 = vrcp.pop %v1686
    %v1776 = vmul.f32 1.0, %v1775
    %v1777 = vrcp.pop %v1687
    %v1778 = vmul.f32 1.0, %v1777
    %v1779 = vrcp.pop %v1688
    %v1780 = vmul.f32 1.0, %v1779
    %v1781 = vrcp.pop %v1689
    %v1782 = vmul.f32 1.0, %v1781
    %v1783 = vrcp.pop %v1690
    %v1784 = vmul.f32 1.0, %v1783
    %v1785 = vrcp.pop %v1691
    %v1786 = vmul.f32 1.0, %v1785
    %v1787 = vrcp.pop %v1692
    %v1788 = vmul.f32 1.0, %v1787
    %v1789 = vrcp.pop %v1693
    %v1790 = vmul.f32 1.0, %v1789
    %v1791 = vrcp.pop %v1694
    %v1792 = vmul.f32 1.0, %v1791
    %v1793 = vrcp.pop %v1695
    %v1794 = vmul.f32 1.0, %v1793
    %v1795 = vrcp.pop %v1696
    %v1796 = vmul.f32 1.0, %v1795
    %v1797 = vrcp.pop %v1697
    %v1798 = vmul.f32 1.0, %v1797
    %v1799 = vrcp.pop %v1698
    %v1800 = vmul.f32 1.0, %v1799
    %v1801 = vrcp.pop %v1699
    %v1802 = vmul.f32 1.0, %v1801
    %v1803 = vrcp.pop %v1700
    %v1804 = vmul.f32 1.0, %v1803
    %v1805 = vrcp.pop %v1701
    %v1806 = vmul.f32 1.0, %v1805
    %v1807 = vrcp.pop %v1702
    %v1808 = vmul.f32 1.0, %v1807
    %v1809 = vrcp.pop %v1703
    %v1810 = vmul.f32 1.0, %v1809
    %v1811 = vrcp.pop %v1704
    %v1812 = vmul.f32 1.0, %v1811
    %v1813 = vrcp.pop %v1705
    %v1814 = vmul.f32 1.0, %v1813
    %v1815 = vrcp.pop %v1706
    %v1816 = vmul.f32 1.0, %v1815
    %v1817 = vrcp.pop %v1707
    %v1818 = vmul.f32 1.0, %v1817
    %v1819 = vrcp.pop %v1708
    %v1820 = vmul.f32 1.0, %v1819
    %v1821 = vrcp.pop %v1709
    %v1822 = vmul.f32 1.0, %v1821
    %v1823 = vrcp.pop %v1710
    %v1824 = vmul.f32 1.0, %v1823
    %v1825 = vrcp.pop %v1711
    %v1826 = vmul.f32 1.0, %v1825
    %v1827 = vrcp.pop %v1712
    %v1828 = vmul.f32 1.0, %v1827
    %v1829 = vrcp.pop %v1713
    %v1830 = vmul.f32 1.0, %v1829
    %v1831 = vrcp.pop %v1714
    %v1832 = vmul.f32 1.0, %v1831
    %v1833 = vrcp.pop %v1715
    %v1834 = vmul.f32 1.0, %v1833
    %v1835 = vrcp.pop %v1716
    %v1836 = vmul.f32 1.0, %v1835
    %v1837 = vrcp.pop %v1717
    %v1838 = vmul.f32 1.0, %v1837
    %v1839 = vrcp.pop %v1718
    %v1840 = vmul.f32 1.0, %v1839
    %v1841 = vrcp.pop %v1719
    %v1842 = vmul.f32 1.0, %v1841
    %v1843 = vrcp.pop %v1720
    %v1844 = vmul.f32 1.0, %v1843
    %v1845 = vrcp.pop %v1721
    %v1846 = vmul.f32 1.0, %v1845
    %v1847 = vrcp.pop %v1722
    %v1848 = vmul.f32 1.0, %v1847
    %v1849 = vrcp.pop %v1723
    %v1850 = vmul.f32 1.0, %v1849
    %v1851 = vrcp.pop %v1724
    %v1852 = vmul.f32 1.0, %v1851
    %v1853 = vmul.f32 %v1405, %v1726
    %v1854 = vmul.f32 %v1406, %v1728
    %v1855 = vmul.f32 %v1407, %v1730
    %v1856 = vmul.f32 %v1408, %v1732
    %v1857 = vmul.f32 %v1409, %v1734
    %v1858 = vmul.f32 %v1410, %v1736
    %v1859 = vmul.f32 %v1411, %v1738
    %v1860 = vmul.f32 %v1412, %v1740
    %v1861 = vmul.f32 %v1413, %v1742
    %v1862 = vmul.f32 %v1414, %v1744
    %v1863 = vmul.f32 %v1415, %v1746
    %v1864 = vmul.f32 %v1416, %v1748
    %v1865 = vmul.f32 %v1417, %v1750
    %v1866 = vmul.f32 %v1418, %v1752
    %v1867 = vmul.f32 %v1419, %v1754
    %v1868 = vmul.f32 %v1420, %v1756
    %v1869 = vmul.f32 %v1421, %v1758
    %v1870 = vmul.f32 %v1422, %v1760
    %v1871 = vmul.f32 %v1423, %v1762
    %v1872 = vmul.f32 %v1424, %v1764
    %v1873 = vmul.f32 %v1425, %v1766
    %v1874 = vmul.f32 %v1426, %v1768
    %v1875 = vmul.f32 %v1427, %v1770
    %v1876 = vmul.f32 %v1428, %v1772
    %v1877 = vmul.f32 %v1429, %v1774
    %v1878 = vmul.f32 %v1430, %v1776
    %v1879 = vmul.f32 %v1431, %v1778
    %v1880 = vmul.f32 %v1432, %v1780
    %v1881 = vmul.f32 %v1433, %v1782
    %v1882 = vmul.f32 %v1434, %v1784
    %v1883 = vmul.f32 %v1435, %v1786
    %v1884 = vmul.f32 %v1436, %v1788
    %v1885 = vmul.f32 %v1437, %v1790
    %v1886 = vmul.f32 %v1438, %v1792
    %v1887 = vmul.f32 %v1439, %v1794
    %v1888 = vmul.f32 %v1440, %v1796
    %v1889 = vmul.f32 %v1441, %v1798
    %v1890 = vmul.f32 %v1442, %v1800
    %v1891 = vmul.f32 %v1443, %v1802
    %v1892 = vmul.f32 %v1444, %v1804
    %v1893 = vmul.f32 %v1445, %v1806
    %v1894 = vmul.f32 %v1446, %v1808
    %v1895 = vmul.f32 %v1447, %v1810
    %v1896 = vmul.f32 %v1448, %v1812
    %v1897 = vmul.f32 %v1449, %v1814
    %v1898 = vmul.f32 %v1450, %v1816
    %v1899 = vmul.f32 %v1451, %v1818
    %v1900 = vmul.f32 %v1452, %v1820
    %v1901 = vmul.f32 %v1453, %v1822
    %v1902 = vmul.f32 %v1454, %v1824
    %v1903 = vmul.f32 %v1455, %v1826
    %v1904 = vmul.f32 %v1456, %v1828
    %v1905 = vmul.f32 %v1457, %v1830
    %v1906 = vmul.f32 %v1458, %v1832
    %v1907 = vmul.f32 %v1459, %v1834
    %v1908 = vmul.f32 %v1460, %v1836
    %v1909 = vmul.f32 %v1461, %v1838
    %v1910 = vmul.f32 %v1462, %v1840
    %v1911 = vmul.f32 %v1463, %v1842
    %v1912 = vmul.f32 %v1464, %v1844
    %v1913 = vmul.f32 %v1465, %v1846
    %v1914 = vmul.f32 %v1466, %v1848
    %v1915 = vmul.f32 %v1467, %v1850
    %v1916 = vmul.f32 %v1468, %v1852
    %vm1917 = vcmask 64512
    %1918 = vst.msk [vmem:[#allocation13] sm:$0xff] %vm1917, %v1853
    %1919 = vst.msk [vmem:[#allocation13 + $0x8] sm:$0xff] %vm1917, %v1854
    %1920 = vst.msk [vmem:[#allocation13 + $0x10] sm:$0xff] %vm1917, %v1855
    %1921 = vst.msk [vmem:[#allocation13 + $0x18] sm:$0xff] %vm1917, %v1856
    %1922 = vst.msk [vmem:[#allocation13 + $0x20] sm:$0xff] %vm1917, %v1857
    %1923 = vst.msk [vmem:[#allocation13 + $0x28] sm:$0xff] %vm1917, %v1858
    %1924 = vst.msk [vmem:[#allocation13 + $0x30] sm:$0xff] %vm1917, %v1859
    %1925 = vst.msk [vmem:[#allocation13 + $0x38] sm:$0xff] %vm1917, %v1860
    %1926 = vst.msk [vmem:[#allocation13 + $0x40] sm:$0xff] %vm1917, %v1861
    %1927 = vst.msk [vmem:[#allocation13 + $0x48] sm:$0xff] %vm1917, %v1862
    %1928 = vst.msk [vmem:[#allocation13 + $0x50] sm:$0xff] %vm1917, %v1863
    %1929 = vst.msk [vmem:[#allocation13 + $0x58] sm:$0xff] %vm1917, %v1864
    %1930 = vst.msk [vmem:[#allocation13 + $0x60] sm:$0xff] %vm1917, %v1865
    %1931 = vst.msk [vmem:[#allocation13 + $0x68] sm:$0xff] %vm1917, %v1866
    %1932 = vst.msk [vmem:[#allocation13 + $0x70] sm:$0xff] %vm1917, %v1867
    %1933 = vst.msk [vmem:[#allocation13 + $0x78] sm:$0xff] %vm1917, %v1868
    %1934 = vst.msk [vmem:[#allocation13 + $0x80] sm:$0xff] %vm1917, %v1869
    %1935 = vst.msk [vmem:[#allocation13 + $0x88] sm:$0xff] %vm1917, %v1870
    %1936 = vst.msk [vmem:[#allocation13 + $0x90] sm:$0xff] %vm1917, %v1871
    %1937 = vst.msk [vmem:[#allocation13 + $0x98] sm:$0xff] %vm1917, %v1872
    %1938 = vst.msk [vmem:[#allocation13 + $0xa0] sm:$0xff] %vm1917, %v1873
    %1939 = vst.msk [vmem:[#allocation13 + $0xa8] sm:$0xff] %vm1917, %v1874
    %1940 = vst.msk [vmem:[#allocation13 + $0xb0] sm:$0xff] %vm1917, %v1875
    %1941 = vst.msk [vmem:[#allocation13 + $0xb8] sm:$0xff] %vm1917, %v1876
    %1942 = vst.msk [vmem:[#allocation13 + $0xc0] sm:$0xff] %vm1917, %v1877
    %1943 = vst.msk [vmem:[#allocation13 + $0xc8] sm:$0xff] %vm1917, %v1878
    %1944 = vst.msk [vmem:[#allocation13 + $0xd0] sm:$0xff] %vm1917, %v1879
    %1945 = vst.msk [vmem:[#allocation13 + $0xd8] sm:$0xff] %vm1917, %v1880
    %1946 = vst.msk [vmem:[#allocation13 + $0xe0] sm:$0xff] %vm1917, %v1881
    %1947 = vst.msk [vmem:[#allocation13 + $0xe8] sm:$0xff] %vm1917, %v1882
    %1948 = vst.msk [vmem:[#allocation13 + $0xf0] sm:$0xff] %vm1917, %v1883
    %1949 = vst.msk [vmem:[#allocation13 + $0xf8] sm:$0xff] %vm1917, %v1884
    %1950 = vst.msk [vmem:[#allocation13 + $0x100] sm:$0xff] %vm1917, %v1885
    %1951 = vst.msk [vmem:[#allocation13 + $0x108] sm:$0xff] %vm1917, %v1886
    %1952 = vst.msk [vmem:[#allocation13 + $0x110] sm:$0xff] %vm1917, %v1887
    %1953 = vst.msk [vmem:[#allocation13 + $0x118] sm:$0xff] %vm1917, %v1888
    %1954 = vst.msk [vmem:[#allocation13 + $0x120] sm:$0xff] %vm1917, %v1889
    %1955 = vst.msk [vmem:[#allocation13 + $0x128] sm:$0xff] %vm1917, %v1890
    %1956 = vst.msk [vmem:[#allocation13 + $0x130] sm:$0xff] %vm1917, %v1891
    %1957 = vst.msk [vmem:[#allocation13 + $0x138] sm:$0xff] %vm1917, %v1892
    %1958 = vst.msk [vmem:[#allocation13 + $0x140] sm:$0xff] %vm1917, %v1893
    %1959 = vst.msk [vmem:[#allocation13 + $0x148] sm:$0xff] %vm1917, %v1894
    %1960 = vst.msk [vmem:[#allocation13 + $0x150] sm:$0xff] %vm1917, %v1895
    %1961 = vst.msk [vmem:[#allocation13 + $0x158] sm:$0xff] %vm1917, %v1896
    %1962 = vst.msk [vmem:[#allocation13 + $0x160] sm:$0xff] %vm1917, %v1897
    %1963 = vst.msk [vmem:[#allocation13 + $0x168] sm:$0xff] %vm1917, %v1898
    %1964 = vst.msk [vmem:[#allocation13 + $0x170] sm:$0xff] %vm1917, %v1899
    %1965 = vst.msk [vmem:[#allocation13 + $0x178] sm:$0xff] %vm1917, %v1900
    %1966 = vst.msk [vmem:[#allocation13 + $0x180] sm:$0xff] %vm1917, %v1901
    %1967 = vst.msk [vmem:[#allocation13 + $0x188] sm:$0xff] %vm1917, %v1902
    %1968 = vst.msk [vmem:[#allocation13 + $0x190] sm:$0xff] %vm1917, %v1903
    %1969 = vst.msk [vmem:[#allocation13 + $0x198] sm:$0xff] %vm1917, %v1904
    %1970 = vst.msk [vmem:[#allocation13 + $0x1a0] sm:$0xff] %vm1917, %v1905
    %1971 = vst.msk [vmem:[#allocation13 + $0x1a8] sm:$0xff] %vm1917, %v1906
    %1972 = vst.msk [vmem:[#allocation13 + $0x1b0] sm:$0xff] %vm1917, %v1907
    %1973 = vst.msk [vmem:[#allocation13 + $0x1b8] sm:$0xff] %vm1917, %v1908
    %1974 = vst.msk [vmem:[#allocation13 + $0x1c0] sm:$0xff] %vm1917, %v1909
    %1975 = vst.msk [vmem:[#allocation13 + $0x1c8] sm:$0xff] %vm1917, %v1910
    %1976 = vst.msk [vmem:[#allocation13 + $0x1d0] sm:$0xff] %vm1917, %v1911
    %1977 = vst.msk [vmem:[#allocation13 + $0x1d8] sm:$0xff] %vm1917, %v1912
    %1978 = vst.msk [vmem:[#allocation13 + $0x1e0] sm:$0xff] %vm1917, %v1913
    %1979 = vst.msk [vmem:[#allocation13 + $0x1e8] sm:$0xff] %vm1917, %v1914
    %1980 = vst.msk [vmem:[#allocation13 + $0x1f0] sm:$0xff] %vm1917, %v1915
    %1981 = vst.msk [vmem:[#allocation13 + $0x1f8] sm:$0xff] %vm1917, %v1916
    // Predicated region
    $region50: #{cspsppf_forward.9} parent=1 // pred_check
      _
    $region51: #{cspsppf_forward.9} parent=1 // pred_check_branch
      %1983 = sbr.rel (0) target = $region53
    $region52: #{cspsppf_forward.9} parent=1 // pred_region
      %s1985 = ssub.s32 8192, 8192
      %1986 = vsyncadd [#allocation4], %s1985
      %s1987 = sshll.u32 [#allocation13], 4
      %s1988 = int_to_ptr.vmem [resolvable:$true] %s1987
      %1993 = dma.vmem_to_hbm [thread:$0]  %s1988, 8192, %s6, [#allocation4], 128, 128, 8
    $region53: #{cspsppf_forward.9} parent=1 // pred_fallthru
      _
    // Predicated region
    $region54: #{cspsppf_forward.9} parent=1 // pred_check
      _
    $region55: #{cspsppf_forward.9} parent=1 // pred_check_branch
      %1995 = sbr.rel (0) target = $region57
    $region56: #{cspsppf_forward.9} parent=1 // pred_region
      %1996 = dma.done [#allocation4], 8192
    $region57: #{cspsppf_forward.9} parent=1 // pred_fallthru
      _
    %1997 = vsyncpa [#allocation3], 1
    %1998 = vsyncpa [#allocation6], 1
    %1999 = vsyncpa [#allocation9], 1
    %2000 = vsyncpa [#allocation12], 1
    %2001 = vsyncpa [#allocation4], 1

// kernel: cspsppf_forward.7
$region0: #{cspsppf_forward.7}
  #allocation0 [shape = 'u32[]', space=smem, size = 0x4, offset = 0x4, fixed_abs, tag = 'smem constant byte address 0x4 - core index']
  #allocation1 [shape = 'u32[144,128]{1,0:T(1,128)}', space=vmem, size = 0x12000, scoped, tag = 'internal scratch']
  %s0 = inlined_call_operand.hbm [shape: bf16[2,16,16,4], index: 0, kind: input, shape index: {}]
  %s1 = inlined_call_operand.hbm [shape: bf16[4,4], index: 1, kind: input, shape index: {}]
  %s2 = inlined_call_operand.hbm [shape: f32[1,4], index: 2, kind: input, shape index: {}]
  %s3 = inlined_call_operand.hbm [shape: f32[1,4], index: 3, kind: input, shape index: {}]
  %s4 = inlined_call_operand.hbm [shape: bf16[4,4,4], index: 4, kind: input, shape index: {}]
  %s5 = inlined_call_operand.hbm [shape: f32[1,4], index: 5, kind: input, shape index: {}]
  %s6 = inlined_call_operand.hbm [shape: f32[1,4], index: 6, kind: input, shape index: {}]
  %s7 = inlined_call_operand.hbm [shape: bf16[2,16,16,4], index: 7, kind: output, shape index: {}]
  %s8 = sld [smem:[#allocation0]]
  $region89: #{cspsppf_forward.7} parent=0
    _
  %s10 = ssub.s32 1, %s8
  %s11 = scalar_select 0, %s10, %s8
  $region1: #{cspsppf_forward.7} parent=0
    #allocation2 [shape = 'u8[131072]{0}', space=vmem, size = 0x20000, scoped, tag = 'input window, operand 0']
    #allocation3 [shape = 's32[2]{0}', space=sflag, size = 0x8, scoped, tag = 'scoped memory for cspsppf_forward.7']
    #allocation4 [shape = 's32[2]{0}', space=sflag, size = 0x8, scoped, tag = 'scoped memory for cspsppf_forward.7']
    #allocation5 [shape = 'u8[1024]{0}', space=vmem, size = 0x400, scoped, tag = 'input window, operand 1, single buffered']
    #allocation6 [shape = 's32[1]{0}', space=sflag, size = 0x4, scoped, tag = 'scoped memory for cspsppf_forward.7']
    #allocation7 [shape = 'u8[512]{0}', space=vmem, size = 0x400, scoped, tag = 'input window, operand 2, single buffered']
    #allocation8 [shape = 'u8[512]{0}', space=vmem, size = 0x400, scoped, tag = 'input window, operand 3, single buffered']
    #allocation9 [shape = 's32[1]{0}', space=sflag, size = 0x4, scoped, tag = 'scoped memory for cspsppf_forward.7']
    #allocation10 [shape = 'u8[4096]{0}', space=vmem, size = 0x1000, scoped, tag = 'input window, operand 4, single buffered']
    #allocation11 [shape = 'u8[512]{0}', space=vmem, size = 0x400, scoped, tag = 'input window, operand 5, single buffered']
    #allocation12 [shape = 's32[1]{0}', space=sflag, size = 0x4, scoped, tag = 'scoped memory for cspsppf_forward.7']
    #allocation13 [shape = 'u8[512]{0}', space=vmem, size = 0x400, scoped, tag = 'input window, operand 6, single buffered']
    #allocation14 [shape = 'u8[131072]{0}', space=vmem, size = 0x20000, scoped, tag = 'output window, operand 0']
    %12 = vsyncpa [#allocation3], 0
    %s13 = scalar_lea.sflag [#allocation3], 1
    %14 = vsyncpa %s13, 0
    %15 = vsyncpa [#allocation6], 0
    %16 = vsyncpa [#allocation9], 0
    %17 = vsyncpa [#allocation12], 0
    %18 = vsyncpa [#allocation4], 0
    %s19 = scalar_lea.sflag [#allocation4], 1
    %20 = vsyncpa %s19, 0
    loop: start=0, step=1, limit=4
    $region2: #{cspsppf_forward.7} parent=1 // loop_pre_header
      _
    $region3: #{cspsppf_forward.7} parent=1 // loop_header
      %s22 = sphi 0, %s26
      %p23 = scmp.ge.s32.totalorder %s22, 4
      %s32 = sphi 0, %s34
      %s35 = sphi 0, %s32
      %s36 = sphi 0, %s35
      %s52 = sphi 0, %s36
      %s56 = sphi 0, %s56
      %s58 = sphi 0, %s56
      %s59 = sphi 0, %s58
      %s73 = sphi 0, %s59
      %s77 = sphi 0, %s77
      %s79 = sphi 0, %s77
      %s80 = sphi 0, %s79
      %s94 = sphi 0, %s80
      %s98 = sphi 0, %s98
      %s100 = sphi 0, %s98
      %s101 = sphi 0, %s100
      %s115 = sphi 0, %s101
      %s119 = sphi 0, %s119
      %s121 = sphi 0, %s119
      %s122 = sphi 0, %s121
      %s136 = sphi 0, %s122
      %s140 = sphi 0, %s140
      %s142 = sphi 0, %s140
      %s143 = sphi 0, %s142
      %s157 = sphi 0, %s143
      %s161 = sphi 0, %s161
      %s163 = sphi 0, %s161
      %s164 = sphi 0, %s163
      %s178 = sphi 0, %s164
      %s184 = sphi 0, %s186
      %s187 = sphi 0, %s184
      %s188 = sphi 0, %s187
      %s204 = sphi 0, %s188
    $region4: #{cspsppf_forward.7} parent=1 // loop_header_branch
      %25 = sbr.rel (%p23) target = $region8
    $region5: #{cspsppf_forward.7} parent=1 // loop_body
      %s27 = ssub.s32 %s22, 1
      %s28 = ssub.s32 %s22, 2
      %s29 = sadd.s32 %s22, 1
      %s30 = ssub.s32 %s22, %s29
      %p31 = scmp.eq.s32.totalorder %s30, 0
      %s33 = sadd.s32 %s32, 1
      %s34 = scalar_select %p31, %s32, %s33
      %p37 = pneg %p31
      %p38 = scmp.eq.s32.totalorder %s22, 1
      %p39 = por %p37, %p38
      %p40 = scmp.ne.s32.totalorder %s32, %s35
      %p41 = scmp.eq.s32.totalorder %s22, 0
      %p42 = por %p40, %p41
      %p43 = scmp.ne.s32.totalorder %s32, %s35
      %p44 = scmp.eq.s32.totalorder %s27, 1
      %p45 = por %p43, %p44
      %p46 = scmp.ne.s32.totalorder %s35, %s36
      %p47 = scmp.eq.s32.totalorder %s27, 0
      %p48 = por %p46, %p47
      %p49 = scmp.ne.s32.totalorder %s35, %s36
      %p50 = scmp.eq.s32.totalorder %s28, 1
      %p51 = por %p49, %p50
      %p53 = scmp.ne.s32.totalorder %s36, %s52
      %p54 = scmp.eq.s32.totalorder %s28, 0
      %p55 = por %p53, %p54
      %s57 = sadd.s32 %s56, 1
      %p60 = scmp.eq.s32.totalorder %s22, 1
      %p61 = scmp.ne.s32.totalorder %s56, %s58
      %p62 = scmp.eq.s32.totalorder %s22, 0
      %p63 = por %p61, %p62
      %p64 = scmp.ne.s32.totalorder %s56, %s58
      %p65 = scmp.eq.s32.totalorder %s27, 1
      %p66 = por %p64, %p65
      %p67 = scmp.ne.s32.totalorder %s58, %s59
      %p68 = scmp.eq.s32.totalorder %s27, 0
      %p69 = por %p67, %p68
      %p70 = scmp.ne.s32.totalorder %s58, %s59
      %p71 = scmp.eq.s32.totalorder %s28, 1
      %p72 = por %p70, %p71
      %p74 = scmp.ne.s32.totalorder %s59, %s73
      %p75 = scmp.eq.s32.totalorder %s28, 0
      %p76 = por %p74, %p75
      %s78 = sadd.s32 %s77, 1
      %p81 = scmp.eq.s32.totalorder %s22, 1
      %p82 = scmp.ne.s32.totalorder %s77, %s79
      %p83 = scmp.eq.s32.totalorder %s22, 0
      %p84 = por %p82, %p83
      %p85 = scmp.ne.s32.totalorder %s77, %s79
      %p86 = scmp.eq.s32.totalorder %s27, 1
      %p87 = por %p85, %p86
      %p88 = scmp.ne.s32.totalorder %s79, %s80
      %p89 = scmp.eq.s32.totalorder %s27, 0
      %p90 = por %p88, %p89
      %p91 = scmp.ne.s32.totalorder %s79, %s80
      %p92 = scmp.eq.s32.totalorder %s28, 1
      %p93 = por %p91, %p92
      %p95 = scmp.ne.s32.totalorder %s80, %s94
      %p96 = scmp.eq.s32.totalorder %s28, 0
      %p97 = por %p95, %p96
      %s99 = sadd.s32 %s98, 1
      %p102 = scmp.eq.s32.totalorder %s22, 1
      %p103 = scmp.ne.s32.totalorder %s98, %s100
      %p104 = scmp.eq.s32.totalorder %s22, 0
      %p105 = por %p103, %p104
      %p106 = scmp.ne.s32.totalorder %s98, %s100
      %p107 = scmp.eq.s32.totalorder %s27, 1
      %p108 = por %p106, %p107
      %p109 = scmp.ne.s32.totalorder %s100, %s101
      %p110 = scmp.eq.s32.totalorder %s27, 0
      %p111 = por %p109, %p110
      %p112 = scmp.ne.s32.totalorder %s100, %s101
      %p113 = scmp.eq.s32.totalorder %s28, 1
      %p114 = por %p112, %p113
      %p116 = scmp.ne.s32.totalorder %s101, %s115
      %p117 = scmp.eq.s32.totalorder %s28, 0
      %p118 = por %p116, %p117
      %s120 = sadd.s32 %s119, 1
      %p123 = scmp.eq.s32.totalorder %s22, 1
      %p124 = scmp.ne.s32.totalorder %s119, %s121
      %p125 = scmp.eq.s32.totalorder %s22, 0
      %p126 = por %p124, %p125
      %p127 = scmp.ne.s32.totalorder %s119, %s121
      %p128 = scmp.eq.s32.totalorder %s27, 1
      %p129 = por %p127, %p128
      %p130 = scmp.ne.s32.totalorder %s121, %s122
      %p131 = scmp.eq.s32.totalorder %s27, 0
      %p132 = por %p130, %p131
      %p133 = scmp.ne.s32.totalorder %s121, %s122
      %p134 = scmp.eq.s32.totalorder %s28, 1
      %p135 = por %p133, %p134
      %p137 = scmp.ne.s32.totalorder %s122, %s136
      %p138 = scmp.eq.s32.totalorder %s28, 0
      %p139 = por %p137, %p138
      %s141 = sadd.s32 %s140, 1
      %p144 = scmp.eq.s32.totalorder %s22, 1
      %p145 = scmp.ne.s32.totalorder %s140, %s142
      %p146 = scmp.eq.s32.totalorder %s22, 0
      %p147 = por %p145, %p146
      %p148 = scmp.ne.s32.totalorder %s140, %s142
      %p149 = scmp.eq.s32.totalorder %s27, 1
      %p150 = por %p148, %p149
      %p151 = scmp.ne.s32.totalorder %s142, %s143
      %p152 = scmp.eq.s32.totalorder %s27, 0
      %p153 = por %p151, %p152
      %p154 = scmp.ne.s32.totalorder %s142, %s143
      %p155 = scmp.eq.s32.totalorder %s28, 1
      %p156 = por %p154, %p155
      %p158 = scmp.ne.s32.totalorder %s143, %s157
      %p159 = scmp.eq.s32.totalorder %s28, 0
      %p160 = por %p158, %p159
      %s162 = sadd.s32 %s161, 1
      %p165 = scmp.eq.s32.totalorder %s22, 1
      %p166 = scmp.ne.s32.totalorder %s161, %s163
      %p167 = scmp.eq.s32.totalorder %s22, 0
      %p168 = por %p166, %p167
      %p169 = scmp.ne.s32.totalorder %s161, %s163
      %p170 = scmp.eq.s32.totalorder %s27, 1
      %p171 = por %p169, %p170
      %p172 = scmp.ne.s32.totalorder %s163, %s164
      %p173 = scmp.eq.s32.totalorder %s27, 0
      %p174 = por %p172, %p173
      %p175 = scmp.ne.s32.totalorder %s163, %s164
      %p176 = scmp.eq.s32.totalorder %s28, 1
      %p177 = por %p175, %p176
      %p179 = scmp.ne.s32.totalorder %s164, %s178
      %p180 = scmp.eq.s32.totalorder %s28, 0
      %p181 = por %p179, %p180
      %s182 = ssub.s32 %s22, %s29
      %p183 = scmp.eq.s32.totalorder %s182, 0
      %s185 = sadd.s32 %s184, 1
      %s186 = scalar_select %p183, %s184, %s185
      %p189 = pneg %p183
      %p190 = scmp.eq.s32.totalorder %s22, 1
      %p191 = por %p189, %p190
      %p192 = scmp.ne.s32.totalorder %s184, %s187
      %p193 = scmp.eq.s32.totalorder %s22, 0
      %p194 = por %p192, %p193
      %p195 = scmp.ne.s32.totalorder %s184, %s187
      %p196 = scmp.eq.s32.totalorder %s27, 1
      %p197 = por %p195, %p196
      %p198 = scmp.ne.s32.totalorder %s187, %s188
      %p199 = scmp.eq.s32.totalorder %s27, 0
      %p200 = por %p198, %p199
      %p201 = scmp.ne.s32.totalorder %s187, %s188
      %p202 = scmp.eq.s32.totalorder %s28, 1
      %p203 = por %p201, %p202
      %p205 = scmp.ne.s32.totalorder %s188, %s204
      %p206 = scmp.eq.s32.totalorder %s28, 0
      %p207 = por %p205, %p206
      %p208 = scmp.le.s32.totalorder 1, %s22
      %p209 = scmp.lt.s32.totalorder %s22, 3
      %p210 = pnand %p208, %p209
      %p211 = pneg %p210
      // Predicated region
      $region9: #{cspsppf_forward.7} parent=5 // pred_check
        _
      $region10: #{cspsppf_forward.7} parent=5 // pred_check_branch
        %213 = sbr.rel (%p210) target = $region12
      $region11: #{cspsppf_forward.7} parent=5 // pred_region
        %s214 = ssub.s32 %s22, 1
        // Predicated region
        $region13: #{cspsppf_forward.7} parent=11 // pred_check
          %p215 = pneg %p69
        $region14: #{cspsppf_forward.7} parent=11 // pred_check_branch
          %217 = sbr.rel (%p215) target = $region16
        $region15: #{cspsppf_forward.7} parent=11 // pred_region
          %s219 = ssub.s32 32, 32
          %220 = vsyncadd [#allocation6], %s219
          %s222 = sshll.u32 [#allocation5], 4
          %s223 = int_to_ptr.vmem [resolvable:$true] %s222
          %225 = dma.hbm_to_vmem [thread:$0]  %s1, 32, %s223, [#allocation6]
        $region16: #{cspsppf_forward.7} parent=11 // pred_fallthru
          _
        // Predicated region
        $region17: #{cspsppf_forward.7} parent=11 // pred_check
          %p226 = pneg %p90
        $region18: #{cspsppf_forward.7} parent=11 // pred_check_branch
          %228 = sbr.rel (%p226) target = $region20
        $region19: #{cspsppf_forward.7} parent=11 // pred_region
          %s230 = ssub.s32 16, 16
          %231 = vsyncadd [#allocation6], %s230
          %s233 = sshll.u32 [#allocation7], 4
          %s234 = int_to_ptr.vmem [resolvable:$true] %s233
          %236 = dma.hbm_to_vmem [thread:$0]  %s2, 16, %s234, [#allocation6]
        $region20: #{cspsppf_forward.7} parent=11 // pred_fallthru
          _
        // Predicated region
        $region21: #{cspsppf_forward.7} parent=11 // pred_check
          %p237 = pneg %p111
        $region22: #{cspsppf_forward.7} parent=11 // pred_check_branch
          %239 = sbr.rel (%p237) target = $region24
        $region23: #{cspsppf_forward.7} parent=11 // pred_region
          %s241 = ssub.s32 16, 16
          %242 = vsyncadd [#allocation9], %s241
          %s244 = sshll.u32 [#allocation8], 4
          %s245 = int_to_ptr.vmem [resolvable:$true] %s244
          %247 = dma.hbm_to_vmem [thread:$0]  %s3, 16, %s245, [#allocation9]
        $region24: #{cspsppf_forward.7} parent=11 // pred_fallthru
          _
        // Predicated region
        $region25: #{cspsppf_forward.7} parent=11 // pred_check
          %p248 = pneg %p132
        $region26: #{cspsppf_forward.7} parent=11 // pred_check_branch
          %250 = sbr.rel (%p248) target = $region28
        $region27: #{cspsppf_forward.7} parent=11 // pred_region
          %s252 = ssub.s32 128, 128
          %253 = vsyncadd [#allocation9], %s252
          %s254 = sshll.u32 [#allocation10], 4
          %s255 = int_to_ptr.vmem [resolvable:$true] %s254
          %260 = dma.hbm_to_vmem [thread:$0]  %s4, 128, %s255, [#allocation9], 32, 32, 2
        $region28: #{cspsppf_forward.7} parent=11 // pred_fallthru
          _
        // Predicated region
        $region29: #{cspsppf_forward.7} parent=11 // pred_check
          %p261 = pneg %p153
        $region30: #{cspsppf_forward.7} parent=11 // pred_check_branch
          %263 = sbr.rel (%p261) target = $region32
        $region31: #{cspsppf_forward.7} parent=11 // pred_region
          %s265 = ssub.s32 16, 16
          %266 = vsyncadd [#allocation12], %s265
          %s268 = sshll.u32 [#allocation11], 4
          %s269 = int_to_ptr.vmem [resolvable:$true] %s268
          %271 = dma.hbm_to_vmem [thread:$0]  %s5, 16, %s269, [#allocation12]
        $region32: #{cspsppf_forward.7} parent=11 // pred_fallthru
          _
        // Predicated region
        $region33: #{cspsppf_forward.7} parent=11 // pred_check
          %p272 = pneg %p174
        $region34: #{cspsppf_forward.7} parent=11 // pred_check_branch
          %274 = sbr.rel (%p272) target = $region36
        $region35: #{cspsppf_forward.7} parent=11 // pred_region
          %s276 = ssub.s32 16, 16
          %277 = vsyncadd [#allocation12], %s276
          %s279 = sshll.u32 [#allocation13], 4
          %s280 = int_to_ptr.vmem [resolvable:$true] %s279
          %282 = dma.hbm_to_vmem [thread:$0]  %s6, 16, %s280, [#allocation12]
        $region36: #{cspsppf_forward.7} parent=11 // pred_fallthru
          _
      $region12: #{cspsppf_forward.7} parent=5 // pred_fallthru
        _
      %p283 = scmp.lt.s32.totalorder %s22, 2
      // Predicated region
      $region37: #{cspsppf_forward.7} parent=5 // pred_check
        %p284 = pneg %p283
      $region38: #{cspsppf_forward.7} parent=5 // pred_check_branch
        %286 = sbr.rel (%p284) target = $region40
      $region39: #{cspsppf_forward.7} parent=5 // pred_region
        // Predicated region
        $region41: #{cspsppf_forward.7} parent=39 // pred_check
          %p287 = pneg %p42
        $region42: #{cspsppf_forward.7} parent=39 // pred_check_branch
          %289 = sbr.rel (%p287) target = $region44
        $region43: #{cspsppf_forward.7} parent=39 // pred_region
          %s290 = sand.u32 %s32, 1
          %s291 = scalar_lea.sflag [#allocation3], %s290
          %s292 = sand.u32 %s32, 1
          %s293 = smul.addr %s292, 128
          %s294 = scalar_lea.vmem [#allocation2], %s293
          %s296 = ssub.s32 2048, 2048
          %297 = vsyncadd %s291, %s296
          %s298 = smul.addr %s22, 32
          %s299 = smul.addr %s298, 64
          %s300 = scalar_lea.hbm %s0, %s299
          %s301 = sshll.u32 %s294, 4
          %s302 = int_to_ptr.vmem [resolvable:$true] %s301
          %307 = dma.hbm_to_vmem [thread:$0]  %s300, 2048, %s302, %s291, 64, 64, 4
        $region44: #{cspsppf_forward.7} parent=39 // pred_fallthru
          _
      $region40: #{cspsppf_forward.7} parent=5 // pred_fallthru
        _
      %p308 = scmp.le.s32.totalorder 1, %s22
      %p309 = scmp.lt.s32.totalorder %s22, 3
      %p310 = pnand %p308, %p309
      %p311 = pneg %p310
      // Predicated region
      $region45: #{cspsppf_forward.7} parent=5 // pred_check
        _
      $region46: #{cspsppf_forward.7} parent=5 // pred_check_branch
        %313 = sbr.rel (%p310) target = $region48
      $region47: #{cspsppf_forward.7} parent=5 // pred_region
        %s314 = ssub.s32 %s22, 1
        %s315 = sand.u32 %s35, 1
        %s316 = scalar_lea.sflag [#allocation3], %s315
        %s317 = sand.u32 %s35, 1
        %s318 = smul.addr %s317, 128
        %s319 = scalar_lea.vmem [#allocation2], %s318
        // Predicated region
        $region49: #{cspsppf_forward.7} parent=47 // pred_check
          %p320 = pneg %p48
        $region50: #{cspsppf_forward.7} parent=47 // pred_check_branch
          %322 = sbr.rel (%p320) target = $region52
        $region51: #{cspsppf_forward.7} parent=47 // pred_region
          %323 = dma.done %s316, 2048
        $region52: #{cspsppf_forward.7} parent=47 // pred_fallthru
          _
        // Predicated region
        $region53: #{cspsppf_forward.7} parent=47 // pred_check
          %p324 = pneg %p69
        $region54: #{cspsppf_forward.7} parent=47 // pred_check_branch
          %326 = sbr.rel (%p324) target = $region56
        $region55: #{cspsppf_forward.7} parent=47 // pred_region
          %327 = dma.done [#allocation6], 32
        $region56: #{cspsppf_forward.7} parent=47 // pred_fallthru
          _
        // Predicated region
        $region57: #{cspsppf_forward.7} parent=47 // pred_check
          %p328 = pneg %p90
        $region58: #{cspsppf_forward.7} parent=47 // pred_check_branch
          %330 = sbr.rel (%p328) target = $region60
        $region59: #{cspsppf_forward.7} parent=47 // pred_region
          %331 = dma.done [#allocation6], 16
        $region60: #{cspsppf_forward.7} parent=47 // pred_fallthru
          _
        // Predicated region
        $region61: #{cspsppf_forward.7} parent=47 // pred_check
          %p332 = pneg %p111
        $region62: #{cspsppf_forward.7} parent=47 // pred_check_branch
          %334 = sbr.rel (%p332) target = $region64
        $region63: #{cspsppf_forward.7} parent=47 // pred_region
          %335 = dma.done [#allocation9], 16
        $region64: #{cspsppf_forward.7} parent=47 // pred_fallthru
          _
        // Predicated region
        $region65: #{cspsppf_forward.7} parent=47 // pred_check
          %p336 = pneg %p132
        $region66: #{cspsppf_forward.7} parent=47 // pred_check_branch
          %338 = sbr.rel (%p336) target = $region68
        $region67: #{cspsppf_forward.7} parent=47 // pred_region
          %339 = dma.done [#allocation9], 128
        $region68: #{cspsppf_forward.7} parent=47 // pred_fallthru
          _
        // Predicated region
        $region69: #{cspsppf_forward.7} parent=47 // pred_check
          %p340 = pneg %p153
        $region70: #{cspsppf_forward.7} parent=47 // pred_check_branch
          %342 = sbr.rel (%p340) target = $region72
        $region71: #{cspsppf_forward.7} parent=47 // pred_region
          %343 = dma.done [#allocation12], 16
        $region72: #{cspsppf_forward.7} parent=47 // pred_fallthru
          _
        // Predicated region
        $region73: #{cspsppf_forward.7} parent=47 // pred_check
          %p344 = pneg %p174
        $region74: #{cspsppf_forward.7} parent=47 // pred_check_branch
          %346 = sbr.rel (%p344) target = $region76
        $region75: #{cspsppf_forward.7} parent=47 // pred_region
          %347 = dma.done [#allocation12], 16
        $region76: #{cspsppf_forward.7} parent=47 // pred_fallthru
          _
        %s348 = sand.u32 %s35, 1
        %s349 = scalar_lea.sflag [#allocation3], %s348
        %s350 = sand.u32 %s35, 1
        %s351 = smul.addr %s350, 128
        %s352 = scalar_lea.vmem [#allocation2], %s351
        %p353 = pneg %p48
        %p354 = pneg %p45
        %p355 = pneg %p69
        %p356 = pneg %p66
        %p357 = pneg %p90
        %p358 = pneg %p87
        %p359 = pneg %p111
        %p360 = pneg %p108
        %p361 = pneg %p132
        %p362 = pneg %p129
        %p363 = pneg %p153
        %p364 = pneg %p150
        %p365 = pneg %p174
        %p366 = pneg %p171
        %p367 = pneg %p200
        %p368 = pneg %p197
        %s369 = sand.u32 %s187, 1
        %s370 = scalar_lea.sflag [#allocation4], %s369
        %s371 = sand.u32 %s187, 1
        %s372 = smul.addr %s371, 128
        %s373 = scalar_lea.vmem [#allocation14], %s372
        %v375 = vld [vmem:[%s319] sm:$0xf]
        %v376 = vld [vmem:[%s319 + $0x4] sm:$0xf]
        %v377 = vld [vmem:[%s319 + $0x8] sm:$0xf]
        %v378 = vld [vmem:[%s319 + $0xc] sm:$0xf]
        %v379 = vld [vmem:[%s319 + $0x10] sm:$0xf]
        %v380 = vld [vmem:[%s319 + $0x14] sm:$0xf]
        %v381 = vld [vmem:[%s319 + $0x18] sm:$0xf]
        %v382 = vld [vmem:[%s319 + $0x1c] sm:$0xf]
        %v383 = vld [vmem:[%s319 + $0x20] sm:$0xf]
        %v384 = vld [vmem:[%s319 + $0x24] sm:$0xf]
        %v385 = vld [vmem:[%s319 + $0x28] sm:$0xf]
        %v386 = vld [vmem:[%s319 + $0x2c] sm:$0xf]
        %v387 = vld [vmem:[%s319 + $0x30] sm:$0xf]
        %v388 = vld [vmem:[%s319 + $0x34] sm:$0xf]
        %v389 = vld [vmem:[%s319 + $0x38] sm:$0xf]
        %v390 = vld [vmem:[%s319 + $0x3c] sm:$0xf]
        %v391 = vld [vmem:[%s319 + $0x40] sm:$0xf]
        %v392 = vld [vmem:[%s319 + $0x44] sm:$0xf]
        %v393 = vld [vmem:[%s319 + $0x48] sm:$0xf]
        %v394 = vld [vmem:[%s319 + $0x4c] sm:$0xf]
        %v395 = vld [vmem:[%s319 + $0x50] sm:$0xf]
        %v396 = vld [vmem:[%s319 + $0x54] sm:$0xf]
        %v397 = vld [vmem:[%s319 + $0x58] sm:$0xf]
        %v398 = vld [vmem:[%s319 + $0x5c] sm:$0xf]
        %v399 = vld [vmem:[%s319 + $0x60] sm:$0xf]
        %v400 = vld [vmem:[%s319 + $0x64] sm:$0xf]
        %v401 = vld [vmem:[%s319 + $0x68] sm:$0xf]
        %v402 = vld [vmem:[%s319 + $0x6c] sm:$0xf]
        %v403 = vld [vmem:[%s319 + $0x70] sm:$0xf]
        %v404 = vld [vmem:[%s319 + $0x74] sm:$0xf]
        %v405 = vld [vmem:[%s319 + $0x78] sm:$0xf]
        %v406 = vld [vmem:[%s319 + $0x7c] sm:$0xf]
        %v407 = vld [vmem:[#allocation5] sm:$0x3]
        %v440 = vunpack.c.l.b16 %v375
        %v441 = vunpack.c.l.b16 %v376
        %v442 = vunpack.c.l.b16 %v377
        %v443 = vunpack.c.l.b16 %v378
        %v444 = vunpack.c.l.b16 %v379
        %v445 = vunpack.c.l.b16 %v380
        %v446 = vunpack.c.l.b16 %v381
        %v447 = vunpack.c.l.b16 %v382
        %v448 = vunpack.c.l.b16 %v383
        %v449 = vunpack.c.l.b16 %v384
        %v450 = vunpack.c.l.b16 %v385
        %v451 = vunpack.c.l.b16 %v386
        %v452 = vunpack.c.l.b16 %v387
        %v453 = vunpack.c.l.b16 %v388
        %v454 = vunpack.c.l.b16 %v389
        %v455 = vunpack.c.l.b16 %v390
        %v456 = vunpack.c.l.b16 %v391
        %v457 = vunpack.c.l.b16 %v392
        %v458 = vunpack.c.l.b16 %v393
        %v459 = vunpack.c.l.b16 %v394
        %v460 = vunpack.c.l.b16 %v395
        %v461 = vunpack.c.l.b16 %v396
        %v462 = vunpack.c.l.b16 %v397
        %v463 = vunpack.c.l.b16 %v398
        %v464 = vunpack.c.l.b16 %v399
        %v465 = vunpack.c.l.b16 %v400
        %v466 = vunpack.c.l.b16 %v401
        %v467 = vunpack.c.l.b16 %v402
        %v468 = vunpack.c.l.b16 %v403
        %v469 = vunpack.c.l.b16 %v404
        %v470 = vunpack.c.l.b16 %v405
        %v471 = vunpack.c.l.b16 %v406
        %v472 = vpack.c.b16 %v441, %v440
        %v473 = vpack.c.b16 %v443, %v442
        %v474 = vpack.c.b16 %v445, %v444
        %v475 = vpack.c.b16 %v447, %v446
        %v476 = vpack.c.b16 %v449, %v448
        %v477 = vpack.c.b16 %v451, %v450
        %v478 = vpack.c.b16 %v453, %v452
        %v479 = vpack.c.b16 %v455, %v454
        %v480 = vpack.c.b16 %v457, %v456
        %v481 = vpack.c.b16 %v459, %v458
        %v482 = vpack.c.b16 %v461, %v460
        %v483 = vpack.c.b16 %v463, %v462
        %v484 = vpack.c.b16 %v465, %v464
        %v485 = vpack.c.b16 %v467, %v466
        %v486 = vpack.c.b16 %v469, %v468
        %v487 = vpack.c.b16 %v471, %v470
        %vm488 = vcmask 31744
        %v490 = vsel %vm488, %v472, 0
        %v493 = vsel %vm488, %v473, 0
        %v496 = vsel %vm488, %v474, 0
        %v499 = vsel %vm488, %v475, 0
        %v502 = vsel %vm488, %v476, 0
        %v505 = vsel %vm488, %v477, 0
        %v508 = vsel %vm488, %v478, 0
        %v511 = vsel %vm488, %v479, 0
        %v514 = vsel %vm488, %v480, 0
        %v517 = vsel %vm488, %v481, 0
        %v520 = vsel %vm488, %v482, 0
        %v523 = vsel %vm488, %v483, 0
        %v526 = vsel %vm488, %v484, 0
        %v529 = vsel %vm488, %v485, 0
        %v532 = vsel %vm488, %v486, 0
        %v535 = vsel %vm488, %v487, 0
        %vm537 = vcmask 1041408
        %v539 = vsel %vm537, %v407, 0
        %541 = vmatprep.subr.bf16.mxu0 0
        %542 = vmatpush1.bf16.msra.mxu0 %v539
        %543 = vmatprep.subr.bf16.mxu0 0
        %544 = vmatpush1.bf16.msra.mxu0 0
        %545 = vmatprep.subr.bf16.mxu0 0
        %546 = vmatpush1.bf16.msra.mxu0 0
        %547 = vmatprep.subr.bf16.mxu0 0
        %548 = vmatpush1.bf16.msra.mxu0 0
        %549 = vmatprep.subr.bf16.mxu0 0
        %550 = vmatpush1.bf16.msra.mxu0 0
        %551 = vmatprep.subr.bf16.mxu0 0
        %552 = vmatpush1.bf16.msra.mxu0 0
        %553 = vmatprep.subr.bf16.mxu0 0
        %554 = vmatpush1.bf16.msra.mxu0 0
        %555 = vmatprep.subr.bf16.mxu0 0
        %556 = vmatpush1.bf16.msra.mxu0 0
        %557 = vmatprep.subr.bf16.mxu0 0
        %558 = vmatpush1.bf16.msra.mxu0 0
        %559 = vmatprep.subr.bf16.mxu0 0
        %560 = vmatpush1.bf16.msra.mxu0 0
        %561 = vmatprep.subr.bf16.mxu0 0
        %562 = vmatpush1.bf16.msra.mxu0 0
        %563 = vmatprep.subr.bf16.mxu0 0
        %564 = vmatpush1.bf16.msra.mxu0 0
        %565 = vmatprep.subr.bf16.mxu0 0
        %566 = vmatpush1.bf16.msra.mxu0 0
        %567 = vmatprep.subr.bf16.mxu0 0
        %568 = vmatpush1.bf16.msra.mxu0 0
        %569 = vmatprep.subr.bf16.mxu0 0
        %570 = vmatpush1.bf16.msra.mxu0 0
        %571 = vmatprep.subr.bf16.mxu0 0
        %572 = vmatpush1.bf16.msra.mxu0 0
        %573 = vmatprep.mubr.bf16.mxu0 0
        %574 = vmatmul.mubr.bf16.gmra.mrb[0].mxu0 %v490
        %v575 = vpop.f32.mrb[0].mxu0
        %v576 = vadd.f32 0.0, %v575
        %v577 = vpop.f32.mrb[0].mxu0
        %v578 = vpop.f32.mrb[0].mxu0
        %v579 = vadd.f32 0.0, %v578
        %v580 = vpop.f32.mrb[0].mxu0
        %581 = vmatprep.mubr.bf16.mxu0 0
        %582 = vmatmul.mubr.bf16.gmra.mrb[0].mxu0 %v493
        %v583 = vpop.f32.mrb[0].mxu0
        %v584 = vadd.f32 0.0, %v583
        %v585 = vpop.f32.mrb[0].mxu0
        %v586 = vpop.f32.mrb[0].mxu0
        %v587 = vadd.f32 0.0, %v586
        %v588 = vpop.f32.mrb[0].mxu0
        %589 = vmatprep.mubr.bf16.mxu0 0
        %590 = vmatmul.mubr.bf16.gmra.mrb[0].mxu0 %v496
        %v591 = vpop.f32.mrb[0].mxu0
        %v592 = vadd.f32 0.0, %v591
        %v593 = vpop.f32.mrb[0].mxu0
        %v594 = vpop.f32.mrb[0].mxu0
        %v595 = vadd.f32 0.0, %v594
        %v596 = vpop.f32.mrb[0].mxu0
        %597 = vmatprep.mubr.bf16.mxu0 0
        %598 = vmatmul.mubr.bf16.gmra.mrb[0].mxu0 %v499
        %v599 = vpop.f32.mrb[0].mxu0
        %v600 = vadd.f32 0.0, %v599
        %v601 = vpop.f32.mrb[0].mxu0
        %v602 = vpop.f32.mrb[0].mxu0
        %v603 = vadd.f32 0.0, %v602
        %v604 = vpop.f32.mrb[0].mxu0
        %605 = vmatprep.mubr.bf16.mxu0 0
        %606 = vmatmul.mubr.bf16.gmra.mrb[0].mxu0 %v502
        %v607 = vpop.f32.mrb[0].mxu0
        %v608 = vadd.f32 0.0, %v607
        %v609 = vpop.f32.mrb[0].mxu0
        %v610 = vpop.f32.mrb[0].mxu0
        %v611 = vadd.f32 0.0, %v610
        %v612 = vpop.f32.mrb[0].mxu0
        %613 = vmatprep.mubr.bf16.mxu0 0
        %614 = vmatmul.mubr.bf16.gmra.mrb[0].mxu0 %v505
        %v615 = vpop.f32.mrb[0].mxu0
        %v616 = vadd.f32 0.0, %v615
        %v617 = vpop.f32.mrb[0].mxu0
        %v618 = vpop.f32.mrb[0].mxu0
        %v619 = vadd.f32 0.0, %v618
        %v620 = vpop.f32.mrb[0].mxu0
        %621 = vmatprep.mubr.bf16.mxu0 0
        %622 = vmatmul.mubr.bf16.gmra.mrb[0].mxu0 %v508
        %v623 = vpop.f32.mrb[0].mxu0
        %v624 = vadd.f32 0.0, %v623
        %v625 = vpop.f32.mrb[0].mxu0
        %v626 = vpop.f32.mrb[0].mxu0
        %v627 = vadd.f32 0.0, %v626
        %v628 = vpop.f32.mrb[0].mxu0
        %629 = vmatprep.mubr.bf16.mxu0 0
        %630 = vmatmul.mubr.bf16.gmra.mrb[0].mxu0 %v511
        %v631 = vpop.f32.mrb[0].mxu0
        %v632 = vadd.f32 0.0, %v631
        %v633 = vpop.f32.mrb[0].mxu0
        %v634 = vpop.f32.mrb[0].mxu0
        %v635 = vadd.f32 0.0, %v634
        %v636 = vpop.f32.mrb[0].mxu0
        %637 = vmatprep.mubr.bf16.mxu0 0
        %638 = vmatmul.mubr.bf16.gmra.mrb[0].mxu0 %v514
        %v639 = vpop.f32.mrb[0].mxu0
        %v640 = vadd.f32 0.0, %v639
        %v641 = vpop.f32.mrb[0].mxu0
        %v642 = vpop.f32.mrb[0].mxu0
        %v643 = vadd.f32 0.0, %v642
        %v644 = vpop.f32.mrb[0].mxu0
        %645 = vmatprep.mubr.bf16.mxu0 0
        %646 = vmatmul.mubr.bf16.gmra.mrb[0].mxu0 %v517
        %v647 = vpop.f32.mrb[0].mxu0
        %v648 = vadd.f32 0.0, %v647
        %v649 = vpop.f32.mrb[0].mxu0
        %v650 = vpop.f32.mrb[0].mxu0
        %v651 = vadd.f32 0.0, %v650
        %v652 = vpop.f32.mrb[0].mxu0
        %653 = vmatprep.mubr.bf16.mxu0 0
        %654 = vmatmul.mubr.bf16.gmra.mrb[0].mxu0 %v520
        %v655 = vpop.f32.mrb[0].mxu0
        %v656 = vadd.f32 0.0, %v655
        %v657 = vpop.f32.mrb[0].mxu0
        %v658 = vpop.f32.mrb[0].mxu0
        %v659 = vadd.f32 0.0, %v658
        %v660 = vpop.f32.mrb[0].mxu0
        %661 = vmatprep.mubr.bf16.mxu0 0
        %662 = vmatmul.mubr.bf16.gmra.mrb[0].mxu0 %v523
        %v663 = vpop.f32.mrb[0].mxu0
        %v664 = vadd.f32 0.0, %v663
        %v665 = vpop.f32.mrb[0].mxu0
        %v666 = vpop.f32.mrb[0].mxu0
        %v667 = vadd.f32 0.0, %v666
        %v668 = vpop.f32.mrb[0].mxu0
        %669 = vmatprep.mubr.bf16.mxu0 0
        %670 = vmatmul.mubr.bf16.gmra.mrb[0].mxu0 %v526
        %v671 = vpop.f32.mrb[0].mxu0
        %v672 = vadd.f32 0.0, %v671
        %v673 = vpop.f32.mrb[0].mxu0
        %v674 = vpop.f32.mrb[0].mxu0
        %v675 = vadd.f32 0.0, %v674
        %v676 = vpop.f32.mrb[0].mxu0
        %677 = vmatprep.mubr.bf16.mxu0 0
        %678 = vmatmul.mubr.bf16.gmra.mrb[0].mxu0 %v529
        %v679 = vpop.f32.mrb[0].mxu0
        %v680 = vadd.f32 0.0, %v679
        %v681 = vpop.f32.mrb[0].mxu0
        %v682 = vpop.f32.mrb[0].mxu0
        %v683 = vadd.f32 0.0, %v682
        %v684 = vpop.f32.mrb[0].mxu0
        %685 = vmatprep.mubr.bf16.mxu0 0
        %686 = vmatmul.mubr.bf16.gmra.mrb[0].mxu0 %v532
        %v687 = vpop.f32.mrb[0].mxu0
        %v688 = vadd.f32 0.0, %v687
        %v689 = vpop.f32.mrb[0].mxu0
        %v690 = vpop.f32.mrb[0].mxu0
        %v691 = vadd.f32 0.0, %v690
        %v692 = vpop.f32.mrb[0].mxu0
        %693 = vmatprep.mubr.bf16.mxu0 0
        %694 = vmatmul.mubr.bf16.gmra.mrb[0].mxu0 %v535
        %v695 = vpop.f32.mrb[0].mxu0
        %v696 = vadd.f32 0.0, %v695
        %v697 = vpop.f32.mrb[0].mxu0
        %v698 = vpop.f32.mrb[0].mxu0
        %v699 = vadd.f32 0.0, %v698
        %v700 = vpop.f32.mrb[0].mxu0
        %701 = vdwg.mxu0
        %v702 = vld [vmem:[#allocation7] sm:$0x1]
        %v704 = vlaneseq
        %v705 = vshrl.u32 %v704, 7
        %v706 = vsub.s32 0, %v705
        %v707 = vrot.slane %v702, %v706
        %v709 = vmul.f32 %v576, %v707
        %v710 = vmul.f32 %v579, %v707
        %v711 = vmul.f32 %v584, %v707
        %v712 = vmul.f32 %v587, %v707
        %v713 = vmul.f32 %v592, %v707
        %v714 = vmul.f32 %v595, %v707
        %v715 = vmul.f32 %v600, %v707
        %v716 = vmul.f32 %v603, %v707
        %v717 = vmul.f32 %v608, %v707
        %v718 = vmul.f32 %v611, %v707
        %v719 = vmul.f32 %v616, %v707
        %v720 = vmul.f32 %v619, %v707
        %v721 = vmul.f32 %v624, %v707
        %v722 = vmul.f32 %v627, %v707
        %v723 = vmul.f32 %v632, %v707
        %v724 = vmul.f32 %v635, %v707
        %v725 = vmul.f32 %v640, %v707
        %v726 = vmul.f32 %v643, %v707
        %v727 = vmul.f32 %v648, %v707
        %v728 = vmul.f32 %v651, %v707
        %v729 = vmul.f32 %v656, %v707
        %v730 = vmul.f32 %v659, %v707
        %v731 = vmul.f32 %v664, %v707
        %v732 = vmul.f32 %v667, %v707
        %v733 = vmul.f32 %v672, %v707
        %v734 = vmul.f32 %v675, %v707
        %v735 = vmul.f32 %v680, %v707
        %v736 = vmul.f32 %v683, %v707
        %v737 = vmul.f32 %v688, %v707
        %v738 = vmul.f32 %v691, %v707
        %v739 = vmul.f32 %v696, %v707
        %v740 = vmul.f32 %v699, %v707
        %v741 = vld [vmem:[#allocation8] sm:$0x1]
        %v743 = vlaneseq
        %v744 = vshrl.u32 %v743, 7
        %v745 = vsub.s32 0, %v744
        %v746 = vrot.slane %v741, %v745
        %v748 = vadd.f32 %v709, %v746
        %v749 = vadd.f32 %v710, %v746
        %v750 = vadd.f32 %v711, %v746
        %v751 = vadd.f32 %v712, %v746
        %v752 = vadd.f32 %v713, %v746
        %v753 = vadd.f32 %v714, %v746
        %v754 = vadd.f32 %v715, %v746
        %v755 = vadd.f32 %v716, %v746
        %v756 = vadd.f32 %v717, %v746
        %v757 = vadd.f32 %v718, %v746
        %v758 = vadd.f32 %v719, %v746
        %v759 = vadd.f32 %v720, %v746
        %v760 = vadd.f32 %v721, %v746
        %v761 = vadd.f32 %v722, %v746
        %v762 = vadd.f32 %v723, %v746
        %v763 = vadd.f32 %v724, %v746
        %v764 = vadd.f32 %v725, %v746
        %v765 = vadd.f32 %v726, %v746
        %v766 = vadd.f32 %v727, %v746
        %v767 = vadd.f32 %v728, %v746
        %v768 = vadd.f32 %v729, %v746
        %v769 = vadd.f32 %v730, %v746
        %v770 = vadd.f32 %v731, %v746
        %v771 = vadd.f32 %v732, %v746
        %v772 = vadd.f32 %v733, %v746
        %v773 = vadd.f32 %v734, %v746
        %v774 = vadd.f32 %v735, %v746
        %v775 = vadd.f32 %v736, %v746
        %v776 = vadd.f32 %v737, %v746
        %v777 = vadd.f32 %v738, %v746
        %v778 = vadd.f32 %v739, %v746
        %v779 = vadd.f32 %v740, %v746
        %v780 = vsub.f32 0.0, %v748
        %v781 = vsub.f32 0.0, %v749
        %v782 = vsub.f32 0.0, %v750
        %v783 = vsub.f32 0.0, %v751
        %v784 = vsub.f32 0.0, %v752
        %v785 = vsub.f32 0.0, %v753
        %v786 = vsub.f32 0.0, %v754
        %v787 = vsub.f32 0.0, %v755
        %v788 = vsub.f32 0.0, %v756
        %v789 = vsub.f32 0.0, %v757
        %v790 = vsub.f32 0.0, %v758
        %v791 = vsub.f32 0.0, %v759
        %v792 = vsub.f32 0.0, %v760
        %v793 = vsub.f32 0.0, %v761
        %v794 = vsub.f32 0.0, %v762
        %v795 = vsub.f32 0.0, %v763
        %v796 = vsub.f32 0.0, %v764
        %v797 = vsub.f32 0.0, %v765
        %v798 = vsub.f32 0.0, %v766
        %v799 = vsub.f32 0.0, %v767
        %v800 = vsub.f32 0.0, %v768
        %v801 = vsub.f32 0.0, %v769
        %v802 = vsub.f32 0.0, %v770
        %v803 = vsub.f32 0.0, %v771
        %v804 = vsub.f32 0.0, %v772
        %v805 = vsub.f32 0.0, %v773
        %v806 = vsub.f32 0.0, %v774
        %v807 = vsub.f32 0.0, %v775
        %v808 = vsub.f32 0.0, %v776
        %v809 = vsub.f32 0.0, %v777
        %v810 = vsub.f32 0.0, %v778
        %v811 = vsub.f32 0.0, %v779
        %v812 = vmul.f32 %v780, 1.442695
        %v813 = vpow.pop %v812
        %v814 = vmul.f32 %v781, 1.442695
        %v815 = vpow.pop %v814
        %v816 = vmul.f32 %v782, 1.442695
        %v817 = vpow.pop %v816
        %v818 = vmul.f32 %v783, 1.442695
        %v819 = vpow.pop %v818
        %v820 = vmul.f32 %v784, 1.442695
        %v821 = vpow.pop %v820
        %v822 = vmul.f32 %v785, 1.442695
        %v823 = vpow.pop %v822
        %v824 = vmul.f32 %v786, 1.442695
        %v825 = vpow.pop %v824
        %v826 = vmul.f32 %v787, 1.442695
        %v827 = vpow.pop %v826
        %v828 = vmul.f32 %v788, 1.442695
        %v829 = vpow.pop %v828
        %v830 = vmul.f32 %v789, 1.442695
        %v831 = vpow.pop %v830
        %v832 = vmul.f32 %v790, 1.442695
        %v833 = vpow.pop %v832
        %v834 = vmul.f32 %v791, 1.442695
        %v835 = vpow.pop %v834
        %v836 = vmul.f32 %v792, 1.442695
        %v837 = vpow.pop %v836
        %v838 = vmul.f32 %v793, 1.442695
        %v839 = vpow.pop %v838
        %v840 = vmul.f32 %v794, 1.442695
        %v841 = vpow.pop %v840
        %v842 = vmul.f32 %v795, 1.442695
        %v843 = vpow.pop %v842
        %v844 = vmul.f32 %v796, 1.442695
        %v845 = vpow.pop %v844
        %v846 = vmul.f32 %v797, 1.442695
        %v847 = vpow.pop %v846
        %v848 = vmul.f32 %v798, 1.442695
        %v849 = vpow.pop %v848
        %v850 = vmul.f32 %v799, 1.442695
        %v851 = vpow.pop %v850
        %v852 = vmul.f32 %v800, 1.442695
        %v853 = vpow.pop %v852
        %v854 = vmul.f32 %v801, 1.442695
        %v855 = vpow.pop %v854
        %v856 = vmul.f32 %v802, 1.442695
        %v857 = vpow.pop %v856
        %v858 = vmul.f32 %v803, 1.442695
        %v859 = vpow.pop %v858
        %v860 = vmul.f32 %v804, 1.442695
        %v861 = vpow.pop %v860
        %v862 = vmul.f32 %v805, 1.442695
        %v863 = vpow.pop %v862
        %v864 = vmul.f32 %v806, 1.442695
        %v865 = vpow.pop %v864
        %v866 = vmul.f32 %v807, 1.442695
        %v867 = vpow.pop %v866
        %v868 = vmul.f32 %v808, 1.442695
        %v869 = vpow.pop %v868
        %v870 = vmul.f32 %v809, 1.442695
        %v871 = vpow.pop %v870
        %v872 = vmul.f32 %v810, 1.442695
        %v873 = vpow.pop %v872
        %v874 = vmul.f32 %v811, 1.442695
        %v875 = vpow.pop %v874
        %v876 = vadd.f32 %v813, 1.0
        %v877 = vadd.f32 %v815, 1.0
        %v878 = vadd.f32 %v817, 1.0
        %v879 = vadd.f32 %v819, 1.0
        %v880 = vadd.f32 %v821, 1.0
        %v881 = vadd.f32 %v823, 1.0
        %v882 = vadd.f32 %v825, 1.0
        %v883 = vadd.f32 %v827, 1.0
        %v884 = vadd.f32 %v829, 1.0
        %v885 = vadd.f32 %v831, 1.0
        %v886 = vadd.f32 %v833, 1.0
        %v887 = vadd.f32 %v835, 1.0
        %v888 = vadd.f32 %v837, 1.0
        %v889 = vadd.f32 %v839, 1.0
        %v890 = vadd.f32 %v841, 1.0
        %v891 = vadd.f32 %v843, 1.0
        %v892 = vadd.f32 %v845, 1.0
        %v893 = vadd.f32 %v847, 1.0
        %v894 = vadd.f32 %v849, 1.0
        %v895 = vadd.f32 %v851, 1.0
        %v896 = vadd.f32 %v853, 1.0
        %v897 = vadd.f32 %v855, 1.0
        %v898 = vadd.f32 %v857, 1.0
        %v899 = vadd.f32 %v859, 1.0
        %v900 = vadd.f32 %v861, 1.0
        %v901 = vadd.f32 %v863, 1.0
        %v902 = vadd.f32 %v865, 1.0
        %v903 = vadd.f32 %v867, 1.0
        %v904 = vadd.f32 %v869, 1.0
        %v905 = vadd.f32 %v871, 1.0
        %v906 = vadd.f32 %v873, 1.0
        %v907 = vadd.f32 %v875, 1.0
        %v908 = vrcp.pop %v876
        %v909 = vmul.f32 1.0, %v908
        %v910 = vrcp.pop %v877
        %v911 = vmul.f32 1.0, %v910
        %v912 = vrcp.pop %v878
        %v913 = vmul.f32 1.0, %v912
        %v914 = vrcp.pop %v879
        %v915 = vmul.f32 1.0, %v914
        %v916 = vrcp.pop %v880
        %v917 = vmul.f32 1.0, %v916
        %v918 = vrcp.pop %v881
        %v919 = vmul.f32 1.0, %v918
        %v920 = vrcp.pop %v882
        %v921 = vmul.f32 1.0, %v920
        %v922 = vrcp.pop %v883
        %v923 = vmul.f32 1.0, %v922
        %v924 = vrcp.pop %v884
        %v925 = vmul.f32 1.0, %v924
        %v926 = vrcp.pop %v885
        %v927 = vmul.f32 1.0, %v926
        %v928 = vrcp.pop %v886
        %v929 = vmul.f32 1.0, %v928
        %v930 = vrcp.pop %v887
        %v931 = vmul.f32 1.0, %v930
        %v932 = vrcp.pop %v888
        %v933 = vmul.f32 1.0, %v932
        %v934 = vrcp.pop %v889
        %v935 = vmul.f32 1.0, %v934
        %v936 = vrcp.pop %v890
        %v937 = vmul.f32 1.0, %v936
        %v938 = vrcp.pop %v891
        %v939 = vmul.f32 1.0, %v938
        %v940 = vrcp.pop %v892
        %v941 = vmul.f32 1.0, %v940
        %v942 = vrcp.pop %v893
        %v943 = vmul.f32 1.0, %v942
        %v944 = vrcp.pop %v894
        %v945 = vmul.f32 1.0, %v944
        %v946 = vrcp.pop %v895
        %v947 = vmul.f32 1.0, %v946
        %v948 = vrcp.pop %v896
        %v949 = vmul.f32 1.0, %v948
        %v950 = vrcp.pop %v897
        %v951 = vmul.f32 1.0, %v950
        %v952 = vrcp.pop %v898
        %v953 = vmul.f32 1.0, %v952
        %v954 = vrcp.pop %v899
        %v955 = vmul.f32 1.0, %v954
        %v956 = vrcp.pop %v900
        %v957 = vmul.f32 1.0, %v956
        %v958 = vrcp.pop %v901
        %v959 = vmul.f32 1.0, %v958
        %v960 = vrcp.pop %v902
        %v961 = vmul.f32 1.0, %v960
        %v962 = vrcp.pop %v903
        %v963 = vmul.f32 1.0, %v962
        %v964 = vrcp.pop %v904
        %v965 = vmul.f32 1.0, %v964
        %v966 = vrcp.pop %v905
        %v967 = vmul.f32 1.0, %v966
        %v968 = vrcp.pop %v906
        %v969 = vmul.f32 1.0, %v968
        %v970 = vrcp.pop %v907
        %v971 = vmul.f32 1.0, %v970
        %v972 = vmul.f32 %v748, %v909
        %v973 = vmul.f32 %v749, %v911
        %v974 = vmul.f32 %v750, %v913
        %v975 = vmul.f32 %v751, %v915
        %v976 = vmul.f32 %v752, %v917
        %v977 = vmul.f32 %v753, %v919
        %v978 = vmul.f32 %v754, %v921
        %v979 = vmul.f32 %v755, %v923
        %v980 = vmul.f32 %v756, %v925
        %v981 = vmul.f32 %v757, %v927
        %v982 = vmul.f32 %v758, %v929
        %v983 = vmul.f32 %v759, %v931
        %v984 = vmul.f32 %v760, %v933
        %v985 = vmul.f32 %v761, %v935
        %v986 = vmul.f32 %v762, %v937
        %v987 = vmul.f32 %v763, %v939
        %v988 = vmul.f32 %v764, %v941
        %v989 = vmul.f32 %v765, %v943
        %v990 = vmul.f32 %v766, %v945
        %v991 = vmul.f32 %v767, %v947
        %v992 = vmul.f32 %v768, %v949
        %v993 = vmul.f32 %v769, %v951
        %v994 = vmul.f32 %v770, %v953
        %v995 = vmul.f32 %v771, %v955
        %v996 = vmul.f32 %v772, %v957
        %v997 = vmul.f32 %v773, %v959
        %v998 = vmul.f32 %v774, %v961
        %v999 = vmul.f32 %v775, %v963
        %v1000 = vmul.f32 %v776, %v965
        %v1001 = vmul.f32 %v777, %v967
        %v1002 = vmul.f32 %v778, %v969
        %v1003 = vmul.f32 %v779, %v971
        %v1036 = vrot.slane %v972, 6
        %v1037 = vrot.slane %v973, 6
        %v1038 = vsel %vm537, %v1036, %v1037
        %v1039 = vrot.slane %v974, 6
        %v1040 = vrot.slane %v975, 6
        %v1041 = vsel %vm537, %v1039, %v1040
        %v1042 = vrot.slane %v976, 6
        %v1043 = vrot.slane %v977, 6
        %v1044 = vsel %vm537, %v1042, %v1043
        %v1045 = vrot.slane %v978, 6
        %v1046 = vrot.slane %v979, 6
        %v1047 = vsel %vm537, %v1045, %v1046
        %v1048 = vrot.slane %v980, 6
        %v1049 = vrot.slane %v981, 6
        %v1050 = vsel %vm537, %v1048, %v1049
        %v1051 = vrot.slane %v982, 6
        %v1052 = vrot.slane %v983, 6
        %v1053 = vsel %vm537, %v1051, %v1052
        %v1054 = vrot.slane %v984, 6
        %v1055 = vrot.slane %v985, 6
        %v1056 = vsel %vm537, %v1054, %v1055
        %v1057 = vrot.slane %v986, 6
        %v1058 = vrot.slane %v987, 6
        %v1059 = vsel %vm537, %v1057, %v1058
        %v1060 = vrot.slane %v988, 6
        %v1061 = vrot.slane %v989, 6
        %v1062 = vsel %vm537, %v1060, %v1061
        %v1063 = vrot.slane %v990, 6
        %v1064 = vrot.slane %v991, 6
        %v1065 = vsel %vm537, %v1063, %v1064
        %v1066 = vrot.slane %v992, 6
        %v1067 = vrot.slane %v993, 6
        %v1068 = vsel %vm537, %v1066, %v1067
        %v1069 = vrot.slane %v994, 6
        %v1070 = vrot.slane %v995, 6
        %v1071 = vsel %vm537, %v1069, %v1070
        %v1072 = vrot.slane %v996, 6
        %v1073 = vrot.slane %v997, 6
        %v1074 = vsel %vm537, %v1072, %v1073
        %v1075 = vrot.slane %v998, 6
        %v1076 = vrot.slane %v999, 6
        %v1077 = vsel %vm537, %v1075, %v1076
        %v1078 = vrot.slane %v1000, 6
        %v1079 = vrot.slane %v1001, 6
        %v1080 = vsel %vm537, %v1078, %v1079
        %v1081 = vrot.slane %v1002, 6
        %v1082 = vrot.slane %v1003, 6
        %v1083 = vsel %vm537, %v1081, %v1082
        %v1132 = vsel %vm537, -inf, %v1036
        %v1133 = vsel %vm537, -inf, %v1039
        %v1134 = vsel %vm537, -inf, %v1042
        %v1135 = vsel %vm537, -inf, %v1045
        %v1136 = vsel %vm537, -inf, %v1048
        %v1137 = vsel %vm537, -inf, %v1051
        %v1138 = vsel %vm537, -inf, %v1054
        %v1139 = vsel %vm537, -inf, %v1057
        %v1140 = vsel %vm537, -inf, %v1060
        %v1141 = vsel %vm537, -inf, %v1063
        %v1142 = vsel %vm537, -inf, %v1066
        %v1143 = vsel %vm537, -inf, %v1069
        %v1144 = vsel %vm537, -inf, %v1072
        %v1145 = vsel %vm537, -inf, %v1075
        %v1146 = vsel %vm537, -inf, %v1078
        %v1147 = vsel %vm537, -inf, %v1081
        %v1148 = vsel %vm537, %v1037, -inf
        %v1149 = vsel %vm537, %v1040, -inf
        %v1150 = vsel %vm537, %v1043, -inf
        %v1151 = vsel %vm537, %v1046, -inf
        %v1152 = vsel %vm537, %v1049, -inf
        %v1153 = vsel %vm537, %v1052, -inf
        %v1154 = vsel %vm537, %v1055, -inf
        %v1155 = vsel %vm537, %v1058, -inf
        %v1156 = vsel %vm537, %v1061, -inf
        %v1157 = vsel %vm537, %v1064, -inf
        %v1158 = vsel %vm537, %v1067, -inf
        %v1159 = vsel %vm537, %v1070, -inf
        %v1160 = vsel %vm537, %v1073, -inf
        %v1161 = vsel %vm537, %v1076, -inf
        %v1162 = vsel %vm537, %v1079, -inf
        %v1163 = vsel %vm537, %v1082, -inf
        %vm1196 = vcmask 1046528
        %v1197 = vrot.slane %v1132, 1
        %v1198 = vrot.slane %v1038, 1
        %v1199 = vsel %vm1196, %v1197, %v1198
        %v1200 = vrot.slane %v1148, 1
        %v1201 = vsel %vm1196, %v1198, %v1200
        %v1202 = vrot.slane %v1133, 1
        %v1203 = vrot.slane %v1041, 1
        %v1204 = vsel %vm1196, %v1202, %v1203
        %v1205 = vrot.slane %v1149, 1
        %v1206 = vsel %vm1196, %v1203, %v1205
        %v1207 = vrot.slane %v1134, 1
        %v1208 = vrot.slane %v1044, 1
        %v1209 = vsel %vm1196, %v1207, %v1208
        %v1210 = vrot.slane %v1150, 1
        %v1211 = vsel %vm1196, %v1208, %v1210
        %v1212 = vrot.slane %v1135, 1
        %v1213 = vrot.slane %v1047, 1
        %v1214 = vsel %vm1196, %v1212, %v1213
        %v1215 = vrot.slane %v1151, 1
        %v1216 = vsel %vm1196, %v1213, %v1215
        %v1217 = vrot.slane %v1136, 1
        %v1218 = vrot.slane %v1050, 1
        %v1219 = vsel %vm1196, %v1217, %v1218
        %v1220 = vrot.slane %v1152, 1
        %v1221 = vsel %vm1196, %v1218, %v1220
        %v1222 = vrot.slane %v1137, 1
        %v1223 = vrot.slane %v1053, 1
        %v1224 = vsel %vm1196, %v1222, %v1223
        %v1225 = vrot.slane %v1153, 1
        %v1226 = vsel %vm1196, %v1223, %v1225
        %v1227 = vrot.slane %v1138, 1
        %v1228 = vrot.slane %v1056, 1
        %v1229 = vsel %vm1196, %v1227, %v1228
        %v1230 = vrot.slane %v1154, 1
        %v1231 = vsel %vm1196, %v1228, %v1230
        %v1232 = vrot.slane %v1139, 1
        %v1233 = vrot.slane %v1059, 1
        %v1234 = vsel %vm1196, %v1232, %v1233
        %v1235 = vrot.slane %v1155, 1
        %v1236 = vsel %vm1196, %v1233, %v1235
        %v1237 = vrot.slane %v1140, 1
        %v1238 = vrot.slane %v1062, 1
        %v1239 = vsel %vm1196, %v1237, %v1238
        %v1240 = vrot.slane %v1156, 1
        %v1241 = vsel %vm1196, %v1238, %v1240
        %v1242 = vrot.slane %v1141, 1
        %v1243 = vrot.slane %v1065, 1
        %v1244 = vsel %vm1196, %v1242, %v1243
        %v1245 = vrot.slane %v1157, 1
        %v1246 = vsel %vm1196, %v1243, %v1245
        %v1247 = vrot.slane %v1142, 1
        %v1248 = vrot.slane %v1068, 1
        %v1249 = vsel %vm1196, %v1247, %v1248
        %v1250 = vrot.slane %v1158, 1
        %v1251 = vsel %vm1196, %v1248, %v1250
        %v1252 = vrot.slane %v1143, 1
        %v1253 = vrot.slane %v1071, 1
        %v1254 = vsel %vm1196, %v1252, %v1253
        %v1255 = vrot.slane %v1159, 1
        %v1256 = vsel %vm1196, %v1253, %v1255
        %v1257 = vrot.slane %v1144, 1
        %v1258 = vrot.slane %v1074, 1
        %v1259 = vsel %vm1196, %v1257, %v1258
        %v1260 = vrot.slane %v1160, 1
        %v1261 = vsel %vm1196, %v1258, %v1260
        %v1262 = vrot.slane %v1145, 1
        %v1263 = vrot.slane %v1077, 1
        %v1264 = vsel %vm1196, %v1262, %v1263
        %v1265 = vrot.slane %v1161, 1
        %v1266 = vsel %vm1196, %v1263, %v1265
        %v1267 = vrot.slane %v1146, 1
        %v1268 = vrot.slane %v1080, 1
        %v1269 = vsel %vm1196, %v1267, %v1268
        %v1270 = vrot.slane %v1162, 1
        %v1271 = vsel %vm1196, %v1268, %v1270
        %v1272 = vrot.slane %v1147, 1
        %v1273 = vrot.slane %v1083, 1
        %v1274 = vsel %vm1196, %v1272, %v1273
        %v1275 = vrot.slane %v1163, 1
        %v1276 = vsel %vm1196, %v1273, %v1275
        %v1309 = vmax.f32 %v1132, %v1199
        %v1310 = vmax.f32 %v1038, %v1201
        %v1311 = vmax.f32 %v1133, %v1204
        %v1312 = vmax.f32 %v1041, %v1206
        %v1313 = vmax.f32 %v1134, %v1209
        %v1314 = vmax.f32 %v1044, %v1211
        %v1315 = vmax.f32 %v1135, %v1214
        %v1316 = vmax.f32 %v1047, %v1216
        %v1317 = vmax.f32 %v1136, %v1219
        %v1318 = vmax.f32 %v1050, %v1221
        %v1319 = vmax.f32 %v1137, %v1224
        %v1320 = vmax.f32 %v1053, %v1226
        %v1321 = vmax.f32 %v1138, %v1229
        %v1322 = vmax.f32 %v1056, %v1231
        %v1323 = vmax.f32 %v1139, %v1234
        %v1324 = vmax.f32 %v1059, %v1236
        %v1325 = vmax.f32 %v1140, %v1239
        %v1326 = vmax.f32 %v1062, %v1241
        %v1327 = vmax.f32 %v1141, %v1244
        %v1328 = vmax.f32 %v1065, %v1246
        %v1329 = vmax.f32 %v1142, %v1249
        %v1330 = vmax.f32 %v1068, %v1251
        %v1331 = vmax.f32 %v1143, %v1254
        %v1332 = vmax.f32 %v1071, %v1256
        %v1333 = vmax.f32 %v1144, %v1259
        %v1334 = vmax.f32 %v1074, %v1261
        %v1335 = vmax.f32 %v1145, %v1264
        %v1336 = vmax.f32 %v1077, %v1266
        %v1337 = vmax.f32 %v1146, %v1269
        %v1338 = vmax.f32 %v1080, %v1271
        %v1339 = vmax.f32 %v1147, %v1274
        %v1340 = vmax.f32 %v1083, %v1276
        %vm1341 = vcmask 1045504
        %v1342 = vrot.slane %v1132, 2
        %v1343 = vrot.slane %v1038, 2
        %v1344 = vsel %vm1341, %v1342, %v1343
        %v1345 = vrot.slane %v1148, 2
        %v1346 = vsel %vm1341, %v1343, %v1345
        %v1347 = vrot.slane %v1133, 2
        %v1348 = vrot.slane %v1041, 2
        %v1349 = vsel %vm1341, %v1347, %v1348
        %v1350 = vrot.slane %v1149, 2
        %v1351 = vsel %vm1341, %v1348, %v1350
        %v1352 = vrot.slane %v1134, 2
        %v1353 = vrot.slane %v1044, 2
        %v1354 = vsel %vm1341, %v1352, %v1353
        %v1355 = vrot.slane %v1150, 2
        %v1356 = vsel %vm1341, %v1353, %v1355
        %v1357 = vrot.slane %v1135, 2
        %v1358 = vrot.slane %v1047, 2
        %v1359 = vsel %vm1341, %v1357, %v1358
        %v1360 = vrot.slane %v1151, 2
        %v1361 = vsel %vm1341, %v1358, %v1360
        %v1362 = vrot.slane %v1136, 2
        %v1363 = vrot.slane %v1050, 2
        %v1364 = vsel %vm1341, %v1362, %v1363
        %v1365 = vrot.slane %v1152, 2
        %v1366 = vsel %vm1341, %v1363, %v1365
        %v1367 = vrot.slane %v1137, 2
        %v1368 = vrot.slane %v1053, 2
        %v1369 = vsel %vm1341, %v1367, %v1368
        %v1370 = vrot.slane %v1153, 2
        %v1371 = vsel %vm1341, %v1368, %v1370
        %v1372 = vrot.slane %v1138, 2
        %v1373 = vrot.slane %v1056, 2
        %v1374 = vsel %vm1341, %v1372, %v1373
        %v1375 = vrot.slane %v1154, 2
        %v1376 = vsel %vm1341, %v1373, %v1375
        %v1377 = vrot.slane %v1139, 2
        %v1378 = vrot.slane %v1059, 2
        %v1379 = vsel %vm1341, %v1377, %v1378
        %v1380 = vrot.slane %v1155, 2
        %v1381 = vsel %vm1341, %v1378, %v1380
        %v1382 = vrot.slane %v1140, 2
        %v1383 = vrot.slane %v1062, 2
        %v1384 = vsel %vm1341, %v1382, %v1383
        %v1385 = vrot.slane %v1156, 2
        %v1386 = vsel %vm1341, %v1383, %v1385
        %v1387 = vrot.slane %v1141, 2
        %v1388 = vrot.slane %v1065, 2
        %v1389 = vsel %vm1341, %v1387, %v1388
        %v1390 = vrot.slane %v1157, 2
        %v1391 = vsel %vm1341, %v1388, %v1390
        %v1392 = vrot.slane %v1142, 2
        %v1393 = vrot.slane %v1068, 2
        %v1394 = vsel %vm1341, %v1392, %v1393
        %v1395 = vrot.slane %v1158, 2
        %v1396 = vsel %vm1341, %v1393, %v1395
        %v1397 = vrot.slane %v1143, 2
        %v1398 = vrot.slane %v1071, 2
        %v1399 = vsel %vm1341, %v1397, %v1398
        %v1400 = vrot.slane %v1159, 2
        %v1401 = vsel %vm1341, %v1398, %v1400
        %v1402 = vrot.slane %v1144, 2
        %v1403 = vrot.slane %v1074, 2
        %v1404 = vsel %vm1341, %v1402, %v1403
        %v1405 = vrot.slane %v1160, 2
        %v1406 = vsel %vm1341, %v1403, %v1405
        %v1407 = vrot.slane %v1145, 2
        %v1408 = vrot.slane %v1077, 2
        %v1409 = vsel %vm1341, %v1407, %v1408
        %v1410 = vrot.slane %v1161, 2
        %v1411 = vsel %vm1341, %v1408, %v1410
        %v1412 = vrot.slane %v1146, 2
        %v1413 = vrot.slane %v1080, 2
        %v1414 = vsel %vm1341, %v1412, %v1413
        %v1415 = vrot.slane %v1162, 2
        %v1416 = vsel %vm1341, %v1413, %v1415
        %v1417 = vrot.slane %v1147, 2
        %v1418 = vrot.slane %v1083, 2
        %v1419 = vsel %vm1341, %v1417, %v1418
        %v1420 = vrot.slane %v1163, 2
        %v1421 = vsel %vm1341, %v1418, %v1420
        %v1454 = vmax.f32 %v1309, %v1344
        %v1455 = vmax.f32 %v1310, %v1346
        %v1456 = vmax.f32 %v1311, %v1349
        %v1457 = vmax.f32 %v1312, %v1351
        %v1458 = vmax.f32 %v1313, %v1354
        %v1459 = vmax.f32 %v1314, %v1356
        %v1460 = vmax.f32 %v1315, %v1359
        %v1461 = vmax.f32 %v1316, %v1361
        %v1462 = vmax.f32 %v1317, %v1364
        %v1463 = vmax.f32 %v1318, %v1366
        %v1464 = vmax.f32 %v1319, %v1369
        %v1465 = vmax.f32 %v1320, %v1371
        %v1466 = vmax.f32 %v1321, %v1374
        %v1467 = vmax.f32 %v1322, %v1376
        %v1468 = vmax.f32 %v1323, %v1379
        %v1469 = vmax.f32 %v1324, %v1381
        %v1470 = vmax.f32 %v1325, %v1384
        %v1471 = vmax.f32 %v1326, %v1386
        %v1472 = vmax.f32 %v1327, %v1389
        %v1473 = vmax.f32 %v1328, %v1391
        %v1474 = vmax.f32 %v1329, %v1394
        %v1475 = vmax.f32 %v1330, %v1396
        %v1476 = vmax.f32 %v1331, %v1399
        %v1477 = vmax.f32 %v1332, %v1401
        %v1478 = vmax.f32 %v1333, %v1404
        %v1479 = vmax.f32 %v1334, %v1406
        %v1480 = vmax.f32 %v1335, %v1409
        %v1481 = vmax.f32 %v1336, %v1411
        %v1482 = vmax.f32 %v1337, %v1414
        %v1483 = vmax.f32 %v1338, %v1416
        %v1484 = vmax.f32 %v1339, %v1419
        %v1485 = vmax.f32 %v1340, %v1421
        %vm1486 = vcmask 1044480
        %v1487 = vrot.slane %v1132, 3
        %v1488 = vrot.slane %v1038, 3
        %v1489 = vsel %vm1486, %v1487, %v1488
        %v1490 = vrot.slane %v1148, 3
        %v1491 = vsel %vm1486, %v1488, %v1490
        %v1492 = vrot.slane %v1133, 3
        %v1493 = vrot.slane %v1041, 3
        %v1494 = vsel %vm1486, %v1492, %v1493
        %v1495 = vrot.slane %v1149, 3
        %v1496 = vsel %vm1486, %v1493, %v1495
        %v1497 = vrot.slane %v1134, 3
        %v1498 = vrot.slane %v1044, 3
        %v1499 = vsel %vm1486, %v1497, %v1498
        %v1500 = vrot.slane %v1150, 3
        %v1501 = vsel %vm1486, %v1498, %v1500
        %v1502 = vrot.slane %v1135, 3
        %v1503 = vrot.slane %v1047, 3
        %v1504 = vsel %vm1486, %v1502, %v1503
        %v1505 = vrot.slane %v1151, 3
        %v1506 = vsel %vm1486, %v1503, %v1505
        %v1507 = vrot.slane %v1136, 3
        %v1508 = vrot.slane %v1050, 3
        %v1509 = vsel %vm1486, %v1507, %v1508
        %v1510 = vrot.slane %v1152, 3
        %v1511 = vsel %vm1486, %v1508, %v1510
        %v1512 = vrot.slane %v1137, 3
        %v1513 = vrot.slane %v1053, 3
        %v1514 = vsel %vm1486, %v1512, %v1513
        %v1515 = vrot.slane %v1153, 3
        %v1516 = vsel %vm1486, %v1513, %v1515
        %v1517 = vrot.slane %v1138, 3
        %v1518 = vrot.slane %v1056, 3
        %v1519 = vsel %vm1486, %v1517, %v1518
        %v1520 = vrot.slane %v1154, 3
        %v1521 = vsel %vm1486, %v1518, %v1520
        %v1522 = vrot.slane %v1139, 3
        %v1523 = vrot.slane %v1059, 3
        %v1524 = vsel %vm1486, %v1522, %v1523
        %v1525 = vrot.slane %v1155, 3
        %v1526 = vsel %vm1486, %v1523, %v1525
        %v1527 = vrot.slane %v1140, 3
        %v1528 = vrot.slane %v1062, 3
        %v1529 = vsel %vm1486, %v1527, %v1528
        %v1530 = vrot.slane %v1156, 3
        %v1531 = vsel %vm1486, %v1528, %v1530
        %v1532 = vrot.slane %v1141, 3
        %v1533 = vrot.slane %v1065, 3
        %v1534 = vsel %vm1486, %v1532, %v1533
        %v1535 = vrot.slane %v1157, 3
        %v1536 = vsel %vm1486, %v1533, %v1535
        %v1537 = vrot.slane %v1142, 3
        %v1538 = vrot.slane %v1068, 3
        %v1539 = vsel %vm1486, %v1537, %v1538
        %v1540 = vrot.slane %v1158, 3
        %v1541 = vsel %vm1486, %v1538, %v1540
        %v1542 = vrot.slane %v1143, 3
        %v1543 = vrot.slane %v1071, 3
        %v1544 = vsel %vm1486, %v1542, %v1543
        %v1545 = vrot.slane %v1159, 3
        %v1546 = vsel %vm1486, %v1543, %v1545
        %v1547 = vrot.slane %v1144, 3
        %v1548 = vrot.slane %v1074, 3
        %v1549 = vsel %vm1486, %v1547, %v1548
        %v1550 = vrot.slane %v1160, 3
        %v1551 = vsel %vm1486, %v1548, %v1550
        %v1552 = vrot.slane %v1145, 3
        %v1553 = vrot.slane %v1077, 3
        %v1554 = vsel %vm1486, %v1552, %v1553
        %v1555 = vrot.slane %v1161, 3
        %v1556 = vsel %vm1486, %v1553, %v1555
        %v1557 = vrot.slane %v1146, 3
        %v1558 = vrot.slane %v1080, 3
        %v1559 = vsel %vm1486, %v1557, %v1558
        %v1560 = vrot.slane %v1162, 3
        %v1561 = vsel %vm1486, %v1558, %v1560
        %v1562 = vrot.slane %v1147, 3
        %v1563 = vrot.slane %v1083, 3
        %v1564 = vsel %vm1486, %v1562, %v1563
        %v1565 = vrot.slane %v1163, 3
        %v1566 = vsel %vm1486, %v1563, %v1565
        %v1599 = vmax.f32 %v1454, %v1489
        %v1600 = vmax.f32 %v1455, %v1491
        %v1601 = vmax.f32 %v1456, %v1494
        %v1602 = vmax.f32 %v1457, %v1496
        %v1603 = vmax.f32 %v1458, %v1499
        %v1604 = vmax.f32 %v1459, %v1501
        %v1605 = vmax.f32 %v1460, %v1504
        %v1606 = vmax.f32 %v1461, %v1506
        %v1607 = vmax.f32 %v1462, %v1509
        %v1608 = vmax.f32 %v1463, %v1511
        %v1609 = vmax.f32 %v1464, %v1514
        %v1610 = vmax.f32 %v1465, %v1516
        %v1611 = vmax.f32 %v1466, %v1519
        %v1612 = vmax.f32 %v1467, %v1521
        %v1613 = vmax.f32 %v1468, %v1524
        %v1614 = vmax.f32 %v1469, %v1526
        %v1615 = vmax.f32 %v1470, %v1529
        %v1616 = vmax.f32 %v1471, %v1531
        %v1617 = vmax.f32 %v1472, %v1534
        %v1618 = vmax.f32 %v1473, %v1536
        %v1619 = vmax.f32 %v1474, %v1539
        %v1620 = vmax.f32 %v1475, %v1541
        %v1621 = vmax.f32 %v1476, %v1544
        %v1622 = vmax.f32 %v1477, %v1546
        %v1623 = vmax.f32 %v1478, %v1549
        %v1624 = vmax.f32 %v1479, %v1551
        %v1625 = vmax.f32 %v1480, %v1554
        %v1626 = vmax.f32 %v1481, %v1556
        %v1627 = vmax.f32 %v1482, %v1559
        %v1628 = vmax.f32 %v1483, %v1561
        %v1629 = vmax.f32 %v1484, %v1564
        %v1630 = vmax.f32 %v1485, %v1566
        %vm1631 = vcmask 1043456
        %v1632 = vrot.slane %v1132, 4
        %v1633 = vrot.slane %v1038, 4
        %v1634 = vsel %vm1631, %v1632, %v1633
        %v1635 = vrot.slane %v1148, 4
        %v1636 = vsel %vm1631, %v1633, %v1635
        %v1637 = vrot.slane %v1133, 4
        %v1638 = vrot.slane %v1041, 4
        %v1639 = vsel %vm1631, %v1637, %v1638
        %v1640 = vrot.slane %v1149, 4
        %v1641 = vsel %vm1631, %v1638, %v1640
        %v1642 = vrot.slane %v1134, 4
        %v1643 = vrot.slane %v1044, 4
        %v1644 = vsel %vm1631, %v1642, %v1643
        %v1645 = vrot.slane %v1150, 4
        %v1646 = vsel %vm1631, %v1643, %v1645
        %v1647 = vrot.slane %v1135, 4
        %v1648 = vrot.slane %v1047, 4
        %v1649 = vsel %vm1631, %v1647, %v1648
        %v1650 = vrot.slane %v1151, 4
        %v1651 = vsel %vm1631, %v1648, %v1650
        %v1652 = vrot.slane %v1136, 4
        %v1653 = vrot.slane %v1050, 4
        %v1654 = vsel %vm1631, %v1652, %v1653
        %v1655 = vrot.slane %v1152, 4
        %v1656 = vsel %vm1631, %v1653, %v1655
        %v1657 = vrot.slane %v1137, 4
        %v1658 = vrot.slane %v1053, 4
        %v1659 = vsel %vm1631, %v1657, %v1658
        %v1660 = vrot.slane %v1153, 4
        %v1661 = vsel %vm1631, %v1658, %v1660
        %v1662 = vrot.slane %v1138, 4
        %v1663 = vrot.slane %v1056, 4
        %v1664 = vsel %vm1631, %v1662, %v1663
        %v1665 = vrot.slane %v1154, 4
        %v1666 = vsel %vm1631, %v1663, %v1665
        %v1667 = vrot.slane %v1139, 4
        %v1668 = vrot.slane %v1059, 4
        %v1669 = vsel %vm1631, %v1667, %v1668
        %v1670 = vrot.slane %v1155, 4
        %v1671 = vsel %vm1631, %v1668, %v1670
        %v1672 = vrot.slane %v1140, 4
        %v1673 = vrot.slane %v1062, 4
        %v1674 = vsel %vm1631, %v1672, %v1673
        %v1675 = vrot.slane %v1156, 4
        %v1676 = vsel %vm1631, %v1673, %v1675
        %v1677 = vrot.slane %v1141, 4
        %v1678 = vrot.slane %v1065, 4
        %v1679 = vsel %vm1631, %v1677, %v1678
        %v1680 = vrot.slane %v1157, 4
        %v1681 = vsel %vm1631, %v1678, %v1680
        %v1682 = vrot.slane %v1142, 4
        %v1683 = vrot.slane %v1068, 4
        %v1684 = vsel %vm1631, %v1682, %v1683
        %v1685 = vrot.slane %v1158, 4
        %v1686 = vsel %vm1631, %v1683, %v1685
        %v1687 = vrot.slane %v1143, 4
        %v1688 = vrot.slane %v1071, 4
        %v1689 = vsel %vm1631, %v1687, %v1688
        %v1690 = vrot.slane %v1159, 4
        %v1691 = vsel %vm1631, %v1688, %v1690
        %v1692 = vrot.slane %v1144, 4
        %v1693 = vrot.slane %v1074, 4
        %v1694 = vsel %vm1631, %v1692, %v1693
        %v1695 = vrot.slane %v1160, 4
        %v1696 = vsel %vm1631, %v1693, %v1695
        %v1697 = vrot.slane %v1145, 4
        %v1698 = vrot.slane %v1077, 4
        %v1699 = vsel %vm1631, %v1697, %v1698
        %v1700 = vrot.slane %v1161, 4
        %v1701 = vsel %vm1631, %v1698, %v1700
        %v1702 = vrot.slane %v1146, 4
        %v1703 = vrot.slane %v1080, 4
        %v1704 = vsel %vm1631, %v1702, %v1703
        %v1705 = vrot.slane %v1162, 4
        %v1706 = vsel %vm1631, %v1703, %v1705
        %v1707 = vrot.slane %v1147, 4
        %v1708 = vrot.slane %v1083, 4
        %v1709 = vsel %vm1631, %v1707, %v1708
        %v1710 = vrot.slane %v1163, 4
        %v1711 = vsel %vm1631, %v1708, %v1710
        %v1744 = vmax.f32 %v1599, %v1634
        %v1745 = vmax.f32 %v1600, %v1636
        %v1746 = vmax.f32 %v1601, %v1639
        %v1747 = vmax.f32 %v1602, %v1641
        %v1748 = vmax.f32 %v1603, %v1644
        %v1749 = vmax.f32 %v1604, %v1646
        %v1750 = vmax.f32 %v1605, %v1649
        %v1751 = vmax.f32 %v1606, %v1651
        %v1752 = vmax.f32 %v1607, %v1654
        %v1753 = vmax.f32 %v1608, %v1656
        %v1754 = vmax.f32 %v1609, %v1659
        %v1755 = vmax.f32 %v1610, %v1661
        %v1756 = vmax.f32 %v1611, %v1664
        %v1757 = vmax.f32 %v1612, %v1666
        %v1758 = vmax.f32 %v1613, %v1669
        %v1759 = vmax.f32 %v1614, %v1671
        %v1760 = vmax.f32 %v1615, %v1674
        %v1761 = vmax.f32 %v1616, %v1676
        %v1762 = vmax.f32 %v1617, %v1679
        %v1763 = vmax.f32 %v1618, %v1681
        %v1764 = vmax.f32 %v1619, %v1684
        %v1765 = vmax.f32 %v1620, %v1686
        %v1766 = vmax.f32 %v1621, %v1689
        %v1767 = vmax.f32 %v1622, %v1691
        %v1768 = vmax.f32 %v1623, %v1694
        %v1769 = vmax.f32 %v1624, %v1696
        %v1770 = vmax.f32 %v1625, %v1699
        %v1771 = vmax.f32 %v1626, %v1701
        %v1772 = vmax.f32 %v1627, %v1704
        %v1773 = vmax.f32 %v1628, %v1706
        %v1774 = vmax.f32 %v1629, %v1709
        %v1775 = vmax.f32 %v1630, %v1711
        %v1776 = vmax.f32 %v1744, %v1746
        %v1777 = vmax.f32 %v1745, %v1747
        %v1778 = vmax.f32 %v1746, %v1748
        %v1779 = vmax.f32 %v1747, %v1749
        %v1780 = vmax.f32 %v1748, %v1750
        %v1781 = vmax.f32 %v1749, %v1751
        %v1782 = vmax.f32 %v1750, %v1752
        %v1783 = vmax.f32 %v1751, %v1753
        %v1784 = vmax.f32 %v1752, %v1754
        %v1785 = vmax.f32 %v1753, %v1755
        %v1786 = vmax.f32 %v1754, %v1756
        %v1787 = vmax.f32 %v1755, %v1757
        %v1788 = vmax.f32 %v1756, %v1758
        %v1789 = vmax.f32 %v1757, %v1759
        %v1790 = vmax.f32 %v1758, %v1760
        %v1791 = vmax.f32 %v1759, %v1761
        %v1792 = vmax.f32 %v1760, %v1762
        %v1793 = vmax.f32 %v1761, %v1763
        %v1794 = vmax.f32 %v1762, %v1764
        %v1795 = vmax.f32 %v1763, %v1765
        %v1796 = vmax.f32 %v1764, %v1766
        %v1797 = vmax.f32 %v1765, %v1767
        %v1798 = vmax.f32 %v1766, %v1768
        %v1799 = vmax.f32 %v1767, %v1769
        %v1800 = vmax.f32 %v1768, %v1770
        %v1801 = vmax.f32 %v1769, %v1771
        %v1802 = vmax.f32 %v1770, %v1772
        %v1803 = vmax.f32 %v1771, %v1773
        %v1804 = vmax.f32 %v1776, %v1748
        %v1805 = vmax.f32 %v1777, %v1749
        %v1806 = vmax.f32 %v1778, %v1750
        %v1807 = vmax.f32 %v1779, %v1751
        %v1808 = vmax.f32 %v1780, %v1752
        %v1809 = vmax.f32 %v1781, %v1753
        %v1810 = vmax.f32 %v1782, %v1754
        %v1811 = vmax.f32 %v1783, %v1755
        %v1812 = vmax.f32 %v1784, %v1756
        %v1813 = vmax.f32 %v1785, %v1757
        %v1814 = vmax.f32 %v1786, %v1758
        %v1815 = vmax.f32 %v1787, %v1759
        %v1816 = vmax.f32 %v1788, %v1760
        %v1817 = vmax.f32 %v1789, %v1761
        %v1818 = vmax.f32 %v1790, %v1762
        %v1819 = vmax.f32 %v1791, %v1763
        %v1820 = vmax.f32 %v1792, %v1764
        %v1821 = vmax.f32 %v1793, %v1765
        %v1822 = vmax.f32 %v1794, %v1766
        %v1823 = vmax.f32 %v1795, %v1767
        %v1824 = vmax.f32 %v1796, %v1768
        %v1825 = vmax.f32 %v1797, %v1769
        %v1826 = vmax.f32 %v1798, %v1770
        %v1827 = vmax.f32 %v1799, %v1771
        %v1828 = vmax.f32 %v1800, %v1772
        %v1829 = vmax.f32 %v1801, %v1773
        %v1830 = vmax.f32 %v1802, %v1774
        %v1831 = vmax.f32 %v1803, %v1775
        %v1832 = vmax.f32 %v1804, %v1750
        %v1833 = vmax.f32 %v1805, %v1751
        %v1834 = vmax.f32 %v1806, %v1752
        %v1835 = vmax.f32 %v1807, %v1753
        %v1836 = vmax.f32 %v1808, %v1754
        %v1837 = vmax.f32 %v1809, %v1755
        %v1838 = vmax.f32 %v1810, %v1756
        %v1839 = vmax.f32 %v1811, %v1757
        %v1840 = vmax.f32 %v1812, %v1758
        %v1841 = vmax.f32 %v1813, %v1759
        %v1842 = vmax.f32 %v1814, %v1760
        %v1843 = vmax.f32 %v1815, %v1761
        %v1844 = vmax.f32 %v1816, %v1762
        %v1845 = vmax.f32 %v1817, %v1763
        %v1846 = vmax.f32 %v1818, %v1764
        %v1847 = vmax.f32 %v1819, %v1765
        %v1848 = vmax.f32 %v1820, %v1766
        %v1849 = vmax.f32 %v1821, %v1767
        %v1850 = vmax.f32 %v1822, %v1768
        %v1851 = vmax.f32 %v1823, %v1769
        %v1852 = vmax.f32 %v1824, %v1770
        %v1853 = vmax.f32 %v1825, %v1771
        %v1854 = vmax.f32 %v1826, %v1772
        %v1855 = vmax.f32 %v1827, %v1773
        %v1856 = vmax.f32 %v1828, %v1774
        %v1857 = vmax.f32 %v1829, %v1775
        %v1858 = vmax.f32 %v1832, %v1752
        %v1859 = vmax.f32 %v1833, %v1753
        %v1860 = vmax.f32 %v1834, %v1754
        %v1861 = vmax.f32 %v1835, %v1755
        %v1862 = vmax.f32 %v1836, %v1756
        %v1863 = vmax.f32 %v1837, %v1757
        %v1864 = vmax.f32 %v1838, %v1758
        %v1865 = vmax.f32 %v1839, %v1759
        %v1866 = vmax.f32 %v1840, %v1760
        %v1867 = vmax.f32 %v1841, %v1761
        %v1868 = vmax.f32 %v1842, %v1762
        %v1869 = vmax.f32 %v1843, %v1763
        %v1870 = vmax.f32 %v1844, %v1764
        %v1871 = vmax.f32 %v1845, %v1765
        %v1872 = vmax.f32 %v1846, %v1766
        %v1873 = vmax.f32 %v1847, %v1767
        %v1874 = vmax.f32 %v1848, %v1768
        %v1875 = vmax.f32 %v1849, %v1769
        %v1876 = vmax.f32 %v1850, %v1770
        %v1877 = vmax.f32 %v1851, %v1771
        %v1878 = vmax.f32 %v1852, %v1772
        %v1879 = vmax.f32 %v1853, %v1773
        %v1880 = vmax.f32 %v1854, %v1774
        %v1881 = vmax.f32 %v1855, %v1775
        %v1914 = vrot.slane %v1804, 6
        %v1915 = vrot.slane %v1805, 6
        %v1916 = vsel %vm537, %v1914, %v1915
        %v1917 = vrot.slane %v1832, 6
        %v1918 = vrot.slane %v1833, 6
        %v1919 = vsel %vm537, %v1917, %v1918
        %v1920 = vrot.slane %v1858, 6
        %v1921 = vrot.slane %v1859, 6
        %v1922 = vsel %vm537, %v1920, %v1921
        %v1923 = vrot.slane %v1860, 6
        %v1924 = vrot.slane %v1861, 6
        %v1925 = vsel %vm537, %v1923, %v1924
        %v1926 = vrot.slane %v1862, 6
        %v1927 = vrot.slane %v1863, 6
        %v1928 = vsel %vm537, %v1926, %v1927
        %v1929 = vrot.slane %v1864, 6
        %v1930 = vrot.slane %v1865, 6
        %v1931 = vsel %vm537, %v1929, %v1930
        %v1932 = vrot.slane %v1866, 6
        %v1933 = vrot.slane %v1867, 6
        %v1934 = vsel %vm537, %v1932, %v1933
        %v1935 = vrot.slane %v1868, 6
        %v1936 = vrot.slane %v1869, 6
        %v1937 = vsel %vm537, %v1935, %v1936
        %v1938 = vrot.slane %v1870, 6
        %v1939 = vrot.slane %v1871, 6
        %v1940 = vsel %vm537, %v1938, %v1939
        %v1941 = vrot.slane %v1872, 6
        %v1942 = vrot.slane %v1873, 6
        %v1943 = vsel %vm537, %v1941, %v1942
        %v1944 = vrot.slane %v1874, 6
        %v1945 = vrot.slane %v1875, 6
        %v1946 = vsel %vm537, %v1944, %v1945
        %v1947 = vrot.slane %v1876, 6
        %v1948 = vrot.slane %v1877, 6
        %v1949 = vsel %vm537, %v1947, %v1948
        %v1950 = vrot.slane %v1878, 6
        %v1951 = vrot.slane %v1879, 6
        %v1952 = vsel %vm537, %v1950, %v1951
        %v1953 = vrot.slane %v1880, 6
        %v1954 = vrot.slane %v1881, 6
        %v1955 = vsel %vm537, %v1953, %v1954
        %v1956 = vrot.slane %v1856, 6
        %v1957 = vrot.slane %v1857, 6
        %v1958 = vsel %vm537, %v1956, %v1957
        %v1959 = vrot.slane %v1830, 6
        %v1960 = vrot.slane %v1831, 6
        %v1961 = vsel %vm537, %v1959, %v1960
        %v2010 = vsel %vm537, -inf, %v1914
        %v2011 = vsel %vm537, -inf, %v1917
        %v2012 = vsel %vm537, -inf, %v1920
        %v2013 = vsel %vm537, -inf, %v1923
        %v2014 = vsel %vm537, -inf, %v1926
        %v2015 = vsel %vm537, -inf, %v1929
        %v2016 = vsel %vm537, -inf, %v1932
        %v2017 = vsel %vm537, -inf, %v1935
        %v2018 = vsel %vm537, -inf, %v1938
        %v2019 = vsel %vm537, -inf, %v1941
        %v2020 = vsel %vm537, -inf, %v1944
        %v2021 = vsel %vm537, -inf, %v1947
        %v2022 = vsel %vm537, -inf, %v1950
        %v2023 = vsel %vm537, -inf, %v1953
        %v2024 = vsel %vm537, -inf, %v1956
        %v2025 = vsel %vm537, -inf, %v1959
        %v2026 = vsel %vm537, %v1915, -inf
        %v2027 = vsel %vm537, %v1918, -inf
        %v2028 = vsel %vm537, %v1921, -inf
        %v2029 = vsel %vm537, %v1924, -inf
        %v2030 = vsel %vm537, %v1927, -inf
        %v2031 = vsel %vm537, %v1930, -inf
        %v2032 = vsel %vm537, %v1933, -inf
        %v2033 = vsel %vm537, %v1936, -inf
        %v2034 = vsel %vm537, %v1939, -inf
        %v2035 = vsel %vm537, %v1942, -inf
        %v2036 = vsel %vm537, %v1945, -inf
        %v2037 = vsel %vm537, %v1948, -inf
        %v2038 = vsel %vm537, %v1951, -inf
        %v2039 = vsel %vm537, %v1954, -inf
        %v2040 = vsel %vm537, %v1957, -inf
        %v2041 = vsel %vm537, %v1960, -inf
        %v2074 = vrot.slane %v2010, 1
        %v2075 = vrot.slane %v1916, 1
        %v2076 = vsel %vm1196, %v2074, %v2075
        %v2077 = vrot.slane %v2026, 1
        %v2078 = vsel %vm1196, %v2075, %v2077
        %v2079 = vrot.slane %v2011, 1
        %v2080 = vrot.slane %v1919, 1
        %v2081 = vsel %vm1196, %v2079, %v2080
        %v2082 = vrot.slane %v2027, 1
        %v2083 = vsel %vm1196, %v2080, %v2082
        %v2084 = vrot.slane %v2012, 1
        %v2085 = vrot.slane %v1922, 1
        %v2086 = vsel %vm1196, %v2084, %v2085
        %v2087 = vrot.slane %v2028, 1
        %v2088 = vsel %vm1196, %v2085, %v2087
        %v2089 = vrot.slane %v2013, 1
        %v2090 = vrot.slane %v1925, 1
        %v2091 = vsel %vm1196, %v2089, %v2090
        %v2092 = vrot.slane %v2029, 1
        %v2093 = vsel %vm1196, %v2090, %v2092
        %v2094 = vrot.slane %v2014, 1
        %v2095 = vrot.slane %v1928, 1
        %v2096 = vsel %vm1196, %v2094, %v2095
        %v2097 = vrot.slane %v2030, 1
        %v2098 = vsel %vm1196, %v2095, %v2097
        %v2099 = vrot.slane %v2015, 1
        %v2100 = vrot.slane %v1931, 1
        %v2101 = vsel %vm1196, %v2099, %v2100
        %v2102 = vrot.slane %v2031, 1
        %v2103 = vsel %vm1196, %v2100, %v2102
        %v2104 = vrot.slane %v2016, 1
        %v2105 = vrot.slane %v1934, 1
        %v2106 = vsel %vm1196, %v2104, %v2105
        %v2107 = vrot.slane %v2032, 1
        %v2108 = vsel %vm1196, %v2105, %v2107
        %v2109 = vrot.slane %v2017, 1
        %v2110 = vrot.slane %v1937, 1
        %v2111 = vsel %vm1196, %v2109, %v2110
        %v2112 = vrot.slane %v2033, 1
        %v2113 = vsel %vm1196, %v2110, %v2112
        %v2114 = vrot.slane %v2018, 1
        %v2115 = vrot.slane %v1940, 1
        %v2116 = vsel %vm1196, %v2114, %v2115
        %v2117 = vrot.slane %v2034, 1
        %v2118 = vsel %vm1196, %v2115, %v2117
        %v2119 = vrot.slane %v2019, 1
        %v2120 = vrot.slane %v1943, 1
        %v2121 = vsel %vm1196, %v2119, %v2120
        %v2122 = vrot.slane %v2035, 1
        %v2123 = vsel %vm1196, %v2120, %v2122
        %v2124 = vrot.slane %v2020, 1
        %v2125 = vrot.slane %v1946, 1
        %v2126 = vsel %vm1196, %v2124, %v2125
        %v2127 = vrot.slane %v2036, 1
        %v2128 = vsel %vm1196, %v2125, %v2127
        %v2129 = vrot.slane %v2021, 1
        %v2130 = vrot.slane %v1949, 1
        %v2131 = vsel %vm1196, %v2129, %v2130
        %v2132 = vrot.slane %v2037, 1
        %v2133 = vsel %vm1196, %v2130, %v2132
        %v2134 = vrot.slane %v2022, 1
        %v2135 = vrot.slane %v1952, 1
        %v2136 = vsel %vm1196, %v2134, %v2135
        %v2137 = vrot.slane %v2038, 1
        %v2138 = vsel %vm1196, %v2135, %v2137
        %v2139 = vrot.slane %v2023, 1
        %v2140 = vrot.slane %v1955, 1
        %v2141 = vsel %vm1196, %v2139, %v2140
        %v2142 = vrot.slane %v2039, 1
        %v2143 = vsel %vm1196, %v2140, %v2142
        %v2144 = vrot.slane %v2024, 1
        %v2145 = vrot.slane %v1958, 1
        %v2146 = vsel %vm1196, %v2144, %v2145
        %v2147 = vrot.slane %v2040, 1
        %v2148 = vsel %vm1196, %v2145, %v2147
        %v2149 = vrot.slane %v2025, 1
        %v2150 = vrot.slane %v1961, 1
        %v2151 = vsel %vm1196, %v2149, %v2150
        %v2152 = vrot.slane %v2041, 1
        %v2153 = vsel %vm1196, %v2150, %v2152
        %v2186 = vmax.f32 %v2010, %v2076
        %v2187 = vmax.f32 %v1916, %v2078
        %v2188 = vmax.f32 %v2011, %v2081
        %v2189 = vmax.f32 %v1919, %v2083
        %v2190 = vmax.f32 %v2012, %v2086
        %v2191 = vmax.f32 %v1922, %v2088
        %v2192 = vmax.f32 %v2013, %v2091
        %v2193 = vmax.f32 %v1925, %v2093
        %v2194 = vmax.f32 %v2014, %v2096
        %v2195 = vmax.f32 %v1928, %v2098
        %v2196 = vmax.f32 %v2015, %v2101
        %v2197 = vmax.f32 %v1931, %v2103
        %v2198 = vmax.f32 %v2016, %v2106
        %v2199 = vmax.f32 %v1934, %v2108
        %v2200 = vmax.f32 %v2017, %v2111
        %v2201 = vmax.f32 %v1937, %v2113
        %v2202 = vmax.f32 %v2018, %v2116
        %v2203 = vmax.f32 %v1940, %v2118
        %v2204 = vmax.f32 %v2019, %v2121
        %v2205 = vmax.f32 %v1943, %v2123
        %v2206 = vmax.f32 %v2020, %v2126
        %v2207 = vmax.f32 %v1946, %v2128
        %v2208 = vmax.f32 %v2021, %v2131
        %v2209 = vmax.f32 %v1949, %v2133
        %v2210 = vmax.f32 %v2022, %v2136
        %v2211 = vmax.f32 %v1952, %v2138
        %v2212 = vmax.f32 %v2023, %v2141
        %v2213 = vmax.f32 %v1955, %v2143
        %v2214 = vmax.f32 %v2024, %v2146
        %v2215 = vmax.f32 %v1958, %v2148
        %v2216 = vmax.f32 %v2025, %v2151
        %v2217 = vmax.f32 %v1961, %v2153
        %v2218 = vrot.slane %v2010, 2
        %v2219 = vrot.slane %v1916, 2
        %v2220 = vsel %vm1341, %v2218, %v2219
        %v2221 = vrot.slane %v2026, 2
        %v2222 = vsel %vm1341, %v2219, %v2221
        %v2223 = vrot.slane %v2011, 2
        %v2224 = vrot.slane %v1919, 2
        %v2225 = vsel %vm1341, %v2223, %v2224
        %v2226 = vrot.slane %v2027, 2
        %v2227 = vsel %vm1341, %v2224, %v2226
        %v2228 = vrot.slane %v2012, 2
        %v2229 = vrot.slane %v1922, 2
        %v2230 = vsel %vm1341, %v2228, %v2229
        %v2231 = vrot.slane %v2028, 2
        %v2232 = vsel %vm1341, %v2229, %v2231
        %v2233 = vrot.slane %v2013, 2
        %v2234 = vrot.slane %v1925, 2
        %v2235 = vsel %vm1341, %v2233, %v2234
        %v2236 = vrot.slane %v2029, 2
        %v2237 = vsel %vm1341, %v2234, %v2236
        %v2238 = vrot.slane %v2014, 2
        %v2239 = vrot.slane %v1928, 2
        %v2240 = vsel %vm1341, %v2238, %v2239
        %v2241 = vrot.slane %v2030, 2
        %v2242 = vsel %vm1341, %v2239, %v2241
        %v2243 = vrot.slane %v2015, 2
        %v2244 = vrot.slane %v1931, 2
        %v2245 = vsel %vm1341, %v2243, %v2244
        %v2246 = vrot.slane %v2031, 2
        %v2247 = vsel %vm1341, %v2244, %v2246
        %v2248 = vrot.slane %v2016, 2
        %v2249 = vrot.slane %v1934, 2
        %v2250 = vsel %vm1341, %v2248, %v2249
        %v2251 = vrot.slane %v2032, 2
        %v2252 = vsel %vm1341, %v2249, %v2251
        %v2253 = vrot.slane %v2017, 2
        %v2254 = vrot.slane %v1937, 2
        %v2255 = vsel %vm1341, %v2253, %v2254
        %v2256 = vrot.slane %v2033, 2
        %v2257 = vsel %vm1341, %v2254, %v2256
        %v2258 = vrot.slane %v2018, 2
        %v2259 = vrot.slane %v1940, 2
        %v2260 = vsel %vm1341, %v2258, %v2259
        %v2261 = vrot.slane %v2034, 2
        %v2262 = vsel %vm1341, %v2259, %v2261
        %v2263 = vrot.slane %v2019, 2
        %v2264 = vrot.slane %v1943, 2
        %v2265 = vsel %vm1341, %v2263, %v2264
        %v2266 = vrot.slane %v2035, 2
        %v2267 = vsel %vm1341, %v2264, %v2266
        %v2268 = vrot.slane %v2020, 2
        %v2269 = vrot.slane %v1946, 2
        %v2270 = vsel %vm1341, %v2268, %v2269
        %v2271 = vrot.slane %v2036, 2
        %v2272 = vsel %vm1341, %v2269, %v2271
        %v2273 = vrot.slane %v2021, 2
        %v2274 = vrot.slane %v1949, 2
        %v2275 = vsel %vm1341, %v2273, %v2274
        %v2276 = vrot.slane %v2037, 2
        %v2277 = vsel %vm1341, %v2274, %v2276
        %v2278 = vrot.slane %v2022, 2
        %v2279 = vrot.slane %v1952, 2
        %v2280 = vsel %vm1341, %v2278, %v2279
        %v2281 = vrot.slane %v2038, 2
        %v2282 = vsel %vm1341, %v2279, %v2281
        %v2283 = vrot.slane %v2023, 2
        %v2284 = vrot.slane %v1955, 2
        %v2285 = vsel %vm1341, %v2283, %v2284
        %v2286 = vrot.slane %v2039, 2
        %v2287 = vsel %vm1341, %v2284, %v2286
        %v2288 = vrot.slane %v2024, 2
        %v2289 = vrot.slane %v1958, 2
        %v2290 = vsel %vm1341, %v2288, %v2289
        %v2291 = vrot.slane %v2040, 2
        %v2292 = vsel %vm1341, %v2289, %v2291
        %v2293 = vrot.slane %v2025, 2
        %v2294 = vrot.slane %v1961, 2
        %v2295 = vsel %vm1341, %v2293, %v2294
        %v2296 = vrot.slane %v2041, 2
        %v2297 = vsel %vm1341, %v2294, %v2296
        %v2330 = vmax.f32 %v2186, %v2220
        %v2331 = vmax.f32 %v2187, %v2222
        %v2332 = vmax.f32 %v2188, %v2225
        %v2333 = vmax.f32 %v2189, %v2227
        %v2334 = vmax.f32 %v2190, %v2230
        %v2335 = vmax.f32 %v2191, %v2232
        %v2336 = vmax.f32 %v2192, %v2235
        %v2337 = vmax.f32 %v2193, %v2237
        %v2338 = vmax.f32 %v2194, %v2240
        %v2339 = vmax.f32 %v2195, %v2242
        %v2340 = vmax.f32 %v2196, %v2245
        %v2341 = vmax.f32 %v2197, %v2247
        %v2342 = vmax.f32 %v2198, %v2250
        %v2343 = vmax.f32 %v2199, %v2252
        %v2344 = vmax.f32 %v2200, %v2255
        %v2345 = vmax.f32 %v2201, %v2257
        %v2346 = vmax.f32 %v2202, %v2260
        %v2347 = vmax.f32 %v2203, %v2262
        %v2348 = vmax.f32 %v2204, %v2265
        %v2349 = vmax.f32 %v2205, %v2267
        %v2350 = vmax.f32 %v2206, %v2270
        %v2351 = vmax.f32 %v2207, %v2272
        %v2352 = vmax.f32 %v2208, %v2275
        %v2353 = vmax.f32 %v2209, %v2277
        %v2354 = vmax.f32 %v2210, %v2280
        %v2355 = vmax.f32 %v2211, %v2282
        %v2356 = vmax.f32 %v2212, %v2285
        %v2357 = vmax.f32 %v2213, %v2287
        %v2358 = vmax.f32 %v2214, %v2290
        %v2359 = vmax.f32 %v2215, %v2292
        %v2360 = vmax.f32 %v2216, %v2295
        %v2361 = vmax.f32 %v2217, %v2297
        %v2362 = vrot.slane %v2010, 3
        %v2363 = vrot.slane %v1916, 3
        %v2364 = vsel %vm1486, %v2362, %v2363
        %v2365 = vrot.slane %v2026, 3
        %v2366 = vsel %vm1486, %v2363, %v2365
        %v2367 = vrot.slane %v2011, 3
        %v2368 = vrot.slane %v1919, 3
        %v2369 = vsel %vm1486, %v2367, %v2368
        %v2370 = vrot.slane %v2027, 3
        %v2371 = vsel %vm1486, %v2368, %v2370
        %v2372 = vrot.slane %v2012, 3
        %v2373 = vrot.slane %v1922, 3
        %v2374 = vsel %vm1486, %v2372, %v2373
        %v2375 = vrot.slane %v2028, 3
        %v2376 = vsel %vm1486, %v2373, %v2375
        %v2377 = vrot.slane %v2013, 3
        %v2378 = vrot.slane %v1925, 3
        %v2379 = vsel %vm1486, %v2377, %v2378
        %v2380 = vrot.slane %v2029, 3
        %v2381 = vsel %vm1486, %v2378, %v2380
        %v2382 = vrot.slane %v2014, 3
        %v2383 = vrot.slane %v1928, 3
        %v2384 = vsel %vm1486, %v2382, %v2383
        %v2385 = vrot.slane %v2030, 3
        %v2386 = vsel %vm1486, %v2383, %v2385
        %v2387 = vrot.slane %v2015, 3
        %v2388 = vrot.slane %v1931, 3
        %v2389 = vsel %vm1486, %v2387, %v2388
        %v2390 = vrot.slane %v2031, 3
        %v2391 = vsel %vm1486, %v2388, %v2390
        %v2392 = vrot.slane %v2016, 3
        %v2393 = vrot.slane %v1934, 3
        %v2394 = vsel %vm1486, %v2392, %v2393
        %v2395 = vrot.slane %v2032, 3
        %v2396 = vsel %vm1486, %v2393, %v2395
        %v2397 = vrot.slane %v2017, 3
        %v2398 = vrot.slane %v1937, 3
        %v2399 = vsel %vm1486, %v2397, %v2398
        %v2400 = vrot.slane %v2033, 3
        %v2401 = vsel %vm1486, %v2398, %v2400
        %v2402 = vrot.slane %v2018, 3
        %v2403 = vrot.slane %v1940, 3
        %v2404 = vsel %vm1486, %v2402, %v2403
        %v2405 = vrot.slane %v2034, 3
        %v2406 = vsel %vm1486, %v2403, %v2405
        %v2407 = vrot.slane %v2019, 3
        %v2408 = vrot.slane %v1943, 3
        %v2409 = vsel %vm1486, %v2407, %v2408
        %v2410 = vrot.slane %v2035, 3
        %v2411 = vsel %vm1486, %v2408, %v2410
        %v2412 = vrot.slane %v2020, 3
        %v2413 = vrot.slane %v1946, 3
        %v2414 = vsel %vm1486, %v2412, %v2413
        %v2415 = vrot.slane %v2036, 3
        %v2416 = vsel %vm1486, %v2413, %v2415
        %v2417 = vrot.slane %v2021, 3
        %v2418 = vrot.slane %v1949, 3
        %v2419 = vsel %vm1486, %v2417, %v2418
        %v2420 = vrot.slane %v2037, 3
        %v2421 = vsel %vm1486, %v2418, %v2420
        %v2422 = vrot.slane %v2022, 3
        %v2423 = vrot.slane %v1952, 3
        %v2424 = vsel %vm1486, %v2422, %v2423
        %v2425 = vrot.slane %v2038, 3
        %v2426 = vsel %vm1486, %v2423, %v2425
        %v2427 = vrot.slane %v2023, 3
        %v2428 = vrot.slane %v1955, 3
        %v2429 = vsel %vm1486, %v2427, %v2428
        %v2430 = vrot.slane %v2039, 3
        %v2431 = vsel %vm1486, %v2428, %v2430
        %v2432 = vrot.slane %v2024, 3
        %v2433 = vrot.slane %v1958, 3
        %v2434 = vsel %vm1486, %v2432, %v2433
        %v2435 = vrot.slane %v2040, 3
        %v2436 = vsel %vm1486, %v2433, %v2435
        %v2437 = vrot.slane %v2025, 3
        %v2438 = vrot.slane %v1961, 3
        %v2439 = vsel %vm1486, %v2437, %v2438
        %v2440 = vrot.slane %v2041, 3
        %v2441 = vsel %vm1486, %v2438, %v2440
        %v2474 = vmax.f32 %v2330, %v2364
        %v2475 = vmax.f32 %v2331, %v2366
        %v2476 = vmax.f32 %v2332, %v2369
        %v2477 = vmax.f32 %v2333, %v2371
        %v2478 = vmax.f32 %v2334, %v2374
        %v2479 = vmax.f32 %v2335, %v2376
        %v2480 = vmax.f32 %v2336, %v2379
        %v2481 = vmax.f32 %v2337, %v2381
        %v2482 = vmax.f32 %v2338, %v2384
        %v2483 = vmax.f32 %v2339, %v2386
        %v2484 = vmax.f32 %v2340, %v2389
        %v2485 = vmax.f32 %v2341, %v2391
        %v2486 = vmax.f32 %v2342, %v2394
        %v2487 = vmax.f32 %v2343, %v2396
        %v2488 = vmax.f32 %v2344, %v2399
        %v2489 = vmax.f32 %v2345, %v2401
        %v2490 = vmax.f32 %v2346, %v2404
        %v2491 = vmax.f32 %v2347, %v2406
        %v2492 = vmax.f32 %v2348, %v2409
        %v2493 = vmax.f32 %v2349, %v2411
        %v2494 = vmax.f32 %v2350, %v2414
        %v2495 = vmax.f32 %v2351, %v2416
        %v2496 = vmax.f32 %v2352, %v2419
        %v2497 = vmax.f32 %v2353, %v2421
        %v2498 = vmax.f32 %v2354, %v2424
        %v2499 = vmax.f32 %v2355, %v2426
        %v2500 = vmax.f32 %v2356, %v2429
        %v2501 = vmax.f32 %v2357, %v2431
        %v2502 = vmax.f32 %v2358, %v2434
        %v2503 = vmax.f32 %v2359, %v2436
        %v2504 = vmax.f32 %v2360, %v2439
        %v2505 = vmax.f32 %v2361, %v2441
        %v2506 = vrot.slane %v2010, 4
        %v2507 = vrot.slane %v1916, 4
        %v2508 = vsel %vm1631, %v2506, %v2507
        %v2509 = vrot.slane %v2026, 4
        %v2510 = vsel %vm1631, %v2507, %v2509
        %v2511 = vrot.slane %v2011, 4
        %v2512 = vrot.slane %v1919, 4
        %v2513 = vsel %vm1631, %v2511, %v2512
        %v2514 = vrot.slane %v2027, 4
        %v2515 = vsel %vm1631, %v2512, %v2514
        %v2516 = vrot.slane %v2012, 4
        %v2517 = vrot.slane %v1922, 4
        %v2518 = vsel %vm1631, %v2516, %v2517
        %v2519 = vrot.slane %v2028, 4
        %v2520 = vsel %vm1631, %v2517, %v2519
        %v2521 = vrot.slane %v2013, 4
        %v2522 = vrot.slane %v1925, 4
        %v2523 = vsel %vm1631, %v2521, %v2522
        %v2524 = vrot.slane %v2029, 4
        %v2525 = vsel %vm1631, %v2522, %v2524
        %v2526 = vrot.slane %v2014, 4
        %v2527 = vrot.slane %v1928, 4
        %v2528 = vsel %vm1631, %v2526, %v2527
        %v2529 = vrot.slane %v2030, 4
        %v2530 = vsel %vm1631, %v2527, %v2529
        %v2531 = vrot.slane %v2015, 4
        %v2532 = vrot.slane %v1931, 4
        %v2533 = vsel %vm1631, %v2531, %v2532
        %v2534 = vrot.slane %v2031, 4
        %v2535 = vsel %vm1631, %v2532, %v2534
        %v2536 = vrot.slane %v2016, 4
        %v2537 = vrot.slane %v1934, 4
        %v2538 = vsel %vm1631, %v2536, %v2537
        %v2539 = vrot.slane %v2032, 4
        %v2540 = vsel %vm1631, %v2537, %v2539
        %v2541 = vrot.slane %v2017, 4
        %v2542 = vrot.slane %v1937, 4
        %v2543 = vsel %vm1631, %v2541, %v2542
        %v2544 = vrot.slane %v2033, 4
        %v2545 = vsel %vm1631, %v2542, %v2544
        %v2546 = vrot.slane %v2018, 4
        %v2547 = vrot.slane %v1940, 4
        %v2548 = vsel %vm1631, %v2546, %v2547
        %v2549 = vrot.slane %v2034, 4
        %v2550 = vsel %vm1631, %v2547, %v2549
        %v2551 = vrot.slane %v2019, 4
        %v2552 = vrot.slane %v1943, 4
        %v2553 = vsel %vm1631, %v2551, %v2552
        %v2554 = vrot.slane %v2035, 4
        %v2555 = vsel %vm1631, %v2552, %v2554
        %v2556 = vrot.slane %v2020, 4
        %v2557 = vrot.slane %v1946, 4
        %v2558 = vsel %vm1631, %v2556, %v2557
        %v2559 = vrot.slane %v2036, 4
        %v2560 = vsel %vm1631, %v2557, %v2559
        %v2561 = vrot.slane %v2021, 4
        %v2562 = vrot.slane %v1949, 4
        %v2563 = vsel %vm1631, %v2561, %v2562
        %v2564 = vrot.slane %v2037, 4
        %v2565 = vsel %vm1631, %v2562, %v2564
        %v2566 = vrot.slane %v2022, 4
        %v2567 = vrot.slane %v1952, 4
        %v2568 = vsel %vm1631, %v2566, %v2567
        %v2569 = vrot.slane %v2038, 4
        %v2570 = vsel %vm1631, %v2567, %v2569
        %v2571 = vrot.slane %v2023, 4
        %v2572 = vrot.slane %v1955, 4
        %v2573 = vsel %vm1631, %v2571, %v2572
        %v2574 = vrot.slane %v2039, 4
        %v2575 = vsel %vm1631, %v2572, %v2574
        %v2576 = vrot.slane %v2024, 4
        %v2577 = vrot.slane %v1958, 4
        %v2578 = vsel %vm1631, %v2576, %v2577
        %v2579 = vrot.slane %v2040, 4
        %v2580 = vsel %vm1631, %v2577, %v2579
        %v2581 = vrot.slane %v2025, 4
        %v2582 = vrot.slane %v1961, 4
        %v2583 = vsel %vm1631, %v2581, %v2582
        %v2584 = vrot.slane %v2041, 4
        %v2585 = vsel %vm1631, %v2582, %v2584
        %v2618 = vmax.f32 %v2474, %v2508
        %v2619 = vmax.f32 %v2475, %v2510
        %v2620 = vmax.f32 %v2476, %v2513
        %v2621 = vmax.f32 %v2477, %v2515
        %v2622 = vmax.f32 %v2478, %v2518
        %v2623 = vmax.f32 %v2479, %v2520
        %v2624 = vmax.f32 %v2480, %v2523
        %v2625 = vmax.f32 %v2481, %v2525
        %v2626 = vmax.f32 %v2482, %v2528
        %v2627 = vmax.f32 %v2483, %v2530
        %v2628 = vmax.f32 %v2484, %v2533
        %v2629 = vmax.f32 %v2485, %v2535
        %v2630 = vmax.f32 %v2486, %v2538
        %v2631 = vmax.f32 %v2487, %v2540
        %v2632 = vmax.f32 %v2488, %v2543
        %v2633 = vmax.f32 %v2489, %v2545
        %v2634 = vmax.f32 %v2490, %v2548
        %v2635 = vmax.f32 %v2491, %v2550
        %v2636 = vmax.f32 %v2492, %v2553
        %v2637 = vmax.f32 %v2493, %v2555
        %v2638 = vmax.f32 %v2494, %v2558
        %v2639 = vmax.f32 %v2495, %v2560
        %v2640 = vmax.f32 %v2496, %v2563
        %v2641 = vmax.f32 %v2497, %v2565
        %v2642 = vmax.f32 %v2498, %v2568
        %v2643 = vmax.f32 %v2499, %v2570
        %v2644 = vmax.f32 %v2500, %v2573
        %v2645 = vmax.f32 %v2501, %v2575
        %v2646 = vmax.f32 %v2502, %v2578
        %v2647 = vmax.f32 %v2503, %v2580
        %v2648 = vmax.f32 %v2504, %v2583
        %v2649 = vmax.f32 %v2505, %v2585
        %v2650 = vmax.f32 %v2618, %v2620
        %v2651 = vmax.f32 %v2619, %v2621
        %v2652 = vmax.f32 %v2620, %v2622
        %v2653 = vmax.f32 %v2621, %v2623
        %v2654 = vmax.f32 %v2622, %v2624
        %v2655 = vmax.f32 %v2623, %v2625
        %v2656 = vmax.f32 %v2624, %v2626
        %v2657 = vmax.f32 %v2625, %v2627
        %v2658 = vmax.f32 %v2626, %v2628
        %v2659 = vmax.f32 %v2627, %v2629
        %v2660 = vmax.f32 %v2628, %v2630
        %v2661 = vmax.f32 %v2629, %v2631
        %v2662 = vmax.f32 %v2630, %v2632
        %v2663 = vmax.f32 %v2631, %v2633
        %v2664 = vmax.f32 %v2632, %v2634
        %v2665 = vmax.f32 %v2633, %v2635
        %v2666 = vmax.f32 %v2634, %v2636
        %v2667 = vmax.f32 %v2635, %v2637
        %v2668 = vmax.f32 %v2636, %v2638
        %v2669 = vmax.f32 %v2637, %v2639
        %v2670 = vmax.f32 %v2638, %v2640
        %v2671 = vmax.f32 %v2639, %v2641
        %v2672 = vmax.f32 %v2640, %v2642
        %v2673 = vmax.f32 %v2641, %v2643
        %v2674 = vmax.f32 %v2642, %v2644
        %v2675 = vmax.f32 %v2643, %v2645
        %v2676 = vmax.f32 %v2644, %v2646
        %v2677 = vmax.f32 %v2645, %v2647
        %v2678 = vmax.f32 %v2650, %v2622
        %v2679 = vmax.f32 %v2651, %v2623
        %v2680 = vmax.f32 %v2652, %v2624
        %v2681 = vmax.f32 %v2653, %v2625
        %v2682 = vmax.f32 %v2654, %v2626
        %v2683 = vmax.f32 %v2655, %v2627
        %v2684 = vmax.f32 %v2656, %v2628
        %v2685 = vmax.f32 %v2657, %v2629
        %v2686 = vmax.f32 %v2658, %v2630
        %v2687 = vmax.f32 %v2659, %v2631
        %v2688 = vmax.f32 %v2660, %v2632
        %v2689 = vmax.f32 %v2661, %v2633
        %v2690 = vmax.f32 %v2662, %v2634
        %v2691 = vmax.f32 %v2663, %v2635
        %v2692 = vmax.f32 %v2664, %v2636
        %v2693 = vmax.f32 %v2665, %v2637
        %v2694 = vmax.f32 %v2666, %v2638
        %v2695 = vmax.f32 %v2667, %v2639
        %v2696 = vmax.f32 %v2668, %v2640
        %v2697 = vmax.f32 %v2669, %v2641
        %v2698 = vmax.f32 %v2670, %v2642
        %v2699 = vmax.f32 %v2671, %v2643
        %v2700 = vmax.f32 %v2672, %v2644
        %v2701 = vmax.f32 %v2673, %v2645
        %v2702 = vmax.f32 %v2674, %v2646
        %v2703 = vmax.f32 %v2675, %v2647
        %v2704 = vmax.f32 %v2676, %v2648
        %v2705 = vmax.f32 %v2677, %v2649
        %v2706 = vmax.f32 %v2678, %v2624
        %v2707 = vmax.f32 %v2679, %v2625
        %v2708 = vmax.f32 %v2680, %v2626
        %v2709 = vmax.f32 %v2681, %v2627
        %v2710 = vmax.f32 %v2682, %v2628
        %v2711 = vmax.f32 %v2683, %v2629
        %v2712 = vmax.f32 %v2684, %v2630
        %v2713 = vmax.f32 %v2685, %v2631
        %v2714 = vmax.f32 %v2686, %v2632
        %v2715 = vmax.f32 %v2687, %v2633
        %v2716 = vmax.f32 %v2688, %v2634
        %v2717 = vmax.f32 %v2689, %v2635
        %v2718 = vmax.f32 %v2690, %v2636
        %v2719 = vmax.f32 %v2691, %v2637
        %v2720 = vmax.f32 %v2692, %v2638
        %v2721 = vmax.f32 %v2693, %v2639
        %v2722 = vmax.f32 %v2694, %v2640
        %v2723 = vmax.f32 %v2695, %v2641
        %v2724 = vmax.f32 %v2696, %v2642
        %v2725 = vmax.f32 %v2697, %v2643
        %v2726 = vmax.f32 %v2698, %v2644
        %v2727 = vmax.f32 %v2699, %v2645
        %v2728 = vmax.f32 %v2700, %v2646
        %v2729 = vmax.f32 %v2701, %v2647
        %v2730 = vmax.f32 %v2702, %v2648
        %v2731 = vmax.f32 %v2703, %v2649
        %v2732 = vmax.f32 %v2706, %v2626
        %v2733 = vmax.f32 %v2707, %v2627
        %v2734 = vmax.f32 %v2708, %v2628
        %v2735 = vmax.f32 %v2709, %v2629
        %v2736 = vmax.f32 %v2710, %v2630
        %v2737 = vmax.f32 %v2711, %v2631
        %v2738 = vmax.f32 %v2712, %v2632
        %v2739 = vmax.f32 %v2713, %v2633
        %v2740 = vmax.f32 %v2714, %v2634
        %v2741 = vmax.f32 %v2715, %v2635
        %v2742 = vmax.f32 %v2716, %v2636
        %v2743 = vmax.f32 %v2717, %v2637
        %v2744 = vmax.f32 %v2718, %v2638
        %v2745 = vmax.f32 %v2719, %v2639
        %v2746 = vmax.f32 %v2720, %v2640
        %v2747 = vmax.f32 %v2721, %v2641
        %v2748 = vmax.f32 %v2722, %v2642
        %v2749 = vmax.f32 %v2723, %v2643
        %v2750 = vmax.f32 %v2724, %v2644
        %v2751 = vmax.f32 %v2725, %v2645
        %v2752 = vmax.f32 %v2726, %v2646
        %v2753 = vmax.f32 %v2727, %v2647
        %v2754 = vmax.f32 %v2728, %v2648
        %v2755 = vmax.f32 %v2729, %v2649
        %v2788 = vrot.slane %v2678, 6
        %v2789 = vrot.slane %v2679, 6
        %v2790 = vsel %vm537, %v2788, %v2789
        %v2791 = vrot.slane %v2706, 6
        %v2792 = vrot.slane %v2707, 6
        %v2793 = vsel %vm537, %v2791, %v2792
        %v2794 = vrot.slane %v2732, 6
        %v2795 = vrot.slane %v2733, 6
        %v2796 = vsel %vm537, %v2794, %v2795
        %v2797 = vrot.slane %v2734, 6
        %v2798 = vrot.slane %v2735, 6
        %v2799 = vsel %vm537, %v2797, %v2798
        %v2800 = vrot.slane %v2736, 6
        %v2801 = vrot.slane %v2737, 6
        %v2802 = vsel %vm537, %v2800, %v2801
        %v2803 = vrot.slane %v2738, 6
        %v2804 = vrot.slane %v2739, 6
        %v2805 = vsel %vm537, %v2803, %v2804
        %v2806 = vrot.slane %v2740, 6
        %v2807 = vrot.slane %v2741, 6
        %v2808 = vsel %vm537, %v2806, %v2807
        %v2809 = vrot.slane %v2742, 6
        %v2810 = vrot.slane %v2743, 6
        %v2811 = vsel %vm537, %v2809, %v2810
        %v2812 = vrot.slane %v2744, 6
        %v2813 = vrot.slane %v2745, 6
        %v2814 = vsel %vm537, %v2812, %v2813
        %v2815 = vrot.slane %v2746, 6
        %v2816 = vrot.slane %v2747, 6
        %v2817 = vsel %vm537, %v2815, %v2816
        %v2818 = vrot.slane %v2748, 6
        %v2819 = vrot.slane %v2749, 6
        %v2820 = vsel %vm537, %v2818, %v2819
        %v2821 = vrot.slane %v2750, 6
        %v2822 = vrot.slane %v2751, 6
        %v2823 = vsel %vm537, %v2821, %v2822
        %v2824 = vrot.slane %v2752, 6
        %v2825 = vrot.slane %v2753, 6
        %v2826 = vsel %vm537, %v2824, %v2825
        %v2827 = vrot.slane %v2754, 6
        %v2828 = vrot.slane %v2755, 6
        %v2829 = vsel %vm537, %v2827, %v2828
        %v2830 = vrot.slane %v2730, 6
        %v2831 = vrot.slane %v2731, 6
        %v2832 = vsel %vm537, %v2830, %v2831
        %v2833 = vrot.slane %v2704, 6
        %v2834 = vrot.slane %v2705, 6
        %v2835 = vsel %vm537, %v2833, %v2834
        %v2884 = vsel %vm537, -inf, %v2788
        %v2885 = vsel %vm537, -inf, %v2791
        %v2886 = vsel %vm537, -inf, %v2794
        %v2887 = vsel %vm537, -inf, %v2797
        %v2888 = vsel %vm537, -inf, %v2800
        %v2889 = vsel %vm537, -inf, %v2803
        %v2890 = vsel %vm537, -inf, %v2806
        %v2891 = vsel %vm537, -inf, %v2809
        %v2892 = vsel %vm537, -inf, %v2812
        %v2893 = vsel %vm537, -inf, %v2815
        %v2894 = vsel %vm537, -inf, %v2818
        %v2895 = vsel %vm537, -inf, %v2821
        %v2896 = vsel %vm537, -inf, %v2824
        %v2897 = vsel %vm537, -inf, %v2827
        %v2898 = vsel %vm537, -inf, %v2830
        %v2899 = vsel %vm537, -inf, %v2833
        %v2900 = vsel %vm537, %v2789, -inf
        %v2901 = vsel %vm537, %v2792, -inf
        %v2902 = vsel %vm537, %v2795, -inf
        %v2903 = vsel %vm537, %v2798, -inf
        %v2904 = vsel %vm537, %v2801, -inf
        %v2905 = vsel %vm537, %v2804, -inf
        %v2906 = vsel %vm537, %v2807, -inf
        %v2907 = vsel %vm537, %v2810, -inf
        %v2908 = vsel %vm537, %v2813, -inf
        %v2909 = vsel %vm537, %v2816, -inf
        %v2910 = vsel %vm537, %v2819, -inf
        %v2911 = vsel %vm537, %v2822, -inf
        %v2912 = vsel %vm537, %v2825, -inf
        %v2913 = vsel %vm537, %v2828, -inf
        %v2914 = vsel %vm537, %v2831, -inf
        %v2915 = vsel %vm537, %v2834, -inf
        %v2948 = vrot.slane %v2884, 1
        %v2949 = vrot.slane %v2790, 1
        %v2950 = vsel %vm1196, %v2948, %v2949
        %v2951 = vrot.slane %v2900, 1
        %v2952 = vsel %vm1196, %v2949, %v2951
        %v2953 = vrot.slane %v2885, 1
        %v2954 = vrot.slane %v2793, 1
        %v2955 = vsel %vm1196, %v2953, %v2954
        %v2956 = vrot.slane %v2901, 1
        %v2957 = vsel %vm1196, %v2954, %v2956
        %v2958 = vrot.slane %v2886, 1
        %v2959 = vrot.slane %v2796, 1
        %v2960 = vsel %vm1196, %v2958, %v2959
        %v2961 = vrot.slane %v2902, 1
        %v2962 = vsel %vm1196, %v2959, %v2961
        %v2963 = vrot.slane %v2887, 1
        %v2964 = vrot.slane %v2799, 1
        %v2965 = vsel %vm1196, %v2963, %v2964
        %v2966 = vrot.slane %v2903, 1
        %v2967 = vsel %vm1196, %v2964, %v2966
        %v2968 = vrot.slane %v2888, 1
        %v2969 = vrot.slane %v2802, 1
        %v2970 = vsel %vm1196, %v2968, %v2969
        %v2971 = vrot.slane %v2904, 1
        %v2972 = vsel %vm1196, %v2969, %v2971
        %v2973 = vrot.slane %v2889, 1
        %v2974 = vrot.slane %v2805, 1
        %v2975 = vsel %vm1196, %v2973, %v2974
        %v2976 = vrot.slane %v2905, 1
        %v2977 = vsel %vm1196, %v2974, %v2976
        %v2978 = vrot.slane %v2890, 1
        %v2979 = vrot.slane %v2808, 1
        %v2980 = vsel %vm1196, %v2978, %v2979
        %v2981 = vrot.slane %v2906, 1
        %v2982 = vsel %vm1196, %v2979, %v2981
        %v2983 = vrot.slane %v2891, 1
        %v2984 = vrot.slane %v2811, 1
        %v2985 = vsel %vm1196, %v2983, %v2984
        %v2986 = vrot.slane %v2907, 1
        %v2987 = vsel %vm1196, %v2984, %v2986
        %v2988 = vrot.slane %v2892, 1
        %v2989 = vrot.slane %v2814, 1
        %v2990 = vsel %vm1196, %v2988, %v2989
        %v2991 = vrot.slane %v2908, 1
        %v2992 = vsel %vm1196, %v2989, %v2991
        %v2993 = vrot.slane %v2893, 1
        %v2994 = vrot.slane %v2817, 1
        %v2995 = vsel %vm1196, %v2993, %v2994
        %v2996 = vrot.slane %v2909, 1
        %v2997 = vsel %vm1196, %v2994, %v2996
        %v2998 = vrot.slane %v2894, 1
        %v2999 = vrot.slane %v2820, 1
        %v3000 = vsel %vm1196, %v2998, %v2999
        %v3001 = vrot.slane %v2910, 1
        %v3002 = vsel %vm1196, %v2999, %v3001
        %v3003 = vrot.slane %v2895, 1
        %v3004 = vrot.slane %v2823, 1
        %v3005 = vsel %vm1196, %v3003, %v3004
        %v3006 = vrot.slane %v2911, 1
        %v3007 = vsel %vm1196, %v3004, %v3006
        %v3008 = vrot.slane %v2896, 1
        %v3009 = vrot.slane %v2826, 1
        %v3010 = vsel %vm1196, %v3008, %v3009
        %v3011 = vrot.slane %v2912, 1
        %v3012 = vsel %vm1196, %v3009, %v3011
        %v3013 = vrot.slane %v2897, 1
        %v3014 = vrot.slane %v2829, 1
        %v3015 = vsel %vm1196, %v3013, %v3014
        %v3016 = vrot.slane %v2913, 1
        %v3017 = vsel %vm1196, %v3014, %v3016
        %v3018 = vrot.slane %v2898, 1
        %v3019 = vrot.slane %v2832, 1
        %v3020 = vsel %vm1196, %v3018, %v3019
        %v3021 = vrot.slane %v2914, 1
        %v3022 = vsel %vm1196, %v3019, %v3021
        %v3023 = vrot.slane %v2899, 1
        %v3024 = vrot.slane %v2835, 1
        %v3025 = vsel %vm1196, %v3023, %v3024
        %v3026 = vrot.slane %v2915, 1
        %v3027 = vsel %vm1196, %v3024, %v3026
        %v3060 = vmax.f32 %v2884, %v2950
        %v3061 = vmax.f32 %v2790, %v2952
        %v3062 = vmax.f32 %v2885, %v2955
        %v3063 = vmax.f32 %v2793, %v2957
        %v3064 = vmax.f32 %v2886, %v2960
        %v3065 = vmax.f32 %v2796, %v2962
        %v3066 = vmax.f32 %v2887, %v2965
        %v3067 = vmax.f32 %v2799, %v2967
        %v3068 = vmax.f32 %v2888, %v2970
        %v3069 = vmax.f32 %v2802, %v2972
        %v3070 = vmax.f32 %v2889, %v2975
        %v3071 = vmax.f32 %v2805, %v2977
        %v3072 = vmax.f32 %v2890, %v2980
        %v3073 = vmax.f32 %v2808, %v2982
        %v3074 = vmax.f32 %v2891, %v2985
        %v3075 = vmax.f32 %v2811, %v2987
        %v3076 = vmax.f32 %v2892, %v2990
        %v3077 = vmax.f32 %v2814, %v2992
        %v3078 = vmax.f32 %v2893, %v2995
        %v3079 = vmax.f32 %v2817, %v2997
        %v3080 = vmax.f32 %v2894, %v3000
        %v3081 = vmax.f32 %v2820, %v3002
        %v3082 = vmax.f32 %v2895, %v3005
        %v3083 = vmax.f32 %v2823, %v3007
        %v3084 = vmax.f32 %v2896, %v3010
        %v3085 = vmax.f32 %v2826, %v3012
        %v3086 = vmax.f32 %v2897, %v3015
        %v3087 = vmax.f32 %v2829, %v3017
        %v3088 = vmax.f32 %v2898, %v3020
        %v3089 = vmax.f32 %v2832, %v3022
        %v3090 = vmax.f32 %v2899, %v3025
        %v3091 = vmax.f32 %v2835, %v3027
        %v3092 = vrot.slane %v2884, 2
        %v3093 = vrot.slane %v2790, 2
        %v3094 = vsel %vm1341, %v3092, %v3093
        %v3095 = vrot.slane %v2900, 2
        %v3096 = vsel %vm1341, %v3093, %v3095
        %v3097 = vrot.slane %v2885, 2
        %v3098 = vrot.slane %v2793, 2
        %v3099 = vsel %vm1341, %v3097, %v3098
        %v3100 = vrot.slane %v2901, 2
        %v3101 = vsel %vm1341, %v3098, %v3100
        %v3102 = vrot.slane %v2886, 2
        %v3103 = vrot.slane %v2796, 2
        %v3104 = vsel %vm1341, %v3102, %v3103
        %v3105 = vrot.slane %v2902, 2
        %v3106 = vsel %vm1341, %v3103, %v3105
        %v3107 = vrot.slane %v2887, 2
        %v3108 = vrot.slane %v2799, 2
        %v3109 = vsel %vm1341, %v3107, %v3108
        %v3110 = vrot.slane %v2903, 2
        %v3111 = vsel %vm1341, %v3108, %v3110
        %v3112 = vrot.slane %v2888, 2
        %v3113 = vrot.slane %v2802, 2
        %v3114 = vsel %vm1341, %v3112, %v3113
        %v3115 = vrot.slane %v2904, 2
        %v3116 = vsel %vm1341, %v3113, %v3115
        %v3117 = vrot.slane %v2889, 2
        %v3118 = vrot.slane %v2805, 2
        %v3119 = vsel %vm1341, %v3117, %v3118
        %v3120 = vrot.slane %v2905, 2
        %v3121 = vsel %vm1341, %v3118, %v3120
        %v3122 = vrot.slane %v2890, 2
        %v3123 = vrot.slane %v2808, 2
        %v3124 = vsel %vm1341, %v3122, %v3123
        %v3125 = vrot.slane %v2906, 2
        %v3126 = vsel %vm1341, %v3123, %v3125
        %v3127 = vrot.slane %v2891, 2
        %v3128 = vrot.slane %v2811, 2
        %v3129 = vsel %vm1341, %v3127, %v3128
        %v3130 = vrot.slane %v2907, 2
        %v3131 = vsel %vm1341, %v3128, %v3130
        %v3132 = vrot.slane %v2892, 2
        %v3133 = vrot.slane %v2814, 2
        %v3134 = vsel %vm1341, %v3132, %v3133
        %v3135 = vrot.slane %v2908, 2
        %v3136 = vsel %vm1341, %v3133, %v3135
        %v3137 = vrot.slane %v2893, 2
        %v3138 = vrot.slane %v2817, 2
        %v3139 = vsel %vm1341, %v3137, %v3138
        %v3140 = vrot.slane %v2909, 2
        %v3141 = vsel %vm1341, %v3138, %v3140
        %v3142 = vrot.slane %v2894, 2
        %v3143 = vrot.slane %v2820, 2
        %v3144 = vsel %vm1341, %v3142, %v3143
        %v3145 = vrot.slane %v2910, 2
        %v3146 = vsel %vm1341, %v3143, %v3145
        %v3147 = vrot.slane %v2895, 2
        %v3148 = vrot.slane %v2823, 2
        %v3149 = vsel %vm1341, %v3147, %v3148
        %v3150 = vrot.slane %v2911, 2
        %v3151 = vsel %vm1341, %v3148, %v3150
        %v3152 = vrot.slane %v2896, 2
        %v3153 = vrot.slane %v2826, 2
        %v3154 = vsel %vm1341, %v3152, %v3153
        %v3155 = vrot.slane %v2912, 2
        %v3156 = vsel %vm1341, %v3153, %v3155
        %v3157 = vrot.slane %v2897, 2
        %v3158 = vrot.slane %v2829, 2
        %v3159 = vsel %vm1341, %v3157, %v3158
        %v3160 = vrot.slane %v2913, 2
        %v3161 = vsel %vm1341, %v3158, %v3160
        %v3162 = vrot.slane %v2898, 2
        %v3163 = vrot.slane %v2832, 2
        %v3164 = vsel %vm1341, %v3162, %v3163
        %v3165 = vrot.slane %v2914, 2
        %v3166 = vsel %vm1341, %v3163, %v3165
        %v3167 = vrot.slane %v2899, 2
        %v3168 = vrot.slane %v2835, 2
        %v3169 = vsel %vm1341, %v3167, %v3168
        %v3170 = vrot.slane %v2915, 2
        %v3171 = vsel %vm1341, %v3168, %v3170
        %v3204 = vmax.f32 %v3060, %v3094
        %v3205 = vmax.f32 %v3061, %v3096
        %v3206 = vmax.f32 %v3062, %v3099
        %v3207 = vmax.f32 %v3063, %v3101
        %v3208 = vmax.f32 %v3064, %v3104
        %v3209 = vmax.f32 %v3065, %v3106
        %v3210 = vmax.f32 %v3066, %v3109
        %v3211 = vmax.f32 %v3067, %v3111
        %v3212 = vmax.f32 %v3068, %v3114
        %v3213 = vmax.f32 %v3069, %v3116
        %v3214 = vmax.f32 %v3070, %v3119
        %v3215 = vmax.f32 %v3071, %v3121
        %v3216 = vmax.f32 %v3072, %v3124
        %v3217 = vmax.f32 %v3073, %v3126
        %v3218 = vmax.f32 %v3074, %v3129
        %v3219 = vmax.f32 %v3075, %v3131
        %v3220 = vmax.f32 %v3076, %v3134
        %v3221 = vmax.f32 %v3077, %v3136
        %v3222 = vmax.f32 %v3078, %v3139
        %v3223 = vmax.f32 %v3079, %v3141
        %v3224 = vmax.f32 %v3080, %v3144
        %v3225 = vmax.f32 %v3081, %v3146
        %v3226 = vmax.f32 %v3082, %v3149
        %v3227 = vmax.f32 %v3083, %v3151
        %v3228 = vmax.f32 %v3084, %v3154
        %v3229 = vmax.f32 %v3085, %v3156
        %v3230 = vmax.f32 %v3086, %v3159
        %v3231 = vmax.f32 %v3087, %v3161
        %v3232 = vmax.f32 %v3088, %v3164
        %v3233 = vmax.f32 %v3089, %v3166
        %v3234 = vmax.f32 %v3090, %v3169
        %v3235 = vmax.f32 %v3091, %v3171
        %v3236 = vrot.slane %v2884, 3
        %v3237 = vrot.slane %v2790, 3
        %v3238 = vsel %vm1486, %v3236, %v3237
        %v3239 = vrot.slane %v2900, 3
        %v3240 = vsel %vm1486, %v3237, %v3239
        %v3241 = vrot.slane %v2885, 3
        %v3242 = vrot.slane %v2793, 3
        %v3243 = vsel %vm1486, %v3241, %v3242
        %v3244 = vrot.slane %v2901, 3
        %v3245 = vsel %vm1486, %v3242, %v3244
        %v3246 = vrot.slane %v2886, 3
        %v3247 = vrot.slane %v2796, 3
        %v3248 = vsel %vm1486, %v3246, %v3247
        %v3249 = vrot.slane %v2902, 3
        %v3250 = vsel %vm1486, %v3247, %v3249
        %v3251 = vrot.slane %v2887, 3
        %v3252 = vrot.slane %v2799, 3
        %v3253 = vsel %vm1486, %v3251, %v3252
        %v3254 = vrot.slane %v2903, 3
        %v3255 = vsel %vm1486, %v3252, %v3254
        %v3256 = vrot.slane %v2888, 3
        %v3257 = vrot.slane %v2802, 3
        %v3258 = vsel %vm1486, %v3256, %v3257
        %v3259 = vrot.slane %v2904, 3
        %v3260 = vsel %vm1486, %v3257, %v3259
        %v3261 = vrot.slane %v2889, 3
        %v3262 = vrot.slane %v2805, 3
        %v3263 = vsel %vm1486, %v3261, %v3262
        %v3264 = vrot.slane %v2905, 3
        %v3265 = vsel %vm1486, %v3262, %v3264
        %v3266 = vrot.slane %v2890, 3
        %v3267 = vrot.slane %v2808, 3
        %v3268 = vsel %vm1486, %v3266, %v3267
        %v3269 = vrot.slane %v2906, 3
        %v3270 = vsel %vm1486, %v3267, %v3269
        %v3271 = vrot.slane %v2891, 3
        %v3272 = vrot.slane %v2811, 3
        %v3273 = vsel %vm1486, %v3271, %v3272
        %v3274 = vrot.slane %v2907, 3
        %v3275 = vsel %vm1486, %v3272, %v3274
        %v3276 = vrot.slane %v2892, 3
        %v3277 = vrot.slane %v2814, 3
        %v3278 = vsel %vm1486, %v3276, %v3277
        %v3279 = vrot.slane %v2908, 3
        %v3280 = vsel %vm1486, %v3277, %v3279
        %v3281 = vrot.slane %v2893, 3
        %v3282 = vrot.slane %v2817, 3
        %v3283 = vsel %vm1486, %v3281, %v3282
        %v3284 = vrot.slane %v2909, 3
        %v3285 = vsel %vm1486, %v3282, %v3284
        %v3286 = vrot.slane %v2894, 3
        %v3287 = vrot.slane %v2820, 3
        %v3288 = vsel %vm1486, %v3286, %v3287
        %v3289 = vrot.slane %v2910, 3
        %v3290 = vsel %vm1486, %v3287, %v3289
        %v3291 = vrot.slane %v2895, 3
        %v3292 = vrot.slane %v2823, 3
        %v3293 = vsel %vm1486, %v3291, %v3292
        %v3294 = vrot.slane %v2911, 3
        %v3295 = vsel %vm1486, %v3292, %v3294
        %v3296 = vrot.slane %v2896, 3
        %v3297 = vrot.slane %v2826, 3
        %v3298 = vsel %vm1486, %v3296, %v3297
        %v3299 = vrot.slane %v2912, 3
        %v3300 = vsel %vm1486, %v3297, %v3299
        %v3301 = vrot.slane %v2897, 3
        %v3302 = vrot.slane %v2829, 3
        %v3303 = vsel %vm1486, %v3301, %v3302
        %v3304 = vrot.slane %v2913, 3
        %v3305 = vsel %vm1486, %v3302, %v3304
        %v3306 = vrot.slane %v2898, 3
        %v3307 = vrot.slane %v2832, 3
        %v3308 = vsel %vm1486, %v3306, %v3307
        %v3309 = vrot.slane %v2914, 3
        %v3310 = vsel %vm1486, %v3307, %v3309
        %v3311 = vrot.slane %v2899, 3
        %v3312 = vrot.slane %v2835, 3
        %v3313 = vsel %vm1486, %v3311, %v3312
        %v3314 = vrot.slane %v2915, 3
        %v3315 = vsel %vm1486, %v3312, %v3314
        %v3348 = vmax.f32 %v3204, %v3238
        %v3349 = vmax.f32 %v3205, %v3240
        %v3350 = vmax.f32 %v3206, %v3243
        %v3351 = vmax.f32 %v3207, %v3245
        %v3352 = vmax.f32 %v3208, %v3248
        %v3353 = vmax.f32 %v3209, %v3250
        %v3354 = vmax.f32 %v3210, %v3253
        %v3355 = vmax.f32 %v3211, %v3255
        %v3356 = vmax.f32 %v3212, %v3258
        %v3357 = vmax.f32 %v3213, %v3260
        %v3358 = vmax.f32 %v3214, %v3263
        %v3359 = vmax.f32 %v3215, %v3265
        %v3360 = vmax.f32 %v3216, %v3268
        %v3361 = vmax.f32 %v3217, %v3270
        %v3362 = vmax.f32 %v3218, %v3273
        %v3363 = vmax.f32 %v3219, %v3275
        %v3364 = vmax.f32 %v3220, %v3278
        %v3365 = vmax.f32 %v3221, %v3280
        %v3366 = vmax.f32 %v3222, %v3283
        %v3367 = vmax.f32 %v3223, %v3285
        %v3368 = vmax.f32 %v3224, %v3288
        %v3369 = vmax.f32 %v3225, %v3290
        %v3370 = vmax.f32 %v3226, %v3293
        %v3371 = vmax.f32 %v3227, %v3295
        %v3372 = vmax.f32 %v3228, %v3298
        %v3373 = vmax.f32 %v3229, %v3300
        %v3374 = vmax.f32 %v3230, %v3303
        %v3375 = vmax.f32 %v3231, %v3305
        %v3376 = vmax.f32 %v3232, %v3308
        %v3377 = vmax.f32 %v3233, %v3310
        %v3378 = vmax.f32 %v3234, %v3313
        %v3379 = vmax.f32 %v3235, %v3315
        %v3380 = vrot.slane %v2884, 4
        %v3381 = vrot.slane %v2790, 4
        %v3382 = vsel %vm1631, %v3380, %v3381
        %v3383 = vrot.slane %v2900, 4
        %v3384 = vsel %vm1631, %v3381, %v3383
        %v3385 = vrot.slane %v2885, 4
        %v3386 = vrot.slane %v2793, 4
        %v3387 = vsel %vm1631, %v3385, %v3386
        %v3388 = vrot.slane %v2901, 4
        %v3389 = vsel %vm1631, %v3386, %v3388
        %v3390 = vrot.slane %v2886, 4
        %v3391 = vrot.slane %v2796, 4
        %v3392 = vsel %vm1631, %v3390, %v3391
        %v3393 = vrot.slane %v2902, 4
        %v3394 = vsel %vm1631, %v3391, %v3393
        %v3395 = vrot.slane %v2887, 4
        %v3396 = vrot.slane %v2799, 4
        %v3397 = vsel %vm1631, %v3395, %v3396
        %v3398 = vrot.slane %v2903, 4
        %v3399 = vsel %vm1631, %v3396, %v3398
        %v3400 = vrot.slane %v2888, 4
        %v3401 = vrot.slane %v2802, 4
        %v3402 = vsel %vm1631, %v3400, %v3401
        %v3403 = vrot.slane %v2904, 4
        %v3404 = vsel %vm1631, %v3401, %v3403
        %v3405 = vrot.slane %v2889, 4
        %v3406 = vrot.slane %v2805, 4
        %v3407 = vsel %vm1631, %v3405, %v3406
        %v3408 = vrot.slane %v2905, 4
        %v3409 = vsel %vm1631, %v3406, %v3408
        %v3410 = vrot.slane %v2890, 4
        %v3411 = vrot.slane %v2808, 4
        %v3412 = vsel %vm1631, %v3410, %v3411
        %v3413 = vrot.slane %v2906, 4
        %v3414 = vsel %vm1631, %v3411, %v3413
        %v3415 = vrot.slane %v2891, 4
        %v3416 = vrot.slane %v2811, 4
        %v3417 = vsel %vm1631, %v3415, %v3416
        %v3418 = vrot.slane %v2907, 4
        %v3419 = vsel %vm1631, %v3416, %v3418
        %v3420 = vrot.slane %v2892, 4
        %v3421 = vrot.slane %v2814, 4
        %v3422 = vsel %vm1631, %v3420, %v3421
        %v3423 = vrot.slane %v2908, 4
        %v3424 = vsel %vm1631, %v3421, %v3423
        %v3425 = vrot.slane %v2893, 4
        %v3426 = vrot.slane %v2817, 4
        %v3427 = vsel %vm1631, %v3425, %v3426
        %v3428 = vrot.slane %v2909, 4
        %v3429 = vsel %vm1631, %v3426, %v3428
        %v3430 = vrot.slane %v2894, 4
        %v3431 = vrot.slane %v2820, 4
        %v3432 = vsel %vm1631, %v3430, %v3431
        %v3433 = vrot.slane %v2910, 4
        %v3434 = vsel %vm1631, %v3431, %v3433
        %v3435 = vrot.slane %v2895, 4
        %v3436 = vrot.slane %v2823, 4
        %v3437 = vsel %vm1631, %v3435, %v3436
        %v3438 = vrot.slane %v2911, 4
        %v3439 = vsel %vm1631, %v3436, %v3438
        %v3440 = vrot.slane %v2896, 4
        %v3441 = vrot.slane %v2826, 4
        %v3442 = vsel %vm1631, %v3440, %v3441
        %v3443 = vrot.slane %v2912, 4
        %v3444 = vsel %vm1631, %v3441, %v3443
        %v3445 = vrot.slane %v2897, 4
        %v3446 = vrot.slane %v2829, 4
        %v3447 = vsel %vm1631, %v3445, %v3446
        %v3448 = vrot.slane %v2913, 4
        %v3449 = vsel %vm1631, %v3446, %v3448
        %v3450 = vrot.slane %v2898, 4
        %v3451 = vrot.slane %v2832, 4
        %v3452 = vsel %vm1631, %v3450, %v3451
        %v3453 = vrot.slane %v2914, 4
        %v3454 = vsel %vm1631, %v3451, %v3453
        %v3455 = vrot.slane %v2899, 4
        %v3456 = vrot.slane %v2835, 4
        %v3457 = vsel %vm1631, %v3455, %v3456
        %v3458 = vrot.slane %v2915, 4
        %v3459 = vsel %vm1631, %v3456, %v3458
        %v3492 = vmax.f32 %v3348, %v3382
        %v3493 = vmax.f32 %v3349, %v3384
        %v3494 = vmax.f32 %v3350, %v3387
        %v3495 = vmax.f32 %v3351, %v3389
        %v3496 = vmax.f32 %v3352, %v3392
        %v3497 = vmax.f32 %v3353, %v3394
        %v3498 = vmax.f32 %v3354, %v3397
        %v3499 = vmax.f32 %v3355, %v3399
        %v3500 = vmax.f32 %v3356, %v3402
        %v3501 = vmax.f32 %v3357, %v3404
        %v3502 = vmax.f32 %v3358, %v3407
        %v3503 = vmax.f32 %v3359, %v3409
        %v3504 = vmax.f32 %v3360, %v3412
        %v3505 = vmax.f32 %v3361, %v3414
        %v3506 = vmax.f32 %v3362, %v3417
        %v3507 = vmax.f32 %v3363, %v3419
        %v3508 = vmax.f32 %v3364, %v3422
        %v3509 = vmax.f32 %v3365, %v3424
        %v3510 = vmax.f32 %v3366, %v3427
        %v3511 = vmax.f32 %v3367, %v3429
        %v3512 = vmax.f32 %v3368, %v3432
        %v3513 = vmax.f32 %v3369, %v3434
        %v3514 = vmax.f32 %v3370, %v3437
        %v3515 = vmax.f32 %v3371, %v3439
        %v3516 = vmax.f32 %v3372, %v3442
        %v3517 = vmax.f32 %v3373, %v3444
        %v3518 = vmax.f32 %v3374, %v3447
        %v3519 = vmax.f32 %v3375, %v3449
        %v3520 = vmax.f32 %v3376, %v3452
        %v3521 = vmax.f32 %v3377, %v3454
        %v3522 = vmax.f32 %v3378, %v3457
        %v3523 = vmax.f32 %v3379, %v3459
        %v3524 = vmax.f32 %v3492, %v3494
        %v3525 = vmax.f32 %v3493, %v3495
        %v3526 = vmax.f32 %v3494, %v3496
        %v3527 = vmax.f32 %v3495, %v3497
        %v3528 = vmax.f32 %v3496, %v3498
        %v3529 = vmax.f32 %v3497, %v3499
        %v3530 = vmax.f32 %v3498, %v3500
        %v3531 = vmax.f32 %v3499, %v3501
        %v3532 = vmax.f32 %v3500, %v3502
        %v3533 = vmax.f32 %v3501, %v3503
        %v3534 = vmax.f32 %v3502, %v3504
        %v3535 = vmax.f32 %v3503, %v3505
        %v3536 = vmax.f32 %v3504, %v3506
        %v3537 = vmax.f32 %v3505, %v3507
        %v3538 = vmax.f32 %v3506, %v3508
        %v3539 = vmax.f32 %v3507, %v3509
        %v3540 = vmax.f32 %v3508, %v3510
        %v3541 = vmax.f32 %v3509, %v3511
        %v3542 = vmax.f32 %v3510, %v3512
        %v3543 = vmax.f32 %v3511, %v3513
        %v3544 = vmax.f32 %v3512, %v3514
        %v3545 = vmax.f32 %v3513, %v3515
        %v3546 = vmax.f32 %v3514, %v3516
        %v3547 = vmax.f32 %v3515, %v3517
        %v3548 = vmax.f32 %v3516, %v3518
        %v3549 = vmax.f32 %v3517, %v3519
        %v3550 = vmax.f32 %v3518, %v3520
        %v3551 = vmax.f32 %v3519, %v3521
        %v3552 = vmax.f32 %v3524, %v3496
        %v3553 = vmax.f32 %v3525, %v3497
        %v3554 = vmax.f32 %v3526, %v3498
        %v3555 = vmax.f32 %v3527, %v3499
        %v3556 = vmax.f32 %v3528, %v3500
        %v3557 = vmax.f32 %v3529, %v3501
        %v3558 = vmax.f32 %v3530, %v3502
        %v3559 = vmax.f32 %v3531, %v3503
        %v3560 = vmax.f32 %v3532, %v3504
        %v3561 = vmax.f32 %v3533, %v3505
        %v3562 = vmax.f32 %v3534, %v3506
        %v3563 = vmax.f32 %v3535, %v3507
        %v3564 = vmax.f32 %v3536, %v3508
        %v3565 = vmax.f32 %v3537, %v3509
        %v3566 = vmax.f32 %v3538, %v3510
        %v3567 = vmax.f32 %v3539, %v3511
        %v3568 = vmax.f32 %v3540, %v3512
        %v3569 = vmax.f32 %v3541, %v3513
        %v3570 = vmax.f32 %v3542, %v3514
        %v3571 = vmax.f32 %v3543, %v3515
        %v3572 = vmax.f32 %v3544, %v3516
        %v3573 = vmax.f32 %v3545, %v3517
        %v3574 = vmax.f32 %v3546, %v3518
        %v3575 = vmax.f32 %v3547, %v3519
        %v3576 = vmax.f32 %v3548, %v3520
        %v3577 = vmax.f32 %v3549, %v3521
        %v3578 = vmax.f32 %v3550, %v3522
        %v3579 = vmax.f32 %v3551, %v3523
        %v3580 = vmax.f32 %v3552, %v3498
        %v3581 = vmax.f32 %v3553, %v3499
        %v3582 = vmax.f32 %v3554, %v3500
        %v3583 = vmax.f32 %v3555, %v3501
        %v3584 = vmax.f32 %v3556, %v3502
        %v3585 = vmax.f32 %v3557, %v3503
        %v3586 = vmax.f32 %v3558, %v3504
        %v3587 = vmax.f32 %v3559, %v3505
        %v3588 = vmax.f32 %v3560, %v3506
        %v3589 = vmax.f32 %v3561, %v3507
        %v3590 = vmax.f32 %v3562, %v3508
        %v3591 = vmax.f32 %v3563, %v3509
        %v3592 = vmax.f32 %v3564, %v3510
        %v3593 = vmax.f32 %v3565, %v3511
        %v3594 = vmax.f32 %v3566, %v3512
        %v3595 = vmax.f32 %v3567, %v3513
        %v3596 = vmax.f32 %v3568, %v3514
        %v3597 = vmax.f32 %v3569, %v3515
        %v3598 = vmax.f32 %v3570, %v3516
        %v3599 = vmax.f32 %v3571, %v3517
        %v3600 = vmax.f32 %v3572, %v3518
        %v3601 = vmax.f32 %v3573, %v3519
        %v3602 = vmax.f32 %v3574, %v3520
        %v3603 = vmax.f32 %v3575, %v3521
        %v3604 = vmax.f32 %v3576, %v3522
        %v3605 = vmax.f32 %v3577, %v3523
        %v3606 = vmax.f32 %v3580, %v3500
        %v3607 = vmax.f32 %v3581, %v3501
        %v3608 = vmax.f32 %v3582, %v3502
        %v3609 = vmax.f32 %v3583, %v3503
        %v3610 = vmax.f32 %v3584, %v3504
        %v3611 = vmax.f32 %v3585, %v3505
        %v3612 = vmax.f32 %v3586, %v3506
        %v3613 = vmax.f32 %v3587, %v3507
        %v3614 = vmax.f32 %v3588, %v3508
        %v3615 = vmax.f32 %v3589, %v3509
        %v3616 = vmax.f32 %v3590, %v3510
        %v3617 = vmax.f32 %v3591, %v3511
        %v3618 = vmax.f32 %v3592, %v3512
        %v3619 = vmax.f32 %v3593, %v3513
        %v3620 = vmax.f32 %v3594, %v3514
        %v3621 = vmax.f32 %v3595, %v3515
        %v3622 = vmax.f32 %v3596, %v3516
        %v3623 = vmax.f32 %v3597, %v3517
        %v3624 = vmax.f32 %v3598, %v3518
        %v3625 = vmax.f32 %v3599, %v3519
        %v3626 = vmax.f32 %v3600, %v3520
        %v3627 = vmax.f32 %v3601, %v3521
        %v3628 = vmax.f32 %v3602, %v3522
        %v3629 = vmax.f32 %v3603, %v3523
        %v3630 = vpack.c.bf16 %v973, %v972
        %v3631 = vpack.c.bf16 %v975, %v974
        %v3632 = vpack.c.bf16 %v977, %v976
        %v3633 = vpack.c.bf16 %v979, %v978
        %v3634 = vpack.c.bf16 %v981, %v980
        %v3635 = vpack.c.bf16 %v983, %v982
        %v3636 = vpack.c.bf16 %v985, %v984
        %v3637 = vpack.c.bf16 %v987, %v986
        %v3638 = vpack.c.bf16 %v989, %v988
        %v3639 = vpack.c.bf16 %v991, %v990
        %v3640 = vpack.c.bf16 %v993, %v992
        %v3641 = vpack.c.bf16 %v995, %v994
        %v3642 = vpack.c.bf16 %v997, %v996
        %v3643 = vpack.c.bf16 %v999, %v998
        %v3644 = vpack.c.bf16 %v1001, %v1000
        %v3645 = vpack.c.bf16 %v1003, %v1002
        %v3646 = vld [vmem:[#allocation10] sm:$0x3]
        %v3647 = vpack.c.bf16 %v1805, %v1804
        %v3648 = vpack.c.bf16 %v1833, %v1832
        %v3649 = vpack.c.bf16 %v1859, %v1858
        %v3650 = vpack.c.bf16 %v1861, %v1860
        %v3651 = vpack.c.bf16 %v1863, %v1862
        %v3652 = vpack.c.bf16 %v1865, %v1864
        %v3653 = vpack.c.bf16 %v1867, %v1866
        %v3654 = vpack.c.bf16 %v1869, %v1868
        %v3655 = vpack.c.bf16 %v1871, %v1870
        %v3656 = vpack.c.bf16 %v1873, %v1872
        %v3657 = vpack.c.bf16 %v1875, %v1874
        %v3658 = vpack.c.bf16 %v1877, %v1876
        %v3659 = vpack.c.bf16 %v1879, %v1878
        %v3660 = vpack.c.bf16 %v1881, %v1880
        %v3661 = vpack.c.bf16 %v1857, %v1856
        %v3662 = vpack.c.bf16 %v1831, %v1830
        %s3663 = scalar_lea.vmem [#allocation10], 2
        %v3664 = vld [vmem:[%s3663] sm:$0x3]
        %v3666 = vsel %vm488, %v3647, 0
        %v3669 = vsel %vm488, %v3648, 0
        %v3672 = vsel %vm488, %v3649, 0
        %v3675 = vsel %vm488, %v3650, 0
        %v3678 = vsel %vm488, %v3651, 0
        %v3681 = vsel %vm488, %v3652, 0
        %v3684 = vsel %vm488, %v3653, 0
        %v3687 = vsel %vm488, %v3654, 0
        %v3690 = vsel %vm488, %v3655, 0
        %v3693 = vsel %vm488, %v3656, 0
        %v3696 = vsel %vm488, %v3657, 0
        %v3699 = vsel %vm488, %v3658, 0
        %v3702 = vsel %vm488, %v3659, 0
        %v3705 = vsel %vm488, %v3660, 0
        %v3708 = vsel %vm488, %v3661, 0
        %v3711 = vsel %vm488, %v3662, 0
        %v3714 = vsel %vm537, %v3664, 0
        %3716 = vmatprep.subr.bf16.mxu0 0
        %3717 = vmatpush1.bf16.msra.mxu0 %v3714
        %3718 = vmatprep.subr.bf16.mxu0 0
        %3719 = vmatpush1.bf16.msra.mxu0 0
        %3720 = vmatprep.subr.bf16.mxu0 0
        %3721 = vmatpush1.bf16.msra.mxu0 0
        %3722 = vmatprep.subr.bf16.mxu0 0
        %3723 = vmatpush1.bf16.msra.mxu0 0
        %3724 = vmatprep.subr.bf16.mxu0 0
        %3725 = vmatpush1.bf16.msra.mxu0 0
        %3726 = vmatprep.subr.bf16.mxu0 0
        %3727 = vmatpush1.bf16.msra.mxu0 0
        %3728 = vmatprep.subr.bf16.mxu0 0
        %3729 = vmatpush1.bf16.msra.mxu0 0
        %3730 = vmatprep.subr.bf16.mxu0 0
        %3731 = vmatpush1.bf16.msra.mxu0 0
        %3732 = vmatprep.subr.bf16.mxu0 0
        %3733 = vmatpush1.bf16.msra.mxu0 0
        %3734 = vmatprep.subr.bf16.mxu0 0
        %3735 = vmatpush1.bf16.msra.mxu0 0
        %3736 = vmatprep.subr.bf16.mxu0 0
        %3737 = vmatpush1.bf16.msra.mxu0 0
        %3738 = vmatprep.subr.bf16.mxu0 0
        %3739 = vmatpush1.bf16.msra.mxu0 0
        %3740 = vmatprep.subr.bf16.mxu0 0
        %3741 = vmatpush1.bf16.msra.mxu0 0
        %3742 = vmatprep.subr.bf16.mxu0 0
        %3743 = vmatpush1.bf16.msra.mxu0 0
        %3744 = vmatprep.subr.bf16.mxu0 0
        %3745 = vmatpush1.bf16.msra.mxu0 0
        %3746 = vmatprep.subr.bf16.mxu0 0
        %3747 = vmatpush1.bf16.msra.mxu0 0
        %3748 = vmatprep.mubr.bf16.mxu0 0
        %3749 = vmatmul.mubr.bf16.gmra.mrb[0].mxu0 %v3666
        %v3750 = vpop.f32.mrb[0].mxu0
        %v3751 = vadd.f32 0.0, %v3750
        %v3752 = vpop.f32.mrb[0].mxu0
        %v3753 = vpop.f32.mrb[0].mxu0
        %v3754 = vadd.f32 0.0, %v3753
        %v3755 = vpop.f32.mrb[0].mxu0
        %3756 = vmatprep.mubr.bf16.mxu0 0
        %3757 = vmatmul.mubr.bf16.gmra.mrb[0].mxu0 %v3669
        %v3758 = vpop.f32.mrb[0].mxu0
        %v3759 = vadd.f32 0.0, %v3758
        %v3760 = vpop.f32.mrb[0].mxu0
        %v3761 = vpop.f32.mrb[0].mxu0
        %v3762 = vadd.f32 0.0, %v3761
        %v3763 = vpop.f32.mrb[0].mxu0
        %3764 = vmatprep.mubr.bf16.mxu0 0
        %3765 = vmatmul.mubr.bf16.gmra.mrb[0].mxu0 %v3672
        %v3766 = vpop.f32.mrb[0].mxu0
        %v3767 = vadd.f32 0.0, %v3766
        %v3768 = vpop.f32.mrb[0].mxu0
        %v3769 = vpop.f32.mrb[0].mxu0
        %v3770 = vadd.f32 0.0, %v3769
        %v3771 = vpop.f32.mrb[0].mxu0
        %3772 = vmatprep.mubr.bf16.mxu0 0
        %3773 = vmatmul.mubr.bf16.gmra.mrb[0].mxu0 %v3675
        %v3774 = vpop.f32.mrb[0].mxu0
        %v3775 = vadd.f32 0.0, %v3774
        %v3776 = vpop.f32.mrb[0].mxu0
        %v3777 = vpop.f32.mrb[0].mxu0
        %v3778 = vadd.f32 0.0, %v3777
        %v3779 = vpop.f32.mrb[0].mxu0
        %3780 = vmatprep.mubr.bf16.mxu0 0
        %3781 = vmatmul.mubr.bf16.gmra.mrb[0].mxu0 %v3678
        %v3782 = vpop.f32.mrb[0].mxu0
        %v3783 = vadd.f32 0.0, %v3782
        %v3784 = vpop.f32.mrb[0].mxu0
        %v3785 = vpop.f32.mrb[0].mxu0
        %v3786 = vadd.f32 0.0, %v3785
        %v3787 = vpop.f32.mrb[0].mxu0
        %3788 = vmatprep.mubr.bf16.mxu0 0
        %3789 = vmatmul.mubr.bf16.gmra.mrb[0].mxu0 %v3681
        %v3790 = vpop.f32.mrb[0].mxu0
        %v3791 = vadd.f32 0.0, %v3790
        %v3792 = vpop.f32.mrb[0].mxu0
        %v3793 = vpop.f32.mrb[0].mxu0
        %v3794 = vadd.f32 0.0, %v3793
        %v3795 = vpop.f32.mrb[0].mxu0
        %3796 = vmatprep.mubr.bf16.mxu0 0
        %3797 = vmatmul.mubr.bf16.gmra.mrb[0].mxu0 %v3684
        %v3798 = vpop.f32.mrb[0].mxu0
        %v3799 = vadd.f32 0.0, %v3798
        %v3800 = vpop.f32.mrb[0].mxu0
        %v3801 = vpop.f32.mrb[0].mxu0
        %v3802 = vadd.f32 0.0, %v3801
        %v3803 = vpop.f32.mrb[0].mxu0
        %3804 = vmatprep.mubr.bf16.mxu0 0
        %3805 = vmatmul.mubr.bf16.gmra.mrb[0].mxu0 %v3687
        %v3806 = vpop.f32.mrb[0].mxu0
        %v3807 = vadd.f32 0.0, %v3806
        %v3808 = vpop.f32.mrb[0].mxu0
        %v3809 = vpop.f32.mrb[0].mxu0
        %v3810 = vadd.f32 0.0, %v3809
        %v3811 = vpop.f32.mrb[0].mxu0
        %3812 = vmatprep.mubr.bf16.mxu0 0
        %3813 = vmatmul.mubr.bf16.gmra.mrb[0].mxu0 %v3690
        %v3814 = vpop.f32.mrb[0].mxu0
        %v3815 = vadd.f32 0.0, %v3814
        %v3816 = vpop.f32.mrb[0].mxu0
        %v3817 = vpop.f32.mrb[0].mxu0
        %v3818 = vadd.f32 0.0, %v3817
        %v3819 = vpop.f32.mrb[0].mxu0
        %3820 = vmatprep.mubr.bf16.mxu0 0
        %3821 = vmatmul.mubr.bf16.gmra.mrb[0].mxu0 %v3693
        %v3822 = vpop.f32.mrb[0].mxu0
        %v3823 = vadd.f32 0.0, %v3822
        %v3824 = vpop.f32.mrb[0].mxu0
        %v3825 = vpop.f32.mrb[0].mxu0
        %v3826 = vadd.f32 0.0, %v3825
        %v3827 = vpop.f32.mrb[0].mxu0
        %3828 = vmatprep.mubr.bf16.mxu0 0
        %3829 = vmatmul.mubr.bf16.gmra.mrb[0].mxu0 %v3696
        %v3830 = vpop.f32.mrb[0].mxu0
        %v3831 = vadd.f32 0.0, %v3830
        %v3832 = vpop.f32.mrb[0].mxu0
        %v3833 = vpop.f32.mrb[0].mxu0
        %v3834 = vadd.f32 0.0, %v3833
        %v3835 = vpop.f32.mrb[0].mxu0
        %3836 = vmatprep.mubr.bf16.mxu0 0
        %3837 = vmatmul.mubr.bf16.gmra.mrb[0].mxu0 %v3699
        %v3838 = vpop.f32.mrb[0].mxu0
        %v3839 = vadd.f32 0.0, %v3838
        %v3840 = vpop.f32.mrb[0].mxu0
        %v3841 = vpop.f32.mrb[0].mxu0
        %v3842 = vadd.f32 0.0, %v3841
        %v3843 = vpop.f32.mrb[0].mxu0
        %3844 = vmatprep.mubr.bf16.mxu0 0
        %3845 = vmatmul.mubr.bf16.gmra.mrb[0].mxu0 %v3702
        %v3846 = vpop.f32.mrb[0].mxu0
        %v3847 = vadd.f32 0.0, %v3846
        %v3848 = vpop.f32.mrb[0].mxu0
        %v3849 = vpop.f32.mrb[0].mxu0
        %v3850 = vadd.f32 0.0, %v3849
        %v3851 = vpop.f32.mrb[0].mxu0
        %3852 = vmatprep.mubr.bf16.mxu0 0
        %3853 = vmatmul.mubr.bf16.gmra.mrb[0].mxu0 %v3705
        %v3854 = vpop.f32.mrb[0].mxu0
        %v3855 = vadd.f32 0.0, %v3854
        %v3856 = vpop.f32.mrb[0].mxu0
        %v3857 = vpop.f32.mrb[0].mxu0
        %v3858 = vadd.f32 0.0, %v3857
        %v3859 = vpop.f32.mrb[0].mxu0
        %3860 = vmatprep.mubr.bf16.mxu0 0
        %3861 = vmatmul.mubr.bf16.gmra.mrb[0].mxu0 %v3708
        %v3862 = vpop.f32.mrb[0].mxu0
        %v3863 = vadd.f32 0.0, %v3862
        %v3864 = vpop.f32.mrb[0].mxu0
        %v3865 = vpop.f32.mrb[0].mxu0
        %v3866 = vadd.f32 0.0, %v3865
        %v3867 = vpop.f32.mrb[0].mxu0
        %3868 = vmatprep.mubr.bf16.mxu0 0
        %3869 = vmatmul.mubr.bf16.gmra.mrb[0].mxu0 %v3711
        %v3870 = vpop.f32.mrb[0].mxu0
        %v3871 = vadd.f32 0.0, %v3870
        %v3872 = vpop.f32.mrb[0].mxu0
        %v3873 = vpop.f32.mrb[0].mxu0
        %v3874 = vadd.f32 0.0, %v3873
        %v3875 = vpop.f32.mrb[0].mxu0
        %3876 = vdwg.mxu0
        %v3878 = vsel %vm488, %v3630, 0
        %v3881 = vsel %vm488, %v3631, 0
        %v3884 = vsel %vm488, %v3632, 0
        %v3887 = vsel %vm488, %v3633, 0
        %v3890 = vsel %vm488, %v3634, 0
        %v3893 = vsel %vm488, %v3635, 0
        %v3896 = vsel %vm488, %v3636, 0
        %v3899 = vsel %vm488, %v3637, 0
        %v3902 = vsel %vm488, %v3638, 0
        %v3905 = vsel %vm488, %v3639, 0
        %v3908 = vsel %vm488, %v3640, 0
        %v3911 = vsel %vm488, %v3641, 0
        %v3914 = vsel %vm488, %v3642, 0
        %v3917 = vsel %vm488, %v3643, 0
        %v3920 = vsel %vm488, %v3644, 0
        %v3923 = vsel %vm488, %v3645, 0
        %v3926 = vsel %vm537, %v3646, 0
        %3928 = vmatprep.subr.bf16.mxu0 0
        %3929 = vmatpush1.bf16.msra.mxu0 %v3926
        %3930 = vmatprep.subr.bf16.mxu0 0
        %3931 = vmatpush1.bf16.msra.mxu0 0
        %3932 = vmatprep.subr.bf16.mxu0 0
        %3933 = vmatpush1.bf16.msra.mxu0 0
        %3934 = vmatprep.subr.bf16.mxu0 0
        %3935 = vmatpush1.bf16.msra.mxu0 0
        %3936 = vmatprep.subr.bf16.mxu0 0
        %3937 = vmatpush1.bf16.msra.mxu0 0
        %3938 = vmatprep.subr.bf16.mxu0 0
        %3939 = vmatpush1.bf16.msra.mxu0 0
        %3940 = vmatprep.subr.bf16.mxu0 0
        %3941 = vmatpush1.bf16.msra.mxu0 0
        %3942 = vmatprep.subr.bf16.mxu0 0
        %3943 = vmatpush1.bf16.msra.mxu0 0
        %3944 = vmatprep.subr.bf16.mxu0 0
        %3945 = vmatpush1.bf16.msra.mxu0 0
        %3946 = vmatprep.subr.bf16.mxu0 0
        %3947 = vmatpush1.bf16.msra.mxu0 0
        %3948 = vmatprep.subr.bf16.mxu0 0
        %3949 = vmatpush1.bf16.msra.mxu0 0
        %3950 = vmatprep.subr.bf16.mxu0 0
        %3951 = vmatpush1.bf16.msra.mxu0 0
        %3952 = vmatprep.subr.bf16.mxu0 0
        %3953 = vmatpush1.bf16.msra.mxu0 0
        %3954 = vmatprep.subr.bf16.mxu0 0
        %3955 = vmatpush1.bf16.msra.mxu0 0
        %3956 = vmatprep.subr.bf16.mxu0 0
        %3957 = vmatpush1.bf16.msra.mxu0 0
        %3958 = vmatprep.subr.bf16.mxu0 0
        %3959 = vmatpush1.bf16.msra.mxu0 0
        %3960 = vmatprep.mubr.bf16.mxu0 0
        %3961 = vmatmul.mubr.bf16.gmra.mrb[0].mxu0 %v3878
        %v3962 = vpop.f32.mrb[0].mxu0
        %v3963 = vadd.f32 %v3751, %v3962
        %v3964 = vpop.f32.mrb[0].mxu0
        %v3965 = vpop.f32.mrb[0].mxu0
        %v3966 = vadd.f32 %v3754, %v3965
        %v3967 = vpop.f32.mrb[0].mxu0
        %3968 = vmatprep.mubr.bf16.mxu0 0
        %3969 = vmatmul.mubr.bf16.gmra.mrb[0].mxu0 %v3881
        %v3970 = vpop.f32.mrb[0].mxu0
        %v3971 = vadd.f32 %v3759, %v3970
        %v3972 = vpop.f32.mrb[0].mxu0
        %v3973 = vpop.f32.mrb[0].mxu0
        %v3974 = vadd.f32 %v3762, %v3973
        %v3975 = vpop.f32.mrb[0].mxu0
        %3976 = vmatprep.mubr.bf16.mxu0 0
        %3977 = vmatmul.mubr.bf16.gmra.mrb[0].mxu0 %v3884
        %v3978 = vpop.f32.mrb[0].mxu0
        %v3979 = vadd.f32 %v3767, %v3978
        %v3980 = vpop.f32.mrb[0].mxu0
        %v3981 = vpop.f32.mrb[0].mxu0
        %v3982 = vadd.f32 %v3770, %v3981
        %v3983 = vpop.f32.mrb[0].mxu0
        %3984 = vmatprep.mubr.bf16.mxu0 0
        %3985 = vmatmul.mubr.bf16.gmra.mrb[0].mxu0 %v3887
        %v3986 = vpop.f32.mrb[0].mxu0
        %v3987 = vadd.f32 %v3775, %v3986
        %v3988 = vpop.f32.mrb[0].mxu0
        %v3989 = vpop.f32.mrb[0].mxu0
        %v3990 = vadd.f32 %v3778, %v3989
        %v3991 = vpop.f32.mrb[0].mxu0
        %3992 = vmatprep.mubr.bf16.mxu0 0
        %3993 = vmatmul.mubr.bf16.gmra.mrb[0].mxu0 %v3890
        %v3994 = vpop.f32.mrb[0].mxu0
        %v3995 = vadd.f32 %v3783, %v3994
        %v3996 = vpop.f32.mrb[0].mxu0
        %v3997 = vpop.f32.mrb[0].mxu0
        %v3998 = vadd.f32 %v3786, %v3997
        %v3999 = vpop.f32.mrb[0].mxu0
        %4000 = vmatprep.mubr.bf16.mxu0 0
        %4001 = vmatmul.mubr.bf16.gmra.mrb[0].mxu0 %v3893
        %v4002 = vpop.f32.mrb[0].mxu0
        %v4003 = vadd.f32 %v3791, %v4002
        %v4004 = vpop.f32.mrb[0].mxu0
        %v4005 = vpop.f32.mrb[0].mxu0
        %v4006 = vadd.f32 %v3794, %v4005
        %v4007 = vpop.f32.mrb[0].mxu0
        %4008 = vmatprep.mubr.bf16.mxu0 0
        %4009 = vmatmul.mubr.bf16.gmra.mrb[0].mxu0 %v3896
        %v4010 = vpop.f32.mrb[0].mxu0
        %v4011 = vadd.f32 %v3799, %v4010
        %v4012 = vpop.f32.mrb[0].mxu0
        %v4013 = vpop.f32.mrb[0].mxu0
        %v4014 = vadd.f32 %v3802, %v4013
        %v4015 = vpop.f32.mrb[0].mxu0
        %4016 = vmatprep.mubr.bf16.mxu0 0
        %4017 = vmatmul.mubr.bf16.gmra.mrb[0].mxu0 %v3899
        %v4018 = vpop.f32.mrb[0].mxu0
        %v4019 = vadd.f32 %v3807, %v4018
        %v4020 = vpop.f32.mrb[0].mxu0
        %v4021 = vpop.f32.mrb[0].mxu0
        %v4022 = vadd.f32 %v3810, %v4021
        %v4023 = vpop.f32.mrb[0].mxu0
        %4024 = vmatprep.mubr.bf16.mxu0 0
        %4025 = vmatmul.mubr.bf16.gmra.mrb[0].mxu0 %v3902
        %v4026 = vpop.f32.mrb[0].mxu0
        %v4027 = vadd.f32 %v3815, %v4026
        %v4028 = vpop.f32.mrb[0].mxu0
        %v4029 = vpop.f32.mrb[0].mxu0
        %v4030 = vadd.f32 %v3818, %v4029
        %v4031 = vpop.f32.mrb[0].mxu0
        %4032 = vmatprep.mubr.bf16.mxu0 0
        %4033 = vmatmul.mubr.bf16.gmra.mrb[0].mxu0 %v3905
        %v4034 = vpop.f32.mrb[0].mxu0
        %v4035 = vadd.f32 %v3823, %v4034
        %v4036 = vpop.f32.mrb[0].mxu0
        %v4037 = vpop.f32.mrb[0].mxu0
        %v4038 = vadd.f32 %v3826, %v4037
        %v4039 = vpop.f32.mrb[0].mxu0
        %4040 = vmatprep.mubr.bf16.mxu0 0
        %4041 = vmatmul.mubr.bf16.gmra.mrb[0].mxu0 %v3908
        %v4042 = vpop.f32.mrb[0].mxu0
        %v4043 = vadd.f32 %v3831, %v4042
        %v4044 = vpop.f32.mrb[0].mxu0
        %v4045 = vpop.f32.mrb[0].mxu0
        %v4046 = vadd.f32 %v3834, %v4045
        %v4047 = vpop.f32.mrb[0].mxu0
        %4048 = vmatprep.mubr.bf16.mxu0 0
        %4049 = vmatmul.mubr.bf16.gmra.mrb[0].mxu0 %v3911
        %v4050 = vpop.f32.mrb[0].mxu0
        %v4051 = vadd.f32 %v3839, %v4050
        %v4052 = vpop.f32.mrb[0].mxu0
        %v4053 = vpop.f32.mrb[0].mxu0
        %v4054 = vadd.f32 %v3842, %v4053
        %v4055 = vpop.f32.mrb[0].mxu0
        %4056 = vmatprep.mubr.bf16.mxu0 0
        %4057 = vmatmul.mubr.bf16.gmra.mrb[0].mxu0 %v3914
        %v4058 = vpop.f32.mrb[0].mxu0
        %v4059 = vadd.f32 %v3847, %v4058
        %v4060 = vpop.f32.mrb[0].mxu0
        %v4061 = vpop.f32.mrb[0].mxu0
        %v4062 = vadd.f32 %v3850, %v4061
        %v4063 = vpop.f32.mrb[0].mxu0
        %4064 = vmatprep.mubr.bf16.mxu0 0
        %4065 = vmatmul.mubr.bf16.gmra.mrb[0].mxu0 %v3917
        %v4066 = vpop.f32.mrb[0].mxu0
        %v4067 = vadd.f32 %v3855, %v4066
        %v4068 = vpop.f32.mrb[0].mxu0
        %v4069 = vpop.f32.mrb[0].mxu0
        %v4070 = vadd.f32 %v3858, %v4069
        %v4071 = vpop.f32.mrb[0].mxu0
        %4072 = vmatprep.mubr.bf16.mxu0 0
        %4073 = vmatmul.mubr.bf16.gmra.mrb[0].mxu0 %v3920
        %v4074 = vpop.f32.mrb[0].mxu0
        %v4075 = vadd.f32 %v3863, %v4074
        %v4076 = vpop.f32.mrb[0].mxu0
        %v4077 = vpop.f32.mrb[0].mxu0
        %v4078 = vadd.f32 %v3866, %v4077
        %v4079 = vpop.f32.mrb[0].mxu0
        %4080 = vmatprep.mubr.bf16.mxu0 0
        %4081 = vmatmul.mubr.bf16.gmra.mrb[0].mxu0 %v3923
        %v4082 = vpop.f32.mrb[0].mxu0
        %v4083 = vadd.f32 %v3871, %v4082
        %v4084 = vpop.f32.mrb[0].mxu0
        %v4085 = vpop.f32.mrb[0].mxu0
        %v4086 = vadd.f32 %v3874, %v4085
        %v4087 = vpop.f32.mrb[0].mxu0
        %4088 = vdwg.mxu0
        %v4089 = vpack.c.bf16 %v2679, %v2678
        %v4090 = vpack.c.bf16 %v2707, %v2706
        %v4091 = vpack.c.bf16 %v2733, %v2732
        %v4092 = vpack.c.bf16 %v2735, %v2734
        %v4093 = vpack.c.bf16 %v2737, %v2736
        %v4094 = vpack.c.bf16 %v2739, %v2738
        %v4095 = vpack.c.bf16 %v2741, %v2740
        %v4096 = vpack.c.bf16 %v2743, %v2742
        %v4097 = vpack.c.bf16 %v2745, %v2744
        %v4098 = vpack.c.bf16 %v2747, %v2746
        %v4099 = vpack.c.bf16 %v2749, %v2748
        %v4100 = vpack.c.bf16 %v2751, %v2750
        %v4101 = vpack.c.bf16 %v2753, %v2752
        %v4102 = vpack.c.bf16 %v2755, %v2754
        %v4103 = vpack.c.bf16 %v2731, %v2730
        %v4104 = vpack.c.bf16 %v2705, %v2704
        %s4105 = scalar_lea.vmem [#allocation10], 4
        %v4106 = vld [vmem:[%s4105] sm:$0x3]
        %v4108 = vsel %vm488, %v4089, 0
        %v4111 = vsel %vm488, %v4090, 0
        %v4114 = vsel %vm488, %v4091, 0
        %v4117 = vsel %vm488, %v4092, 0
        %v4120 = vsel %vm488, %v4093, 0
        %v4123 = vsel %vm488, %v4094, 0
        %v4126 = vsel %vm488, %v4095, 0
        %v4129 = vsel %vm488, %v4096, 0
        %v4132 = vsel %vm488, %v4097, 0
        %v4135 = vsel %vm488, %v4098, 0
        %v4138 = vsel %vm488, %v4099, 0
        %v4141 = vsel %vm488, %v4100, 0
        %v4144 = vsel %vm488, %v4101, 0
        %v4147 = vsel %vm488, %v4102, 0
        %v4150 = vsel %vm488, %v4103, 0
        %v4153 = vsel %vm488, %v4104, 0
        %v4156 = vsel %vm537, %v4106, 0
        %4158 = vmatprep.subr.bf16.mxu0 0
        %4159 = vmatpush1.bf16.msra.mxu0 %v4156
        %4160 = vmatprep.subr.bf16.mxu0 0
        %4161 = vmatpush1.bf16.msra.mxu0 0
        %4162 = vmatprep.subr.bf16.mxu0 0
        %4163 = vmatpush1.bf16.msra.mxu0 0
        %4164 = vmatprep.subr.bf16.mxu0 0
        %4165 = vmatpush1.bf16.msra.mxu0 0
        %4166 = vmatprep.subr.bf16.mxu0 0
        %4167 = vmatpush1.bf16.msra.mxu0 0
        %4168 = vmatprep.subr.bf16.mxu0 0
        %4169 = vmatpush1.bf16.msra.mxu0 0
        %4170 = vmatprep.subr.bf16.mxu0 0
        %4171 = vmatpush1.bf16.msra.mxu0 0
        %4172 = vmatprep.subr.bf16.mxu0 0
        %4173 = vmatpush1.bf16.msra.mxu0 0
        %4174 = vmatprep.subr.bf16.mxu0 0
        %4175 = vmatpush1.bf16.msra.mxu0 0
        %4176 = vmatprep.subr.bf16.mxu0 0
        %4177 = vmatpush1.bf16.msra.mxu0 0
        %4178 = vmatprep.subr.bf16.mxu0 0
        %4179 = vmatpush1.bf16.msra.mxu0 0
        %4180 = vmatprep.subr.bf16.mxu0 0
        %4181 = vmatpush1.bf16.msra.mxu0 0
        %4182 = vmatprep.subr.bf16.mxu0 0
        %4183 = vmatpush1.bf16.msra.mxu0 0
        %4184 = vmatprep.subr.bf16.mxu0 0
        %4185 = vmatpush1.bf16.msra.mxu0 0
        %4186 = vmatprep.subr.bf16.mxu0 0
        %4187 = vmatpush1.bf16.msra.mxu0 0
        %4188 = vmatprep.subr.bf16.mxu0 0
        %4189 = vmatpush1.bf16.msra.mxu0 0
        %4190 = vmatprep.mubr.bf16.mxu0 0
        %4191 = vmatmul.mubr.bf16.gmra.mrb[0].mxu0 %v4108
        %v4192 = vpop.f32.mrb[0].mxu0
        %v4193 = vadd.f32 0.0, %v4192
        %v4194 = vpop.f32.mrb[0].mxu0
        %v4195 = vpop.f32.mrb[0].mxu0
        %v4196 = vadd.f32 0.0, %v4195
        %v4197 = vpop.f32.mrb[0].mxu0
        %4198 = vmatprep.mubr.bf16.mxu0 0
        %4199 = vmatmul.mubr.bf16.gmra.mrb[0].mxu0 %v4111
        %v4200 = vpop.f32.mrb[0].mxu0
        %v4201 = vadd.f32 0.0, %v4200
        %v4202 = vpop.f32.mrb[0].mxu0
        %v4203 = vpop.f32.mrb[0].mxu0
        %v4204 = vadd.f32 0.0, %v4203
        %v4205 = vpop.f32.mrb[0].mxu0
        %4206 = vmatprep.mubr.bf16.mxu0 0
        %4207 = vmatmul.mubr.bf16.gmra.mrb[0].mxu0 %v4114
        %v4208 = vpop.f32.mrb[0].mxu0
        %v4209 = vadd.f32 0.0, %v4208
        %v4210 = vpop.f32.mrb[0].mxu0
        %v4211 = vpop.f32.mrb[0].mxu0
        %v4212 = vadd.f32 0.0, %v4211
        %v4213 = vpop.f32.mrb[0].mxu0
        %4214 = vmatprep.mubr.bf16.mxu0 0
        %4215 = vmatmul.mubr.bf16.gmra.mrb[0].mxu0 %v4117
        %v4216 = vpop.f32.mrb[0].mxu0
        %v4217 = vadd.f32 0.0, %v4216
        %v4218 = vpop.f32.mrb[0].mxu0
        %v4219 = vpop.f32.mrb[0].mxu0
        %v4220 = vadd.f32 0.0, %v4219
        %v4221 = vpop.f32.mrb[0].mxu0
        %4222 = vmatprep.mubr.bf16.mxu0 0
        %4223 = vmatmul.mubr.bf16.gmra.mrb[0].mxu0 %v4120
        %v4224 = vpop.f32.mrb[0].mxu0
        %v4225 = vadd.f32 0.0, %v4224
        %v4226 = vpop.f32.mrb[0].mxu0
        %v4227 = vpop.f32.mrb[0].mxu0
        %v4228 = vadd.f32 0.0, %v4227
        %v4229 = vpop.f32.mrb[0].mxu0
        %4230 = vmatprep.mubr.bf16.mxu0 0
        %4231 = vmatmul.mubr.bf16.gmra.mrb[0].mxu0 %v4123
        %v4232 = vpop.f32.mrb[0].mxu0
        %v4233 = vadd.f32 0.0, %v4232
        %v4234 = vpop.f32.mrb[0].mxu0
        %v4235 = vpop.f32.mrb[0].mxu0
        %v4236 = vadd.f32 0.0, %v4235
        %v4237 = vpop.f32.mrb[0].mxu0
        %4238 = vmatprep.mubr.bf16.mxu0 0
        %4239 = vmatmul.mubr.bf16.gmra.mrb[0].mxu0 %v4126
        %v4240 = vpop.f32.mrb[0].mxu0
        %v4241 = vadd.f32 0.0, %v4240
        %v4242 = vpop.f32.mrb[0].mxu0
        %v4243 = vpop.f32.mrb[0].mxu0
        %v4244 = vadd.f32 0.0, %v4243
        %v4245 = vpop.f32.mrb[0].mxu0
        %4246 = vmatprep.mubr.bf16.mxu0 0
        %4247 = vmatmul.mubr.bf16.gmra.mrb[0].mxu0 %v4129
        %v4248 = vpop.f32.mrb[0].mxu0
        %v4249 = vadd.f32 0.0, %v4248
        %v4250 = vpop.f32.mrb[0].mxu0
        %v4251 = vpop.f32.mrb[0].mxu0
        %v4252 = vadd.f32 0.0, %v4251
        %v4253 = vpop.f32.mrb[0].mxu0
        %4254 = vmatprep.mubr.bf16.mxu0 0
        %4255 = vmatmul.mubr.bf16.gmra.mrb[0].mxu0 %v4132
        %v4256 = vpop.f32.mrb[0].mxu0
        %v4257 = vadd.f32 0.0, %v4256
        %v4258 = vpop.f32.mrb[0].mxu0
        %v4259 = vpop.f32.mrb[0].mxu0
        %v4260 = vadd.f32 0.0, %v4259
        %v4261 = vpop.f32.mrb[0].mxu0
        %4262 = vmatprep.mubr.bf16.mxu0 0
        %4263 = vmatmul.mubr.bf16.gmra.mrb[0].mxu0 %v4135
        %v4264 = vpop.f32.mrb[0].mxu0
        %v4265 = vadd.f32 0.0, %v4264
        %v4266 = vpop.f32.mrb[0].mxu0
        %v4267 = vpop.f32.mrb[0].mxu0
        %v4268 = vadd.f32 0.0, %v4267
        %v4269 = vpop.f32.mrb[0].mxu0
        %4270 = vmatprep.mubr.bf16.mxu0 0
        %4271 = vmatmul.mubr.bf16.gmra.mrb[0].mxu0 %v4138
        %v4272 = vpop.f32.mrb[0].mxu0
        %v4273 = vadd.f32 0.0, %v4272
        %v4274 = vpop.f32.mrb[0].mxu0
        %v4275 = vpop.f32.mrb[0].mxu0
        %v4276 = vadd.f32 0.0, %v4275
        %v4277 = vpop.f32.mrb[0].mxu0
        %4278 = vmatprep.mubr.bf16.mxu0 0
        %4279 = vmatmul.mubr.bf16.gmra.mrb[0].mxu0 %v4141
        %v4280 = vpop.f32.mrb[0].mxu0
        %v4281 = vadd.f32 0.0, %v4280
        %v4282 = vpop.f32.mrb[0].mxu0
        %v4283 = vpop.f32.mrb[0].mxu0
        %v4284 = vadd.f32 0.0, %v4283
        %v4285 = vpop.f32.mrb[0].mxu0
        %4286 = vmatprep.mubr.bf16.mxu0 0
        %4287 = vmatmul.mubr.bf16.gmra.mrb[0].mxu0 %v4144
        %v4288 = vpop.f32.mrb[0].mxu0
        %v4289 = vadd.f32 0.0, %v4288
        %v4290 = vpop.f32.mrb[0].mxu0
        %v4291 = vpop.f32.mrb[0].mxu0
        %v4292 = vadd.f32 0.0, %v4291
        %v4293 = vpop.f32.mrb[0].mxu0
        %4294 = vmatprep.mubr.bf16.mxu0 0
        %4295 = vmatmul.mubr.bf16.gmra.mrb[0].mxu0 %v4147
        %v4296 = vpop.f32.mrb[0].mxu0
        %v4297 = vadd.f32 0.0, %v4296
        %v4298 = vpop.f32.mrb[0].mxu0
        %v4299 = vpop.f32.mrb[0].mxu0
        %v4300 = vadd.f32 0.0, %v4299
        %v4301 = vpop.f32.mrb[0].mxu0
        %4302 = vmatprep.mubr.bf16.mxu0 0
        %4303 = vmatmul.mubr.bf16.gmra.mrb[0].mxu0 %v4150
        %v4304 = vpop.f32.mrb[0].mxu0
        %v4305 = vadd.f32 0.0, %v4304
        %v4306 = vpop.f32.mrb[0].mxu0
        %v4307 = vpop.f32.mrb[0].mxu0
        %v4308 = vadd.f32 0.0, %v4307
        %v4309 = vpop.f32.mrb[0].mxu0
        %4310 = vmatprep.mubr.bf16.mxu0 0
        %4311 = vmatmul.mubr.bf16.gmra.mrb[0].mxu0 %v4153
        %v4312 = vpop.f32.mrb[0].mxu0
        %v4313 = vadd.f32 0.0, %v4312
        %v4314 = vpop.f32.mrb[0].mxu0
        %v4315 = vpop.f32.mrb[0].mxu0
        %v4316 = vadd.f32 0.0, %v4315
        %v4317 = vpop.f32.mrb[0].mxu0
        %4318 = vdwg.mxu0
        %v4319 = vadd.f32 %v3963, %v4193
        %v4320 = vadd.f32 %v3966, %v4196
        %v4321 = vadd.f32 %v3971, %v4201
        %v4322 = vadd.f32 %v3974, %v4204
        %v4323 = vadd.f32 %v3979, %v4209
        %v4324 = vadd.f32 %v3982, %v4212
        %v4325 = vadd.f32 %v3987, %v4217
        %v4326 = vadd.f32 %v3990, %v4220
        %v4327 = vadd.f32 %v3995, %v4225
        %v4328 = vadd.f32 %v3998, %v4228
        %v4329 = vadd.f32 %v4003, %v4233
        %v4330 = vadd.f32 %v4006, %v4236
        %v4331 = vadd.f32 %v4011, %v4241
        %v4332 = vadd.f32 %v4014, %v4244
        %v4333 = vadd.f32 %v4019, %v4249
        %v4334 = vadd.f32 %v4022, %v4252
        %v4335 = vadd.f32 %v4027, %v4257
        %v4336 = vadd.f32 %v4030, %v4260
        %v4337 = vadd.f32 %v4035, %v4265
        %v4338 = vadd.f32 %v4038, %v4268
        %v4339 = vadd.f32 %v4043, %v4273
        %v4340 = vadd.f32 %v4046, %v4276
        %v4341 = vadd.f32 %v4051, %v4281
        %v4342 = vadd.f32 %v4054, %v4284
        %v4343 = vadd.f32 %v4059, %v4289
        %v4344 = vadd.f32 %v4062, %v4292
        %v4345 = vadd.f32 %v4067, %v4297
        %v4346 = vadd.f32 %v4070, %v4300
        %v4347 = vadd.f32 %v4075, %v4305
        %v4348 = vadd.f32 %v4078, %v4308
        %v4349 = vadd.f32 %v4083, %v4313
        %v4350 = vadd.f32 %v4086, %v4316
        %v4351 = vpack.c.bf16 %v3553, %v3552
        %v4352 = vpack.c.bf16 %v3581, %v3580
        %v4353 = vpack.c.bf16 %v3607, %v3606
        %v4354 = vpack.c.bf16 %v3609, %v3608
        %v4355 = vpack.c.bf16 %v3611, %v3610
        %v4356 = vpack.c.bf16 %v3613, %v3612
        %v4357 = vpack.c.bf16 %v3615, %v3614
        %v4358 = vpack.c.bf16 %v3617, %v3616
        %v4359 = vpack.c.bf16 %v3619, %v3618
        %v4360 = vpack.c.bf16 %v3621, %v3620
        %v4361 = vpack.c.bf16 %v3623, %v3622
        %v4362 = vpack.c.bf16 %v3625, %v3624
        %v4363 = vpack.c.bf16 %v3627, %v3626
        %v4364 = vpack.c.bf16 %v3629, %v3628
        %v4365 = vpack.c.bf16 %v3605, %v3604
        %v4366 = vpack.c.bf16 %v3579, %v3578
        %s4367 = scalar_lea.vmem [#allocation10], 6
        %v4368 = vld [vmem:[%s4367] sm:$0x3]
        %v4370 = vsel %vm488, %v4351, 0
        %v4373 = vsel %vm488, %v4352, 0
        %v4376 = vsel %vm488, %v4353, 0
        %v4379 = vsel %vm488, %v4354, 0
        %v4382 = vsel %vm488, %v4355, 0
        %v4385 = vsel %vm488, %v4356, 0
        %v4388 = vsel %vm488, %v4357, 0
        %v4391 = vsel %vm488, %v4358, 0
        %v4394 = vsel %vm488, %v4359, 0
        %v4397 = vsel %vm488, %v4360, 0
        %v4400 = vsel %vm488, %v4361, 0
        %v4403 = vsel %vm488, %v4362, 0
        %v4406 = vsel %vm488, %v4363, 0
        %v4409 = vsel %vm488, %v4364, 0
        %v4412 = vsel %vm488, %v4365, 0
        %v4415 = vsel %vm488, %v4366, 0
        %v4418 = vsel %vm537, %v4368, 0
        %4420 = vmatprep.subr.bf16.mxu0 0
        %4421 = vmatpush1.bf16.msra.mxu0 %v4418
        %4422 = vmatprep.subr.bf16.mxu0 0
        %4423 = vmatpush1.bf16.msra.mxu0 0
        %4424 = vmatprep.subr.bf16.mxu0 0
        %4425 = vmatpush1.bf16.msra.mxu0 0
        %4426 = vmatprep.subr.bf16.mxu0 0
        %4427 = vmatpush1.bf16.msra.mxu0 0
        %4428 = vmatprep.subr.bf16.mxu0 0
        %4429 = vmatpush1.bf16.msra.mxu0 0
        %4430 = vmatprep.subr.bf16.mxu0 0
        %4431 = vmatpush1.bf16.msra.mxu0 0
        %4432 = vmatprep.subr.bf16.mxu0 0
        %4433 = vmatpush1.bf16.msra.mxu0 0
        %4434 = vmatprep.subr.bf16.mxu0 0
        %4435 = vmatpush1.bf16.msra.mxu0 0
        %4436 = vmatprep.subr.bf16.mxu0 0
        %4437 = vmatpush1.bf16.msra.mxu0 0
        %4438 = vmatprep.subr.bf16.mxu0 0
        %4439 = vmatpush1.bf16.msra.mxu0 0
        %4440 = vmatprep.subr.bf16.mxu0 0
        %4441 = vmatpush1.bf16.msra.mxu0 0
        %4442 = vmatprep.subr.bf16.mxu0 0
        %4443 = vmatpush1.bf16.msra.mxu0 0
        %4444 = vmatprep.subr.bf16.mxu0 0
        %4445 = vmatpush1.bf16.msra.mxu0 0
        %4446 = vmatprep.subr.bf16.mxu0 0
        %4447 = vmatpush1.bf16.msra.mxu0 0
        %4448 = vmatprep.subr.bf16.mxu0 0
        %4449 = vmatpush1.bf16.msra.mxu0 0
        %4450 = vmatprep.subr.bf16.mxu0 0
        %4451 = vmatpush1.bf16.msra.mxu0 0
        %4452 = vmatprep.mubr.bf16.mxu0 0
        %4453 = vmatmul.mubr.bf16.gmra.mrb[0].mxu0 %v4370
        %v4454 = vpop.f32.mrb[0].mxu0
        %v4455 = vadd.f32 0.0, %v4454
        %v4456 = vpop.f32.mrb[0].mxu0
        %v4457 = vpop.f32.mrb[0].mxu0
        %v4458 = vadd.f32 0.0, %v4457
        %v4459 = vpop.f32.mrb[0].mxu0
        %4460 = vmatprep.mubr.bf16.mxu0 0
        %4461 = vmatmul.mubr.bf16.gmra.mrb[0].mxu0 %v4373
        %v4462 = vpop.f32.mrb[0].mxu0
        %v4463 = vadd.f32 0.0, %v4462
        %v4464 = vpop.f32.mrb[0].mxu0
        %v4465 = vpop.f32.mrb[0].mxu0
        %v4466 = vadd.f32 0.0, %v4465
        %v4467 = vpop.f32.mrb[0].mxu0
        %4468 = vmatprep.mubr.bf16.mxu0 0
        %4469 = vmatmul.mubr.bf16.gmra.mrb[0].mxu0 %v4376
        %v4470 = vpop.f32.mrb[0].mxu0
        %v4471 = vadd.f32 0.0, %v4470
        %v4472 = vpop.f32.mrb[0].mxu0
        %v4473 = vpop.f32.mrb[0].mxu0
        %v4474 = vadd.f32 0.0, %v4473
        %v4475 = vpop.f32.mrb[0].mxu0
        %4476 = vmatprep.mubr.bf16.mxu0 0
        %4477 = vmatmul.mubr.bf16.gmra.mrb[0].mxu0 %v4379
        %v4478 = vpop.f32.mrb[0].mxu0
        %v4479 = vadd.f32 0.0, %v4478
        %v4480 = vpop.f32.mrb[0].mxu0
        %v4481 = vpop.f32.mrb[0].mxu0
        %v4482 = vadd.f32 0.0, %v4481
        %v4483 = vpop.f32.mrb[0].mxu0
        %4484 = vmatprep.mubr.bf16.mxu0 0
        %4485 = vmatmul.mubr.bf16.gmra.mrb[0].mxu0 %v4382
        %v4486 = vpop.f32.mrb[0].mxu0
        %v4487 = vadd.f32 0.0, %v4486
        %v4488 = vpop.f32.mrb[0].mxu0
        %v4489 = vpop.f32.mrb[0].mxu0
        %v4490 = vadd.f32 0.0, %v4489
        %v4491 = vpop.f32.mrb[0].mxu0
        %4492 = vmatprep.mubr.bf16.mxu0 0
        %4493 = vmatmul.mubr.bf16.gmra.mrb[0].mxu0 %v4385
        %v4494 = vpop.f32.mrb[0].mxu0
        %v4495 = vadd.f32 0.0, %v4494
        %v4496 = vpop.f32.mrb[0].mxu0
        %v4497 = vpop.f32.mrb[0].mxu0
        %v4498 = vadd.f32 0.0, %v4497
        %v4499 = vpop.f32.mrb[0].mxu0
        %4500 = vmatprep.mubr.bf16.mxu0 0
        %4501 = vmatmul.mubr.bf16.gmra.mrb[0].mxu0 %v4388
        %v4502 = vpop.f32.mrb[0].mxu0
        %v4503 = vadd.f32 0.0, %v4502
        %v4504 = vpop.f32.mrb[0].mxu0
        %v4505 = vpop.f32.mrb[0].mxu0
        %v4506 = vadd.f32 0.0, %v4505
        %v4507 = vpop.f32.mrb[0].mxu0
        %4508 = vmatprep.mubr.bf16.mxu0 0
        %4509 = vmatmul.mubr.bf16.gmra.mrb[0].mxu0 %v4391
        %v4510 = vpop.f32.mrb[0].mxu0
        %v4511 = vadd.f32 0.0, %v4510
        %v4512 = vpop.f32.mrb[0].mxu0
        %v4513 = vpop.f32.mrb[0].mxu0
        %v4514 = vadd.f32 0.0, %v4513
        %v4515 = vpop.f32.mrb[0].mxu0
        %4516 = vmatprep.mubr.bf16.mxu0 0
        %4517 = vmatmul.mubr.bf16.gmra.mrb[0].mxu0 %v4394
        %v4518 = vpop.f32.mrb[0].mxu0
        %v4519 = vadd.f32 0.0, %v4518
        %v4520 = vpop.f32.mrb[0].mxu0
        %v4521 = vpop.f32.mrb[0].mxu0
        %v4522 = vadd.f32 0.0, %v4521
        %v4523 = vpop.f32.mrb[0].mxu0
        %4524 = vmatprep.mubr.bf16.mxu0 0
        %4525 = vmatmul.mubr.bf16.gmra.mrb[0].mxu0 %v4397
        %v4526 = vpop.f32.mrb[0].mxu0
        %v4527 = vadd.f32 0.0, %v4526
        %v4528 = vpop.f32.mrb[0].mxu0
        %v4529 = vpop.f32.mrb[0].mxu0
        %v4530 = vadd.f32 0.0, %v4529
        %v4531 = vpop.f32.mrb[0].mxu0
        %4532 = vmatprep.mubr.bf16.mxu0 0
        %4533 = vmatmul.mubr.bf16.gmra.mrb[0].mxu0 %v4400
        %v4534 = vpop.f32.mrb[0].mxu0
        %v4535 = vadd.f32 0.0, %v4534
        %v4536 = vpop.f32.mrb[0].mxu0
        %v4537 = vpop.f32.mrb[0].mxu0
        %v4538 = vadd.f32 0.0, %v4537
        %v4539 = vpop.f32.mrb[0].mxu0
        %4540 = vmatprep.mubr.bf16.mxu0 0
        %4541 = vmatmul.mubr.bf16.gmra.mrb[0].mxu0 %v4403
        %v4542 = vpop.f32.mrb[0].mxu0
        %v4543 = vadd.f32 0.0, %v4542
        %v4544 = vpop.f32.mrb[0].mxu0
        %v4545 = vpop.f32.mrb[0].mxu0
        %v4546 = vadd.f32 0.0, %v4545
        %v4547 = vpop.f32.mrb[0].mxu0
        %4548 = vmatprep.mubr.bf16.mxu0 0
        %4549 = vmatmul.mubr.bf16.gmra.mrb[0].mxu0 %v4406
        %v4550 = vpop.f32.mrb[0].mxu0
        %v4551 = vadd.f32 0.0, %v4550
        %v4552 = vpop.f32.mrb[0].mxu0
        %v4553 = vpop.f32.mrb[0].mxu0
        %v4554 = vadd.f32 0.0, %v4553
        %v4555 = vpop.f32.mrb[0].mxu0
        %4556 = vmatprep.mubr.bf16.mxu0 0
        %4557 = vmatmul.mubr.bf16.gmra.mrb[0].mxu0 %v4409
        %v4558 = vpop.f32.mrb[0].mxu0
        %v4559 = vadd.f32 0.0, %v4558
        %v4560 = vpop.f32.mrb[0].mxu0
        %v4561 = vpop.f32.mrb[0].mxu0
        %v4562 = vadd.f32 0.0, %v4561
        %v4563 = vpop.f32.mrb[0].mxu0
        %4564 = vmatprep.mubr.bf16.mxu0 0
        %4565 = vmatmul.mubr.bf16.gmra.mrb[0].mxu0 %v4412
        %v4566 = vpop.f32.mrb[0].mxu0
        %v4567 = vadd.f32 0.0, %v4566
        %v4568 = vpop.f32.mrb[0].mxu0
        %v4569 = vpop.f32.mrb[0].mxu0
        %v4570 = vadd.f32 0.0, %v4569
        %v4571 = vpop.f32.mrb[0].mxu0
        %4572 = vmatprep.mubr.bf16.mxu0 0
        %4573 = vmatmul.mubr.bf16.gmra.mrb[0].mxu0 %v4415
        %v4574 = vpop.f32.mrb[0].mxu0
        %v4575 = vadd.f32 0.0, %v4574
        %v4576 = vpop.f32.mrb[0].mxu0
        %v4577 = vpop.f32.mrb[0].mxu0
        %v4578 = vadd.f32 0.0, %v4577
        %v4579 = vpop.f32.mrb[0].mxu0
        %4580 = vdwg.mxu0
        %v4581 = vadd.f32 %v4319, %v4455
        %v4582 = vadd.f32 %v4320, %v4458
        %v4583 = vadd.f32 %v4321, %v4463
        %v4584 = vadd.f32 %v4322, %v4466
        %v4585 = vadd.f32 %v4323, %v4471
        %v4586 = vadd.f32 %v4324, %v4474
        %v4587 = vadd.f32 %v4325, %v4479
        %v4588 = vadd.f32 %v4326, %v4482
        %v4589 = vadd.f32 %v4327, %v4487
        %v4590 = vadd.f32 %v4328, %v4490
        %v4591 = vadd.f32 %v4329, %v4495
        %v4592 = vadd.f32 %v4330, %v4498
        %v4593 = vadd.f32 %v4331, %v4503
        %v4594 = vadd.f32 %v4332, %v4506
        %v4595 = vadd.f32 %v4333, %v4511
        %v4596 = vadd.f32 %v4334, %v4514
        %v4597 = vadd.f32 %v4335, %v4519
        %v4598 = vadd.f32 %v4336, %v4522
        %v4599 = vadd.f32 %v4337, %v4527
        %v4600 = vadd.f32 %v4338, %v4530
        %v4601 = vadd.f32 %v4339, %v4535
        %v4602 = vadd.f32 %v4340, %v4538
        %v4603 = vadd.f32 %v4341, %v4543
        %v4604 = vadd.f32 %v4342, %v4546
        %v4605 = vadd.f32 %v4343, %v4551
        %v4606 = vadd.f32 %v4344, %v4554
        %v4607 = vadd.f32 %v4345, %v4559
        %v4608 = vadd.f32 %v4346, %v4562
        %v4609 = vadd.f32 %v4347, %v4567
        %v4610 = vadd.f32 %v4348, %v4570
        %v4611 = vadd.f32 %v4349, %v4575
        %v4612 = vadd.f32 %v4350, %v4578
        %v4613 = vld [vmem:[#allocation11] sm:$0x1]
        %v4615 = vlaneseq
        %v4616 = vshrl.u32 %v4615, 7
        %v4617 = vsub.s32 0, %v4616
        %v4618 = vrot.slane %v4613, %v4617
        %v4620 = vmul.f32 %v4581, %v4618
        %v4621 = vmul.f32 %v4582, %v4618
        %v4622 = vmul.f32 %v4583, %v4618
        %v4623 = vmul.f32 %v4584, %v4618
        %v4624 = vmul.f32 %v4585, %v4618
        %v4625 = vmul.f32 %v4586, %v4618
        %v4626 = vmul.f32 %v4587, %v4618
        %v4627 = vmul.f32 %v4588, %v4618
        %v4628 = vmul.f32 %v4589, %v4618
        %v4629 = vmul.f32 %v4590, %v4618
        %v4630 = vmul.f32 %v4591, %v4618
        %v4631 = vmul.f32 %v4592, %v4618
        %v4632 = vmul.f32 %v4593, %v4618
        %v4633 = vmul.f32 %v4594, %v4618
        %v4634 = vmul.f32 %v4595, %v4618
        %v4635 = vmul.f32 %v4596, %v4618
        %v4636 = vmul.f32 %v4597, %v4618
        %v4637 = vmul.f32 %v4598, %v4618
        %v4638 = vmul.f32 %v4599, %v4618
        %v4639 = vmul.f32 %v4600, %v4618
        %v4640 = vmul.f32 %v4601, %v4618
        %v4641 = vmul.f32 %v4602, %v4618
        %v4642 = vmul.f32 %v4603, %v4618
        %v4643 = vmul.f32 %v4604, %v4618
        %v4644 = vmul.f32 %v4605, %v4618
        %v4645 = vmul.f32 %v4606, %v4618
        %v4646 = vmul.f32 %v4607, %v4618
        %v4647 = vmul.f32 %v4608, %v4618
        %v4648 = vmul.f32 %v4609, %v4618
        %v4649 = vmul.f32 %v4610, %v4618
        %v4650 = vmul.f32 %v4611, %v4618
        %v4651 = vmul.f32 %v4612, %v4618
        %v4652 = vld [vmem:[#allocation13] sm:$0x1]
        %v4654 = vlaneseq
        %v4655 = vshrl.u32 %v4654, 7
        %v4656 = vsub.s32 0, %v4655
        %v4657 = vrot.slane %v4652, %v4656
        %v4659 = vadd.f32 %v4620, %v4657
        %v4660 = vadd.f32 %v4621, %v4657
        %v4661 = vadd.f32 %v4622, %v4657
        %v4662 = vadd.f32 %v4623, %v4657
        %v4663 = vadd.f32 %v4624, %v4657
        %v4664 = vadd.f32 %v4625, %v4657
        %v4665 = vadd.f32 %v4626, %v4657
        %v4666 = vadd.f32 %v4627, %v4657
        %v4667 = vadd.f32 %v4628, %v4657
        %v4668 = vadd.f32 %v4629, %v4657
        %v4669 = vadd.f32 %v4630, %v4657
        %v4670 = vadd.f32 %v4631, %v4657
        %v4671 = vadd.f32 %v4632, %v4657
        %v4672 = vadd.f32 %v4633, %v4657
        %v4673 = vadd.f32 %v4634, %v4657
        %v4674 = vadd.f32 %v4635, %v4657
        %v4675 = vadd.f32 %v4636, %v4657
        %v4676 = vadd.f32 %v4637, %v4657
        %v4677 = vadd.f32 %v4638, %v4657
        %v4678 = vadd.f32 %v4639, %v4657
        %v4679 = vadd.f32 %v4640, %v4657
        %v4680 = vadd.f32 %v4641, %v4657
        %v4681 = vadd.f32 %v4642, %v4657
        %v4682 = vadd.f32 %v4643, %v4657
        %v4683 = vadd.f32 %v4644, %v4657
        %v4684 = vadd.f32 %v4645, %v4657
        %v4685 = vadd.f32 %v4646, %v4657
        %v4686 = vadd.f32 %v4647, %v4657
        %v4687 = vadd.f32 %v4648, %v4657
        %v4688 = vadd.f32 %v4649, %v4657
        %v4689 = vadd.f32 %v4650, %v4657
        %v4690 = vadd.f32 %v4651, %v4657
        %v4691 = vsub.f32 0.0, %v4659
        %v4692 = vsub.f32 0.0, %v4660
        %v4693 = vsub.f32 0.0, %v4661
        %v4694 = vsub.f32 0.0, %v4662
        %v4695 = vsub.f32 0.0, %v4663
        %v4696 = vsub.f32 0.0, %v4664
        %v4697 = vsub.f32 0.0, %v4665
        %v4698 = vsub.f32 0.0, %v4666
        %v4699 = vsub.f32 0.0, %v4667
        %v4700 = vsub.f32 0.0, %v4668
        %v4701 = vsub.f32 0.0, %v4669
        %v4702 = vsub.f32 0.0, %v4670
        %v4703 = vsub.f32 0.0, %v4671
        %v4704 = vsub.f32 0.0, %v4672
        %v4705 = vsub.f32 0.0, %v4673
        %v4706 = vsub.f32 0.0, %v4674
        %v4707 = vsub.f32 0.0, %v4675
        %v4708 = vsub.f32 0.0, %v4676
        %v4709 = vsub.f32 0.0, %v4677
        %v4710 = vsub.f32 0.0, %v4678
        %v4711 = vsub.f32 0.0, %v4679
        %v4712 = vsub.f32 0.0, %v4680
        %v4713 = vsub.f32 0.0, %v4681
        %v4714 = vsub.f32 0.0, %v4682
        %v4715 = vsub.f32 0.0, %v4683
        %v4716 = vsub.f32 0.0, %v4684
        %v4717 = vsub.f32 0.0, %v4685
        %v4718 = vsub.f32 0.0, %v4686
        %v4719 = vsub.f32 0.0, %v4687
        %v4720 = vsub.f32 0.0, %v4688
        %v4721 = vsub.f32 0.0, %v4689
        %v4722 = vsub.f32 0.0, %v4690
        %v4723 = vmul.f32 %v4691, 1.442695
        %v4724 = vpow.pop %v4723
        %v4725 = vmul.f32 %v4692, 1.442695
        %v4726 = vpow.pop %v4725
        %v4727 = vmul.f32 %v4693, 1.442695
        %v4728 = vpow.pop %v4727
        %v4729 = vmul.f32 %v4694, 1.442695
        %v4730 = vpow.pop %v4729
        %v4731 = vmul.f32 %v4695, 1.442695
        %v4732 = vpow.pop %v4731
        %v4733 = vmul.f32 %v4696, 1.442695
        %v4734 = vpow.pop %v4733
        %v4735 = vmul.f32 %v4697, 1.442695
        %v4736 = vpow.pop %v4735
        %v4737 = vmul.f32 %v4698, 1.442695
        %v4738 = vpow.pop %v4737
        %v4739 = vmul.f32 %v4699, 1.442695
        %v4740 = vpow.pop %v4739
        %v4741 = vmul.f32 %v4700, 1.442695
        %v4742 = vpow.pop %v4741
        %v4743 = vmul.f32 %v4701, 1.442695
        %v4744 = vpow.pop %v4743
        %v4745 = vmul.f32 %v4702, 1.442695
        %v4746 = vpow.pop %v4745
        %v4747 = vmul.f32 %v4703, 1.442695
        %v4748 = vpow.pop %v4747
        %v4749 = vmul.f32 %v4704, 1.442695
        %v4750 = vpow.pop %v4749
        %v4751 = vmul.f32 %v4705, 1.442695
        %v4752 = vpow.pop %v4751
        %v4753 = vmul.f32 %v4706, 1.442695
        %v4754 = vpow.pop %v4753
        %v4755 = vmul.f32 %v4707, 1.442695
        %v4756 = vpow.pop %v4755
        %v4757 = vmul.f32 %v4708, 1.442695
        %v4758 = vpow.pop %v4757
        %v4759 = vmul.f32 %v4709, 1.442695
        %v4760 = vpow.pop %v4759
        %v4761 = vmul.f32 %v4710, 1.442695
        %v4762 = vpow.pop %v4761
        %v4763 = vmul.f32 %v4711, 1.442695
        %v4764 = vpow.pop %v4763
        %v4765 = vmul.f32 %v4712, 1.442695
        %v4766 = vpow.pop %v4765
        %v4767 = vmul.f32 %v4713, 1.442695
        %v4768 = vpow.pop %v4767
        %v4769 = vmul.f32 %v4714, 1.442695
        %v4770 = vpow.pop %v4769
        %v4771 = vmul.f32 %v4715, 1.442695
        %v4772 = vpow.pop %v4771
        %v4773 = vmul.f32 %v4716, 1.442695
        %v4774 = vpow.pop %v4773
        %v4775 = vmul.f32 %v4717, 1.442695
        %v4776 = vpow.pop %v4775
        %v4777 = vmul.f32 %v4718, 1.442695
        %v4778 = vpow.pop %v4777
        %v4779 = vmul.f32 %v4719, 1.442695
        %v4780 = vpow.pop %v4779
        %v4781 = vmul.f32 %v4720, 1.442695
        %v4782 = vpow.pop %v4781
        %v4783 = vmul.f32 %v4721, 1.442695
        %v4784 = vpow.pop %v4783
        %v4785 = vmul.f32 %v4722, 1.442695
        %v4786 = vpow.pop %v4785
        %v4787 = vadd.f32 %v4724, 1.0
        %v4788 = vadd.f32 %v4726, 1.0
        %v4789 = vadd.f32 %v4728, 1.0
        %v4790 = vadd.f32 %v4730, 1.0
        %v4791 = vadd.f32 %v4732, 1.0
        %v4792 = vadd.f32 %v4734, 1.0
        %v4793 = vadd.f32 %v4736, 1.0
        %v4794 = vadd.f32 %v4738, 1.0
        %v4795 = vadd.f32 %v4740, 1.0
        %v4796 = vadd.f32 %v4742, 1.0
        %v4797 = vadd.f32 %v4744, 1.0
        %v4798 = vadd.f32 %v4746, 1.0
        %v4799 = vadd.f32 %v4748, 1.0
        %v4800 = vadd.f32 %v4750, 1.0
        %v4801 = vadd.f32 %v4752, 1.0
        %v4802 = vadd.f32 %v4754, 1.0
        %v4803 = vadd.f32 %v4756, 1.0
        %v4804 = vadd.f32 %v4758, 1.0
        %v4805 = vadd.f32 %v4760, 1.0
        %v4806 = vadd.f32 %v4762, 1.0
        %v4807 = vadd.f32 %v4764, 1.0
        %v4808 = vadd.f32 %v4766, 1.0
        %v4809 = vadd.f32 %v4768, 1.0
        %v4810 = vadd.f32 %v4770, 1.0
        %v4811 = vadd.f32 %v4772, 1.0
        %v4812 = vadd.f32 %v4774, 1.0
        %v4813 = vadd.f32 %v4776, 1.0
        %v4814 = vadd.f32 %v4778, 1.0
        %v4815 = vadd.f32 %v4780, 1.0
        %v4816 = vadd.f32 %v4782, 1.0
        %v4817 = vadd.f32 %v4784, 1.0
        %v4818 = vadd.f32 %v4786, 1.0
        %v4819 = vrcp.pop %v4787
        %v4820 = vmul.f32 1.0, %v4819
        %v4821 = vrcp.pop %v4788
        %v4822 = vmul.f32 1.0, %v4821
        %v4823 = vrcp.pop %v4789
        %v4824 = vmul.f32 1.0, %v4823
        %v4825 = vrcp.pop %v4790
        %v4826 = vmul.f32 1.0, %v4825
        %v4827 = vrcp.pop %v4791
        %v4828 = vmul.f32 1.0, %v4827
        %v4829 = vrcp.pop %v4792
        %v4830 = vmul.f32 1.0, %v4829
        %v4831 = vrcp.pop %v4793
        %v4832 = vmul.f32 1.0, %v4831
        %v4833 = vrcp.pop %v4794
        %v4834 = vmul.f32 1.0, %v4833
        %v4835 = vrcp.pop %v4795
        %v4836 = vmul.f32 1.0, %v4835
        %v4837 = vrcp.pop %v4796
        %v4838 = vmul.f32 1.0, %v4837
        %v4839 = vrcp.pop %v4797
        %v4840 = vmul.f32 1.0, %v4839
        %v4841 = vrcp.pop %v4798
        %v4842 = vmul.f32 1.0, %v4841
        %v4843 = vrcp.pop %v4799
        %v4844 = vmul.f32 1.0, %v4843
        %v4845 = vrcp.pop %v4800
        %v4846 = vmul.f32 1.0, %v4845
        %v4847 = vrcp.pop %v4801
        %v4848 = vmul.f32 1.0, %v4847
        %v4849 = vrcp.pop %v4802
        %v4850 = vmul.f32 1.0, %v4849
        %v4851 = vrcp.pop %v4803
        %v4852 = vmul.f32 1.0, %v4851
        %v4853 = vrcp.pop %v4804
        %v4854 = vmul.f32 1.0, %v4853
        %v4855 = vrcp.pop %v4805
        %v4856 = vmul.f32 1.0, %v4855
        %v4857 = vrcp.pop %v4806
        %v4858 = vmul.f32 1.0, %v4857
        %v4859 = vrcp.pop %v4807
        %v4860 = vmul.f32 1.0, %v4859
        %v4861 = vrcp.pop %v4808
        %v4862 = vmul.f32 1.0, %v4861
        %v4863 = vrcp.pop %v4809
        %v4864 = vmul.f32 1.0, %v4863
        %v4865 = vrcp.pop %v4810
        %v4866 = vmul.f32 1.0, %v4865
        %v4867 = vrcp.pop %v4811
        %v4868 = vmul.f32 1.0, %v4867
        %v4869 = vrcp.pop %v4812
        %v4870 = vmul.f32 1.0, %v4869
        %v4871 = vrcp.pop %v4813
        %v4872 = vmul.f32 1.0, %v4871
        %v4873 = vrcp.pop %v4814
        %v4874 = vmul.f32 1.0, %v4873
        %v4875 = vrcp.pop %v4815
        %v4876 = vmul.f32 1.0, %v4875
        %v4877 = vrcp.pop %v4816
        %v4878 = vmul.f32 1.0, %v4877
        %v4879 = vrcp.pop %v4817
        %v4880 = vmul.f32 1.0, %v4879
        %v4881 = vrcp.pop %v4818
        %v4882 = vmul.f32 1.0, %v4881
        %v4883 = vmul.f32 %v4659, %v4820
        %v4884 = vmul.f32 %v4660, %v4822
        %v4885 = vmul.f32 %v4661, %v4824
        %v4886 = vmul.f32 %v4662, %v4826
        %v4887 = vmul.f32 %v4663, %v4828
        %v4888 = vmul.f32 %v4664, %v4830
        %v4889 = vmul.f32 %v4665, %v4832
        %v4890 = vmul.f32 %v4666, %v4834
        %v4891 = vmul.f32 %v4667, %v4836
        %v4892 = vmul.f32 %v4668, %v4838
        %v4893 = vmul.f32 %v4669, %v4840
        %v4894 = vmul.f32 %v4670, %v4842
        %v4895 = vmul.f32 %v4671, %v4844
        %v4896 = vmul.f32 %v4672, %v4846
        %v4897 = vmul.f32 %v4673, %v4848
        %v4898 = vmul.f32 %v4674, %v4850
        %v4899 = vmul.f32 %v4675, %v4852
        %v4900 = vmul.f32 %v4676, %v4854
        %v4901 = vmul.f32 %v4677, %v4856
        %v4902 = vmul.f32 %v4678, %v4858
        %v4903 = vmul.f32 %v4679, %v4860
        %v4904 = vmul.f32 %v4680, %v4862
        %v4905 = vmul.f32 %v4681, %v4864
        %v4906 = vmul.f32 %v4682, %v4866
        %v4907 = vmul.f32 %v4683, %v4868
        %v4908 = vmul.f32 %v4684, %v4870
        %v4909 = vmul.f32 %v4685, %v4872
        %v4910 = vmul.f32 %v4686, %v4874
        %v4911 = vmul.f32 %v4687, %v4876
        %v4912 = vmul.f32 %v4688, %v4878
        %v4913 = vmul.f32 %v4689, %v4880
        %v4914 = vmul.f32 %v4690, %v4882
        %v4915 = vpack.c.bf16 %v4884, %v4883
        %v4916 = vpack.c.bf16 %v4886, %v4885
        %v4917 = vpack.c.bf16 %v4888, %v4887
        %v4918 = vpack.c.bf16 %v4890, %v4889
        %v4919 = vpack.c.bf16 %v4892, %v4891
        %v4920 = vpack.c.bf16 %v4894, %v4893
        %v4921 = vpack.c.bf16 %v4896, %v4895
        %v4922 = vpack.c.bf16 %v4898, %v4897
        %v4923 = vpack.c.bf16 %v4900, %v4899
        %v4924 = vpack.c.bf16 %v4902, %v4901
        %v4925 = vpack.c.bf16 %v4904, %v4903
        %v4926 = vpack.c.bf16 %v4906, %v4905
        %v4927 = vpack.c.bf16 %v4908, %v4907
        %v4928 = vpack.c.bf16 %v4910, %v4909
        %v4929 = vpack.c.bf16 %v4912, %v4911
        %v4930 = vpack.c.bf16 %v4914, %v4913
        %v4947 = vunpack.c.l.b16 %v4915
        %v4948 = vunpack.c.h.b16 %v4915
        %v4949 = vunpack.c.l.b16 %v4916
        %v4950 = vunpack.c.h.b16 %v4916
        %v4951 = vunpack.c.l.b16 %v4917
        %v4952 = vunpack.c.h.b16 %v4917
        %v4953 = vunpack.c.l.b16 %v4918
        %v4954 = vunpack.c.h.b16 %v4918
        %v4955 = vunpack.c.l.b16 %v4919
        %v4956 = vunpack.c.h.b16 %v4919
        %v4957 = vunpack.c.l.b16 %v4920
        %v4958 = vunpack.c.h.b16 %v4920
        %v4959 = vunpack.c.l.b16 %v4921
        %v4960 = vunpack.c.h.b16 %v4921
        %v4961 = vunpack.c.l.b16 %v4922
        %v4962 = vunpack.c.h.b16 %v4922
        %v4963 = vunpack.c.l.b16 %v4923
        %v4964 = vunpack.c.h.b16 %v4923
        %v4965 = vunpack.c.l.b16 %v4924
        %v4966 = vunpack.c.h.b16 %v4924
        %v4967 = vunpack.c.l.b16 %v4925
        %v4968 = vunpack.c.h.b16 %v4925
        %v4969 = vunpack.c.l.b16 %v4926
        %v4970 = vunpack.c.h.b16 %v4926
        %v4971 = vunpack.c.l.b16 %v4927
        %v4972 = vunpack.c.h.b16 %v4927
        %v4973 = vunpack.c.l.b16 %v4928
        %v4974 = vunpack.c.h.b16 %v4928
        %v4975 = vunpack.c.l.b16 %v4929
        %v4976 = vunpack.c.h.b16 %v4929
        %v4977 = vunpack.c.l.b16 %v4930
        %v4978 = vunpack.c.h.b16 %v4930
        %v4979 = vpack.c.b16 %v4947, %v4947
        %v4980 = vpack.c.b16 %v4948, %v4948
        %v4981 = vpack.c.b16 %v4949, %v4949
        %v4982 = vpack.c.b16 %v4950, %v4950
        %v4983 = vpack.c.b16 %v4951, %v4951
        %v4984 = vpack.c.b16 %v4952, %v4952
        %v4985 = vpack.c.b16 %v4953, %v4953
        %v4986 = vpack.c.b16 %v4954, %v4954
        %v4987 = vpack.c.b16 %v4955, %v4955
        %v4988 = vpack.c.b16 %v4956, %v4956
        %v4989 = vpack.c.b16 %v4957, %v4957
        %v4990 = vpack.c.b16 %v4958, %v4958
        %v4991 = vpack.c.b16 %v4959, %v4959
        %v4992 = vpack.c.b16 %v4960, %v4960
        %v4993 = vpack.c.b16 %v4961, %v4961
        %v4994 = vpack.c.b16 %v4962, %v4962
        %v4995 = vpack.c.b16 %v4963, %v4963
        %v4996 = vpack.c.b16 %v4964, %v4964
        %v4997 = vpack.c.b16 %v4965, %v4965
        %v4998 = vpack.c.b16 %v4966, %v4966
        %v4999 = vpack.c.b16 %v4967, %v4967
        %v5000 = vpack.c.b16 %v4968, %v4968
        %v5001 = vpack.c.b16 %v4969, %v4969
        %v5002 = vpack.c.b16 %v4970, %v4970
        %v5003 = vpack.c.b16 %v4971, %v4971
        %v5004 = vpack.c.b16 %v4972, %v4972
        %v5005 = vpack.c.b16 %v4973, %v4973
        %v5006 = vpack.c.b16 %v4974, %v4974
        %v5007 = vpack.c.b16 %v4975, %v4975
        %v5008 = vpack.c.b16 %v4976, %v4976
        %v5009 = vpack.c.b16 %v4977, %v4977
        %v5010 = vpack.c.b16 %v4978, %v4978
        %vm5043 = vcmask 27648
        %5044 = vst.msk [vmem:[%s373] sm:$0xf] %vm5043, %v4979
        %5045 = vst.msk [vmem:[%s373 + $0x4] sm:$0xf] %vm5043, %v4980
        %5046 = vst.msk [vmem:[%s373 + $0x8] sm:$0xf] %vm5043, %v4981
        %5047 = vst.msk [vmem:[%s373 + $0xc] sm:$0xf] %vm5043, %v4982
        %5048 = vst.msk [vmem:[%s373 + $0x10] sm:$0xf] %vm5043, %v4983
        %5049 = vst.msk [vmem:[%s373 + $0x14] sm:$0xf] %vm5043, %v4984
        %5050 = vst.msk [vmem:[%s373 + $0x18] sm:$0xf] %vm5043, %v4985
        %5051 = vst.msk [vmem:[%s373 + $0x1c] sm:$0xf] %vm5043, %v4986
        %5052 = vst.msk [vmem:[%s373 + $0x20] sm:$0xf] %vm5043, %v4987
        %5053 = vst.msk [vmem:[%s373 + $0x24] sm:$0xf] %vm5043, %v4988
        %5054 = vst.msk [vmem:[%s373 + $0x28] sm:$0xf] %vm5043, %v4989
        %5055 = vst.msk [vmem:[%s373 + $0x2c] sm:$0xf] %vm5043, %v4990
        %5056 = vst.msk [vmem:[%s373 + $0x30] sm:$0xf] %vm5043, %v4991
        %5057 = vst.msk [vmem:[%s373 + $0x34] sm:$0xf] %vm5043, %v4992
        %5058 = vst.msk [vmem:[%s373 + $0x38] sm:$0xf] %vm5043, %v4993
        %5059 = vst.msk [vmem:[%s373 + $0x3c] sm:$0xf] %vm5043, %v4994
        %5060 = vst.msk [vmem:[%s373 + $0x40] sm:$0xf] %vm5043, %v4995
        %5061 = vst.msk [vmem:[%s373 + $0x44] sm:$0xf] %vm5043, %v4996
        %5062 = vst.msk [vmem:[%s373 + $0x48] sm:$0xf] %vm5043, %v4997
        %5063 = vst.msk [vmem:[%s373 + $0x4c] sm:$0xf] %vm5043, %v4998
        %5064 = vst.msk [vmem:[%s373 + $0x50] sm:$0xf] %vm5043, %v4999
        %5065 = vst.msk [vmem:[%s373 + $0x54] sm:$0xf] %vm5043, %v5000
        %5066 = vst.msk [vmem:[%s373 + $0x58] sm:$0xf] %vm5043, %v5001
        %5067 = vst.msk [vmem:[%s373 + $0x5c] sm:$0xf] %vm5043, %v5002
        %5068 = vst.msk [vmem:[%s373 + $0x60] sm:$0xf] %vm5043, %v5003
        %5069 = vst.msk [vmem:[%s373 + $0x64] sm:$0xf] %vm5043, %v5004
        %5070 = vst.msk [vmem:[%s373 + $0x68] sm:$0xf] %vm5043, %v5005
        %5071 = vst.msk [vmem:[%s373 + $0x6c] sm:$0xf] %vm5043, %v5006
        %5072 = vst.msk [vmem:[%s373 + $0x70] sm:$0xf] %vm5043, %v5007
        %5073 = vst.msk [vmem:[%s373 + $0x74] sm:$0xf] %vm5043, %v5008
        %5074 = vst.msk [vmem:[%s373 + $0x78] sm:$0xf] %vm5043, %v5009
        %5075 = vst.msk [vmem:[%s373 + $0x7c] sm:$0xf] %vm5043, %v5010
        %s5076 = sand.u32 %s187, 1
        %s5077 = scalar_lea.sflag [#allocation4], %s5076
        %s5078 = sand.u32 %s187, 1
        %s5079 = smul.addr %s5078, 128
        %s5080 = scalar_lea.vmem [#allocation14], %s5079
        // Predicated region
        $region77: #{cspsppf_forward.7} parent=47 // pred_check
          %p5081 = pneg %p197
        $region78: #{cspsppf_forward.7} parent=47 // pred_check_branch
          %5083 = sbr.rel (%p5081) target = $region80
        $region79: #{cspsppf_forward.7} parent=47 // pred_region
          %s5085 = ssub.s32 2048, 2048
          %5086 = vsyncadd %s5077, %s5085
          %s5087 = smul.addr %s27, 32
          %s5088 = smul.addr %s5087, 64
          %s5089 = scalar_lea.hbm %s7, %s5088
          %s5090 = sshll.u32 %s5080, 4
          %s5091 = int_to_ptr.vmem [resolvable:$true] %s5090
          %5096 = dma.vmem_to_hbm [thread:$0]  %s5091, 2048, %s5089, %s5077, 64, 64, 4
        $region80: #{cspsppf_forward.7} parent=47 // pred_fallthru
          _
      $region48: #{cspsppf_forward.7} parent=5 // pred_fallthru
        _
      %p5097 = scmp.le.s32.totalorder 2, %s22
      // Predicated region
      $region81: #{cspsppf_forward.7} parent=5 // pred_check
        %p5098 = pneg %p5097
      $region82: #{cspsppf_forward.7} parent=5 // pred_check_branch
        %5100 = sbr.rel (%p5098) target = $region84
      $region83: #{cspsppf_forward.7} parent=5 // pred_region
        %s5101 = ssub.s32 %s22, 2
        // Predicated region
        $region85: #{cspsppf_forward.7} parent=83 // pred_check
          %p5102 = pneg %p203
        $region86: #{cspsppf_forward.7} parent=83 // pred_check_branch
          %5104 = sbr.rel (%p5102) target = $region88
        $region87: #{cspsppf_forward.7} parent=83 // pred_region
          %s5105 = sand.u32 %s188, 1
          %s5106 = scalar_lea.sflag [#allocation4], %s5105
          %s5107 = sand.u32 %s188, 1
          %s5108 = smul.addr %s5107, 128
          %s5109 = scalar_lea.vmem [#allocation14], %s5108
          %5110 = dma.done %s5106, 2048
        $region88: #{cspsppf_forward.7} parent=83 // pred_fallthru
          _
      $region84: #{cspsppf_forward.7} parent=5 // pred_fallthru
        _
    $region6: #{cspsppf_forward.7} parent=1 // loop_footer
      %s26 = sadd.s32 1, %s22
    $region7: #{cspsppf_forward.7} parent=1 // loop_footer_branch
      %21 = sbr.rel target = $region3
    $region8: #{cspsppf_forward.7} parent=1 // loop_exit
      _
    %5111 = vsyncpa [#allocation3], 1
    %s5112 = scalar_lea.sflag [#allocation3], 1
    %5113 = vsyncpa %s5112, 1
    %5114 = vsyncpa [#allocation6], 1
    %5115 = vsyncpa [#allocation9], 1
    %5116 = vsyncpa [#allocation12], 1
    %5117 = vsyncpa [#allocation4], 1
    %s5118 = scalar_lea.sflag [#allocation4], 1
    %5119 = vsyncpa %s5118, 1

</llo_original>
